<compile_context>
chip_gen: v7x
topology: tpu7x:2x2x1
jax: 0.10.0
libtpu: 0.0.40
codegen_flags: <defaults>
</compile_context>

<pallas_src>
import jax
import jax.numpy as jnp
from jax.experimental import pallas as pl
from jax.experimental.pallas import tpu as pltpu

# ---------------- configuration consistent with the module ------------------
DATA_SHAPE = (3, 16, 16)       # (C, H, W)
HIDDEN_SIZE = (16, 16)
NUM_RES_BLOCK = 1
EMBEDDING_SIZE = 8
NUM_EMBEDDING = 32
VQ_COMMIT = 0.25
BN_EPS = 1e-5

CP = 128                       # channel padding -> lane-dense everything
NC_PAD = 128                   # codebook rows padded to one full lane width


# ---------------------------- Pallas kernels --------------------------------
def _make_fused_conv_kernel(phases, has_bn, has_res, act):
    """matmul + bias -> [BatchNorm over rows&phases] -> [+residual] -> [relu|tanh]."""

    def kernel(*refs):
        x_ref, w_ref, b_ref = refs[0], refs[1], refs[2]
        i = 3
        if has_bn:
            g_ref, beta_ref = refs[i], refs[i + 1]
            i += 2
        if has_res:
            r_ref = refs[i]
            i += 1
        o_ref = refs[i]

        y = jnp.dot(x_ref[...], w_ref[...], preferred_element_type=jnp.float32)
        y = y + b_ref[...]                       # (M, phases*CP)
        cp = y.shape[-1] // phases

        if has_bn:
            # training-mode BN: batch statistics over all rows (and all
            # sub-pixel phases for transposed convs), per channel.
            s = jnp.zeros((1, cp), jnp.float32)
            s2 = jnp.zeros((1, cp), jnp.float32)
            for p in range(phases):
                blk = y[:, p * cp:(p + 1) * cp]
                s = s + jnp.sum(blk, axis=0, keepdims=True)
                s2 = s2 + jnp.sum(blk * blk, axis=0, keepdims=True)
            cnt = float(y.shape[0] * phases)
            mean = s / cnt
            var = s2 / cnt - mean * mean
            scale = jax.lax.rsqrt(var + BN_EPS) * g_ref[...]
            shift = beta_ref[...] - mean * scale

        for p in range(phases):
            blk = y[:, p * cp:(p + 1) * cp]
            if has_bn:
                blk = blk * scale + shift
            if has_res:
                blk = blk + r_ref[...]
            if act == "relu":
                blk = jnp.maximum(blk, 0.0)
            elif act == "tanh":
                blk = jnp.tanh(blk)
            if phases == 1:
                o_ref[...] = blk
            else:
                o_ref[:, p * cp:(p + 1) * cp] = blk   # 128-aligned dense store

    return kernel


def fused_conv(patches, w, b, bn=None, residual=None, act=None, phases=1):
    """patches: (M, K) f32, w: (K, phases*CP), b: (1, phases*CP)."""
    M, K = patches.shape
    Nout = w.shape[1]
    inputs = [patches, w, b]
    in_specs = [pl.BlockSpec((M, K), lambda i: (0, 0)),
                pl.BlockSpec((K, Nout), lambda i: (0, 0)),
                pl.BlockSpec((1, Nout), lambda i: (0, 0))]
    if bn is not None:
        inputs += [bn['g'], bn['b']]
        in_specs += [pl.BlockSpec((1, CP), lambda i: (0, 0)),
                     pl.BlockSpec((1, CP), lambda i: (0, 0))]
    if residual is not None:
        inputs.append(residual)
        in_specs.append(pl.BlockSpec((M, CP), lambda i: (0, 0)))

    kernel = _make_fused_conv_kernel(phases, bn is not None,
                                     residual is not None, act)
    return pl.pallas_call(
        kernel,
        out_shape=jax.ShapeDtypeStruct((M, Nout), jnp.float32),
        grid=(1,),
        in_specs=in_specs,
        out_specs=pl.BlockSpec((M, Nout), lambda i: (0, 0)),
        compiler_params=pltpu.CompilerParams(
            dimension_semantics=("arbitrary",)),
    )(*inputs)


def _vq_kernel(z_ref, e_ref, e2_ref, q_ref, code_ref):
    z = z_ref[...]                                   # (M, CP)
    e = e_ref[...]                                   # (NC_PAD, CP)
    # z @ e^T on the MXU without transposing e (contract last dims).
    ze = jax.lax.dot_general(z, e, (((1,), (1,)), ((), ())),
                             preferred_element_type=jnp.float32)
    z2 = jnp.sum(z * z, axis=-1, keepdims=True)      # (M, 1)
    dist = z2 + e2_ref[...] - 2.0 * ze               # (M, NC_PAD), pads huge
    iota = jax.lax.broadcasted_iota(jnp.int32, dist.shape, 1)
    min_d = jnp.min(dist, axis=-1, keepdims=True)
    # first-occurrence argmin (same tie-break as torch.argmin)
    code = jnp.min(jnp.where(dist <= min_d, iota, dist.shape[-1]),
                   axis=-1, keepdims=True)           # (M, 1)
    onehot = (iota == code).astype(jnp.float32)      # (M, NC_PAD)
    q_ref[...] = jnp.dot(onehot, e, preferred_element_type=jnp.float32)
    code_ref[...] = code


def pallas_vq(z_flat, codebook, e2p):
    M, D = z_flat.shape
    NC = codebook.shape[0]
    q, code = pl.pallas_call(
        _vq_kernel,
        out_shape=(jax.ShapeDtypeStruct((M, D), jnp.float32),
                   jax.ShapeDtypeStruct((M, 1), jnp.int32)),
        grid=(1,),
        in_specs=[pl.BlockSpec((M, D), lambda i: (0, 0)),
                  pl.BlockSpec((NC, D), lambda i: (0, 0)),
                  pl.BlockSpec((1, NC), lambda i: (0, 0))],
        out_specs=(pl.BlockSpec((M, D), lambda i: (0, 0)),
                   pl.BlockSpec((M, 1), lambda i: (0, 0))),
        compiler_params=pltpu.CompilerParams(
            dimension_semantics=("arbitrary",)),
    )(z_flat, codebook, e2p)
    return q, code[:, 0]


# ---------------------------- XLA glue (data movement only) ------------------
def im2col(x, kh, kw, stride, pad):
    """x: (N, H, W, CP) -> patches (N*oh*ow, kh*kw*CP), plus output dims."""
    xp = jnp.pad(x, ((0, 0), (pad, pad), (pad, pad), (0, 0)))
    N, H, W, C = xp.shape
    oh = (H - kh) // stride + 1
    ow = (W - kw) // stride + 1
    cols = [xp[:, i:i + stride * oh:stride, j:j + stride * ow:stride, :]
            for i in range(kh) for j in range(kw)]
    patches = jnp.concatenate(cols, axis=-1).reshape(N * oh * ow, kh * kw * C)
    return patches, (N, oh, ow)


def uninterleave_phases(y4, N, H, W):
    """(N*H*W, 4*CP) phase-major -> (N, 2H, 2W, CP)."""
    y = y4.reshape(N, H, W, 2, 2, CP)
    y = jnp.transpose(y, (0, 1, 3, 2, 4, 5))
    return y.reshape(N, 2 * H, 2 * W, CP)


# ---------------------------- model blocks -----------------------------------
def conv_block(x, cw, k, stride, pad, bn=None, act=None):
    patches, (N, oh, ow) = im2col(x, k, k, stride, pad)
    out = fused_conv(patches, cw['w'], cw['b'], bn=bn, act=act, phases=1)
    return out.reshape(N, oh, ow, CP)


def resblock(x, p):
    N, H, W, _ = x.shape
    y = conv_block(x, p['c1'], 3, 1, 1, bn=p['bn1'], act='relu')
    patches, _ = im2col(y, 3, 3, 1, 1)
    out = fused_conv(patches, p['c2']['w'], p['c2']['b'], bn=p['bn2'],
                     residual=x.reshape(-1, CP), act='relu', phases=1)
    return out.reshape(N, H, W, CP)


def upconv_block(x, cw, bn=None, act=None):
    """ConvTranspose2d(k=4, s=2, p=1) via 4 sub-pixel phases, one matmul."""
    N, H, W, _ = x.shape
    patches, _ = im2col(x, 3, 3, 1, 1)
    out = fused_conv(patches, cw['w'], cw['b'], bn=bn, act=act, phases=4)
    return uninterleave_phases(out, N, H, W)


def encoder_fwd(p, x):
    x = conv_block(x, p['c0'], 4, 2, 1, bn=p['bn0'], act='relu')
    for d in p['downs']:
        x = conv_block(x, d['c'], 4, 2, 1, bn=d['bn'], act='relu')
    for r in p['res']:
        x = resblock(r_x := x, r) if False else resblock(x, r)
    x = conv_block(x, p['out'], 3, 1, 1)             # no BN / act
    return x


def decoder_fwd(p, x):
    x = conv_block(x, p['in'], 3, 1, 1, bn=p['bn_in'], act='relu')
    for r in p['res']:
        x = resblock(x, r)
    for u in p['ups']:
        x = upconv_block(x, u['c'], bn=u['bn'], act='relu')
    x = upconv_block(x, p['out'], act='tanh')
    return x


def vqvae_forward(params, img_nchw):
    x = jnp.transpose(img_nchw, (0, 2, 3, 1))                    # NCHW -> NHWC
    x = jnp.pad(x, ((0, 0), (0, 0), (0, 0), (0, CP - x.shape[-1])))

    z = encoder_fwd(params['enc'], x)                            # (N, h, w, CP)
    N, h, w, _ = z.shape
    z_flat = z.reshape(-1, CP)                                   # pads are zero

    cb = params['codebook']                                      # (NC_PAD, CP)
    pad_penalty = jnp.where(jnp.arange(cb.shape[0]) >= NUM_EMBEDDING, 1e30, 0.0)
    e2p = (jnp.sum(cb * cb, axis=-1) + pad_penalty).reshape(1, -1)

    q_flat, code_flat = pallas_vq(z_flat, cb, e2p)
    # commitment term; pads are zero in both q and z -> mean over real dims
    vq_loss = jnp.sum((q_flat - z_flat) ** 2) / (z_flat.shape[0] * EMBEDDING_SIZE)

    quantized = q_flat.reshape(N, h, w, CP)
    decoded = decoder_fwd(params['dec'], quantized)              # (N, H, W, CP)
    decoded = decoded[..., :DATA_SHAPE[0]]
    decoded_nchw = jnp.transpose(decoded, (0, 3, 1, 2))          # NHWC -> NCHW

    loss = jnp.mean((decoded_nchw - img_nchw) ** 2) + VQ_COMMIT * vq_loss
    return {'loss': loss,
            'code': code_flat.reshape(N, h, w),
            'img': decoded_nchw}


# ---------------------------- parameter init ---------------------------------
def init_params(key):
    keys = iter(jax.random.split(key, 64))

    def rnd(shape, scale=0.05):
        return scale * jax.random.normal(next(keys), shape, dtype=jnp.float32)

    def conv_p(k, cin, cout):
        w = rnd((k, k, cin, cout))
        wp = jnp.zeros((k, k, CP, CP), jnp.float32).at[:, :, :cin, :cout].set(w)
        return {'w': wp.reshape(k * k * CP, CP),
                'b': jnp.zeros((1, CP), jnp.float32)}

    def upconv_p(cin, cout):
        # w_eq is the equivalent forward-conv weight (spatially flipped,
        # in/out swapped relative to PyTorch ConvTranspose2d storage).
        w_eq = rnd((4, 4, cin, cout))
        W = jnp.zeros((3, 3, CP, 2, 2, CP), jnp.float32)
        # phase taps: even output index uses offsets {-1,0} with w_eq[{0,2}],
        #             odd  output index uses offsets {0,+1} with w_eq[{1,3}].
        pmap = {0: [(-1, 0), (0, 2)], 1: [(0, 1), (1, 3)]}
        for ar in (0, 1):
            for ac in (0, 1):
                for dy, ky in pmap[ar]:
                    for dx, kx in pmap[ac]:
                        W = W.at[dy + 1, dx + 1, :cin, ar, ac, :cout].set(
                            w_eq[ky, kx])
        return {'w': W.reshape(9 * CP, 4 * CP),
                'b': jnp.zeros((1, 4 * CP), jnp.float32)}

    def bn_p(c):
        g = jnp.zeros((1, CP), jnp.float32).at[0, :c].set(1.0)
        return {'g': g, 'b': jnp.zeros((1, CP), jnp.float32)}

    enc = {'c0': conv_p(4, DATA_SHAPE[0], HIDDEN_SIZE[0]),
           'bn0': bn_p(HIDDEN_SIZE[0]),
           'downs': [], 'res': [],
           'out': conv_p(3, HIDDEN_SIZE[-1], EMBEDDING_SIZE)}
    for i in range(len(HIDDEN_SIZE) - 1):
        enc['downs'].append({'c': conv_p(4, HIDDEN_SIZE[i], HIDDEN_SIZE[i + 1]),
                             'bn': bn_p(HIDDEN_SIZE[i + 1])})
    for _ in range(NUM_RES_BLOCK):
        c = HIDDEN_SIZE[-1]
        enc['res'].append({'c1': conv_p(3, c, c), 'bn1': bn_p(c),
                           'c2': conv_p(3, c, c), 'bn2': bn_p(c)})

    dec = {'in': conv_p(3, EMBEDDING_SIZE, HIDDEN_SIZE[-1]),
           'bn_in': bn_p(HIDDEN_SIZE[-1]),
           'res': [], 'ups': [],
           'out': upconv_p(HIDDEN_SIZE[0], DATA_SHAPE[0])}
    for _ in range(NUM_RES_BLOCK):
        c = HIDDEN_SIZE[-1]
        dec['res'].append({'c1': conv_p(3, c, c), 'bn1': bn_p(c),
                           'c2': conv_p(3, c, c), 'bn2': bn_p(c)})
    for i in range(len(HIDDEN_SIZE) - 1, 0, -1):
        dec['ups'].append({'c': upconv_p(HIDDEN_SIZE[i], HIDDEN_SIZE[i - 1]),
                           'bn': bn_p(HIDDEN_SIZE[i - 1])})

    cb_real = rnd((NUM_EMBEDDING, EMBEDDING_SIZE), scale=1.0)
    codebook = jnp.zeros((NC_PAD, CP), jnp.float32
                         ).at[:NUM_EMBEDDING, :EMBEDDING_SIZE].set(cb_real)

    return {'enc': enc, 'dec': dec, 'codebook': codebook}


# --------------------------------- main ---------------------------------------
if __name__ == "__main__":
    key = jax.random.PRNGKey(0)
    pkey, xkey = jax.random.split(key)
    params = init_params(pkey)
    img = jax.random.normal(xkey, (2,) + DATA_SHAPE, dtype=jnp.float32)

    fwd = jax.jit(vqvae_forward)
    out = fwd(params, img)
    jax.block_until_ready(out)

    assert out['img'].shape == img.shape
    assert out['img'].dtype == jnp.float32
    assert out['code'].shape == (2, DATA_SHAPE[1] // 4, DATA_SHAPE[2] // 4)
    assert out['loss'].shape == ()
    print("KERNEL_OK")
</pallas_src>

<mosaic_0001>
module attributes {stable_mosaic.version = 11 : i64} {
  func.func @kernel(%arg0: i32, %arg1: memref<128x2048xf32, #tpu.memory_space<vmem>>, %arg2: memref<2048x128xf32, #tpu.memory_space<vmem>>, %arg3: memref<1x128xf32, #tpu.memory_space<vmem>>, %arg4: memref<1x128xf32, #tpu.memory_space<vmem>>, %arg5: memref<1x128xf32, #tpu.memory_space<vmem>>, %arg6: memref<128x128xf32, #tpu.memory_space<vmem>>) attributes {dimension_semantics = [#tpu.dimension_semantics<arbitrary>], iteration_bounds = array<i64: 1>, scalar_prefetch = 0 : i64, scratch_operands = 0 : i64, tpu.core_type = #tpu.core_type<tc>, window_params = [{pipeline_mode = #tpu.pipeline_mode<synchronous>, transform_indices = @transform_0, window_bounds = array<i64: 128, 2048>}, {pipeline_mode = #tpu.pipeline_mode<synchronous>, transform_indices = @transform_1, window_bounds = array<i64: 2048, 128>}, {pipeline_mode = #tpu.pipeline_mode<synchronous>, transform_indices = @transform_2, window_bounds = array<i64: 1, 128>}, {pipeline_mode = #tpu.pipeline_mode<synchronous>, transform_indices = @transform_3, window_bounds = array<i64: 1, 128>}, {pipeline_mode = #tpu.pipeline_mode<synchronous>, transform_indices = @transform_4, window_bounds = array<i64: 1, 128>}, {pipeline_mode = #tpu.pipeline_mode<synchronous>, transform_indices = @transform_5, window_bounds = array<i64: 128, 128>}]} {
    %c0 = arith.constant 0 : index
    %c0_0 = arith.constant 0 : index
    %0 = vector.load %arg1[%c0, %c0_0] : memref<128x2048xf32, #tpu.memory_space<vmem>>, vector<128x2048xf32>
    %c0_1 = arith.constant 0 : index
    %c0_2 = arith.constant 0 : index
    %1 = vector.load %arg2[%c0_1, %c0_2] : memref<2048x128xf32, #tpu.memory_space<vmem>>, vector<2048x128xf32>
    %cst = arith.constant dense<0.000000e+00> : vector<128x128xf32>
    %2 = tpu.matmul %0, %1, %cst {dimension_numbers = #tpu.dot_dimension_numbers<[1], [0], [0], [1], [0, 0, 1, 1], [], []>} : vector<128x2048xf32>, vector<2048x128xf32>, vector<128x128xf32> -> vector<128x128xf32>
    %c0_3 = arith.constant 0 : index
    %c0_4 = arith.constant 0 : index
    %3 = vector.load %arg3[%c0_3, %c0_4] : memref<1x128xf32, #tpu.memory_space<vmem>>, vector<1x128xf32>
    %4 = vector.broadcast %3 : vector<1x128xf32> to vector<128x128xf32>
    %5 = arith.addf %2, %4 : vector<128x128xf32>
    %cst_5 = arith.constant 0.000000e+00 : f32
    %6 = vector.broadcast %cst_5 : f32 to vector<1x128xf32>
    %cst_6 = arith.constant 0.000000e+00 : f32
    %7 = vector.broadcast %cst_6 : f32 to vector<1x128xf32>
    %cst_7 = arith.constant dense<0.000000e+00> : vector<128xf32>
    %8 = vector.multi_reduction <add>, %5, %cst_7 [0] : vector<128x128xf32> to vector<128xf32>
    %9 = vector.shape_cast %8 : vector<128xf32> to vector<1x128xf32>
    %10 = arith.addf %6, %9 : vector<1x128xf32>
    %11 = arith.mulf %5, %5 : vector<128x128xf32>
    %cst_8 = arith.constant dense<0.000000e+00> : vector<128xf32>
    %12 = vector.multi_reduction <add>, %11, %cst_8 [0] : vector<128x128xf32> to vector<128xf32>
    %13 = vector.shape_cast %12 : vector<128xf32> to vector<1x128xf32>
    %14 = arith.addf %7, %13 : vector<1x128xf32>
    %cst_9 = arith.constant 1.280000e+02 : f32
    %15 = vector.broadcast %cst_9 : f32 to vector<1x128xf32>
    %16 = arith.divf %10, %15 : vector<1x128xf32>
    %cst_10 = arith.constant 1.280000e+02 : f32
    %17 = vector.broadcast %cst_10 : f32 to vector<1x128xf32>
    %18 = arith.divf %14, %17 : vector<1x128xf32>
    %19 = arith.mulf %16, %16 : vector<1x128xf32>
    %20 = arith.subf %18, %19 : vector<1x128xf32>
    %cst_11 = arith.constant 9.99999974E-6 : f32
    %21 = vector.broadcast %cst_11 : f32 to vector<1x128xf32>
    %22 = arith.addf %20, %21 : vector<1x128xf32>
    %23 = math.rsqrt %22 : vector<1x128xf32>
    %c0_12 = arith.constant 0 : index
    %c0_13 = arith.constant 0 : index
    %24 = vector.load %arg4[%c0_12, %c0_13] : memref<1x128xf32, #tpu.memory_space<vmem>>, vector<1x128xf32>
    %25 = arith.mulf %23, %24 : vector<1x128xf32>
    %c0_14 = arith.constant 0 : index
    %c0_15 = arith.constant 0 : index
    %26 = vector.load %arg5[%c0_14, %c0_15] : memref<1x128xf32, #tpu.memory_space<vmem>>, vector<1x128xf32>
    %27 = arith.mulf %16, %25 : vector<1x128xf32>
    %28 = arith.subf %26, %27 : vector<1x128xf32>
    %29 = vector.broadcast %25 : vector<1x128xf32> to vector<128x128xf32>
    %30 = arith.mulf %5, %29 : vector<128x128xf32>
    %31 = vector.broadcast %28 : vector<1x128xf32> to vector<128x128xf32>
    %32 = arith.addf %30, %31 : vector<128x128xf32>
    %cst_16 = arith.constant 0.000000e+00 : f32
    %33 = vector.broadcast %cst_16 : f32 to vector<128x128xf32>
    %34 = arith.maximumf %32, %33 : vector<128x128xf32>
    %c0_17 = arith.constant 0 : index
    %c0_18 = arith.constant 0 : index
    %35 = vector.load %arg6[%c0_17, %c0_18] : memref<128x128xf32, #tpu.memory_space<vmem>>, vector<128x128xf32>
    tpu.vector_store %arg6[%c0_17, %c0_18], %34 {strides = array<i32>} : memref<128x128xf32, #tpu.memory_space<vmem>>, vector<128x128xf32>,
    return
  }
  func.func @transform_0(%arg0: i32) -> (i32, i32) {
    %c0_i32 = arith.constant 0 : i32
    %c0_i32_0 = arith.constant 0 : i32
    %c0_i32_1 = arith.constant 0 : i32
    return %c0_i32, %c0_i32_0 : i32, i32
  }
  func.func @transform_1(%arg0: i32) -> (i32, i32) {
    %c0_i32 = arith.constant 0 : i32
    %c0_i32_0 = arith.constant 0 : i32
    %c0_i32_1 = arith.constant 0 : i32
    return %c0_i32, %c0_i32_0 : i32, i32
  }
  func.func @transform_2(%arg0: i32) -> (i32, i32) {
    %c0_i32 = arith.constant 0 : i32
    %c0_i32_0 = arith.constant 0 : i32
    %c0_i32_1 = arith.constant 0 : i32
    return %c0_i32, %c0_i32_0 : i32, i32
  }
  func.func @transform_3(%arg0: i32) -> (i32, i32) {
    %c0_i32 = arith.constant 0 : i32
    %c0_i32_0 = arith.constant 0 : i32
    %c0_i32_1 = arith.constant 0 : i32
    return %c0_i32, %c0_i32_0 : i32, i32
  }
  func.func @transform_4(%arg0: i32) -> (i32, i32) {
    %c0_i32 = arith.constant 0 : i32
    %c0_i32_0 = arith.constant 0 : i32
    %c0_i32_1 = arith.constant 0 : i32
    return %c0_i32, %c0_i32_0 : i32, i32
  }
  func.func @transform_5(%arg0: i32) -> (i32, i32) {
    %c0_i32 = arith.constant 0 : i32
    %c0_i32_0 = arith.constant 0 : i32
    %c0_i32_1 = arith.constant 0 : i32
    return %c0_i32, %c0_i32_0 : i32, i32
  }
}

module attributes {stable_mosaic.version = 11 : i64} {
  func.func @kernel(%arg0: i32, %arg1: memref<32x2048xf32, #tpu.memory_space<vmem>>, %arg2: memref<2048x128xf32, #tpu.memory_space<vmem>>, %arg3: memref<1x128xf32, #tpu.memory_space<vmem>>, %arg4: memref<1x128xf32, #tpu.memory_space<vmem>>, %arg5: memref<1x128xf32, #tpu.memory_space<vmem>>, %arg6: memref<32x128xf32, #tpu.memory_space<vmem>>) attributes {dimension_semantics = [#tpu.dimension_semantics<arbitrary>], iteration_bounds = array<i64: 1>, scalar_prefetch = 0 : i64, scratch_operands = 0 : i64, tpu.core_type = #tpu.core_type<tc>, window_params = [{pipeline_mode = #tpu.pipeline_mode<synchronous>, transform_indices = @transform_0, window_bounds = array<i64: 32, 2048>}, {pipeline_mode = #tpu.pipeline_mode<synchronous>, transform_indices = @transform_1, window_bounds = array<i64: 2048, 128>}, {pipeline_mode = #tpu.pipeline_mode<synchronous>, transform_indices = @transform_2, window_bounds = array<i64: 1, 128>}, {pipeline_mode = #tpu.pipeline_mode<synchronous>, transform_indices = @transform_3, window_bounds = array<i64: 1, 128>}, {pipeline_mode = #tpu.pipeline_mode<synchronous>, transform_indices = @transform_4, window_bounds = array<i64: 1, 128>}, {pipeline_mode = #tpu.pipeline_mode<synchronous>, transform_indices = @transform_5, window_bounds = array<i64: 32, 128>}]} {
    %c0 = arith.constant 0 : index
    %c0_0 = arith.constant 0 : index
    %0 = vector.load %arg1[%c0, %c0_0] : memref<32x2048xf32, #tpu.memory_space<vmem>>, vector<32x2048xf32>
    %c0_1 = arith.constant 0 : index
    %c0_2 = arith.constant 0 : index
    %1 = vector.load %arg2[%c0_1, %c0_2] : memref<2048x128xf32, #tpu.memory_space<vmem>>, vector<2048x128xf32>
    %cst = arith.constant dense<0.000000e+00> : vector<32x128xf32>
    %2 = tpu.matmul %0, %1, %cst {dimension_numbers = #tpu.dot_dimension_numbers<[1], [0], [0], [1], [0, 0, 1, 1], [], []>} : vector<32x2048xf32>, vector<2048x128xf32>, vector<32x128xf32> -> vector<32x128xf32>
    %c0_3 = arith.constant 0 : index
    %c0_4 = arith.constant 0 : index
    %3 = vector.load %arg3[%c0_3, %c0_4] : memref<1x128xf32, #tpu.memory_space<vmem>>, vector<1x128xf32>
    %4 = vector.broadcast %3 : vector<1x128xf32> to vector<32x128xf32>
    %5 = arith.addf %2, %4 : vector<32x128xf32>
    %cst_5 = arith.constant 0.000000e+00 : f32
    %6 = vector.broadcast %cst_5 : f32 to vector<1x128xf32>
    %cst_6 = arith.constant 0.000000e+00 : f32
    %7 = vector.broadcast %cst_6 : f32 to vector<1x128xf32>
    %cst_7 = arith.constant dense<0.000000e+00> : vector<128xf32>
    %8 = vector.multi_reduction <add>, %5, %cst_7 [0] : vector<32x128xf32> to vector<128xf32>
    %9 = vector.shape_cast %8 : vector<128xf32> to vector<1x128xf32>
    %10 = arith.addf %6, %9 : vector<1x128xf32>
    %11 = arith.mulf %5, %5 : vector<32x128xf32>
    %cst_8 = arith.constant dense<0.000000e+00> : vector<128xf32>
    %12 = vector.multi_reduction <add>, %11, %cst_8 [0] : vector<32x128xf32> to vector<128xf32>
    %13 = vector.shape_cast %12 : vector<128xf32> to vector<1x128xf32>
    %14 = arith.addf %7, %13 : vector<1x128xf32>
    %cst_9 = arith.constant 3.200000e+01 : f32
    %15 = vector.broadcast %cst_9 : f32 to vector<1x128xf32>
    %16 = arith.divf %10, %15 : vector<1x128xf32>
    %cst_10 = arith.constant 3.200000e+01 : f32
    %17 = vector.broadcast %cst_10 : f32 to vector<1x128xf32>
    %18 = arith.divf %14, %17 : vector<1x128xf32>
    %19 = arith.mulf %16, %16 : vector<1x128xf32>
    %20 = arith.subf %18, %19 : vector<1x128xf32>
    %cst_11 = arith.constant 9.99999974E-6 : f32
    %21 = vector.broadcast %cst_11 : f32 to vector<1x128xf32>
    %22 = arith.addf %20, %21 : vector<1x128xf32>
    %23 = math.rsqrt %22 : vector<1x128xf32>
    %c0_12 = arith.constant 0 : index
    %c0_13 = arith.constant 0 : index
    %24 = vector.load %arg4[%c0_12, %c0_13] : memref<1x128xf32, #tpu.memory_space<vmem>>, vector<1x128xf32>
    %25 = arith.mulf %23, %24 : vector<1x128xf32>
    %c0_14 = arith.constant 0 : index
    %c0_15 = arith.constant 0 : index
    %26 = vector.load %arg5[%c0_14, %c0_15] : memref<1x128xf32, #tpu.memory_space<vmem>>, vector<1x128xf32>
    %27 = arith.mulf %16, %25 : vector<1x128xf32>
    %28 = arith.subf %26, %27 : vector<1x128xf32>
    %29 = vector.broadcast %25 : vector<1x128xf32> to vector<32x128xf32>
    %30 = arith.mulf %5, %29 : vector<32x128xf32>
    %31 = vector.broadcast %28 : vector<1x128xf32> to vector<32x128xf32>
    %32 = arith.addf %30, %31 : vector<32x128xf32>
    %cst_16 = arith.constant 0.000000e+00 : f32
    %33 = vector.broadcast %cst_16 : f32 to vector<32x128xf32>
    %34 = arith.maximumf %32, %33 : vector<32x128xf32>
    %c0_17 = arith.constant 0 : index
    %c0_18 = arith.constant 0 : index
    %35 = vector.load %arg6[%c0_17, %c0_18] : memref<32x128xf32, #tpu.memory_space<vmem>>, vector<32x128xf32>
    tpu.vector_store %arg6[%c0_17, %c0_18], %34 {strides = array<i32>} : memref<32x128xf32, #tpu.memory_space<vmem>>, vector<32x128xf32>,
    return
  }
  func.func @transform_0(%arg0: i32) -> (i32, i32) {
    %c0_i32 = arith.constant 0 : i32
    %c0_i32_0 = arith.constant 0 : i32
    %c0_i32_1 = arith.constant 0 : i32
    return %c0_i32, %c0_i32_0 : i32, i32
  }
  func.func @transform_1(%arg0: i32) -> (i32, i32) {
    %c0_i32 = arith.constant 0 : i32
    %c0_i32_0 = arith.constant 0 : i32
    %c0_i32_1 = arith.constant 0 : i32
    return %c0_i32, %c0_i32_0 : i32, i32
  }
  func.func @transform_2(%arg0: i32) -> (i32, i32) {
    %c0_i32 = arith.constant 0 : i32
    %c0_i32_0 = arith.constant 0 : i32
    %c0_i32_1 = arith.constant 0 : i32
    return %c0_i32, %c0_i32_0 : i32, i32
  }
  func.func @transform_3(%arg0: i32) -> (i32, i32) {
    %c0_i32 = arith.constant 0 : i32
    %c0_i32_0 = arith.constant 0 : i32
    %c0_i32_1 = arith.constant 0 : i32
    return %c0_i32, %c0_i32_0 : i32, i32
  }
  func.func @transform_4(%arg0: i32) -> (i32, i32) {
    %c0_i32 = arith.constant 0 : i32
    %c0_i32_0 = arith.constant 0 : i32
    %c0_i32_1 = arith.constant 0 : i32
    return %c0_i32, %c0_i32_0 : i32, i32
  }
  func.func @transform_5(%arg0: i32) -> (i32, i32) {
    %c0_i32 = arith.constant 0 : i32
    %c0_i32_0 = arith.constant 0 : i32
    %c0_i32_1 = arith.constant 0 : i32
    return %c0_i32, %c0_i32_0 : i32, i32
  }
}

module attributes {stable_mosaic.version = 11 : i64} {
  func.func @kernel(%arg0: i32, %arg1: memref<32x1152xf32, #tpu.memory_space<vmem>>, %arg2: memref<1152x128xf32, #tpu.memory_space<vmem>>, %arg3: memref<1x128xf32, #tpu.memory_space<vmem>>, %arg4: memref<1x128xf32, #tpu.memory_space<vmem>>, %arg5: memref<1x128xf32, #tpu.memory_space<vmem>>, %arg6: memref<32x128xf32, #tpu.memory_space<vmem>>) attributes {dimension_semantics = [#tpu.dimension_semantics<arbitrary>], iteration_bounds = array<i64: 1>, scalar_prefetch = 0 : i64, scratch_operands = 0 : i64, tpu.core_type = #tpu.core_type<tc>, window_params = [{pipeline_mode = #tpu.pipeline_mode<synchronous>, transform_indices = @transform_0, window_bounds = array<i64: 32, 1152>}, {pipeline_mode = #tpu.pipeline_mode<synchronous>, transform_indices = @transform_1, window_bounds = array<i64: 1152, 128>}, {pipeline_mode = #tpu.pipeline_mode<synchronous>, transform_indices = @transform_2, window_bounds = array<i64: 1, 128>}, {pipeline_mode = #tpu.pipeline_mode<synchronous>, transform_indices = @transform_3, window_bounds = array<i64: 1, 128>}, {pipeline_mode = #tpu.pipeline_mode<synchronous>, transform_indices = @transform_4, window_bounds = array<i64: 1, 128>}, {pipeline_mode = #tpu.pipeline_mode<synchronous>, transform_indices = @transform_5, window_bounds = array<i64: 32, 128>}]} {
    %c0 = arith.constant 0 : index
    %c0_0 = arith.constant 0 : index
    %0 = vector.load %arg1[%c0, %c0_0] : memref<32x1152xf32, #tpu.memory_space<vmem>>, vector<32x1152xf32>
    %c0_1 = arith.constant 0 : index
    %c0_2 = arith.constant 0 : index
    %1 = vector.load %arg2[%c0_1, %c0_2] : memref<1152x128xf32, #tpu.memory_space<vmem>>, vector<1152x128xf32>
    %cst = arith.constant dense<0.000000e+00> : vector<32x128xf32>
    %2 = tpu.matmul %0, %1, %cst {dimension_numbers = #tpu.dot_dimension_numbers<[1], [0], [0], [1], [0, 0, 1, 1], [], []>} : vector<32x1152xf32>, vector<1152x128xf32>, vector<32x128xf32> -> vector<32x128xf32>
    %c0_3 = arith.constant 0 : index
    %c0_4 = arith.constant 0 : index
    %3 = vector.load %arg3[%c0_3, %c0_4] : memref<1x128xf32, #tpu.memory_space<vmem>>, vector<1x128xf32>
    %4 = vector.broadcast %3 : vector<1x128xf32> to vector<32x128xf32>
    %5 = arith.addf %2, %4 : vector<32x128xf32>
    %cst_5 = arith.constant 0.000000e+00 : f32
    %6 = vector.broadcast %cst_5 : f32 to vector<1x128xf32>
    %cst_6 = arith.constant 0.000000e+00 : f32
    %7 = vector.broadcast %cst_6 : f32 to vector<1x128xf32>
    %cst_7 = arith.constant dense<0.000000e+00> : vector<128xf32>
    %8 = vector.multi_reduction <add>, %5, %cst_7 [0] : vector<32x128xf32> to vector<128xf32>
    %9 = vector.shape_cast %8 : vector<128xf32> to vector<1x128xf32>
    %10 = arith.addf %6, %9 : vector<1x128xf32>
    %11 = arith.mulf %5, %5 : vector<32x128xf32>
    %cst_8 = arith.constant dense<0.000000e+00> : vector<128xf32>
    %12 = vector.multi_reduction <add>, %11, %cst_8 [0] : vector<32x128xf32> to vector<128xf32>
    %13 = vector.shape_cast %12 : vector<128xf32> to vector<1x128xf32>
    %14 = arith.addf %7, %13 : vector<1x128xf32>
    %cst_9 = arith.constant 3.200000e+01 : f32
    %15 = vector.broadcast %cst_9 : f32 to vector<1x128xf32>
    %16 = arith.divf %10, %15 : vector<1x128xf32>
    %cst_10 = arith.constant 3.200000e+01 : f32
    %17 = vector.broadcast %cst_10 : f32 to vector<1x128xf32>
    %18 = arith.divf %14, %17 : vector<1x128xf32>
    %19 = arith.mulf %16, %16 : vector<1x128xf32>
    %20 = arith.subf %18, %19 : vector<1x128xf32>
    %cst_11 = arith.constant 9.99999974E-6 : f32
    %21 = vector.broadcast %cst_11 : f32 to vector<1x128xf32>
    %22 = arith.addf %20, %21 : vector<1x128xf32>
    %23 = math.rsqrt %22 : vector<1x128xf32>
    %c0_12 = arith.constant 0 : index
    %c0_13 = arith.constant 0 : index
    %24 = vector.load %arg4[%c0_12, %c0_13] : memref<1x128xf32, #tpu.memory_space<vmem>>, vector<1x128xf32>
    %25 = arith.mulf %23, %24 : vector<1x128xf32>
    %c0_14 = arith.constant 0 : index
    %c0_15 = arith.constant 0 : index
    %26 = vector.load %arg5[%c0_14, %c0_15] : memref<1x128xf32, #tpu.memory_space<vmem>>, vector<1x128xf32>
    %27 = arith.mulf %16, %25 : vector<1x128xf32>
    %28 = arith.subf %26, %27 : vector<1x128xf32>
    %29 = vector.broadcast %25 : vector<1x128xf32> to vector<32x128xf32>
    %30 = arith.mulf %5, %29 : vector<32x128xf32>
    %31 = vector.broadcast %28 : vector<1x128xf32> to vector<32x128xf32>
    %32 = arith.addf %30, %31 : vector<32x128xf32>
    %cst_16 = arith.constant 0.000000e+00 : f32
    %33 = vector.broadcast %cst_16 : f32 to vector<32x128xf32>
    %34 = arith.maximumf %32, %33 : vector<32x128xf32>
    %c0_17 = arith.constant 0 : index
    %c0_18 = arith.constant 0 : index
    %35 = vector.load %arg6[%c0_17, %c0_18] : memref<32x128xf32, #tpu.memory_space<vmem>>, vector<32x128xf32>
    tpu.vector_store %arg6[%c0_17, %c0_18], %34 {strides = array<i32>} : memref<32x128xf32, #tpu.memory_space<vmem>>, vector<32x128xf32>,
    return
  }
  func.func @transform_0(%arg0: i32) -> (i32, i32) {
    %c0_i32 = arith.constant 0 : i32
    %c0_i32_0 = arith.constant 0 : i32
    %c0_i32_1 = arith.constant 0 : i32
    return %c0_i32, %c0_i32_0 : i32, i32
  }
  func.func @transform_1(%arg0: i32) -> (i32, i32) {
    %c0_i32 = arith.constant 0 : i32
    %c0_i32_0 = arith.constant 0 : i32
    %c0_i32_1 = arith.constant 0 : i32
    return %c0_i32, %c0_i32_0 : i32, i32
  }
  func.func @transform_2(%arg0: i32) -> (i32, i32) {
    %c0_i32 = arith.constant 0 : i32
    %c0_i32_0 = arith.constant 0 : i32
    %c0_i32_1 = arith.constant 0 : i32
    return %c0_i32, %c0_i32_0 : i32, i32
  }
  func.func @transform_3(%arg0: i32) -> (i32, i32) {
    %c0_i32 = arith.constant 0 : i32
    %c0_i32_0 = arith.constant 0 : i32
    %c0_i32_1 = arith.constant 0 : i32
    return %c0_i32, %c0_i32_0 : i32, i32
  }
  func.func @transform_4(%arg0: i32) -> (i32, i32) {
    %c0_i32 = arith.constant 0 : i32
    %c0_i32_0 = arith.constant 0 : i32
    %c0_i32_1 = arith.constant 0 : i32
    return %c0_i32, %c0_i32_0 : i32, i32
  }
  func.func @transform_5(%arg0: i32) -> (i32, i32) {
    %c0_i32 = arith.constant 0 : i32
    %c0_i32_0 = arith.constant 0 : i32
    %c0_i32_1 = arith.constant 0 : i32
    return %c0_i32, %c0_i32_0 : i32, i32
  }
}

module attributes {stable_mosaic.version = 11 : i64} {
  func.func @kernel(%arg0: i32, %arg1: memref<32x1152xf32, #tpu.memory_space<vmem>>, %arg2: memref<1152x128xf32, #tpu.memory_space<vmem>>, %arg3: memref<1x128xf32, #tpu.memory_space<vmem>>, %arg4: memref<1x128xf32, #tpu.memory_space<vmem>>, %arg5: memref<1x128xf32, #tpu.memory_space<vmem>>, %arg6: memref<32x128xf32, #tpu.memory_space<vmem>>, %arg7: memref<32x128xf32, #tpu.memory_space<vmem>>) attributes {dimension_semantics = [#tpu.dimension_semantics<arbitrary>], iteration_bounds = array<i64: 1>, scalar_prefetch = 0 : i64, scratch_operands = 0 : i64, tpu.core_type = #tpu.core_type<tc>, window_params = [{pipeline_mode = #tpu.pipeline_mode<synchronous>, transform_indices = @transform_0, window_bounds = array<i64: 32, 1152>}, {pipeline_mode = #tpu.pipeline_mode<synchronous>, transform_indices = @transform_1, window_bounds = array<i64: 1152, 128>}, {pipeline_mode = #tpu.pipeline_mode<synchronous>, transform_indices = @transform_2, window_bounds = array<i64: 1, 128>}, {pipeline_mode = #tpu.pipeline_mode<synchronous>, transform_indices = @transform_3, window_bounds = array<i64: 1, 128>}, {pipeline_mode = #tpu.pipeline_mode<synchronous>, transform_indices = @transform_4, window_bounds = array<i64: 1, 128>}, {pipeline_mode = #tpu.pipeline_mode<synchronous>, transform_indices = @transform_5, window_bounds = array<i64: 32, 128>}, {pipeline_mode = #tpu.pipeline_mode<synchronous>, transform_indices = @transform_6, window_bounds = array<i64: 32, 128>}]} {
    %c0 = arith.constant 0 : index
    %c0_0 = arith.constant 0 : index
    %0 = vector.load %arg1[%c0, %c0_0] : memref<32x1152xf32, #tpu.memory_space<vmem>>, vector<32x1152xf32>
    %c0_1 = arith.constant 0 : index
    %c0_2 = arith.constant 0 : index
    %1 = vector.load %arg2[%c0_1, %c0_2] : memref<1152x128xf32, #tpu.memory_space<vmem>>, vector<1152x128xf32>
    %cst = arith.constant dense<0.000000e+00> : vector<32x128xf32>
    %2 = tpu.matmul %0, %1, %cst {dimension_numbers = #tpu.dot_dimension_numbers<[1], [0], [0], [1], [0, 0, 1, 1], [], []>} : vector<32x1152xf32>, vector<1152x128xf32>, vector<32x128xf32> -> vector<32x128xf32>
    %c0_3 = arith.constant 0 : index
    %c0_4 = arith.constant 0 : index
    %3 = vector.load %arg3[%c0_3, %c0_4] : memref<1x128xf32, #tpu.memory_space<vmem>>, vector<1x128xf32>
    %4 = vector.broadcast %3 : vector<1x128xf32> to vector<32x128xf32>
    %5 = arith.addf %2, %4 : vector<32x128xf32>
    %cst_5 = arith.constant 0.000000e+00 : f32
    %6 = vector.broadcast %cst_5 : f32 to vector<1x128xf32>
    %cst_6 = arith.constant 0.000000e+00 : f32
    %7 = vector.broadcast %cst_6 : f32 to vector<1x128xf32>
    %cst_7 = arith.constant dense<0.000000e+00> : vector<128xf32>
    %8 = vector.multi_reduction <add>, %5, %cst_7 [0] : vector<32x128xf32> to vector<128xf32>
    %9 = vector.shape_cast %8 : vector<128xf32> to vector<1x128xf32>
    %10 = arith.addf %6, %9 : vector<1x128xf32>
    %11 = arith.mulf %5, %5 : vector<32x128xf32>
    %cst_8 = arith.constant dense<0.000000e+00> : vector<128xf32>
    %12 = vector.multi_reduction <add>, %11, %cst_8 [0] : vector<32x128xf32> to vector<128xf32>
    %13 = vector.shape_cast %12 : vector<128xf32> to vector<1x128xf32>
    %14 = arith.addf %7, %13 : vector<1x128xf32>
    %cst_9 = arith.constant 3.200000e+01 : f32
    %15 = vector.broadcast %cst_9 : f32 to vector<1x128xf32>
    %16 = arith.divf %10, %15 : vector<1x128xf32>
    %cst_10 = arith.constant 3.200000e+01 : f32
    %17 = vector.broadcast %cst_10 : f32 to vector<1x128xf32>
    %18 = arith.divf %14, %17 : vector<1x128xf32>
    %19 = arith.mulf %16, %16 : vector<1x128xf32>
    %20 = arith.subf %18, %19 : vector<1x128xf32>
    %cst_11 = arith.constant 9.99999974E-6 : f32
    %21 = vector.broadcast %cst_11 : f32 to vector<1x128xf32>
    %22 = arith.addf %20, %21 : vector<1x128xf32>
    %23 = math.rsqrt %22 : vector<1x128xf32>
    %c0_12 = arith.constant 0 : index
    %c0_13 = arith.constant 0 : index
    %24 = vector.load %arg4[%c0_12, %c0_13] : memref<1x128xf32, #tpu.memory_space<vmem>>, vector<1x128xf32>
    %25 = arith.mulf %23, %24 : vector<1x128xf32>
    %c0_14 = arith.constant 0 : index
    %c0_15 = arith.constant 0 : index
    %26 = vector.load %arg5[%c0_14, %c0_15] : memref<1x128xf32, #tpu.memory_space<vmem>>, vector<1x128xf32>
    %27 = arith.mulf %16, %25 : vector<1x128xf32>
    %28 = arith.subf %26, %27 : vector<1x128xf32>
    %29 = vector.broadcast %25 : vector<1x128xf32> to vector<32x128xf32>
    %30 = arith.mulf %5, %29 : vector<32x128xf32>
    %31 = vector.broadcast %28 : vector<1x128xf32> to vector<32x128xf32>
    %32 = arith.addf %30, %31 : vector<32x128xf32>
    %c0_16 = arith.constant 0 : index
    %c0_17 = arith.constant 0 : index
    %33 = vector.load %arg6[%c0_16, %c0_17] : memref<32x128xf32, #tpu.memory_space<vmem>>, vector<32x128xf32>
    %34 = arith.addf %32, %33 : vector<32x128xf32>
    %cst_18 = arith.constant 0.000000e+00 : f32
    %35 = vector.broadcast %cst_18 : f32 to vector<32x128xf32>
    %36 = arith.maximumf %34, %35 : vector<32x128xf32>
    %c0_19 = arith.constant 0 : index
    %c0_20 = arith.constant 0 : index
    %37 = vector.load %arg7[%c0_19, %c0_20] : memref<32x128xf32, #tpu.memory_space<vmem>>, vector<32x128xf32>
    tpu.vector_store %arg7[%c0_19, %c0_20], %36 {strides = array<i32>} : memref<32x128xf32, #tpu.memory_space<vmem>>, vector<32x128xf32>,
    return
  }
  func.func @transform_0(%arg0: i32) -> (i32, i32) {
    %c0_i32 = arith.constant 0 : i32
    %c0_i32_0 = arith.constant 0 : i32
    %c0_i32_1 = arith.constant 0 : i32
    return %c0_i32, %c0_i32_0 : i32, i32
  }
  func.func @transform_1(%arg0: i32) -> (i32, i32) {
    %c0_i32 = arith.constant 0 : i32
    %c0_i32_0 = arith.constant 0 : i32
    %c0_i32_1 = arith.constant 0 : i32
    return %c0_i32, %c0_i32_0 : i32, i32
  }
  func.func @transform_2(%arg0: i32) -> (i32, i32) {
    %c0_i32 = arith.constant 0 : i32
    %c0_i32_0 = arith.constant 0 : i32
    %c0_i32_1 = arith.constant 0 : i32
    return %c0_i32, %c0_i32_0 : i32, i32
  }
  func.func @transform_3(%arg0: i32) -> (i32, i32) {
    %c0_i32 = arith.constant 0 : i32
    %c0_i32_0 = arith.constant 0 : i32
    %c0_i32_1 = arith.constant 0 : i32
    return %c0_i32, %c0_i32_0 : i32, i32
  }
  func.func @transform_4(%arg0: i32) -> (i32, i32) {
    %c0_i32 = arith.constant 0 : i32
    %c0_i32_0 = arith.constant 0 : i32
    %c0_i32_1 = arith.constant 0 : i32
    return %c0_i32, %c0_i32_0 : i32, i32
  }
  func.func @transform_5(%arg0: i32) -> (i32, i32) {
    %c0_i32 = arith.constant 0 : i32
    %c0_i32_0 = arith.constant 0 : i32
    %c0_i32_1 = arith.constant 0 : i32
    return %c0_i32, %c0_i32_0 : i32, i32
  }
  func.func @transform_6(%arg0: i32) -> (i32, i32) {
    %c0_i32 = arith.constant 0 : i32
    %c0_i32_0 = arith.constant 0 : i32
    %c0_i32_1 = arith.constant 0 : i32
    return %c0_i32, %c0_i32_0 : i32, i32
  }
}

module attributes {stable_mosaic.version = 11 : i64} {
  func.func @kernel(%arg0: i32, %arg1: memref<32x1152xf32, #tpu.memory_space<vmem>>, %arg2: memref<1152x128xf32, #tpu.memory_space<vmem>>, %arg3: memref<1x128xf32, #tpu.memory_space<vmem>>, %arg4: memref<32x128xf32, #tpu.memory_space<vmem>>) attributes {dimension_semantics = [#tpu.dimension_semantics<arbitrary>], iteration_bounds = array<i64: 1>, scalar_prefetch = 0 : i64, scratch_operands = 0 : i64, tpu.core_type = #tpu.core_type<tc>, window_params = [{pipeline_mode = #tpu.pipeline_mode<synchronous>, transform_indices = @transform_0, window_bounds = array<i64: 32, 1152>}, {pipeline_mode = #tpu.pipeline_mode<synchronous>, transform_indices = @transform_1, window_bounds = array<i64: 1152, 128>}, {pipeline_mode = #tpu.pipeline_mode<synchronous>, transform_indices = @transform_2, window_bounds = array<i64: 1, 128>}, {pipeline_mode = #tpu.pipeline_mode<synchronous>, transform_indices = @transform_3, window_bounds = array<i64: 32, 128>}]} {
    %c0 = arith.constant 0 : index
    %c0_0 = arith.constant 0 : index
    %0 = vector.load %arg1[%c0, %c0_0] : memref<32x1152xf32, #tpu.memory_space<vmem>>, vector<32x1152xf32>
    %c0_1 = arith.constant 0 : index
    %c0_2 = arith.constant 0 : index
    %1 = vector.load %arg2[%c0_1, %c0_2] : memref<1152x128xf32, #tpu.memory_space<vmem>>, vector<1152x128xf32>
    %cst = arith.constant dense<0.000000e+00> : vector<32x128xf32>
    %2 = tpu.matmul %0, %1, %cst {dimension_numbers = #tpu.dot_dimension_numbers<[1], [0], [0], [1], [0, 0, 1, 1], [], []>} : vector<32x1152xf32>, vector<1152x128xf32>, vector<32x128xf32> -> vector<32x128xf32>
    %c0_3 = arith.constant 0 : index
    %c0_4 = arith.constant 0 : index
    %3 = vector.load %arg3[%c0_3, %c0_4] : memref<1x128xf32, #tpu.memory_space<vmem>>, vector<1x128xf32>
    %4 = vector.broadcast %3 : vector<1x128xf32> to vector<32x128xf32>
    %5 = arith.addf %2, %4 : vector<32x128xf32>
    %c0_5 = arith.constant 0 : index
    %c0_6 = arith.constant 0 : index
    %6 = vector.load %arg4[%c0_5, %c0_6] : memref<32x128xf32, #tpu.memory_space<vmem>>, vector<32x128xf32>
    tpu.vector_store %arg4[%c0_5, %c0_6], %5 {strides = array<i32>} : memref<32x128xf32, #tpu.memory_space<vmem>>, vector<32x128xf32>,
    return
  }
  func.func @transform_0(%arg0: i32) -> (i32, i32) {
    %c0_i32 = arith.constant 0 : i32
    %c0_i32_0 = arith.constant 0 : i32
    %c0_i32_1 = arith.constant 0 : i32
    return %c0_i32, %c0_i32_0 : i32, i32
  }
  func.func @transform_1(%arg0: i32) -> (i32, i32) {
    %c0_i32 = arith.constant 0 : i32
    %c0_i32_0 = arith.constant 0 : i32
    %c0_i32_1 = arith.constant 0 : i32
    return %c0_i32, %c0_i32_0 : i32, i32
  }
  func.func @transform_2(%arg0: i32) -> (i32, i32) {
    %c0_i32 = arith.constant 0 : i32
    %c0_i32_0 = arith.constant 0 : i32
    %c0_i32_1 = arith.constant 0 : i32
    return %c0_i32, %c0_i32_0 : i32, i32
  }
  func.func @transform_3(%arg0: i32) -> (i32, i32) {
    %c0_i32 = arith.constant 0 : i32
    %c0_i32_0 = arith.constant 0 : i32
    %c0_i32_1 = arith.constant 0 : i32
    return %c0_i32, %c0_i32_0 : i32, i32
  }
}

module attributes {stable_mosaic.version = 11 : i64} {
  func.func @_vq_kernel(%arg0: i32, %arg1: memref<32x128xf32, #tpu.memory_space<vmem>>, %arg2: memref<128x128xf32, #tpu.memory_space<vmem>>, %arg3: memref<1x128xf32, #tpu.memory_space<vmem>>, %arg4: memref<32x128xf32, #tpu.memory_space<vmem>>, %arg5: memref<32x1xi32, #tpu.memory_space<vmem>>) attributes {dimension_semantics = [#tpu.dimension_semantics<arbitrary>], iteration_bounds = array<i64: 1>, scalar_prefetch = 0 : i64, scratch_operands = 0 : i64, tpu.core_type = #tpu.core_type<tc>, window_params = [{pipeline_mode = #tpu.pipeline_mode<synchronous>, transform_indices = @transform_0, window_bounds = array<i64: 32, 128>}, {pipeline_mode = #tpu.pipeline_mode<synchronous>, transform_indices = @transform_1, window_bounds = array<i64: 128, 128>}, {pipeline_mode = #tpu.pipeline_mode<synchronous>, transform_indices = @transform_2, window_bounds = array<i64: 1, 128>}, {pipeline_mode = #tpu.pipeline_mode<synchronous>, transform_indices = @transform_3, window_bounds = array<i64: 32, 128>}, {pipeline_mode = #tpu.pipeline_mode<synchronous>, transform_indices = @transform_4, window_bounds = array<i64: 32, 1>}]} {
    %c0 = arith.constant 0 : index
    %c0_0 = arith.constant 0 : index
    %0 = vector.load %arg1[%c0, %c0_0] : memref<32x128xf32, #tpu.memory_space<vmem>>, vector<32x128xf32>
    %c0_1 = arith.constant 0 : index
    %c0_2 = arith.constant 0 : index
    %1 = vector.load %arg2[%c0_1, %c0_2] : memref<128x128xf32, #tpu.memory_space<vmem>>, vector<128x128xf32>
    %cst = arith.constant dense<0.000000e+00> : vector<32x128xf32>
    %2 = tpu.matmul %0, %1, %cst {dimension_numbers = #tpu.dot_dimension_numbers<[1], [1], [0], [0], [0, 0, 1, 0], [], []>} : vector<32x128xf32>, vector<128x128xf32>, vector<32x128xf32> -> vector<32x128xf32>
    %3 = arith.mulf %0, %0 : vector<32x128xf32>
    %cst_3 = arith.constant dense<0.000000e+00> : vector<32xf32>
    %4 = vector.multi_reduction <add>, %3, %cst_3 [1] : vector<32x128xf32> to vector<32xf32>
    %5 = vector.shape_cast %4 : vector<32xf32> to vector<32x1xf32>
    %c0_4 = arith.constant 0 : index
    %c0_5 = arith.constant 0 : index
    %6 = vector.load %arg3[%c0_4, %c0_5] : memref<1x128xf32, #tpu.memory_space<vmem>>, vector<1x128xf32>
    %7 = vector.broadcast %5 : vector<32x1xf32> to vector<32x128xf32>
    %8 = vector.broadcast %6 : vector<1x128xf32> to vector<32x128xf32>
    %9 = arith.addf %7, %8 : vector<32x128xf32>
    %cst_6 = arith.constant 2.000000e+00 : f32
    %10 = vector.broadcast %cst_6 : f32 to vector<32x128xf32>
    %11 = arith.mulf %10, %2 : vector<32x128xf32>
    %12 = arith.subf %9, %11 : vector<32x128xf32>
    %13 = tpu.iota {dimensions = array<i32: 1>} : vector<32x128xi32>
    %cst_7 = arith.constant dense<0x7F800000> : vector<32xf32>
    %14 = vector.multi_reduction <minimumf>, %12, %cst_7 [1] : vector<32x128xf32> to vector<32xf32>
    %15 = vector.shape_cast %14 : vector<32xf32> to vector<32x1xf32>
    %16 = vector.broadcast %15 : vector<32x1xf32> to vector<32x128xf32>
    %17 = arith.cmpf ole, %12, %16 : vector<32x128xf32>
    %c128_i32 = arith.constant 128 : i32
    %18 = vector.broadcast %c128_i32 : i32 to vector<32x128xi32>
    %19 = arith.select %17, %13, %18 : vector<32x128xi1>, vector<32x128xi32>
    %cst_8 = arith.constant dense<2147483647> : vector<32xi32>
    %20 = vector.multi_reduction <minsi>, %19, %cst_8 [1] : vector<32x128xi32> to vector<32xi32>
    %21 = vector.shape_cast %20 : vector<32xi32> to vector<32x1xi32>
    %22 = vector.broadcast %21 : vector<32x1xi32> to vector<32x128xi32>
    %23 = arith.cmpi eq, %13, %22 : vector<32x128xi32>
    %24 = arith.extui %23 : vector<32x128xi1> to vector<32x128xi32>
    %25 = arith.sitofp %24 : vector<32x128xi32> to vector<32x128xf32>
    %cst_9 = arith.constant dense<0.000000e+00> : vector<32x128xf32>
    %26 = tpu.matmul %25, %1, %cst_9 {dimension_numbers = #tpu.dot_dimension_numbers<[1], [0], [0], [1], [0, 0, 1, 1], [], []>} : vector<32x128xf32>, vector<128x128xf32>, vector<32x128xf32> -> vector<32x128xf32>
    %c0_10 = arith.constant 0 : index
    %c0_11 = arith.constant 0 : index
    %27 = vector.load %arg4[%c0_10, %c0_11] : memref<32x128xf32, #tpu.memory_space<vmem>>, vector<32x128xf32>
    tpu.vector_store %arg4[%c0_10, %c0_11], %26 {strides = array<i32>} : memref<32x128xf32, #tpu.memory_space<vmem>>, vector<32x128xf32>,
    %c0_12 = arith.constant 0 : index
    %c0_13 = arith.constant 0 : index
    %28 = vector.load %arg5[%c0_12, %c0_13] : memref<32x1xi32, #tpu.memory_space<vmem>>, vector<32x1xi32>
    tpu.vector_store %arg5[%c0_12, %c0_13], %21 {strides = array<i32>} : memref<32x1xi32, #tpu.memory_space<vmem>>, vector<32x1xi32>,
    return
  }
  func.func @transform_0(%arg0: i32) -> (i32, i32) {
    %c0_i32 = arith.constant 0 : i32
    %c0_i32_0 = arith.constant 0 : i32
    %c0_i32_1 = arith.constant 0 : i32
    return %c0_i32, %c0_i32_0 : i32, i32
  }
  func.func @transform_1(%arg0: i32) -> (i32, i32) {
    %c0_i32 = arith.constant 0 : i32
    %c0_i32_0 = arith.constant 0 : i32
    %c0_i32_1 = arith.constant 0 : i32
    return %c0_i32, %c0_i32_0 : i32, i32
  }
  func.func @transform_2(%arg0: i32) -> (i32, i32) {
    %c0_i32 = arith.constant 0 : i32
    %c0_i32_0 = arith.constant 0 : i32
    %c0_i32_1 = arith.constant 0 : i32
    return %c0_i32, %c0_i32_0 : i32, i32
  }
  func.func @transform_3(%arg0: i32) -> (i32, i32) {
    %c0_i32 = arith.constant 0 : i32
    %c0_i32_0 = arith.constant 0 : i32
    %c0_i32_1 = arith.constant 0 : i32
    return %c0_i32, %c0_i32_0 : i32, i32
  }
  func.func @transform_4(%arg0: i32) -> (i32, i32) {
    %c0_i32 = arith.constant 0 : i32
    %c0_i32_0 = arith.constant 0 : i32
    %c0_i32_1 = arith.constant 0 : i32
    return %c0_i32, %c0_i32_0 : i32, i32
  }
}

module attributes {stable_mosaic.version = 11 : i64} {
  func.func @kernel(%arg0: i32, %arg1: memref<32x1152xf32, #tpu.memory_space<vmem>>, %arg2: memref<1152x512xf32, #tpu.memory_space<vmem>>, %arg3: memref<1x512xf32, #tpu.memory_space<vmem>>, %arg4: memref<1x128xf32, #tpu.memory_space<vmem>>, %arg5: memref<1x128xf32, #tpu.memory_space<vmem>>, %arg6: memref<32x512xf32, #tpu.memory_space<vmem>>) attributes {dimension_semantics = [#tpu.dimension_semantics<arbitrary>], iteration_bounds = array<i64: 1>, scalar_prefetch = 0 : i64, scratch_operands = 0 : i64, tpu.core_type = #tpu.core_type<tc>, window_params = [{pipeline_mode = #tpu.pipeline_mode<synchronous>, transform_indices = @transform_0, window_bounds = array<i64: 32, 1152>}, {pipeline_mode = #tpu.pipeline_mode<synchronous>, transform_indices = @transform_1, window_bounds = array<i64: 1152, 512>}, {pipeline_mode = #tpu.pipeline_mode<synchronous>, transform_indices = @transform_2, window_bounds = array<i64: 1, 512>}, {pipeline_mode = #tpu.pipeline_mode<synchronous>, transform_indices = @transform_3, window_bounds = array<i64: 1, 128>}, {pipeline_mode = #tpu.pipeline_mode<synchronous>, transform_indices = @transform_4, window_bounds = array<i64: 1, 128>}, {pipeline_mode = #tpu.pipeline_mode<synchronous>, transform_indices = @transform_5, window_bounds = array<i64: 32, 512>}]} {
    %c0 = arith.constant 0 : index
    %c0_0 = arith.constant 0 : index
    %0 = vector.load %arg1[%c0, %c0_0] : memref<32x1152xf32, #tpu.memory_space<vmem>>, vector<32x1152xf32>
    %c0_1 = arith.constant 0 : index
    %c0_2 = arith.constant 0 : index
    %1 = vector.load %arg2[%c0_1, %c0_2] : memref<1152x512xf32, #tpu.memory_space<vmem>>, vector<1152x512xf32>
    %cst = arith.constant dense<0.000000e+00> : vector<32x512xf32>
    %2 = tpu.matmul %0, %1, %cst {dimension_numbers = #tpu.dot_dimension_numbers<[1], [0], [0], [1], [0, 0, 1, 1], [], []>} : vector<32x1152xf32>, vector<1152x512xf32>, vector<32x512xf32> -> vector<32x512xf32>
    %c0_3 = arith.constant 0 : index
    %c0_4 = arith.constant 0 : index
    %3 = vector.load %arg3[%c0_3, %c0_4] : memref<1x512xf32, #tpu.memory_space<vmem>>, vector<1x512xf32>
    %4 = vector.broadcast %3 : vector<1x512xf32> to vector<32x512xf32>
    %5 = arith.addf %2, %4 : vector<32x512xf32>
    %cst_5 = arith.constant 0.000000e+00 : f32
    %6 = vector.broadcast %cst_5 : f32 to vector<1x128xf32>
    %cst_6 = arith.constant 0.000000e+00 : f32
    %7 = vector.broadcast %cst_6 : f32 to vector<1x128xf32>
    %8 = vector.extract_strided_slice %5 {offsets = [0, 0], sizes = [32, 128], strides = [1, 1]} : vector<32x512xf32> to vector<32x128xf32>
    %cst_7 = arith.constant dense<0.000000e+00> : vector<128xf32>
    %9 = vector.multi_reduction <add>, %8, %cst_7 [0] : vector<32x128xf32> to vector<128xf32>
    %10 = vector.shape_cast %9 : vector<128xf32> to vector<1x128xf32>
    %11 = arith.addf %6, %10 : vector<1x128xf32>
    %12 = arith.mulf %8, %8 : vector<32x128xf32>
    %cst_8 = arith.constant dense<0.000000e+00> : vector<128xf32>
    %13 = vector.multi_reduction <add>, %12, %cst_8 [0] : vector<32x128xf32> to vector<128xf32>
    %14 = vector.shape_cast %13 : vector<128xf32> to vector<1x128xf32>
    %15 = arith.addf %7, %14 : vector<1x128xf32>
    %16 = vector.extract_strided_slice %5 {offsets = [0, 128], sizes = [32, 128], strides = [1, 1]} : vector<32x512xf32> to vector<32x128xf32>
    %cst_9 = arith.constant dense<0.000000e+00> : vector<128xf32>
    %17 = vector.multi_reduction <add>, %16, %cst_9 [0] : vector<32x128xf32> to vector<128xf32>
    %18 = vector.shape_cast %17 : vector<128xf32> to vector<1x128xf32>
    %19 = arith.addf %11, %18 : vector<1x128xf32>
    %20 = arith.mulf %16, %16 : vector<32x128xf32>
    %cst_10 = arith.constant dense<0.000000e+00> : vector<128xf32>
    %21 = vector.multi_reduction <add>, %20, %cst_10 [0] : vector<32x128xf32> to vector<128xf32>
    %22 = vector.shape_cast %21 : vector<128xf32> to vector<1x128xf32>
    %23 = arith.addf %15, %22 : vector<1x128xf32>
    %24 = vector.extract_strided_slice %5 {offsets = [0, 256], sizes = [32, 128], strides = [1, 1]} : vector<32x512xf32> to vector<32x128xf32>
    %cst_11 = arith.constant dense<0.000000e+00> : vector<128xf32>
    %25 = vector.multi_reduction <add>, %24, %cst_11 [0] : vector<32x128xf32> to vector<128xf32>
    %26 = vector.shape_cast %25 : vector<128xf32> to vector<1x128xf32>
    %27 = arith.addf %19, %26 : vector<1x128xf32>
    %28 = arith.mulf %24, %24 : vector<32x128xf32>
    %cst_12 = arith.constant dense<0.000000e+00> : vector<128xf32>
    %29 = vector.multi_reduction <add>, %28, %cst_12 [0] : vector<32x128xf32> to vector<128xf32>
    %30 = vector.shape_cast %29 : vector<128xf32> to vector<1x128xf32>
    %31 = arith.addf %23, %30 : vector<1x128xf32>
    %32 = vector.extract_strided_slice %5 {offsets = [0, 384], sizes = [32, 128], strides = [1, 1]} : vector<32x512xf32> to vector<32x128xf32>
    %cst_13 = arith.constant dense<0.000000e+00> : vector<128xf32>
    %33 = vector.multi_reduction <add>, %32, %cst_13 [0] : vector<32x128xf32> to vector<128xf32>
    %34 = vector.shape_cast %33 : vector<128xf32> to vector<1x128xf32>
    %35 = arith.addf %27, %34 : vector<1x128xf32>
    %36 = arith.mulf %32, %32 : vector<32x128xf32>
    %cst_14 = arith.constant dense<0.000000e+00> : vector<128xf32>
    %37 = vector.multi_reduction <add>, %36, %cst_14 [0] : vector<32x128xf32> to vector<128xf32>
    %38 = vector.shape_cast %37 : vector<128xf32> to vector<1x128xf32>
    %39 = arith.addf %31, %38 : vector<1x128xf32>
    %cst_15 = arith.constant 1.280000e+02 : f32
    %40 = vector.broadcast %cst_15 : f32 to vector<1x128xf32>
    %41 = arith.divf %35, %40 : vector<1x128xf32>
    %cst_16 = arith.constant 1.280000e+02 : f32
    %42 = vector.broadcast %cst_16 : f32 to vector<1x128xf32>
    %43 = arith.divf %39, %42 : vector<1x128xf32>
    %44 = arith.mulf %41, %41 : vector<1x128xf32>
    %45 = arith.subf %43, %44 : vector<1x128xf32>
    %cst_17 = arith.constant 9.99999974E-6 : f32
    %46 = vector.broadcast %cst_17 : f32 to vector<1x128xf32>
    %47 = arith.addf %45, %46 : vector<1x128xf32>
    %48 = math.rsqrt %47 : vector<1x128xf32>
    %c0_18 = arith.constant 0 : index
    %c0_19 = arith.constant 0 : index
    %49 = vector.load %arg4[%c0_18, %c0_19] : memref<1x128xf32, #tpu.memory_space<vmem>>, vector<1x128xf32>
    %50 = arith.mulf %48, %49 : vector<1x128xf32>
    %c0_20 = arith.constant 0 : index
    %c0_21 = arith.constant 0 : index
    %51 = vector.load %arg5[%c0_20, %c0_21] : memref<1x128xf32, #tpu.memory_space<vmem>>, vector<1x128xf32>
    %52 = arith.mulf %41, %50 : vector<1x128xf32>
    %53 = arith.subf %51, %52 : vector<1x128xf32>
    %54 = vector.extract_strided_slice %5 {offsets = [0, 0], sizes = [32, 128], strides = [1, 1]} : vector<32x512xf32> to vector<32x128xf32>
    %55 = vector.broadcast %50 : vector<1x128xf32> to vector<32x128xf32>
    %56 = arith.mulf %54, %55 : vector<32x128xf32>
    %57 = vector.broadcast %53 : vector<1x128xf32> to vector<32x128xf32>
    %58 = arith.addf %56, %57 : vector<32x128xf32>
    %cst_22 = arith.constant 0.000000e+00 : f32
    %59 = vector.broadcast %cst_22 : f32 to vector<32x128xf32>
    %60 = arith.maximumf %58, %59 : vector<32x128xf32>
    %c0_23 = arith.constant 0 : index
    %c0_24 = arith.constant 0 : index
    %61 = vector.load %arg6[%c0_23, %c0_24] : memref<32x512xf32, #tpu.memory_space<vmem>>, vector<32x128xf32>
    tpu.vector_store %arg6[%c0_23, %c0_24], %60 {strides = array<i32>} : memref<32x512xf32, #tpu.memory_space<vmem>>, vector<32x128xf32>,
    %62 = vector.extract_strided_slice %5 {offsets = [0, 128], sizes = [32, 128], strides = [1, 1]} : vector<32x512xf32> to vector<32x128xf32>
    %63 = vector.broadcast %50 : vector<1x128xf32> to vector<32x128xf32>
    %64 = arith.mulf %62, %63 : vector<32x128xf32>
    %65 = vector.broadcast %53 : vector<1x128xf32> to vector<32x128xf32>
    %66 = arith.addf %64, %65 : vector<32x128xf32>
    %cst_25 = arith.constant 0.000000e+00 : f32
    %67 = vector.broadcast %cst_25 : f32 to vector<32x128xf32>
    %68 = arith.maximumf %66, %67 : vector<32x128xf32>
    %c0_26 = arith.constant 0 : index
    %c128 = arith.constant 128 : index
    %69 = vector.load %arg6[%c0_26, %c128] : memref<32x512xf32, #tpu.memory_space<vmem>>, vector<32x128xf32>
    tpu.vector_store %arg6[%c0_26, %c128], %68 {strides = array<i32>} : memref<32x512xf32, #tpu.memory_space<vmem>>, vector<32x128xf32>,
    %70 = vector.extract_strided_slice %5 {offsets = [0, 256], sizes = [32, 128], strides = [1, 1]} : vector<32x512xf32> to vector<32x128xf32>
    %71 = vector.broadcast %50 : vector<1x128xf32> to vector<32x128xf32>
    %72 = arith.mulf %70, %71 : vector<32x128xf32>
    %73 = vector.broadcast %53 : vector<1x128xf32> to vector<32x128xf32>
    %74 = arith.addf %72, %73 : vector<32x128xf32>
    %cst_27 = arith.constant 0.000000e+00 : f32
    %75 = vector.broadcast %cst_27 : f32 to vector<32x128xf32>
    %76 = arith.maximumf %74, %75 : vector<32x128xf32>
    %c0_28 = arith.constant 0 : index
    %c256 = arith.constant 256 : index
    %77 = vector.load %arg6[%c0_28, %c256] : memref<32x512xf32, #tpu.memory_space<vmem>>, vector<32x128xf32>
    tpu.vector_store %arg6[%c0_28, %c256], %76 {strides = array<i32>} : memref<32x512xf32, #tpu.memory_space<vmem>>, vector<32x128xf32>,
    %78 = vector.extract_strided_slice %5 {offsets = [0, 384], sizes = [32, 128], strides = [1, 1]} : vector<32x512xf32> to vector<32x128xf32>
    %79 = vector.broadcast %50 : vector<1x128xf32> to vector<32x128xf32>
    %80 = arith.mulf %78, %79 : vector<32x128xf32>
    %81 = vector.broadcast %53 : vector<1x128xf32> to vector<32x128xf32>
    %82 = arith.addf %80, %81 : vector<32x128xf32>
    %cst_29 = arith.constant 0.000000e+00 : f32
    %83 = vector.broadcast %cst_29 : f32 to vector<32x128xf32>
    %84 = arith.maximumf %82, %83 : vector<32x128xf32>
    %c0_30 = arith.constant 0 : index
    %c384 = arith.constant 384 : index
    %85 = vector.load %arg6[%c0_30, %c384] : memref<32x512xf32, #tpu.memory_space<vmem>>, vector<32x128xf32>
    tpu.vector_store %arg6[%c0_30, %c384], %84 {strides = array<i32>} : memref<32x512xf32, #tpu.memory_space<vmem>>, vector<32x128xf32>,
    return
  }
  func.func @transform_0(%arg0: i32) -> (i32, i32) {
    %c0_i32 = arith.constant 0 : i32
    %c0_i32_0 = arith.constant 0 : i32
    %c0_i32_1 = arith.constant 0 : i32
    return %c0_i32, %c0_i32_0 : i32, i32
  }
  func.func @transform_1(%arg0: i32) -> (i32, i32) {
    %c0_i32 = arith.constant 0 : i32
    %c0_i32_0 = arith.constant 0 : i32
    %c0_i32_1 = arith.constant 0 : i32
    return %c0_i32, %c0_i32_0 : i32, i32
  }
  func.func @transform_2(%arg0: i32) -> (i32, i32) {
    %c0_i32 = arith.constant 0 : i32
    %c0_i32_0 = arith.constant 0 : i32
    %c0_i32_1 = arith.constant 0 : i32
    return %c0_i32, %c0_i32_0 : i32, i32
  }
  func.func @transform_3(%arg0: i32) -> (i32, i32) {
    %c0_i32 = arith.constant 0 : i32
    %c0_i32_0 = arith.constant 0 : i32
    %c0_i32_1 = arith.constant 0 : i32
    return %c0_i32, %c0_i32_0 : i32, i32
  }
  func.func @transform_4(%arg0: i32) -> (i32, i32) {
    %c0_i32 = arith.constant 0 : i32
    %c0_i32_0 = arith.constant 0 : i32
    %c0_i32_1 = arith.constant 0 : i32
    return %c0_i32, %c0_i32_0 : i32, i32
  }
  func.func @transform_5(%arg0: i32) -> (i32, i32) {
    %c0_i32 = arith.constant 0 : i32
    %c0_i32_0 = arith.constant 0 : i32
    %c0_i32_1 = arith.constant 0 : i32
    return %c0_i32, %c0_i32_0 : i32, i32
  }
}

module attributes {stable_mosaic.version = 11 : i64} {
  func.func @kernel(%arg0: i32, %arg1: memref<128x1152xf32, #tpu.memory_space<vmem>>, %arg2: memref<1152x512xf32, #tpu.memory_space<vmem>>, %arg3: memref<1x512xf32, #tpu.memory_space<vmem>>, %arg4: memref<128x512xf32, #tpu.memory_space<vmem>>) attributes {dimension_semantics = [#tpu.dimension_semantics<arbitrary>], iteration_bounds = array<i64: 1>, scalar_prefetch = 0 : i64, scratch_operands = 0 : i64, tpu.core_type = #tpu.core_type<tc>, window_params = [{pipeline_mode = #tpu.pipeline_mode<synchronous>, transform_indices = @transform_0, window_bounds = array<i64: 128, 1152>}, {pipeline_mode = #tpu.pipeline_mode<synchronous>, transform_indices = @transform_1, window_bounds = array<i64: 1152, 512>}, {pipeline_mode = #tpu.pipeline_mode<synchronous>, transform_indices = @transform_2, window_bounds = array<i64: 1, 512>}, {pipeline_mode = #tpu.pipeline_mode<synchronous>, transform_indices = @transform_3, window_bounds = array<i64: 128, 512>}]} {
    %c0 = arith.constant 0 : index
    %c0_0 = arith.constant 0 : index
    %0 = vector.load %arg1[%c0, %c0_0] : memref<128x1152xf32, #tpu.memory_space<vmem>>, vector<128x1152xf32>
    %c0_1 = arith.constant 0 : index
    %c0_2 = arith.constant 0 : index
    %1 = vector.load %arg2[%c0_1, %c0_2] : memref<1152x512xf32, #tpu.memory_space<vmem>>, vector<1152x512xf32>
    %cst = arith.constant dense<0.000000e+00> : vector<128x512xf32>
    %2 = tpu.matmul %0, %1, %cst {dimension_numbers = #tpu.dot_dimension_numbers<[1], [0], [0], [1], [0, 0, 1, 1], [], []>} : vector<128x1152xf32>, vector<1152x512xf32>, vector<128x512xf32> -> vector<128x512xf32>
    %c0_3 = arith.constant 0 : index
    %c0_4 = arith.constant 0 : index
    %3 = vector.load %arg3[%c0_3, %c0_4] : memref<1x512xf32, #tpu.memory_space<vmem>>, vector<1x512xf32>
    %4 = vector.broadcast %3 : vector<1x512xf32> to vector<128x512xf32>
    %5 = arith.addf %2, %4 : vector<128x512xf32>
    %6 = vector.extract_strided_slice %5 {offsets = [0, 0], sizes = [128, 128], strides = [1, 1]} : vector<128x512xf32> to vector<128x128xf32>
    %7 = math.tanh %6 : vector<128x128xf32>
    %c0_5 = arith.constant 0 : index
    %c0_6 = arith.constant 0 : index
    %8 = vector.load %arg4[%c0_5, %c0_6] : memref<128x512xf32, #tpu.memory_space<vmem>>, vector<128x128xf32>
    tpu.vector_store %arg4[%c0_5, %c0_6], %7 {strides = array<i32>} : memref<128x512xf32, #tpu.memory_space<vmem>>, vector<128x128xf32>,
    %9 = vector.extract_strided_slice %5 {offsets = [0, 128], sizes = [128, 128], strides = [1, 1]} : vector<128x512xf32> to vector<128x128xf32>
    %10 = math.tanh %9 : vector<128x128xf32>
    %c0_7 = arith.constant 0 : index
    %c128 = arith.constant 128 : index
    %11 = vector.load %arg4[%c0_7, %c128] : memref<128x512xf32, #tpu.memory_space<vmem>>, vector<128x128xf32>
    tpu.vector_store %arg4[%c0_7, %c128], %10 {strides = array<i32>} : memref<128x512xf32, #tpu.memory_space<vmem>>, vector<128x128xf32>,
    %12 = vector.extract_strided_slice %5 {offsets = [0, 256], sizes = [128, 128], strides = [1, 1]} : vector<128x512xf32> to vector<128x128xf32>
    %13 = math.tanh %12 : vector<128x128xf32>
    %c0_8 = arith.constant 0 : index
    %c256 = arith.constant 256 : index
    %14 = vector.load %arg4[%c0_8, %c256] : memref<128x512xf32, #tpu.memory_space<vmem>>, vector<128x128xf32>
    tpu.vector_store %arg4[%c0_8, %c256], %13 {strides = array<i32>} : memref<128x512xf32, #tpu.memory_space<vmem>>, vector<128x128xf32>,
    %15 = vector.extract_strided_slice %5 {offsets = [0, 384], sizes = [128, 128], strides = [1, 1]} : vector<128x512xf32> to vector<128x128xf32>
    %16 = math.tanh %15 : vector<128x128xf32>
    %c0_9 = arith.constant 0 : index
    %c384 = arith.constant 384 : index
    %17 = vector.load %arg4[%c0_9, %c384] : memref<128x512xf32, #tpu.memory_space<vmem>>, vector<128x128xf32>
    tpu.vector_store %arg4[%c0_9, %c384], %16 {strides = array<i32>} : memref<128x512xf32, #tpu.memory_space<vmem>>, vector<128x128xf32>,
    return
  }
  func.func @transform_0(%arg0: i32) -> (i32, i32) {
    %c0_i32 = arith.constant 0 : i32
    %c0_i32_0 = arith.constant 0 : i32
    %c0_i32_1 = arith.constant 0 : i32
    return %c0_i32, %c0_i32_0 : i32, i32
  }
  func.func @transform_1(%arg0: i32) -> (i32, i32) {
    %c0_i32 = arith.constant 0 : i32
    %c0_i32_0 = arith.constant 0 : i32
    %c0_i32_1 = arith.constant 0 : i32
    return %c0_i32, %c0_i32_0 : i32, i32
  }
  func.func @transform_2(%arg0: i32) -> (i32, i32) {
    %c0_i32 = arith.constant 0 : i32
    %c0_i32_0 = arith.constant 0 : i32
    %c0_i32_1 = arith.constant 0 : i32
    return %c0_i32, %c0_i32_0 : i32, i32
  }
  func.func @transform_3(%arg0: i32) -> (i32, i32) {
    %c0_i32 = arith.constant 0 : i32
    %c0_i32_0 = arith.constant 0 : i32
    %c0_i32_1 = arith.constant 0 : i32
    return %c0_i32, %c0_i32_0 : i32, i32
  }
}

</mosaic_0001>

<llo_original>
// kernel: vqvae_forward.11
$region0: #{vqvae_forward.11}
  #allocation0 [shape = 'u32[]', space=smem, size = 0x4, offset = 0x4, fixed_abs, tag = 'smem constant byte address 0x4 - core index']
  #allocation1 [shape = 'u32[144,128]{1,0:T(1,128)}', space=vmem, size = 0x12000, scoped, tag = 'internal scratch']
  %s0 = inlined_call_operand.vmem [shape: f32[128,2048], index: 0, kind: input, shape index: {}]
  %s1 = inlined_call_operand.vmem [shape: f32[2048,128], index: 1, kind: input, shape index: {}]
  %s2 = inlined_call_operand.vmem [shape: f32[1,128], index: 2, kind: input, shape index: {}]
  %s3 = inlined_call_operand.vmem [shape: f32[1,128], index: 3, kind: input, shape index: {}]
  %s4 = inlined_call_operand.vmem [shape: f32[1,128], index: 4, kind: input, shape index: {}]
  %s5 = inlined_call_operand.vmem [shape: f32[128,128], index: 5, kind: output, shape index: {}]
  %s6 = sld [smem:[#allocation0]]
  $region30: #{vqvae_forward.11} parent=0
    _
  %s8 = ssub.s32 1, %s6
  %s9 = scalar_select 0, %s8, %s6
  // Predicated region
  $region2: #{vqvae_forward.11} parent=0 // pred_check
    _
  $region3: #{vqvae_forward.11} parent=0 // pred_check_branch
    %11 = sbr.rel (0) target = $region5
  $region4: #{vqvae_forward.11} parent=0 // pred_region
    _
  $region5: #{vqvae_forward.11} parent=0 // pred_fallthru
    _
  // Predicated region
  $region6: #{vqvae_forward.11} parent=0 // pred_check
    _
  $region7: #{vqvae_forward.11} parent=0 // pred_check_branch
    %13 = sbr.rel (0) target = $region9
  $region8: #{vqvae_forward.11} parent=0 // pred_region
    _
  $region9: #{vqvae_forward.11} parent=0 // pred_fallthru
    _
  // Predicated region
  $region10: #{vqvae_forward.11} parent=0 // pred_check
    _
  $region11: #{vqvae_forward.11} parent=0 // pred_check_branch
    %15 = sbr.rel (0) target = $region13
  $region12: #{vqvae_forward.11} parent=0 // pred_region
    _
  $region13: #{vqvae_forward.11} parent=0 // pred_fallthru
    _
  // Predicated region
  $region14: #{vqvae_forward.11} parent=0 // pred_check
    _
  $region15: #{vqvae_forward.11} parent=0 // pred_check_branch
    %17 = sbr.rel (0) target = $region17
  $region16: #{vqvae_forward.11} parent=0 // pred_region
    _
  $region17: #{vqvae_forward.11} parent=0 // pred_fallthru
    _
  // Predicated region
  $region18: #{vqvae_forward.11} parent=0 // pred_check
    _
  $region19: #{vqvae_forward.11} parent=0 // pred_check_branch
    %19 = sbr.rel (0) target = $region21
  $region20: #{vqvae_forward.11} parent=0 // pred_region
    _
  $region21: #{vqvae_forward.11} parent=0 // pred_fallthru
    _
  %v20 = vld [vmem:[%s0] sm:$0xff]
  %v21 = vld [vmem:[%s0 + $0x8] sm:$0xff]
  %v22 = vld [vmem:[%s0 + $0x10] sm:$0xff]
  %v23 = vld [vmem:[%s0 + $0x18] sm:$0xff]
  %v24 = vld [vmem:[%s0 + $0x20] sm:$0xff]
  %v25 = vld [vmem:[%s0 + $0x28] sm:$0xff]
  %v26 = vld [vmem:[%s0 + $0x30] sm:$0xff]
  %v27 = vld [vmem:[%s0 + $0x38] sm:$0xff]
  %v28 = vld [vmem:[%s0 + $0x40] sm:$0xff]
  %v29 = vld [vmem:[%s0 + $0x48] sm:$0xff]
  %v30 = vld [vmem:[%s0 + $0x50] sm:$0xff]
  %v31 = vld [vmem:[%s0 + $0x58] sm:$0xff]
  %v32 = vld [vmem:[%s0 + $0x60] sm:$0xff]
  %v33 = vld [vmem:[%s0 + $0x68] sm:$0xff]
  %v34 = vld [vmem:[%s0 + $0x70] sm:$0xff]
  %v35 = vld [vmem:[%s0 + $0x78] sm:$0xff]
  %v36 = vld [vmem:[%s0 + $0x80] sm:$0xff]
  %v37 = vld [vmem:[%s0 + $0x88] sm:$0xff]
  %v38 = vld [vmem:[%s0 + $0x90] sm:$0xff]
  %v39 = vld [vmem:[%s0 + $0x98] sm:$0xff]
  %v40 = vld [vmem:[%s0 + $0xa0] sm:$0xff]
  %v41 = vld [vmem:[%s0 + $0xa8] sm:$0xff]
  %v42 = vld [vmem:[%s0 + $0xb0] sm:$0xff]
  %v43 = vld [vmem:[%s0 + $0xb8] sm:$0xff]
  %v44 = vld [vmem:[%s0 + $0xc0] sm:$0xff]
  %v45 = vld [vmem:[%s0 + $0xc8] sm:$0xff]
  %v46 = vld [vmem:[%s0 + $0xd0] sm:$0xff]
  %v47 = vld [vmem:[%s0 + $0xd8] sm:$0xff]
  %v48 = vld [vmem:[%s0 + $0xe0] sm:$0xff]
  %v49 = vld [vmem:[%s0 + $0xe8] sm:$0xff]
  %v50 = vld [vmem:[%s0 + $0xf0] sm:$0xff]
  %v51 = vld [vmem:[%s0 + $0xf8] sm:$0xff]
  %v52 = vld [vmem:[%s0 + $0x100] sm:$0xff]
  %v53 = vld [vmem:[%s0 + $0x108] sm:$0xff]
  %v54 = vld [vmem:[%s0 + $0x110] sm:$0xff]
  %v55 = vld [vmem:[%s0 + $0x118] sm:$0xff]
  %v56 = vld [vmem:[%s0 + $0x120] sm:$0xff]
  %v57 = vld [vmem:[%s0 + $0x128] sm:$0xff]
  %v58 = vld [vmem:[%s0 + $0x130] sm:$0xff]
  %v59 = vld [vmem:[%s0 + $0x138] sm:$0xff]
  %v60 = vld [vmem:[%s0 + $0x140] sm:$0xff]
  %v61 = vld [vmem:[%s0 + $0x148] sm:$0xff]
  %v62 = vld [vmem:[%s0 + $0x150] sm:$0xff]
  %v63 = vld [vmem:[%s0 + $0x158] sm:$0xff]
  %v64 = vld [vmem:[%s0 + $0x160] sm:$0xff]
  %v65 = vld [vmem:[%s0 + $0x168] sm:$0xff]
  %v66 = vld [vmem:[%s0 + $0x170] sm:$0xff]
  %v67 = vld [vmem:[%s0 + $0x178] sm:$0xff]
  %v68 = vld [vmem:[%s0 + $0x180] sm:$0xff]
  %v69 = vld [vmem:[%s0 + $0x188] sm:$0xff]
  %v70 = vld [vmem:[%s0 + $0x190] sm:$0xff]
  %v71 = vld [vmem:[%s0 + $0x198] sm:$0xff]
  %v72 = vld [vmem:[%s0 + $0x1a0] sm:$0xff]
  %v73 = vld [vmem:[%s0 + $0x1a8] sm:$0xff]
  %v74 = vld [vmem:[%s0 + $0x1b0] sm:$0xff]
  %v75 = vld [vmem:[%s0 + $0x1b8] sm:$0xff]
  %v76 = vld [vmem:[%s0 + $0x1c0] sm:$0xff]
  %v77 = vld [vmem:[%s0 + $0x1c8] sm:$0xff]
  %v78 = vld [vmem:[%s0 + $0x1d0] sm:$0xff]
  %v79 = vld [vmem:[%s0 + $0x1d8] sm:$0xff]
  %v80 = vld [vmem:[%s0 + $0x1e0] sm:$0xff]
  %v81 = vld [vmem:[%s0 + $0x1e8] sm:$0xff]
  %v82 = vld [vmem:[%s0 + $0x1f0] sm:$0xff]
  %v83 = vld [vmem:[%s0 + $0x1f8] sm:$0xff]
  %v84 = vld [vmem:[%s0 + $0x200] sm:$0xff]
  %v85 = vld [vmem:[%s0 + $0x208] sm:$0xff]
  %v86 = vld [vmem:[%s0 + $0x210] sm:$0xff]
  %v87 = vld [vmem:[%s0 + $0x218] sm:$0xff]
  %v88 = vld [vmem:[%s0 + $0x220] sm:$0xff]
  %v89 = vld [vmem:[%s0 + $0x228] sm:$0xff]
  %v90 = vld [vmem:[%s0 + $0x230] sm:$0xff]
  %v91 = vld [vmem:[%s0 + $0x238] sm:$0xff]
  %v92 = vld [vmem:[%s0 + $0x240] sm:$0xff]
  %v93 = vld [vmem:[%s0 + $0x248] sm:$0xff]
  %v94 = vld [vmem:[%s0 + $0x250] sm:$0xff]
  %v95 = vld [vmem:[%s0 + $0x258] sm:$0xff]
  %v96 = vld [vmem:[%s0 + $0x260] sm:$0xff]
  %v97 = vld [vmem:[%s0 + $0x268] sm:$0xff]
  %v98 = vld [vmem:[%s0 + $0x270] sm:$0xff]
  %v99 = vld [vmem:[%s0 + $0x278] sm:$0xff]
  %v100 = vld [vmem:[%s0 + $0x280] sm:$0xff]
  %v101 = vld [vmem:[%s0 + $0x288] sm:$0xff]
  %v102 = vld [vmem:[%s0 + $0x290] sm:$0xff]
  %v103 = vld [vmem:[%s0 + $0x298] sm:$0xff]
  %v104 = vld [vmem:[%s0 + $0x2a0] sm:$0xff]
  %v105 = vld [vmem:[%s0 + $0x2a8] sm:$0xff]
  %v106 = vld [vmem:[%s0 + $0x2b0] sm:$0xff]
  %v107 = vld [vmem:[%s0 + $0x2b8] sm:$0xff]
  %v108 = vld [vmem:[%s0 + $0x2c0] sm:$0xff]
  %v109 = vld [vmem:[%s0 + $0x2c8] sm:$0xff]
  %v110 = vld [vmem:[%s0 + $0x2d0] sm:$0xff]
  %v111 = vld [vmem:[%s0 + $0x2d8] sm:$0xff]
  %v112 = vld [vmem:[%s0 + $0x2e0] sm:$0xff]
  %v113 = vld [vmem:[%s0 + $0x2e8] sm:$0xff]
  %v114 = vld [vmem:[%s0 + $0x2f0] sm:$0xff]
  %v115 = vld [vmem:[%s0 + $0x2f8] sm:$0xff]
  %v116 = vld [vmem:[%s0 + $0x300] sm:$0xff]
  %v117 = vld [vmem:[%s0 + $0x308] sm:$0xff]
  %v118 = vld [vmem:[%s0 + $0x310] sm:$0xff]
  %v119 = vld [vmem:[%s0 + $0x318] sm:$0xff]
  %v120 = vld [vmem:[%s0 + $0x320] sm:$0xff]
  %v121 = vld [vmem:[%s0 + $0x328] sm:$0xff]
  %v122 = vld [vmem:[%s0 + $0x330] sm:$0xff]
  %v123 = vld [vmem:[%s0 + $0x338] sm:$0xff]
  %v124 = vld [vmem:[%s0 + $0x340] sm:$0xff]
  %v125 = vld [vmem:[%s0 + $0x348] sm:$0xff]
  %v126 = vld [vmem:[%s0 + $0x350] sm:$0xff]
  %v127 = vld [vmem:[%s0 + $0x358] sm:$0xff]
  %v128 = vld [vmem:[%s0 + $0x360] sm:$0xff]
  %v129 = vld [vmem:[%s0 + $0x368] sm:$0xff]
  %v130 = vld [vmem:[%s0 + $0x370] sm:$0xff]
  %v131 = vld [vmem:[%s0 + $0x378] sm:$0xff]
  %v132 = vld [vmem:[%s0 + $0x380] sm:$0xff]
  %v133 = vld [vmem:[%s0 + $0x388] sm:$0xff]
  %v134 = vld [vmem:[%s0 + $0x390] sm:$0xff]
  %v135 = vld [vmem:[%s0 + $0x398] sm:$0xff]
  %v136 = vld [vmem:[%s0 + $0x3a0] sm:$0xff]
  %v137 = vld [vmem:[%s0 + $0x3a8] sm:$0xff]
  %v138 = vld [vmem:[%s0 + $0x3b0] sm:$0xff]
  %v139 = vld [vmem:[%s0 + $0x3b8] sm:$0xff]
  %v140 = vld [vmem:[%s0 + $0x3c0] sm:$0xff]
  %v141 = vld [vmem:[%s0 + $0x3c8] sm:$0xff]
  %v142 = vld [vmem:[%s0 + $0x3d0] sm:$0xff]
  %v143 = vld [vmem:[%s0 + $0x3d8] sm:$0xff]
  %v144 = vld [vmem:[%s0 + $0x3e0] sm:$0xff]
  %v145 = vld [vmem:[%s0 + $0x3e8] sm:$0xff]
  %v146 = vld [vmem:[%s0 + $0x3f0] sm:$0xff]
  %v147 = vld [vmem:[%s0 + $0x3f8] sm:$0xff]
  %v148 = vld [vmem:[%s0 + $0x400] sm:$0xff]
  %v149 = vld [vmem:[%s0 + $0x408] sm:$0xff]
  %v150 = vld [vmem:[%s0 + $0x410] sm:$0xff]
  %v151 = vld [vmem:[%s0 + $0x418] sm:$0xff]
  %v152 = vld [vmem:[%s0 + $0x420] sm:$0xff]
  %v153 = vld [vmem:[%s0 + $0x428] sm:$0xff]
  %v154 = vld [vmem:[%s0 + $0x430] sm:$0xff]
  %v155 = vld [vmem:[%s0 + $0x438] sm:$0xff]
  %v156 = vld [vmem:[%s0 + $0x440] sm:$0xff]
  %v157 = vld [vmem:[%s0 + $0x448] sm:$0xff]
  %v158 = vld [vmem:[%s0 + $0x450] sm:$0xff]
  %v159 = vld [vmem:[%s0 + $0x458] sm:$0xff]
  %v160 = vld [vmem:[%s0 + $0x460] sm:$0xff]
  %v161 = vld [vmem:[%s0 + $0x468] sm:$0xff]
  %v162 = vld [vmem:[%s0 + $0x470] sm:$0xff]
  %v163 = vld [vmem:[%s0 + $0x478] sm:$0xff]
  %v164 = vld [vmem:[%s0 + $0x480] sm:$0xff]
  %v165 = vld [vmem:[%s0 + $0x488] sm:$0xff]
  %v166 = vld [vmem:[%s0 + $0x490] sm:$0xff]
  %v167 = vld [vmem:[%s0 + $0x498] sm:$0xff]
  %v168 = vld [vmem:[%s0 + $0x4a0] sm:$0xff]
  %v169 = vld [vmem:[%s0 + $0x4a8] sm:$0xff]
  %v170 = vld [vmem:[%s0 + $0x4b0] sm:$0xff]
  %v171 = vld [vmem:[%s0 + $0x4b8] sm:$0xff]
  %v172 = vld [vmem:[%s0 + $0x4c0] sm:$0xff]
  %v173 = vld [vmem:[%s0 + $0x4c8] sm:$0xff]
  %v174 = vld [vmem:[%s0 + $0x4d0] sm:$0xff]
  %v175 = vld [vmem:[%s0 + $0x4d8] sm:$0xff]
  %v176 = vld [vmem:[%s0 + $0x4e0] sm:$0xff]
  %v177 = vld [vmem:[%s0 + $0x4e8] sm:$0xff]
  %v178 = vld [vmem:[%s0 + $0x4f0] sm:$0xff]
  %v179 = vld [vmem:[%s0 + $0x4f8] sm:$0xff]
  %v180 = vld [vmem:[%s0 + $0x500] sm:$0xff]
  %v181 = vld [vmem:[%s0 + $0x508] sm:$0xff]
  %v182 = vld [vmem:[%s0 + $0x510] sm:$0xff]
  %v183 = vld [vmem:[%s0 + $0x518] sm:$0xff]
  %v184 = vld [vmem:[%s0 + $0x520] sm:$0xff]
  %v185 = vld [vmem:[%s0 + $0x528] sm:$0xff]
  %v186 = vld [vmem:[%s0 + $0x530] sm:$0xff]
  %v187 = vld [vmem:[%s0 + $0x538] sm:$0xff]
  %v188 = vld [vmem:[%s0 + $0x540] sm:$0xff]
  %v189 = vld [vmem:[%s0 + $0x548] sm:$0xff]
  %v190 = vld [vmem:[%s0 + $0x550] sm:$0xff]
  %v191 = vld [vmem:[%s0 + $0x558] sm:$0xff]
  %v192 = vld [vmem:[%s0 + $0x560] sm:$0xff]
  %v193 = vld [vmem:[%s0 + $0x568] sm:$0xff]
  %v194 = vld [vmem:[%s0 + $0x570] sm:$0xff]
  %v195 = vld [vmem:[%s0 + $0x578] sm:$0xff]
  %v196 = vld [vmem:[%s0 + $0x580] sm:$0xff]
  %v197 = vld [vmem:[%s0 + $0x588] sm:$0xff]
  %v198 = vld [vmem:[%s0 + $0x590] sm:$0xff]
  %v199 = vld [vmem:[%s0 + $0x598] sm:$0xff]
  %v200 = vld [vmem:[%s0 + $0x5a0] sm:$0xff]
  %v201 = vld [vmem:[%s0 + $0x5a8] sm:$0xff]
  %v202 = vld [vmem:[%s0 + $0x5b0] sm:$0xff]
  %v203 = vld [vmem:[%s0 + $0x5b8] sm:$0xff]
  %v204 = vld [vmem:[%s0 + $0x5c0] sm:$0xff]
  %v205 = vld [vmem:[%s0 + $0x5c8] sm:$0xff]
  %v206 = vld [vmem:[%s0 + $0x5d0] sm:$0xff]
  %v207 = vld [vmem:[%s0 + $0x5d8] sm:$0xff]
  %v208 = vld [vmem:[%s0 + $0x5e0] sm:$0xff]
  %v209 = vld [vmem:[%s0 + $0x5e8] sm:$0xff]
  %v210 = vld [vmem:[%s0 + $0x5f0] sm:$0xff]
  %v211 = vld [vmem:[%s0 + $0x5f8] sm:$0xff]
  %v212 = vld [vmem:[%s0 + $0x600] sm:$0xff]
  %v213 = vld [vmem:[%s0 + $0x608] sm:$0xff]
  %v214 = vld [vmem:[%s0 + $0x610] sm:$0xff]
  %v215 = vld [vmem:[%s0 + $0x618] sm:$0xff]
  %v216 = vld [vmem:[%s0 + $0x620] sm:$0xff]
  %v217 = vld [vmem:[%s0 + $0x628] sm:$0xff]
  %v218 = vld [vmem:[%s0 + $0x630] sm:$0xff]
  %v219 = vld [vmem:[%s0 + $0x638] sm:$0xff]
  %v220 = vld [vmem:[%s0 + $0x640] sm:$0xff]
  %v221 = vld [vmem:[%s0 + $0x648] sm:$0xff]
  %v222 = vld [vmem:[%s0 + $0x650] sm:$0xff]
  %v223 = vld [vmem:[%s0 + $0x658] sm:$0xff]
  %v224 = vld [vmem:[%s0 + $0x660] sm:$0xff]
  %v225 = vld [vmem:[%s0 + $0x668] sm:$0xff]
  %v226 = vld [vmem:[%s0 + $0x670] sm:$0xff]
  %v227 = vld [vmem:[%s0 + $0x678] sm:$0xff]
  %v228 = vld [vmem:[%s0 + $0x680] sm:$0xff]
  %v229 = vld [vmem:[%s0 + $0x688] sm:$0xff]
  %v230 = vld [vmem:[%s0 + $0x690] sm:$0xff]
  %v231 = vld [vmem:[%s0 + $0x698] sm:$0xff]
  %v232 = vld [vmem:[%s0 + $0x6a0] sm:$0xff]
  %v233 = vld [vmem:[%s0 + $0x6a8] sm:$0xff]
  %v234 = vld [vmem:[%s0 + $0x6b0] sm:$0xff]
  %v235 = vld [vmem:[%s0 + $0x6b8] sm:$0xff]
  %v236 = vld [vmem:[%s0 + $0x6c0] sm:$0xff]
  %v237 = vld [vmem:[%s0 + $0x6c8] sm:$0xff]
  %v238 = vld [vmem:[%s0 + $0x6d0] sm:$0xff]
  %v239 = vld [vmem:[%s0 + $0x6d8] sm:$0xff]
  %v240 = vld [vmem:[%s0 + $0x6e0] sm:$0xff]
  %v241 = vld [vmem:[%s0 + $0x6e8] sm:$0xff]
  %v242 = vld [vmem:[%s0 + $0x6f0] sm:$0xff]
  %v243 = vld [vmem:[%s0 + $0x6f8] sm:$0xff]
  %v244 = vld [vmem:[%s0 + $0x700] sm:$0xff]
  %v245 = vld [vmem:[%s0 + $0x708] sm:$0xff]
  %v246 = vld [vmem:[%s0 + $0x710] sm:$0xff]
  %v247 = vld [vmem:[%s0 + $0x718] sm:$0xff]
  %v248 = vld [vmem:[%s0 + $0x720] sm:$0xff]
  %v249 = vld [vmem:[%s0 + $0x728] sm:$0xff]
  %v250 = vld [vmem:[%s0 + $0x730] sm:$0xff]
  %v251 = vld [vmem:[%s0 + $0x738] sm:$0xff]
  %v252 = vld [vmem:[%s0 + $0x740] sm:$0xff]
  %v253 = vld [vmem:[%s0 + $0x748] sm:$0xff]
  %v254 = vld [vmem:[%s0 + $0x750] sm:$0xff]
  %v255 = vld [vmem:[%s0 + $0x758] sm:$0xff]
  %v256 = vld [vmem:[%s0 + $0x760] sm:$0xff]
  %v257 = vld [vmem:[%s0 + $0x768] sm:$0xff]
  %v258 = vld [vmem:[%s0 + $0x770] sm:$0xff]
  %v259 = vld [vmem:[%s0 + $0x778] sm:$0xff]
  %v260 = vld [vmem:[%s0 + $0x780] sm:$0xff]
  %v261 = vld [vmem:[%s0 + $0x788] sm:$0xff]
  %v262 = vld [vmem:[%s0 + $0x790] sm:$0xff]
  %v263 = vld [vmem:[%s0 + $0x798] sm:$0xff]
  %v264 = vld [vmem:[%s0 + $0x7a0] sm:$0xff]
  %v265 = vld [vmem:[%s0 + $0x7a8] sm:$0xff]
  %v266 = vld [vmem:[%s0 + $0x7b0] sm:$0xff]
  %v267 = vld [vmem:[%s0 + $0x7b8] sm:$0xff]
  %v268 = vld [vmem:[%s0 + $0x7c0] sm:$0xff]
  %v269 = vld [vmem:[%s0 + $0x7c8] sm:$0xff]
  %v270 = vld [vmem:[%s0 + $0x7d0] sm:$0xff]
  %v271 = vld [vmem:[%s0 + $0x7d8] sm:$0xff]
  %v272 = vld [vmem:[%s0 + $0x7e0] sm:$0xff]
  %v273 = vld [vmem:[%s0 + $0x7e8] sm:$0xff]
  %v274 = vld [vmem:[%s0 + $0x7f0] sm:$0xff]
  %v275 = vld [vmem:[%s0 + $0x7f8] sm:$0xff]
  %v276 = vld [vmem:[%s1] sm:$0xff]
  %v277 = vld [vmem:[%s1 + $0x8] sm:$0xff]
  %v278 = vld [vmem:[%s1 + $0x10] sm:$0xff]
  %v279 = vld [vmem:[%s1 + $0x18] sm:$0xff]
  %v280 = vld [vmem:[%s1 + $0x20] sm:$0xff]
  %v281 = vld [vmem:[%s1 + $0x28] sm:$0xff]
  %v282 = vld [vmem:[%s1 + $0x30] sm:$0xff]
  %v283 = vld [vmem:[%s1 + $0x38] sm:$0xff]
  %v284 = vld [vmem:[%s1 + $0x40] sm:$0xff]
  %v285 = vld [vmem:[%s1 + $0x48] sm:$0xff]
  %v286 = vld [vmem:[%s1 + $0x50] sm:$0xff]
  %v287 = vld [vmem:[%s1 + $0x58] sm:$0xff]
  %v288 = vld [vmem:[%s1 + $0x60] sm:$0xff]
  %v289 = vld [vmem:[%s1 + $0x68] sm:$0xff]
  %v290 = vld [vmem:[%s1 + $0x70] sm:$0xff]
  %v291 = vld [vmem:[%s1 + $0x78] sm:$0xff]
  %v292 = vld [vmem:[%s1 + $0x80] sm:$0xff]
  %v293 = vld [vmem:[%s1 + $0x88] sm:$0xff]
  %v294 = vld [vmem:[%s1 + $0x90] sm:$0xff]
  %v295 = vld [vmem:[%s1 + $0x98] sm:$0xff]
  %v296 = vld [vmem:[%s1 + $0xa0] sm:$0xff]
  %v297 = vld [vmem:[%s1 + $0xa8] sm:$0xff]
  %v298 = vld [vmem:[%s1 + $0xb0] sm:$0xff]
  %v299 = vld [vmem:[%s1 + $0xb8] sm:$0xff]
  %v300 = vld [vmem:[%s1 + $0xc0] sm:$0xff]
  %v301 = vld [vmem:[%s1 + $0xc8] sm:$0xff]
  %v302 = vld [vmem:[%s1 + $0xd0] sm:$0xff]
  %v303 = vld [vmem:[%s1 + $0xd8] sm:$0xff]
  %v304 = vld [vmem:[%s1 + $0xe0] sm:$0xff]
  %v305 = vld [vmem:[%s1 + $0xe8] sm:$0xff]
  %v306 = vld [vmem:[%s1 + $0xf0] sm:$0xff]
  %v307 = vld [vmem:[%s1 + $0xf8] sm:$0xff]
  %v308 = vld [vmem:[%s1 + $0x100] sm:$0xff]
  %v309 = vld [vmem:[%s1 + $0x108] sm:$0xff]
  %v310 = vld [vmem:[%s1 + $0x110] sm:$0xff]
  %v311 = vld [vmem:[%s1 + $0x118] sm:$0xff]
  %v312 = vld [vmem:[%s1 + $0x120] sm:$0xff]
  %v313 = vld [vmem:[%s1 + $0x128] sm:$0xff]
  %v314 = vld [vmem:[%s1 + $0x130] sm:$0xff]
  %v315 = vld [vmem:[%s1 + $0x138] sm:$0xff]
  %v316 = vld [vmem:[%s1 + $0x140] sm:$0xff]
  %v317 = vld [vmem:[%s1 + $0x148] sm:$0xff]
  %v318 = vld [vmem:[%s1 + $0x150] sm:$0xff]
  %v319 = vld [vmem:[%s1 + $0x158] sm:$0xff]
  %v320 = vld [vmem:[%s1 + $0x160] sm:$0xff]
  %v321 = vld [vmem:[%s1 + $0x168] sm:$0xff]
  %v322 = vld [vmem:[%s1 + $0x170] sm:$0xff]
  %v323 = vld [vmem:[%s1 + $0x178] sm:$0xff]
  %v324 = vld [vmem:[%s1 + $0x180] sm:$0xff]
  %v325 = vld [vmem:[%s1 + $0x188] sm:$0xff]
  %v326 = vld [vmem:[%s1 + $0x190] sm:$0xff]
  %v327 = vld [vmem:[%s1 + $0x198] sm:$0xff]
  %v328 = vld [vmem:[%s1 + $0x1a0] sm:$0xff]
  %v329 = vld [vmem:[%s1 + $0x1a8] sm:$0xff]
  %v330 = vld [vmem:[%s1 + $0x1b0] sm:$0xff]
  %v331 = vld [vmem:[%s1 + $0x1b8] sm:$0xff]
  %v332 = vld [vmem:[%s1 + $0x1c0] sm:$0xff]
  %v333 = vld [vmem:[%s1 + $0x1c8] sm:$0xff]
  %v334 = vld [vmem:[%s1 + $0x1d0] sm:$0xff]
  %v335 = vld [vmem:[%s1 + $0x1d8] sm:$0xff]
  %v336 = vld [vmem:[%s1 + $0x1e0] sm:$0xff]
  %v337 = vld [vmem:[%s1 + $0x1e8] sm:$0xff]
  %v338 = vld [vmem:[%s1 + $0x1f0] sm:$0xff]
  %v339 = vld [vmem:[%s1 + $0x1f8] sm:$0xff]
  %v340 = vld [vmem:[%s1 + $0x200] sm:$0xff]
  %v341 = vld [vmem:[%s1 + $0x208] sm:$0xff]
  %v342 = vld [vmem:[%s1 + $0x210] sm:$0xff]
  %v343 = vld [vmem:[%s1 + $0x218] sm:$0xff]
  %v344 = vld [vmem:[%s1 + $0x220] sm:$0xff]
  %v345 = vld [vmem:[%s1 + $0x228] sm:$0xff]
  %v346 = vld [vmem:[%s1 + $0x230] sm:$0xff]
  %v347 = vld [vmem:[%s1 + $0x238] sm:$0xff]
  %v348 = vld [vmem:[%s1 + $0x240] sm:$0xff]
  %v349 = vld [vmem:[%s1 + $0x248] sm:$0xff]
  %v350 = vld [vmem:[%s1 + $0x250] sm:$0xff]
  %v351 = vld [vmem:[%s1 + $0x258] sm:$0xff]
  %v352 = vld [vmem:[%s1 + $0x260] sm:$0xff]
  %v353 = vld [vmem:[%s1 + $0x268] sm:$0xff]
  %v354 = vld [vmem:[%s1 + $0x270] sm:$0xff]
  %v355 = vld [vmem:[%s1 + $0x278] sm:$0xff]
  %v356 = vld [vmem:[%s1 + $0x280] sm:$0xff]
  %v357 = vld [vmem:[%s1 + $0x288] sm:$0xff]
  %v358 = vld [vmem:[%s1 + $0x290] sm:$0xff]
  %v359 = vld [vmem:[%s1 + $0x298] sm:$0xff]
  %v360 = vld [vmem:[%s1 + $0x2a0] sm:$0xff]
  %v361 = vld [vmem:[%s1 + $0x2a8] sm:$0xff]
  %v362 = vld [vmem:[%s1 + $0x2b0] sm:$0xff]
  %v363 = vld [vmem:[%s1 + $0x2b8] sm:$0xff]
  %v364 = vld [vmem:[%s1 + $0x2c0] sm:$0xff]
  %v365 = vld [vmem:[%s1 + $0x2c8] sm:$0xff]
  %v366 = vld [vmem:[%s1 + $0x2d0] sm:$0xff]
  %v367 = vld [vmem:[%s1 + $0x2d8] sm:$0xff]
  %v368 = vld [vmem:[%s1 + $0x2e0] sm:$0xff]
  %v369 = vld [vmem:[%s1 + $0x2e8] sm:$0xff]
  %v370 = vld [vmem:[%s1 + $0x2f0] sm:$0xff]
  %v371 = vld [vmem:[%s1 + $0x2f8] sm:$0xff]
  %v372 = vld [vmem:[%s1 + $0x300] sm:$0xff]
  %v373 = vld [vmem:[%s1 + $0x308] sm:$0xff]
  %v374 = vld [vmem:[%s1 + $0x310] sm:$0xff]
  %v375 = vld [vmem:[%s1 + $0x318] sm:$0xff]
  %v376 = vld [vmem:[%s1 + $0x320] sm:$0xff]
  %v377 = vld [vmem:[%s1 + $0x328] sm:$0xff]
  %v378 = vld [vmem:[%s1 + $0x330] sm:$0xff]
  %v379 = vld [vmem:[%s1 + $0x338] sm:$0xff]
  %v380 = vld [vmem:[%s1 + $0x340] sm:$0xff]
  %v381 = vld [vmem:[%s1 + $0x348] sm:$0xff]
  %v382 = vld [vmem:[%s1 + $0x350] sm:$0xff]
  %v383 = vld [vmem:[%s1 + $0x358] sm:$0xff]
  %v384 = vld [vmem:[%s1 + $0x360] sm:$0xff]
  %v385 = vld [vmem:[%s1 + $0x368] sm:$0xff]
  %v386 = vld [vmem:[%s1 + $0x370] sm:$0xff]
  %v387 = vld [vmem:[%s1 + $0x378] sm:$0xff]
  %v388 = vld [vmem:[%s1 + $0x380] sm:$0xff]
  %v389 = vld [vmem:[%s1 + $0x388] sm:$0xff]
  %v390 = vld [vmem:[%s1 + $0x390] sm:$0xff]
  %v391 = vld [vmem:[%s1 + $0x398] sm:$0xff]
  %v392 = vld [vmem:[%s1 + $0x3a0] sm:$0xff]
  %v393 = vld [vmem:[%s1 + $0x3a8] sm:$0xff]
  %v394 = vld [vmem:[%s1 + $0x3b0] sm:$0xff]
  %v395 = vld [vmem:[%s1 + $0x3b8] sm:$0xff]
  %v396 = vld [vmem:[%s1 + $0x3c0] sm:$0xff]
  %v397 = vld [vmem:[%s1 + $0x3c8] sm:$0xff]
  %v398 = vld [vmem:[%s1 + $0x3d0] sm:$0xff]
  %v399 = vld [vmem:[%s1 + $0x3d8] sm:$0xff]
  %v400 = vld [vmem:[%s1 + $0x3e0] sm:$0xff]
  %v401 = vld [vmem:[%s1 + $0x3e8] sm:$0xff]
  %v402 = vld [vmem:[%s1 + $0x3f0] sm:$0xff]
  %v403 = vld [vmem:[%s1 + $0x3f8] sm:$0xff]
  %v404 = vld [vmem:[%s1 + $0x400] sm:$0xff]
  %v405 = vld [vmem:[%s1 + $0x408] sm:$0xff]
  %v406 = vld [vmem:[%s1 + $0x410] sm:$0xff]
  %v407 = vld [vmem:[%s1 + $0x418] sm:$0xff]
  %v408 = vld [vmem:[%s1 + $0x420] sm:$0xff]
  %v409 = vld [vmem:[%s1 + $0x428] sm:$0xff]
  %v410 = vld [vmem:[%s1 + $0x430] sm:$0xff]
  %v411 = vld [vmem:[%s1 + $0x438] sm:$0xff]
  %v412 = vld [vmem:[%s1 + $0x440] sm:$0xff]
  %v413 = vld [vmem:[%s1 + $0x448] sm:$0xff]
  %v414 = vld [vmem:[%s1 + $0x450] sm:$0xff]
  %v415 = vld [vmem:[%s1 + $0x458] sm:$0xff]
  %v416 = vld [vmem:[%s1 + $0x460] sm:$0xff]
  %v417 = vld [vmem:[%s1 + $0x468] sm:$0xff]
  %v418 = vld [vmem:[%s1 + $0x470] sm:$0xff]
  %v419 = vld [vmem:[%s1 + $0x478] sm:$0xff]
  %v420 = vld [vmem:[%s1 + $0x480] sm:$0xff]
  %v421 = vld [vmem:[%s1 + $0x488] sm:$0xff]
  %v422 = vld [vmem:[%s1 + $0x490] sm:$0xff]
  %v423 = vld [vmem:[%s1 + $0x498] sm:$0xff]
  %v424 = vld [vmem:[%s1 + $0x4a0] sm:$0xff]
  %v425 = vld [vmem:[%s1 + $0x4a8] sm:$0xff]
  %v426 = vld [vmem:[%s1 + $0x4b0] sm:$0xff]
  %v427 = vld [vmem:[%s1 + $0x4b8] sm:$0xff]
  %v428 = vld [vmem:[%s1 + $0x4c0] sm:$0xff]
  %v429 = vld [vmem:[%s1 + $0x4c8] sm:$0xff]
  %v430 = vld [vmem:[%s1 + $0x4d0] sm:$0xff]
  %v431 = vld [vmem:[%s1 + $0x4d8] sm:$0xff]
  %v432 = vld [vmem:[%s1 + $0x4e0] sm:$0xff]
  %v433 = vld [vmem:[%s1 + $0x4e8] sm:$0xff]
  %v434 = vld [vmem:[%s1 + $0x4f0] sm:$0xff]
  %v435 = vld [vmem:[%s1 + $0x4f8] sm:$0xff]
  %v436 = vld [vmem:[%s1 + $0x500] sm:$0xff]
  %v437 = vld [vmem:[%s1 + $0x508] sm:$0xff]
  %v438 = vld [vmem:[%s1 + $0x510] sm:$0xff]
  %v439 = vld [vmem:[%s1 + $0x518] sm:$0xff]
  %v440 = vld [vmem:[%s1 + $0x520] sm:$0xff]
  %v441 = vld [vmem:[%s1 + $0x528] sm:$0xff]
  %v442 = vld [vmem:[%s1 + $0x530] sm:$0xff]
  %v443 = vld [vmem:[%s1 + $0x538] sm:$0xff]
  %v444 = vld [vmem:[%s1 + $0x540] sm:$0xff]
  %v445 = vld [vmem:[%s1 + $0x548] sm:$0xff]
  %v446 = vld [vmem:[%s1 + $0x550] sm:$0xff]
  %v447 = vld [vmem:[%s1 + $0x558] sm:$0xff]
  %v448 = vld [vmem:[%s1 + $0x560] sm:$0xff]
  %v449 = vld [vmem:[%s1 + $0x568] sm:$0xff]
  %v450 = vld [vmem:[%s1 + $0x570] sm:$0xff]
  %v451 = vld [vmem:[%s1 + $0x578] sm:$0xff]
  %v452 = vld [vmem:[%s1 + $0x580] sm:$0xff]
  %v453 = vld [vmem:[%s1 + $0x588] sm:$0xff]
  %v454 = vld [vmem:[%s1 + $0x590] sm:$0xff]
  %v455 = vld [vmem:[%s1 + $0x598] sm:$0xff]
  %v456 = vld [vmem:[%s1 + $0x5a0] sm:$0xff]
  %v457 = vld [vmem:[%s1 + $0x5a8] sm:$0xff]
  %v458 = vld [vmem:[%s1 + $0x5b0] sm:$0xff]
  %v459 = vld [vmem:[%s1 + $0x5b8] sm:$0xff]
  %v460 = vld [vmem:[%s1 + $0x5c0] sm:$0xff]
  %v461 = vld [vmem:[%s1 + $0x5c8] sm:$0xff]
  %v462 = vld [vmem:[%s1 + $0x5d0] sm:$0xff]
  %v463 = vld [vmem:[%s1 + $0x5d8] sm:$0xff]
  %v464 = vld [vmem:[%s1 + $0x5e0] sm:$0xff]
  %v465 = vld [vmem:[%s1 + $0x5e8] sm:$0xff]
  %v466 = vld [vmem:[%s1 + $0x5f0] sm:$0xff]
  %v467 = vld [vmem:[%s1 + $0x5f8] sm:$0xff]
  %v468 = vld [vmem:[%s1 + $0x600] sm:$0xff]
  %v469 = vld [vmem:[%s1 + $0x608] sm:$0xff]
  %v470 = vld [vmem:[%s1 + $0x610] sm:$0xff]
  %v471 = vld [vmem:[%s1 + $0x618] sm:$0xff]
  %v472 = vld [vmem:[%s1 + $0x620] sm:$0xff]
  %v473 = vld [vmem:[%s1 + $0x628] sm:$0xff]
  %v474 = vld [vmem:[%s1 + $0x630] sm:$0xff]
  %v475 = vld [vmem:[%s1 + $0x638] sm:$0xff]
  %v476 = vld [vmem:[%s1 + $0x640] sm:$0xff]
  %v477 = vld [vmem:[%s1 + $0x648] sm:$0xff]
  %v478 = vld [vmem:[%s1 + $0x650] sm:$0xff]
  %v479 = vld [vmem:[%s1 + $0x658] sm:$0xff]
  %v480 = vld [vmem:[%s1 + $0x660] sm:$0xff]
  %v481 = vld [vmem:[%s1 + $0x668] sm:$0xff]
  %v482 = vld [vmem:[%s1 + $0x670] sm:$0xff]
  %v483 = vld [vmem:[%s1 + $0x678] sm:$0xff]
  %v484 = vld [vmem:[%s1 + $0x680] sm:$0xff]
  %v485 = vld [vmem:[%s1 + $0x688] sm:$0xff]
  %v486 = vld [vmem:[%s1 + $0x690] sm:$0xff]
  %v487 = vld [vmem:[%s1 + $0x698] sm:$0xff]
  %v488 = vld [vmem:[%s1 + $0x6a0] sm:$0xff]
  %v489 = vld [vmem:[%s1 + $0x6a8] sm:$0xff]
  %v490 = vld [vmem:[%s1 + $0x6b0] sm:$0xff]
  %v491 = vld [vmem:[%s1 + $0x6b8] sm:$0xff]
  %v492 = vld [vmem:[%s1 + $0x6c0] sm:$0xff]
  %v493 = vld [vmem:[%s1 + $0x6c8] sm:$0xff]
  %v494 = vld [vmem:[%s1 + $0x6d0] sm:$0xff]
  %v495 = vld [vmem:[%s1 + $0x6d8] sm:$0xff]
  %v496 = vld [vmem:[%s1 + $0x6e0] sm:$0xff]
  %v497 = vld [vmem:[%s1 + $0x6e8] sm:$0xff]
  %v498 = vld [vmem:[%s1 + $0x6f0] sm:$0xff]
  %v499 = vld [vmem:[%s1 + $0x6f8] sm:$0xff]
  %v500 = vld [vmem:[%s1 + $0x700] sm:$0xff]
  %v501 = vld [vmem:[%s1 + $0x708] sm:$0xff]
  %v502 = vld [vmem:[%s1 + $0x710] sm:$0xff]
  %v503 = vld [vmem:[%s1 + $0x718] sm:$0xff]
  %v504 = vld [vmem:[%s1 + $0x720] sm:$0xff]
  %v505 = vld [vmem:[%s1 + $0x728] sm:$0xff]
  %v506 = vld [vmem:[%s1 + $0x730] sm:$0xff]
  %v507 = vld [vmem:[%s1 + $0x738] sm:$0xff]
  %v508 = vld [vmem:[%s1 + $0x740] sm:$0xff]
  %v509 = vld [vmem:[%s1 + $0x748] sm:$0xff]
  %v510 = vld [vmem:[%s1 + $0x750] sm:$0xff]
  %v511 = vld [vmem:[%s1 + $0x758] sm:$0xff]
  %v512 = vld [vmem:[%s1 + $0x760] sm:$0xff]
  %v513 = vld [vmem:[%s1 + $0x768] sm:$0xff]
  %v514 = vld [vmem:[%s1 + $0x770] sm:$0xff]
  %v515 = vld [vmem:[%s1 + $0x778] sm:$0xff]
  %v516 = vld [vmem:[%s1 + $0x780] sm:$0xff]
  %v517 = vld [vmem:[%s1 + $0x788] sm:$0xff]
  %v518 = vld [vmem:[%s1 + $0x790] sm:$0xff]
  %v519 = vld [vmem:[%s1 + $0x798] sm:$0xff]
  %v520 = vld [vmem:[%s1 + $0x7a0] sm:$0xff]
  %v521 = vld [vmem:[%s1 + $0x7a8] sm:$0xff]
  %v522 = vld [vmem:[%s1 + $0x7b0] sm:$0xff]
  %v523 = vld [vmem:[%s1 + $0x7b8] sm:$0xff]
  %v524 = vld [vmem:[%s1 + $0x7c0] sm:$0xff]
  %v525 = vld [vmem:[%s1 + $0x7c8] sm:$0xff]
  %v526 = vld [vmem:[%s1 + $0x7d0] sm:$0xff]
  %v527 = vld [vmem:[%s1 + $0x7d8] sm:$0xff]
  %v528 = vld [vmem:[%s1 + $0x7e0] sm:$0xff]
  %v529 = vld [vmem:[%s1 + $0x7e8] sm:$0xff]
  %v530 = vld [vmem:[%s1 + $0x7f0] sm:$0xff]
  %v531 = vld [vmem:[%s1 + $0x7f8] sm:$0xff]
  %v532 = vld [vmem:[%s2] sm:$0x1]
  %v534 = vlaneseq
  %v535 = vshrl.u32 %v534, 7
  %v536 = vsub.s32 0, %v535
  %v537 = vrot.slane %v532, %v536
  %539 = vmatprep.subr.mxu0 0.0
  %540 = vmatpush1.msra.mxu0 %v276
  %541 = vmatprep.subr.mxu0 0.0
  %542 = vmatpush1.msra.mxu0 %v277
  %543 = vmatprep.subr.mxu0 0.0
  %544 = vmatpush1.msra.mxu0 %v278
  %545 = vmatprep.subr.mxu0 0.0
  %546 = vmatpush1.msra.mxu0 %v279
  %547 = vmatprep.subr.mxu0 0.0
  %548 = vmatpush1.msra.mxu0 %v280
  %549 = vmatprep.subr.mxu0 0.0
  %550 = vmatpush1.msra.mxu0 %v281
  %551 = vmatprep.subr.mxu0 0.0
  %552 = vmatpush1.msra.mxu0 %v282
  %553 = vmatprep.subr.mxu0 0.0
  %554 = vmatpush1.msra.mxu0 %v283
  %555 = vmatprep.subr.mxu0 0.0
  %556 = vmatpush1.msra.mxu0 %v284
  %557 = vmatprep.subr.mxu0 0.0
  %558 = vmatpush1.msra.mxu0 %v285
  %559 = vmatprep.subr.mxu0 0.0
  %560 = vmatpush1.msra.mxu0 %v286
  %561 = vmatprep.subr.mxu0 0.0
  %562 = vmatpush1.msra.mxu0 %v287
  %563 = vmatprep.subr.mxu0 0.0
  %564 = vmatpush1.msra.mxu0 %v288
  %565 = vmatprep.subr.mxu0 0.0
  %566 = vmatpush1.msra.mxu0 %v289
  %567 = vmatprep.subr.mxu0 0.0
  %568 = vmatpush1.msra.mxu0 %v290
  %569 = vmatprep.subr.mxu0 0.0
  %570 = vmatpush1.msra.mxu0 %v291
  %571 = vmatprep.subr.mxu0 0.0
  %572 = vmatpush1.msra.mxu0 %v292
  %573 = vmatprep.subr.mxu0 0.0
  %574 = vmatpush1.msra.mxu0 %v293
  %575 = vmatprep.subr.mxu0 0.0
  %576 = vmatpush1.msra.mxu0 %v294
  %577 = vmatprep.subr.mxu0 0.0
  %578 = vmatpush1.msra.mxu0 %v295
  %579 = vmatprep.subr.mxu0 0.0
  %580 = vmatpush1.msra.mxu0 %v296
  %581 = vmatprep.subr.mxu0 0.0
  %582 = vmatpush1.msra.mxu0 %v297
  %583 = vmatprep.subr.mxu0 0.0
  %584 = vmatpush1.msra.mxu0 %v298
  %585 = vmatprep.subr.mxu0 0.0
  %586 = vmatpush1.msra.mxu0 %v299
  %587 = vmatprep.subr.mxu0 0.0
  %588 = vmatpush1.msra.mxu0 %v300
  %589 = vmatprep.subr.mxu0 0.0
  %590 = vmatpush1.msra.mxu0 %v301
  %591 = vmatprep.subr.mxu0 0.0
  %592 = vmatpush1.msra.mxu0 %v302
  %593 = vmatprep.subr.mxu0 0.0
  %594 = vmatpush1.msra.mxu0 %v303
  %595 = vmatprep.subr.mxu0 0.0
  %596 = vmatpush1.msra.mxu0 %v304
  %597 = vmatprep.subr.mxu0 0.0
  %598 = vmatpush1.msra.mxu0 %v305
  %599 = vmatprep.subr.mxu0 0.0
  %600 = vmatpush1.msra.mxu0 %v306
  %601 = vmatprep.subr.mxu0 0.0
  %602 = vmatpush1.msra.mxu0 %v307
  %603 = vmatprep.mubr.f32.mxu0 %v21
  %604 = vmatmul.mubr.f32.gmra.mrb[0].mxu0 %v20
  %v605 = vpop.f32.mrb[0].mxu0
  %v606 = vadd.f32 %v537, %v605
  %v607 = vpop.f32.mrb[0].mxu0
  %608 = vmatprep.mubr.f32.mxu0 %v37
  %609 = vmatmul.mubr.f32.gmra.mrb[0].mxu0 %v36
  %v610 = vpop.f32.mrb[0].mxu0
  %v611 = vadd.f32 %v537, %v610
  %v612 = vpop.f32.mrb[0].mxu0
  %613 = vmatprep.mubr.f32.mxu0 %v53
  %614 = vmatmul.mubr.f32.gmra.mrb[0].mxu0 %v52
  %v615 = vpop.f32.mrb[0].mxu0
  %v616 = vadd.f32 %v537, %v615
  %v617 = vpop.f32.mrb[0].mxu0
  %618 = vmatprep.mubr.f32.mxu0 %v69
  %619 = vmatmul.mubr.f32.gmra.mrb[0].mxu0 %v68
  %v620 = vpop.f32.mrb[0].mxu0
  %v621 = vadd.f32 %v537, %v620
  %v622 = vpop.f32.mrb[0].mxu0
  %623 = vmatprep.mubr.f32.mxu0 %v85
  %624 = vmatmul.mubr.f32.gmra.mrb[0].mxu0 %v84
  %v625 = vpop.f32.mrb[0].mxu0
  %v626 = vadd.f32 %v537, %v625
  %v627 = vpop.f32.mrb[0].mxu0
  %628 = vmatprep.mubr.f32.mxu0 %v101
  %629 = vmatmul.mubr.f32.gmra.mrb[0].mxu0 %v100
  %v630 = vpop.f32.mrb[0].mxu0
  %v631 = vadd.f32 %v537, %v630
  %v632 = vpop.f32.mrb[0].mxu0
  %633 = vmatprep.mubr.f32.mxu0 %v117
  %634 = vmatmul.mubr.f32.gmra.mrb[0].mxu0 %v116
  %v635 = vpop.f32.mrb[0].mxu0
  %v636 = vadd.f32 %v537, %v635
  %v637 = vpop.f32.mrb[0].mxu0
  %638 = vmatprep.mubr.f32.mxu0 %v133
  %639 = vmatmul.mubr.f32.gmra.mrb[0].mxu0 %v132
  %v640 = vpop.f32.mrb[0].mxu0
  %v641 = vadd.f32 %v537, %v640
  %v642 = vpop.f32.mrb[0].mxu0
  %643 = vmatprep.mubr.f32.mxu0 %v149
  %644 = vmatmul.mubr.f32.gmra.mrb[0].mxu0 %v148
  %v645 = vpop.f32.mrb[0].mxu0
  %v646 = vadd.f32 %v537, %v645
  %v647 = vpop.f32.mrb[0].mxu0
  %648 = vmatprep.mubr.f32.mxu0 %v165
  %649 = vmatmul.mubr.f32.gmra.mrb[0].mxu0 %v164
  %v650 = vpop.f32.mrb[0].mxu0
  %v651 = vadd.f32 %v537, %v650
  %v652 = vpop.f32.mrb[0].mxu0
  %653 = vmatprep.mubr.f32.mxu0 %v181
  %654 = vmatmul.mubr.f32.gmra.mrb[0].mxu0 %v180
  %v655 = vpop.f32.mrb[0].mxu0
  %v656 = vadd.f32 %v537, %v655
  %v657 = vpop.f32.mrb[0].mxu0
  %658 = vmatprep.mubr.f32.mxu0 %v197
  %659 = vmatmul.mubr.f32.gmra.mrb[0].mxu0 %v196
  %v660 = vpop.f32.mrb[0].mxu0
  %v661 = vadd.f32 %v537, %v660
  %v662 = vpop.f32.mrb[0].mxu0
  %663 = vmatprep.mubr.f32.mxu0 %v213
  %664 = vmatmul.mubr.f32.gmra.mrb[0].mxu0 %v212
  %v665 = vpop.f32.mrb[0].mxu0
  %v666 = vadd.f32 %v537, %v665
  %v667 = vpop.f32.mrb[0].mxu0
  %668 = vmatprep.mubr.f32.mxu0 %v229
  %669 = vmatmul.mubr.f32.gmra.mrb[0].mxu0 %v228
  %v670 = vpop.f32.mrb[0].mxu0
  %v671 = vadd.f32 %v537, %v670
  %v672 = vpop.f32.mrb[0].mxu0
  %673 = vmatprep.mubr.f32.mxu0 %v245
  %674 = vmatmul.mubr.f32.gmra.mrb[0].mxu0 %v244
  %v675 = vpop.f32.mrb[0].mxu0
  %v676 = vadd.f32 %v537, %v675
  %v677 = vpop.f32.mrb[0].mxu0
  %678 = vmatprep.mubr.f32.mxu0 %v261
  %679 = vmatmul.mubr.f32.gmra.mrb[0].mxu0 %v260
  %v680 = vpop.f32.mrb[0].mxu0
  %v681 = vadd.f32 %v537, %v680
  %v682 = vpop.f32.mrb[0].mxu0
  %683 = vdwg.mxu0
  %684 = vmatprep.subr.mxu0 0.0
  %685 = vmatpush1.msra.mxu0 %v308
  %686 = vmatprep.subr.mxu0 0.0
  %687 = vmatpush1.msra.mxu0 %v309
  %688 = vmatprep.subr.mxu0 0.0
  %689 = vmatpush1.msra.mxu0 %v310
  %690 = vmatprep.subr.mxu0 0.0
  %691 = vmatpush1.msra.mxu0 %v311
  %692 = vmatprep.subr.mxu0 0.0
  %693 = vmatpush1.msra.mxu0 %v312
  %694 = vmatprep.subr.mxu0 0.0
  %695 = vmatpush1.msra.mxu0 %v313
  %696 = vmatprep.subr.mxu0 0.0
  %697 = vmatpush1.msra.mxu0 %v314
  %698 = vmatprep.subr.mxu0 0.0
  %699 = vmatpush1.msra.mxu0 %v315
  %700 = vmatprep.subr.mxu0 0.0
  %701 = vmatpush1.msra.mxu0 %v316
  %702 = vmatprep.subr.mxu0 0.0
  %703 = vmatpush1.msra.mxu0 %v317
  %704 = vmatprep.subr.mxu0 0.0
  %705 = vmatpush1.msra.mxu0 %v318
  %706 = vmatprep.subr.mxu0 0.0
  %707 = vmatpush1.msra.mxu0 %v319
  %708 = vmatprep.subr.mxu0 0.0
  %709 = vmatpush1.msra.mxu0 %v320
  %710 = vmatprep.subr.mxu0 0.0
  %711 = vmatpush1.msra.mxu0 %v321
  %712 = vmatprep.subr.mxu0 0.0
  %713 = vmatpush1.msra.mxu0 %v322
  %714 = vmatprep.subr.mxu0 0.0
  %715 = vmatpush1.msra.mxu0 %v323
  %716 = vmatprep.subr.mxu0 0.0
  %717 = vmatpush1.msra.mxu0 %v324
  %718 = vmatprep.subr.mxu0 0.0
  %719 = vmatpush1.msra.mxu0 %v325
  %720 = vmatprep.subr.mxu0 0.0
  %721 = vmatpush1.msra.mxu0 %v326
  %722 = vmatprep.subr.mxu0 0.0
  %723 = vmatpush1.msra.mxu0 %v327
  %724 = vmatprep.subr.mxu0 0.0
  %725 = vmatpush1.msra.mxu0 %v328
  %726 = vmatprep.subr.mxu0 0.0
  %727 = vmatpush1.msra.mxu0 %v329
  %728 = vmatprep.subr.mxu0 0.0
  %729 = vmatpush1.msra.mxu0 %v330
  %730 = vmatprep.subr.mxu0 0.0
  %731 = vmatpush1.msra.mxu0 %v331
  %732 = vmatprep.subr.mxu0 0.0
  %733 = vmatpush1.msra.mxu0 %v332
  %734 = vmatprep.subr.mxu0 0.0
  %735 = vmatpush1.msra.mxu0 %v333
  %736 = vmatprep.subr.mxu0 0.0
  %737 = vmatpush1.msra.mxu0 %v334
  %738 = vmatprep.subr.mxu0 0.0
  %739 = vmatpush1.msra.mxu0 %v335
  %740 = vmatprep.subr.mxu0 0.0
  %741 = vmatpush1.msra.mxu0 %v336
  %742 = vmatprep.subr.mxu0 0.0
  %743 = vmatpush1.msra.mxu0 %v337
  %744 = vmatprep.subr.mxu0 0.0
  %745 = vmatpush1.msra.mxu0 %v338
  %746 = vmatprep.subr.mxu0 0.0
  %747 = vmatpush1.msra.mxu0 %v339
  %748 = vmatprep.mubr.f32.mxu0 %v23
  %749 = vmatmul.mubr.f32.gmra.mrb[0].mxu0 %v22
  %v750 = vpop.f32.mrb[0].mxu0
  %v751 = vadd.f32 %v606, %v750
  %v752 = vpop.f32.mrb[0].mxu0
  %753 = vmatprep.mubr.f32.mxu0 %v39
  %754 = vmatmul.mubr.f32.gmra.mrb[0].mxu0 %v38
  %v755 = vpop.f32.mrb[0].mxu0
  %v756 = vadd.f32 %v611, %v755
  %v757 = vpop.f32.mrb[0].mxu0
  %758 = vmatprep.mubr.f32.mxu0 %v55
  %759 = vmatmul.mubr.f32.gmra.mrb[0].mxu0 %v54
  %v760 = vpop.f32.mrb[0].mxu0
  %v761 = vadd.f32 %v616, %v760
  %v762 = vpop.f32.mrb[0].mxu0
  %763 = vmatprep.mubr.f32.mxu0 %v71
  %764 = vmatmul.mubr.f32.gmra.mrb[0].mxu0 %v70
  %v765 = vpop.f32.mrb[0].mxu0
  %v766 = vadd.f32 %v621, %v765
  %v767 = vpop.f32.mrb[0].mxu0
  %768 = vmatprep.mubr.f32.mxu0 %v87
  %769 = vmatmul.mubr.f32.gmra.mrb[0].mxu0 %v86
  %v770 = vpop.f32.mrb[0].mxu0
  %v771 = vadd.f32 %v626, %v770
  %v772 = vpop.f32.mrb[0].mxu0
  %773 = vmatprep.mubr.f32.mxu0 %v103
  %774 = vmatmul.mubr.f32.gmra.mrb[0].mxu0 %v102
  %v775 = vpop.f32.mrb[0].mxu0
  %v776 = vadd.f32 %v631, %v775
  %v777 = vpop.f32.mrb[0].mxu0
  %778 = vmatprep.mubr.f32.mxu0 %v119
  %779 = vmatmul.mubr.f32.gmra.mrb[0].mxu0 %v118
  %v780 = vpop.f32.mrb[0].mxu0
  %v781 = vadd.f32 %v636, %v780
  %v782 = vpop.f32.mrb[0].mxu0
  %783 = vmatprep.mubr.f32.mxu0 %v135
  %784 = vmatmul.mubr.f32.gmra.mrb[0].mxu0 %v134
  %v785 = vpop.f32.mrb[0].mxu0
  %v786 = vadd.f32 %v641, %v785
  %v787 = vpop.f32.mrb[0].mxu0
  %788 = vmatprep.mubr.f32.mxu0 %v151
  %789 = vmatmul.mubr.f32.gmra.mrb[0].mxu0 %v150
  %v790 = vpop.f32.mrb[0].mxu0
  %v791 = vadd.f32 %v646, %v790
  %v792 = vpop.f32.mrb[0].mxu0
  %793 = vmatprep.mubr.f32.mxu0 %v167
  %794 = vmatmul.mubr.f32.gmra.mrb[0].mxu0 %v166
  %v795 = vpop.f32.mrb[0].mxu0
  %v796 = vadd.f32 %v651, %v795
  %v797 = vpop.f32.mrb[0].mxu0
  %798 = vmatprep.mubr.f32.mxu0 %v183
  %799 = vmatmul.mubr.f32.gmra.mrb[0].mxu0 %v182
  %v800 = vpop.f32.mrb[0].mxu0
  %v801 = vadd.f32 %v656, %v800
  %v802 = vpop.f32.mrb[0].mxu0
  %803 = vmatprep.mubr.f32.mxu0 %v199
  %804 = vmatmul.mubr.f32.gmra.mrb[0].mxu0 %v198
  %v805 = vpop.f32.mrb[0].mxu0
  %v806 = vadd.f32 %v661, %v805
  %v807 = vpop.f32.mrb[0].mxu0
  %808 = vmatprep.mubr.f32.mxu0 %v215
  %809 = vmatmul.mubr.f32.gmra.mrb[0].mxu0 %v214
  %v810 = vpop.f32.mrb[0].mxu0
  %v811 = vadd.f32 %v666, %v810
  %v812 = vpop.f32.mrb[0].mxu0
  %813 = vmatprep.mubr.f32.mxu0 %v231
  %814 = vmatmul.mubr.f32.gmra.mrb[0].mxu0 %v230
  %v815 = vpop.f32.mrb[0].mxu0
  %v816 = vadd.f32 %v671, %v815
  %v817 = vpop.f32.mrb[0].mxu0
  %818 = vmatprep.mubr.f32.mxu0 %v247
  %819 = vmatmul.mubr.f32.gmra.mrb[0].mxu0 %v246
  %v820 = vpop.f32.mrb[0].mxu0
  %v821 = vadd.f32 %v676, %v820
  %v822 = vpop.f32.mrb[0].mxu0
  %823 = vmatprep.mubr.f32.mxu0 %v263
  %824 = vmatmul.mubr.f32.gmra.mrb[0].mxu0 %v262
  %v825 = vpop.f32.mrb[0].mxu0
  %v826 = vadd.f32 %v681, %v825
  %v827 = vpop.f32.mrb[0].mxu0
  %828 = vdwg.mxu0
  %829 = vmatprep.subr.mxu0 0.0
  %830 = vmatpush1.msra.mxu0 %v340
  %831 = vmatprep.subr.mxu0 0.0
  %832 = vmatpush1.msra.mxu0 %v341
  %833 = vmatprep.subr.mxu0 0.0
  %834 = vmatpush1.msra.mxu0 %v342
  %835 = vmatprep.subr.mxu0 0.0
  %836 = vmatpush1.msra.mxu0 %v343
  %837 = vmatprep.subr.mxu0 0.0
  %838 = vmatpush1.msra.mxu0 %v344
  %839 = vmatprep.subr.mxu0 0.0
  %840 = vmatpush1.msra.mxu0 %v345
  %841 = vmatprep.subr.mxu0 0.0
  %842 = vmatpush1.msra.mxu0 %v346
  %843 = vmatprep.subr.mxu0 0.0
  %844 = vmatpush1.msra.mxu0 %v347
  %845 = vmatprep.subr.mxu0 0.0
  %846 = vmatpush1.msra.mxu0 %v348
  %847 = vmatprep.subr.mxu0 0.0
  %848 = vmatpush1.msra.mxu0 %v349
  %849 = vmatprep.subr.mxu0 0.0
  %850 = vmatpush1.msra.mxu0 %v350
  %851 = vmatprep.subr.mxu0 0.0
  %852 = vmatpush1.msra.mxu0 %v351
  %853 = vmatprep.subr.mxu0 0.0
  %854 = vmatpush1.msra.mxu0 %v352
  %855 = vmatprep.subr.mxu0 0.0
  %856 = vmatpush1.msra.mxu0 %v353
  %857 = vmatprep.subr.mxu0 0.0
  %858 = vmatpush1.msra.mxu0 %v354
  %859 = vmatprep.subr.mxu0 0.0
  %860 = vmatpush1.msra.mxu0 %v355
  %861 = vmatprep.subr.mxu0 0.0
  %862 = vmatpush1.msra.mxu0 %v356
  %863 = vmatprep.subr.mxu0 0.0
  %864 = vmatpush1.msra.mxu0 %v357
  %865 = vmatprep.subr.mxu0 0.0
  %866 = vmatpush1.msra.mxu0 %v358
  %867 = vmatprep.subr.mxu0 0.0
  %868 = vmatpush1.msra.mxu0 %v359
  %869 = vmatprep.subr.mxu0 0.0
  %870 = vmatpush1.msra.mxu0 %v360
  %871 = vmatprep.subr.mxu0 0.0
  %872 = vmatpush1.msra.mxu0 %v361
  %873 = vmatprep.subr.mxu0 0.0
  %874 = vmatpush1.msra.mxu0 %v362
  %875 = vmatprep.subr.mxu0 0.0
  %876 = vmatpush1.msra.mxu0 %v363
  %877 = vmatprep.subr.mxu0 0.0
  %878 = vmatpush1.msra.mxu0 %v364
  %879 = vmatprep.subr.mxu0 0.0
  %880 = vmatpush1.msra.mxu0 %v365
  %881 = vmatprep.subr.mxu0 0.0
  %882 = vmatpush1.msra.mxu0 %v366
  %883 = vmatprep.subr.mxu0 0.0
  %884 = vmatpush1.msra.mxu0 %v367
  %885 = vmatprep.subr.mxu0 0.0
  %886 = vmatpush1.msra.mxu0 %v368
  %887 = vmatprep.subr.mxu0 0.0
  %888 = vmatpush1.msra.mxu0 %v369
  %889 = vmatprep.subr.mxu0 0.0
  %890 = vmatpush1.msra.mxu0 %v370
  %891 = vmatprep.subr.mxu0 0.0
  %892 = vmatpush1.msra.mxu0 %v371
  %893 = vmatprep.mubr.f32.mxu0 %v25
  %894 = vmatmul.mubr.f32.gmra.mrb[0].mxu0 %v24
  %v895 = vpop.f32.mrb[0].mxu0
  %v896 = vadd.f32 %v751, %v895
  %v897 = vpop.f32.mrb[0].mxu0
  %898 = vmatprep.mubr.f32.mxu0 %v41
  %899 = vmatmul.mubr.f32.gmra.mrb[0].mxu0 %v40
  %v900 = vpop.f32.mrb[0].mxu0
  %v901 = vadd.f32 %v756, %v900
  %v902 = vpop.f32.mrb[0].mxu0
  %903 = vmatprep.mubr.f32.mxu0 %v57
  %904 = vmatmul.mubr.f32.gmra.mrb[0].mxu0 %v56
  %v905 = vpop.f32.mrb[0].mxu0
  %v906 = vadd.f32 %v761, %v905
  %v907 = vpop.f32.mrb[0].mxu0
  %908 = vmatprep.mubr.f32.mxu0 %v73
  %909 = vmatmul.mubr.f32.gmra.mrb[0].mxu0 %v72
  %v910 = vpop.f32.mrb[0].mxu0
  %v911 = vadd.f32 %v766, %v910
  %v912 = vpop.f32.mrb[0].mxu0
  %913 = vmatprep.mubr.f32.mxu0 %v89
  %914 = vmatmul.mubr.f32.gmra.mrb[0].mxu0 %v88
  %v915 = vpop.f32.mrb[0].mxu0
  %v916 = vadd.f32 %v771, %v915
  %v917 = vpop.f32.mrb[0].mxu0
  %918 = vmatprep.mubr.f32.mxu0 %v105
  %919 = vmatmul.mubr.f32.gmra.mrb[0].mxu0 %v104
  %v920 = vpop.f32.mrb[0].mxu0
  %v921 = vadd.f32 %v776, %v920
  %v922 = vpop.f32.mrb[0].mxu0
  %923 = vmatprep.mubr.f32.mxu0 %v121
  %924 = vmatmul.mubr.f32.gmra.mrb[0].mxu0 %v120
  %v925 = vpop.f32.mrb[0].mxu0
  %v926 = vadd.f32 %v781, %v925
  %v927 = vpop.f32.mrb[0].mxu0
  %928 = vmatprep.mubr.f32.mxu0 %v137
  %929 = vmatmul.mubr.f32.gmra.mrb[0].mxu0 %v136
  %v930 = vpop.f32.mrb[0].mxu0
  %v931 = vadd.f32 %v786, %v930
  %v932 = vpop.f32.mrb[0].mxu0
  %933 = vmatprep.mubr.f32.mxu0 %v153
  %934 = vmatmul.mubr.f32.gmra.mrb[0].mxu0 %v152
  %v935 = vpop.f32.mrb[0].mxu0
  %v936 = vadd.f32 %v791, %v935
  %v937 = vpop.f32.mrb[0].mxu0
  %938 = vmatprep.mubr.f32.mxu0 %v169
  %939 = vmatmul.mubr.f32.gmra.mrb[0].mxu0 %v168
  %v940 = vpop.f32.mrb[0].mxu0
  %v941 = vadd.f32 %v796, %v940
  %v942 = vpop.f32.mrb[0].mxu0
  %943 = vmatprep.mubr.f32.mxu0 %v185
  %944 = vmatmul.mubr.f32.gmra.mrb[0].mxu0 %v184
  %v945 = vpop.f32.mrb[0].mxu0
  %v946 = vadd.f32 %v801, %v945
  %v947 = vpop.f32.mrb[0].mxu0
  %948 = vmatprep.mubr.f32.mxu0 %v201
  %949 = vmatmul.mubr.f32.gmra.mrb[0].mxu0 %v200
  %v950 = vpop.f32.mrb[0].mxu0
  %v951 = vadd.f32 %v806, %v950
  %v952 = vpop.f32.mrb[0].mxu0
  %953 = vmatprep.mubr.f32.mxu0 %v217
  %954 = vmatmul.mubr.f32.gmra.mrb[0].mxu0 %v216
  %v955 = vpop.f32.mrb[0].mxu0
  %v956 = vadd.f32 %v811, %v955
  %v957 = vpop.f32.mrb[0].mxu0
  %958 = vmatprep.mubr.f32.mxu0 %v233
  %959 = vmatmul.mubr.f32.gmra.mrb[0].mxu0 %v232
  %v960 = vpop.f32.mrb[0].mxu0
  %v961 = vadd.f32 %v816, %v960
  %v962 = vpop.f32.mrb[0].mxu0
  %963 = vmatprep.mubr.f32.mxu0 %v249
  %964 = vmatmul.mubr.f32.gmra.mrb[0].mxu0 %v248
  %v965 = vpop.f32.mrb[0].mxu0
  %v966 = vadd.f32 %v821, %v965
  %v967 = vpop.f32.mrb[0].mxu0
  %968 = vmatprep.mubr.f32.mxu0 %v265
  %969 = vmatmul.mubr.f32.gmra.mrb[0].mxu0 %v264
  %v970 = vpop.f32.mrb[0].mxu0
  %v971 = vadd.f32 %v826, %v970
  %v972 = vpop.f32.mrb[0].mxu0
  %973 = vdwg.mxu0
  %974 = vmatprep.subr.mxu0 0.0
  %975 = vmatpush1.msra.mxu0 %v372
  %976 = vmatprep.subr.mxu0 0.0
  %977 = vmatpush1.msra.mxu0 %v373
  %978 = vmatprep.subr.mxu0 0.0
  %979 = vmatpush1.msra.mxu0 %v374
  %980 = vmatprep.subr.mxu0 0.0
  %981 = vmatpush1.msra.mxu0 %v375
  %982 = vmatprep.subr.mxu0 0.0
  %983 = vmatpush1.msra.mxu0 %v376
  %984 = vmatprep.subr.mxu0 0.0
  %985 = vmatpush1.msra.mxu0 %v377
  %986 = vmatprep.subr.mxu0 0.0
  %987 = vmatpush1.msra.mxu0 %v378
  %988 = vmatprep.subr.mxu0 0.0
  %989 = vmatpush1.msra.mxu0 %v379
  %990 = vmatprep.subr.mxu0 0.0
  %991 = vmatpush1.msra.mxu0 %v380
  %992 = vmatprep.subr.mxu0 0.0
  %993 = vmatpush1.msra.mxu0 %v381
  %994 = vmatprep.subr.mxu0 0.0
  %995 = vmatpush1.msra.mxu0 %v382
  %996 = vmatprep.subr.mxu0 0.0
  %997 = vmatpush1.msra.mxu0 %v383
  %998 = vmatprep.subr.mxu0 0.0
  %999 = vmatpush1.msra.mxu0 %v384
  %1000 = vmatprep.subr.mxu0 0.0
  %1001 = vmatpush1.msra.mxu0 %v385
  %1002 = vmatprep.subr.mxu0 0.0
  %1003 = vmatpush1.msra.mxu0 %v386
  %1004 = vmatprep.subr.mxu0 0.0
  %1005 = vmatpush1.msra.mxu0 %v387
  %1006 = vmatprep.subr.mxu0 0.0
  %1007 = vmatpush1.msra.mxu0 %v388
  %1008 = vmatprep.subr.mxu0 0.0
  %1009 = vmatpush1.msra.mxu0 %v389
  %1010 = vmatprep.subr.mxu0 0.0
  %1011 = vmatpush1.msra.mxu0 %v390
  %1012 = vmatprep.subr.mxu0 0.0
  %1013 = vmatpush1.msra.mxu0 %v391
  %1014 = vmatprep.subr.mxu0 0.0
  %1015 = vmatpush1.msra.mxu0 %v392
  %1016 = vmatprep.subr.mxu0 0.0
  %1017 = vmatpush1.msra.mxu0 %v393
  %1018 = vmatprep.subr.mxu0 0.0
  %1019 = vmatpush1.msra.mxu0 %v394
  %1020 = vmatprep.subr.mxu0 0.0
  %1021 = vmatpush1.msra.mxu0 %v395
  %1022 = vmatprep.subr.mxu0 0.0
  %1023 = vmatpush1.msra.mxu0 %v396
  %1024 = vmatprep.subr.mxu0 0.0
  %1025 = vmatpush1.msra.mxu0 %v397
  %1026 = vmatprep.subr.mxu0 0.0
  %1027 = vmatpush1.msra.mxu0 %v398
  %1028 = vmatprep.subr.mxu0 0.0
  %1029 = vmatpush1.msra.mxu0 %v399
  %1030 = vmatprep.subr.mxu0 0.0
  %1031 = vmatpush1.msra.mxu0 %v400
  %1032 = vmatprep.subr.mxu0 0.0
  %1033 = vmatpush1.msra.mxu0 %v401
  %1034 = vmatprep.subr.mxu0 0.0
  %1035 = vmatpush1.msra.mxu0 %v402
  %1036 = vmatprep.subr.mxu0 0.0
  %1037 = vmatpush1.msra.mxu0 %v403
  %1038 = vmatprep.mubr.f32.mxu0 %v27
  %1039 = vmatmul.mubr.f32.gmra.mrb[0].mxu0 %v26
  %v1040 = vpop.f32.mrb[0].mxu0
  %v1041 = vadd.f32 %v896, %v1040
  %v1042 = vpop.f32.mrb[0].mxu0
  %1043 = vmatprep.mubr.f32.mxu0 %v43
  %1044 = vmatmul.mubr.f32.gmra.mrb[0].mxu0 %v42
  %v1045 = vpop.f32.mrb[0].mxu0
  %v1046 = vadd.f32 %v901, %v1045
  %v1047 = vpop.f32.mrb[0].mxu0
  %1048 = vmatprep.mubr.f32.mxu0 %v59
  %1049 = vmatmul.mubr.f32.gmra.mrb[0].mxu0 %v58
  %v1050 = vpop.f32.mrb[0].mxu0
  %v1051 = vadd.f32 %v906, %v1050
  %v1052 = vpop.f32.mrb[0].mxu0
  %1053 = vmatprep.mubr.f32.mxu0 %v75
  %1054 = vmatmul.mubr.f32.gmra.mrb[0].mxu0 %v74
  %v1055 = vpop.f32.mrb[0].mxu0
  %v1056 = vadd.f32 %v911, %v1055
  %v1057 = vpop.f32.mrb[0].mxu0
  %1058 = vmatprep.mubr.f32.mxu0 %v91
  %1059 = vmatmul.mubr.f32.gmra.mrb[0].mxu0 %v90
  %v1060 = vpop.f32.mrb[0].mxu0
  %v1061 = vadd.f32 %v916, %v1060
  %v1062 = vpop.f32.mrb[0].mxu0
  %1063 = vmatprep.mubr.f32.mxu0 %v107
  %1064 = vmatmul.mubr.f32.gmra.mrb[0].mxu0 %v106
  %v1065 = vpop.f32.mrb[0].mxu0
  %v1066 = vadd.f32 %v921, %v1065
  %v1067 = vpop.f32.mrb[0].mxu0
  %1068 = vmatprep.mubr.f32.mxu0 %v123
  %1069 = vmatmul.mubr.f32.gmra.mrb[0].mxu0 %v122
  %v1070 = vpop.f32.mrb[0].mxu0
  %v1071 = vadd.f32 %v926, %v1070
  %v1072 = vpop.f32.mrb[0].mxu0
  %1073 = vmatprep.mubr.f32.mxu0 %v139
  %1074 = vmatmul.mubr.f32.gmra.mrb[0].mxu0 %v138
  %v1075 = vpop.f32.mrb[0].mxu0
  %v1076 = vadd.f32 %v931, %v1075
  %v1077 = vpop.f32.mrb[0].mxu0
  %1078 = vmatprep.mubr.f32.mxu0 %v155
  %1079 = vmatmul.mubr.f32.gmra.mrb[0].mxu0 %v154
  %v1080 = vpop.f32.mrb[0].mxu0
  %v1081 = vadd.f32 %v936, %v1080
  %v1082 = vpop.f32.mrb[0].mxu0
  %1083 = vmatprep.mubr.f32.mxu0 %v171
  %1084 = vmatmul.mubr.f32.gmra.mrb[0].mxu0 %v170
  %v1085 = vpop.f32.mrb[0].mxu0
  %v1086 = vadd.f32 %v941, %v1085
  %v1087 = vpop.f32.mrb[0].mxu0
  %1088 = vmatprep.mubr.f32.mxu0 %v187
  %1089 = vmatmul.mubr.f32.gmra.mrb[0].mxu0 %v186
  %v1090 = vpop.f32.mrb[0].mxu0
  %v1091 = vadd.f32 %v946, %v1090
  %v1092 = vpop.f32.mrb[0].mxu0
  %1093 = vmatprep.mubr.f32.mxu0 %v203
  %1094 = vmatmul.mubr.f32.gmra.mrb[0].mxu0 %v202
  %v1095 = vpop.f32.mrb[0].mxu0
  %v1096 = vadd.f32 %v951, %v1095
  %v1097 = vpop.f32.mrb[0].mxu0
  %1098 = vmatprep.mubr.f32.mxu0 %v219
  %1099 = vmatmul.mubr.f32.gmra.mrb[0].mxu0 %v218
  %v1100 = vpop.f32.mrb[0].mxu0
  %v1101 = vadd.f32 %v956, %v1100
  %v1102 = vpop.f32.mrb[0].mxu0
  %1103 = vmatprep.mubr.f32.mxu0 %v235
  %1104 = vmatmul.mubr.f32.gmra.mrb[0].mxu0 %v234
  %v1105 = vpop.f32.mrb[0].mxu0
  %v1106 = vadd.f32 %v961, %v1105
  %v1107 = vpop.f32.mrb[0].mxu0
  %1108 = vmatprep.mubr.f32.mxu0 %v251
  %1109 = vmatmul.mubr.f32.gmra.mrb[0].mxu0 %v250
  %v1110 = vpop.f32.mrb[0].mxu0
  %v1111 = vadd.f32 %v966, %v1110
  %v1112 = vpop.f32.mrb[0].mxu0
  %1113 = vmatprep.mubr.f32.mxu0 %v267
  %1114 = vmatmul.mubr.f32.gmra.mrb[0].mxu0 %v266
  %v1115 = vpop.f32.mrb[0].mxu0
  %v1116 = vadd.f32 %v971, %v1115
  %v1117 = vpop.f32.mrb[0].mxu0
  %1118 = vdwg.mxu0
  %1119 = vmatprep.subr.mxu0 0.0
  %1120 = vmatpush1.msra.mxu0 %v404
  %1121 = vmatprep.subr.mxu0 0.0
  %1122 = vmatpush1.msra.mxu0 %v405
  %1123 = vmatprep.subr.mxu0 0.0
  %1124 = vmatpush1.msra.mxu0 %v406
  %1125 = vmatprep.subr.mxu0 0.0
  %1126 = vmatpush1.msra.mxu0 %v407
  %1127 = vmatprep.subr.mxu0 0.0
  %1128 = vmatpush1.msra.mxu0 %v408
  %1129 = vmatprep.subr.mxu0 0.0
  %1130 = vmatpush1.msra.mxu0 %v409
  %1131 = vmatprep.subr.mxu0 0.0
  %1132 = vmatpush1.msra.mxu0 %v410
  %1133 = vmatprep.subr.mxu0 0.0
  %1134 = vmatpush1.msra.mxu0 %v411
  %1135 = vmatprep.subr.mxu0 0.0
  %1136 = vmatpush1.msra.mxu0 %v412
  %1137 = vmatprep.subr.mxu0 0.0
  %1138 = vmatpush1.msra.mxu0 %v413
  %1139 = vmatprep.subr.mxu0 0.0
  %1140 = vmatpush1.msra.mxu0 %v414
  %1141 = vmatprep.subr.mxu0 0.0
  %1142 = vmatpush1.msra.mxu0 %v415
  %1143 = vmatprep.subr.mxu0 0.0
  %1144 = vmatpush1.msra.mxu0 %v416
  %1145 = vmatprep.subr.mxu0 0.0
  %1146 = vmatpush1.msra.mxu0 %v417
  %1147 = vmatprep.subr.mxu0 0.0
  %1148 = vmatpush1.msra.mxu0 %v418
  %1149 = vmatprep.subr.mxu0 0.0
  %1150 = vmatpush1.msra.mxu0 %v419
  %1151 = vmatprep.subr.mxu0 0.0
  %1152 = vmatpush1.msra.mxu0 %v420
  %1153 = vmatprep.subr.mxu0 0.0
  %1154 = vmatpush1.msra.mxu0 %v421
  %1155 = vmatprep.subr.mxu0 0.0
  %1156 = vmatpush1.msra.mxu0 %v422
  %1157 = vmatprep.subr.mxu0 0.0
  %1158 = vmatpush1.msra.mxu0 %v423
  %1159 = vmatprep.subr.mxu0 0.0
  %1160 = vmatpush1.msra.mxu0 %v424
  %1161 = vmatprep.subr.mxu0 0.0
  %1162 = vmatpush1.msra.mxu0 %v425
  %1163 = vmatprep.subr.mxu0 0.0
  %1164 = vmatpush1.msra.mxu0 %v426
  %1165 = vmatprep.subr.mxu0 0.0
  %1166 = vmatpush1.msra.mxu0 %v427
  %1167 = vmatprep.subr.mxu0 0.0
  %1168 = vmatpush1.msra.mxu0 %v428
  %1169 = vmatprep.subr.mxu0 0.0
  %1170 = vmatpush1.msra.mxu0 %v429
  %1171 = vmatprep.subr.mxu0 0.0
  %1172 = vmatpush1.msra.mxu0 %v430
  %1173 = vmatprep.subr.mxu0 0.0
  %1174 = vmatpush1.msra.mxu0 %v431
  %1175 = vmatprep.subr.mxu0 0.0
  %1176 = vmatpush1.msra.mxu0 %v432
  %1177 = vmatprep.subr.mxu0 0.0
  %1178 = vmatpush1.msra.mxu0 %v433
  %1179 = vmatprep.subr.mxu0 0.0
  %1180 = vmatpush1.msra.mxu0 %v434
  %1181 = vmatprep.subr.mxu0 0.0
  %1182 = vmatpush1.msra.mxu0 %v435
  %1183 = vmatprep.mubr.f32.mxu0 %v29
  %1184 = vmatmul.mubr.f32.gmra.mrb[0].mxu0 %v28
  %v1185 = vpop.f32.mrb[0].mxu0
  %v1186 = vadd.f32 %v1041, %v1185
  %v1187 = vpop.f32.mrb[0].mxu0
  %1188 = vmatprep.mubr.f32.mxu0 %v45
  %1189 = vmatmul.mubr.f32.gmra.mrb[0].mxu0 %v44
  %v1190 = vpop.f32.mrb[0].mxu0
  %v1191 = vadd.f32 %v1046, %v1190
  %v1192 = vpop.f32.mrb[0].mxu0
  %1193 = vmatprep.mubr.f32.mxu0 %v61
  %1194 = vmatmul.mubr.f32.gmra.mrb[0].mxu0 %v60
  %v1195 = vpop.f32.mrb[0].mxu0
  %v1196 = vadd.f32 %v1051, %v1195
  %v1197 = vpop.f32.mrb[0].mxu0
  %1198 = vmatprep.mubr.f32.mxu0 %v77
  %1199 = vmatmul.mubr.f32.gmra.mrb[0].mxu0 %v76
  %v1200 = vpop.f32.mrb[0].mxu0
  %v1201 = vadd.f32 %v1056, %v1200
  %v1202 = vpop.f32.mrb[0].mxu0
  %1203 = vmatprep.mubr.f32.mxu0 %v93
  %1204 = vmatmul.mubr.f32.gmra.mrb[0].mxu0 %v92
  %v1205 = vpop.f32.mrb[0].mxu0
  %v1206 = vadd.f32 %v1061, %v1205
  %v1207 = vpop.f32.mrb[0].mxu0
  %1208 = vmatprep.mubr.f32.mxu0 %v109
  %1209 = vmatmul.mubr.f32.gmra.mrb[0].mxu0 %v108
  %v1210 = vpop.f32.mrb[0].mxu0
  %v1211 = vadd.f32 %v1066, %v1210
  %v1212 = vpop.f32.mrb[0].mxu0
  %1213 = vmatprep.mubr.f32.mxu0 %v125
  %1214 = vmatmul.mubr.f32.gmra.mrb[0].mxu0 %v124
  %v1215 = vpop.f32.mrb[0].mxu0
  %v1216 = vadd.f32 %v1071, %v1215
  %v1217 = vpop.f32.mrb[0].mxu0
  %1218 = vmatprep.mubr.f32.mxu0 %v141
  %1219 = vmatmul.mubr.f32.gmra.mrb[0].mxu0 %v140
  %v1220 = vpop.f32.mrb[0].mxu0
  %v1221 = vadd.f32 %v1076, %v1220
  %v1222 = vpop.f32.mrb[0].mxu0
  %1223 = vmatprep.mubr.f32.mxu0 %v157
  %1224 = vmatmul.mubr.f32.gmra.mrb[0].mxu0 %v156
  %v1225 = vpop.f32.mrb[0].mxu0
  %v1226 = vadd.f32 %v1081, %v1225
  %v1227 = vpop.f32.mrb[0].mxu0
  %1228 = vmatprep.mubr.f32.mxu0 %v173
  %1229 = vmatmul.mubr.f32.gmra.mrb[0].mxu0 %v172
  %v1230 = vpop.f32.mrb[0].mxu0
  %v1231 = vadd.f32 %v1086, %v1230
  %v1232 = vpop.f32.mrb[0].mxu0
  %1233 = vmatprep.mubr.f32.mxu0 %v189
  %1234 = vmatmul.mubr.f32.gmra.mrb[0].mxu0 %v188
  %v1235 = vpop.f32.mrb[0].mxu0
  %v1236 = vadd.f32 %v1091, %v1235
  %v1237 = vpop.f32.mrb[0].mxu0
  %1238 = vmatprep.mubr.f32.mxu0 %v205
  %1239 = vmatmul.mubr.f32.gmra.mrb[0].mxu0 %v204
  %v1240 = vpop.f32.mrb[0].mxu0
  %v1241 = vadd.f32 %v1096, %v1240
  %v1242 = vpop.f32.mrb[0].mxu0
  %1243 = vmatprep.mubr.f32.mxu0 %v221
  %1244 = vmatmul.mubr.f32.gmra.mrb[0].mxu0 %v220
  %v1245 = vpop.f32.mrb[0].mxu0
  %v1246 = vadd.f32 %v1101, %v1245
  %v1247 = vpop.f32.mrb[0].mxu0
  %1248 = vmatprep.mubr.f32.mxu0 %v237
  %1249 = vmatmul.mubr.f32.gmra.mrb[0].mxu0 %v236
  %v1250 = vpop.f32.mrb[0].mxu0
  %v1251 = vadd.f32 %v1106, %v1250
  %v1252 = vpop.f32.mrb[0].mxu0
  %1253 = vmatprep.mubr.f32.mxu0 %v253
  %1254 = vmatmul.mubr.f32.gmra.mrb[0].mxu0 %v252
  %v1255 = vpop.f32.mrb[0].mxu0
  %v1256 = vadd.f32 %v1111, %v1255
  %v1257 = vpop.f32.mrb[0].mxu0
  %1258 = vmatprep.mubr.f32.mxu0 %v269
  %1259 = vmatmul.mubr.f32.gmra.mrb[0].mxu0 %v268
  %v1260 = vpop.f32.mrb[0].mxu0
  %v1261 = vadd.f32 %v1116, %v1260
  %v1262 = vpop.f32.mrb[0].mxu0
  %1263 = vdwg.mxu0
  %1264 = vmatprep.subr.mxu0 0.0
  %1265 = vmatpush1.msra.mxu0 %v436
  %1266 = vmatprep.subr.mxu0 0.0
  %1267 = vmatpush1.msra.mxu0 %v437
  %1268 = vmatprep.subr.mxu0 0.0
  %1269 = vmatpush1.msra.mxu0 %v438
  %1270 = vmatprep.subr.mxu0 0.0
  %1271 = vmatpush1.msra.mxu0 %v439
  %1272 = vmatprep.subr.mxu0 0.0
  %1273 = vmatpush1.msra.mxu0 %v440
  %1274 = vmatprep.subr.mxu0 0.0
  %1275 = vmatpush1.msra.mxu0 %v441
  %1276 = vmatprep.subr.mxu0 0.0
  %1277 = vmatpush1.msra.mxu0 %v442
  %1278 = vmatprep.subr.mxu0 0.0
  %1279 = vmatpush1.msra.mxu0 %v443
  %1280 = vmatprep.subr.mxu0 0.0
  %1281 = vmatpush1.msra.mxu0 %v444
  %1282 = vmatprep.subr.mxu0 0.0
  %1283 = vmatpush1.msra.mxu0 %v445
  %1284 = vmatprep.subr.mxu0 0.0
  %1285 = vmatpush1.msra.mxu0 %v446
  %1286 = vmatprep.subr.mxu0 0.0
  %1287 = vmatpush1.msra.mxu0 %v447
  %1288 = vmatprep.subr.mxu0 0.0
  %1289 = vmatpush1.msra.mxu0 %v448
  %1290 = vmatprep.subr.mxu0 0.0
  %1291 = vmatpush1.msra.mxu0 %v449
  %1292 = vmatprep.subr.mxu0 0.0
  %1293 = vmatpush1.msra.mxu0 %v450
  %1294 = vmatprep.subr.mxu0 0.0
  %1295 = vmatpush1.msra.mxu0 %v451
  %1296 = vmatprep.subr.mxu0 0.0
  %1297 = vmatpush1.msra.mxu0 %v452
  %1298 = vmatprep.subr.mxu0 0.0
  %1299 = vmatpush1.msra.mxu0 %v453
  %1300 = vmatprep.subr.mxu0 0.0
  %1301 = vmatpush1.msra.mxu0 %v454
  %1302 = vmatprep.subr.mxu0 0.0
  %1303 = vmatpush1.msra.mxu0 %v455
  %1304 = vmatprep.subr.mxu0 0.0
  %1305 = vmatpush1.msra.mxu0 %v456
  %1306 = vmatprep.subr.mxu0 0.0
  %1307 = vmatpush1.msra.mxu0 %v457
  %1308 = vmatprep.subr.mxu0 0.0
  %1309 = vmatpush1.msra.mxu0 %v458
  %1310 = vmatprep.subr.mxu0 0.0
  %1311 = vmatpush1.msra.mxu0 %v459
  %1312 = vmatprep.subr.mxu0 0.0
  %1313 = vmatpush1.msra.mxu0 %v460
  %1314 = vmatprep.subr.mxu0 0.0
  %1315 = vmatpush1.msra.mxu0 %v461
  %1316 = vmatprep.subr.mxu0 0.0
  %1317 = vmatpush1.msra.mxu0 %v462
  %1318 = vmatprep.subr.mxu0 0.0
  %1319 = vmatpush1.msra.mxu0 %v463
  %1320 = vmatprep.subr.mxu0 0.0
  %1321 = vmatpush1.msra.mxu0 %v464
  %1322 = vmatprep.subr.mxu0 0.0
  %1323 = vmatpush1.msra.mxu0 %v465
  %1324 = vmatprep.subr.mxu0 0.0
  %1325 = vmatpush1.msra.mxu0 %v466
  %1326 = vmatprep.subr.mxu0 0.0
  %1327 = vmatpush1.msra.mxu0 %v467
  %1328 = vmatprep.mubr.f32.mxu0 %v31
  %1329 = vmatmul.mubr.f32.gmra.mrb[0].mxu0 %v30
  %v1330 = vpop.f32.mrb[0].mxu0
  %v1331 = vadd.f32 %v1186, %v1330
  %v1332 = vpop.f32.mrb[0].mxu0
  %1333 = vmatprep.mubr.f32.mxu0 %v47
  %1334 = vmatmul.mubr.f32.gmra.mrb[0].mxu0 %v46
  %v1335 = vpop.f32.mrb[0].mxu0
  %v1336 = vadd.f32 %v1191, %v1335
  %v1337 = vpop.f32.mrb[0].mxu0
  %1338 = vmatprep.mubr.f32.mxu0 %v63
  %1339 = vmatmul.mubr.f32.gmra.mrb[0].mxu0 %v62
  %v1340 = vpop.f32.mrb[0].mxu0
  %v1341 = vadd.f32 %v1196, %v1340
  %v1342 = vpop.f32.mrb[0].mxu0
  %1343 = vmatprep.mubr.f32.mxu0 %v79
  %1344 = vmatmul.mubr.f32.gmra.mrb[0].mxu0 %v78
  %v1345 = vpop.f32.mrb[0].mxu0
  %v1346 = vadd.f32 %v1201, %v1345
  %v1347 = vpop.f32.mrb[0].mxu0
  %1348 = vmatprep.mubr.f32.mxu0 %v95
  %1349 = vmatmul.mubr.f32.gmra.mrb[0].mxu0 %v94
  %v1350 = vpop.f32.mrb[0].mxu0
  %v1351 = vadd.f32 %v1206, %v1350
  %v1352 = vpop.f32.mrb[0].mxu0
  %1353 = vmatprep.mubr.f32.mxu0 %v111
  %1354 = vmatmul.mubr.f32.gmra.mrb[0].mxu0 %v110
  %v1355 = vpop.f32.mrb[0].mxu0
  %v1356 = vadd.f32 %v1211, %v1355
  %v1357 = vpop.f32.mrb[0].mxu0
  %1358 = vmatprep.mubr.f32.mxu0 %v127
  %1359 = vmatmul.mubr.f32.gmra.mrb[0].mxu0 %v126
  %v1360 = vpop.f32.mrb[0].mxu0
  %v1361 = vadd.f32 %v1216, %v1360
  %v1362 = vpop.f32.mrb[0].mxu0
  %1363 = vmatprep.mubr.f32.mxu0 %v143
  %1364 = vmatmul.mubr.f32.gmra.mrb[0].mxu0 %v142
  %v1365 = vpop.f32.mrb[0].mxu0
  %v1366 = vadd.f32 %v1221, %v1365
  %v1367 = vpop.f32.mrb[0].mxu0
  %1368 = vmatprep.mubr.f32.mxu0 %v159
  %1369 = vmatmul.mubr.f32.gmra.mrb[0].mxu0 %v158
  %v1370 = vpop.f32.mrb[0].mxu0
  %v1371 = vadd.f32 %v1226, %v1370
  %v1372 = vpop.f32.mrb[0].mxu0
  %1373 = vmatprep.mubr.f32.mxu0 %v175
  %1374 = vmatmul.mubr.f32.gmra.mrb[0].mxu0 %v174
  %v1375 = vpop.f32.mrb[0].mxu0
  %v1376 = vadd.f32 %v1231, %v1375
  %v1377 = vpop.f32.mrb[0].mxu0
  %1378 = vmatprep.mubr.f32.mxu0 %v191
  %1379 = vmatmul.mubr.f32.gmra.mrb[0].mxu0 %v190
  %v1380 = vpop.f32.mrb[0].mxu0
  %v1381 = vadd.f32 %v1236, %v1380
  %v1382 = vpop.f32.mrb[0].mxu0
  %1383 = vmatprep.mubr.f32.mxu0 %v207
  %1384 = vmatmul.mubr.f32.gmra.mrb[0].mxu0 %v206
  %v1385 = vpop.f32.mrb[0].mxu0
  %v1386 = vadd.f32 %v1241, %v1385
  %v1387 = vpop.f32.mrb[0].mxu0
  %1388 = vmatprep.mubr.f32.mxu0 %v223
  %1389 = vmatmul.mubr.f32.gmra.mrb[0].mxu0 %v222
  %v1390 = vpop.f32.mrb[0].mxu0
  %v1391 = vadd.f32 %v1246, %v1390
  %v1392 = vpop.f32.mrb[0].mxu0
  %1393 = vmatprep.mubr.f32.mxu0 %v239
  %1394 = vmatmul.mubr.f32.gmra.mrb[0].mxu0 %v238
  %v1395 = vpop.f32.mrb[0].mxu0
  %v1396 = vadd.f32 %v1251, %v1395
  %v1397 = vpop.f32.mrb[0].mxu0
  %1398 = vmatprep.mubr.f32.mxu0 %v255
  %1399 = vmatmul.mubr.f32.gmra.mrb[0].mxu0 %v254
  %v1400 = vpop.f32.mrb[0].mxu0
  %v1401 = vadd.f32 %v1256, %v1400
  %v1402 = vpop.f32.mrb[0].mxu0
  %1403 = vmatprep.mubr.f32.mxu0 %v271
  %1404 = vmatmul.mubr.f32.gmra.mrb[0].mxu0 %v270
  %v1405 = vpop.f32.mrb[0].mxu0
  %v1406 = vadd.f32 %v1261, %v1405
  %v1407 = vpop.f32.mrb[0].mxu0
  %1408 = vdwg.mxu0
  %1409 = vmatprep.subr.mxu0 0.0
  %1410 = vmatpush1.msra.mxu0 %v468
  %1411 = vmatprep.subr.mxu0 0.0
  %1412 = vmatpush1.msra.mxu0 %v469
  %1413 = vmatprep.subr.mxu0 0.0
  %1414 = vmatpush1.msra.mxu0 %v470
  %1415 = vmatprep.subr.mxu0 0.0
  %1416 = vmatpush1.msra.mxu0 %v471
  %1417 = vmatprep.subr.mxu0 0.0
  %1418 = vmatpush1.msra.mxu0 %v472
  %1419 = vmatprep.subr.mxu0 0.0
  %1420 = vmatpush1.msra.mxu0 %v473
  %1421 = vmatprep.subr.mxu0 0.0
  %1422 = vmatpush1.msra.mxu0 %v474
  %1423 = vmatprep.subr.mxu0 0.0
  %1424 = vmatpush1.msra.mxu0 %v475
  %1425 = vmatprep.subr.mxu0 0.0
  %1426 = vmatpush1.msra.mxu0 %v476
  %1427 = vmatprep.subr.mxu0 0.0
  %1428 = vmatpush1.msra.mxu0 %v477
  %1429 = vmatprep.subr.mxu0 0.0
  %1430 = vmatpush1.msra.mxu0 %v478
  %1431 = vmatprep.subr.mxu0 0.0
  %1432 = vmatpush1.msra.mxu0 %v479
  %1433 = vmatprep.subr.mxu0 0.0
  %1434 = vmatpush1.msra.mxu0 %v480
  %1435 = vmatprep.subr.mxu0 0.0
  %1436 = vmatpush1.msra.mxu0 %v481
  %1437 = vmatprep.subr.mxu0 0.0
  %1438 = vmatpush1.msra.mxu0 %v482
  %1439 = vmatprep.subr.mxu0 0.0
  %1440 = vmatpush1.msra.mxu0 %v483
  %1441 = vmatprep.subr.mxu0 0.0
  %1442 = vmatpush1.msra.mxu0 %v484
  %1443 = vmatprep.subr.mxu0 0.0
  %1444 = vmatpush1.msra.mxu0 %v485
  %1445 = vmatprep.subr.mxu0 0.0
  %1446 = vmatpush1.msra.mxu0 %v486
  %1447 = vmatprep.subr.mxu0 0.0
  %1448 = vmatpush1.msra.mxu0 %v487
  %1449 = vmatprep.subr.mxu0 0.0
  %1450 = vmatpush1.msra.mxu0 %v488
  %1451 = vmatprep.subr.mxu0 0.0
  %1452 = vmatpush1.msra.mxu0 %v489
  %1453 = vmatprep.subr.mxu0 0.0
  %1454 = vmatpush1.msra.mxu0 %v490
  %1455 = vmatprep.subr.mxu0 0.0
  %1456 = vmatpush1.msra.mxu0 %v491
  %1457 = vmatprep.subr.mxu0 0.0
  %1458 = vmatpush1.msra.mxu0 %v492
  %1459 = vmatprep.subr.mxu0 0.0
  %1460 = vmatpush1.msra.mxu0 %v493
  %1461 = vmatprep.subr.mxu0 0.0
  %1462 = vmatpush1.msra.mxu0 %v494
  %1463 = vmatprep.subr.mxu0 0.0
  %1464 = vmatpush1.msra.mxu0 %v495
  %1465 = vmatprep.subr.mxu0 0.0
  %1466 = vmatpush1.msra.mxu0 %v496
  %1467 = vmatprep.subr.mxu0 0.0
  %1468 = vmatpush1.msra.mxu0 %v497
  %1469 = vmatprep.subr.mxu0 0.0
  %1470 = vmatpush1.msra.mxu0 %v498
  %1471 = vmatprep.subr.mxu0 0.0
  %1472 = vmatpush1.msra.mxu0 %v499
  %1473 = vmatprep.mubr.f32.mxu0 %v33
  %1474 = vmatmul.mubr.f32.gmra.mrb[0].mxu0 %v32
  %v1475 = vpop.f32.mrb[0].mxu0
  %v1476 = vadd.f32 %v1331, %v1475
  %v1477 = vpop.f32.mrb[0].mxu0
  %1478 = vmatprep.mubr.f32.mxu0 %v49
  %1479 = vmatmul.mubr.f32.gmra.mrb[0].mxu0 %v48
  %v1480 = vpop.f32.mrb[0].mxu0
  %v1481 = vadd.f32 %v1336, %v1480
  %v1482 = vpop.f32.mrb[0].mxu0
  %1483 = vmatprep.mubr.f32.mxu0 %v65
  %1484 = vmatmul.mubr.f32.gmra.mrb[0].mxu0 %v64
  %v1485 = vpop.f32.mrb[0].mxu0
  %v1486 = vadd.f32 %v1341, %v1485
  %v1487 = vpop.f32.mrb[0].mxu0
  %1488 = vmatprep.mubr.f32.mxu0 %v81
  %1489 = vmatmul.mubr.f32.gmra.mrb[0].mxu0 %v80
  %v1490 = vpop.f32.mrb[0].mxu0
  %v1491 = vadd.f32 %v1346, %v1490
  %v1492 = vpop.f32.mrb[0].mxu0
  %1493 = vmatprep.mubr.f32.mxu0 %v97
  %1494 = vmatmul.mubr.f32.gmra.mrb[0].mxu0 %v96
  %v1495 = vpop.f32.mrb[0].mxu0
  %v1496 = vadd.f32 %v1351, %v1495
  %v1497 = vpop.f32.mrb[0].mxu0
  %1498 = vmatprep.mubr.f32.mxu0 %v113
  %1499 = vmatmul.mubr.f32.gmra.mrb[0].mxu0 %v112
  %v1500 = vpop.f32.mrb[0].mxu0
  %v1501 = vadd.f32 %v1356, %v1500
  %v1502 = vpop.f32.mrb[0].mxu0
  %1503 = vmatprep.mubr.f32.mxu0 %v129
  %1504 = vmatmul.mubr.f32.gmra.mrb[0].mxu0 %v128
  %v1505 = vpop.f32.mrb[0].mxu0
  %v1506 = vadd.f32 %v1361, %v1505
  %v1507 = vpop.f32.mrb[0].mxu0
  %1508 = vmatprep.mubr.f32.mxu0 %v145
  %1509 = vmatmul.mubr.f32.gmra.mrb[0].mxu0 %v144
  %v1510 = vpop.f32.mrb[0].mxu0
  %v1511 = vadd.f32 %v1366, %v1510
  %v1512 = vpop.f32.mrb[0].mxu0
  %1513 = vmatprep.mubr.f32.mxu0 %v161
  %1514 = vmatmul.mubr.f32.gmra.mrb[0].mxu0 %v160
  %v1515 = vpop.f32.mrb[0].mxu0
  %v1516 = vadd.f32 %v1371, %v1515
  %v1517 = vpop.f32.mrb[0].mxu0
  %1518 = vmatprep.mubr.f32.mxu0 %v177
  %1519 = vmatmul.mubr.f32.gmra.mrb[0].mxu0 %v176
  %v1520 = vpop.f32.mrb[0].mxu0
  %v1521 = vadd.f32 %v1376, %v1520
  %v1522 = vpop.f32.mrb[0].mxu0
  %1523 = vmatprep.mubr.f32.mxu0 %v193
  %1524 = vmatmul.mubr.f32.gmra.mrb[0].mxu0 %v192
  %v1525 = vpop.f32.mrb[0].mxu0
  %v1526 = vadd.f32 %v1381, %v1525
  %v1527 = vpop.f32.mrb[0].mxu0
  %1528 = vmatprep.mubr.f32.mxu0 %v209
  %1529 = vmatmul.mubr.f32.gmra.mrb[0].mxu0 %v208
  %v1530 = vpop.f32.mrb[0].mxu0
  %v1531 = vadd.f32 %v1386, %v1530
  %v1532 = vpop.f32.mrb[0].mxu0
  %1533 = vmatprep.mubr.f32.mxu0 %v225
  %1534 = vmatmul.mubr.f32.gmra.mrb[0].mxu0 %v224
  %v1535 = vpop.f32.mrb[0].mxu0
  %v1536 = vadd.f32 %v1391, %v1535
  %v1537 = vpop.f32.mrb[0].mxu0
  %1538 = vmatprep.mubr.f32.mxu0 %v241
  %1539 = vmatmul.mubr.f32.gmra.mrb[0].mxu0 %v240
  %v1540 = vpop.f32.mrb[0].mxu0
  %v1541 = vadd.f32 %v1396, %v1540
  %v1542 = vpop.f32.mrb[0].mxu0
  %1543 = vmatprep.mubr.f32.mxu0 %v257
  %1544 = vmatmul.mubr.f32.gmra.mrb[0].mxu0 %v256
  %v1545 = vpop.f32.mrb[0].mxu0
  %v1546 = vadd.f32 %v1401, %v1545
  %v1547 = vpop.f32.mrb[0].mxu0
  %1548 = vmatprep.mubr.f32.mxu0 %v273
  %1549 = vmatmul.mubr.f32.gmra.mrb[0].mxu0 %v272
  %v1550 = vpop.f32.mrb[0].mxu0
  %v1551 = vadd.f32 %v1406, %v1550
  %v1552 = vpop.f32.mrb[0].mxu0
  %1553 = vdwg.mxu0
  %1554 = vmatprep.subr.mxu0 0.0
  %1555 = vmatpush1.msra.mxu0 %v500
  %1556 = vmatprep.subr.mxu0 0.0
  %1557 = vmatpush1.msra.mxu0 %v501
  %1558 = vmatprep.subr.mxu0 0.0
  %1559 = vmatpush1.msra.mxu0 %v502
  %1560 = vmatprep.subr.mxu0 0.0
  %1561 = vmatpush1.msra.mxu0 %v503
  %1562 = vmatprep.subr.mxu0 0.0
  %1563 = vmatpush1.msra.mxu0 %v504
  %1564 = vmatprep.subr.mxu0 0.0
  %1565 = vmatpush1.msra.mxu0 %v505
  %1566 = vmatprep.subr.mxu0 0.0
  %1567 = vmatpush1.msra.mxu0 %v506
  %1568 = vmatprep.subr.mxu0 0.0
  %1569 = vmatpush1.msra.mxu0 %v507
  %1570 = vmatprep.subr.mxu0 0.0
  %1571 = vmatpush1.msra.mxu0 %v508
  %1572 = vmatprep.subr.mxu0 0.0
  %1573 = vmatpush1.msra.mxu0 %v509
  %1574 = vmatprep.subr.mxu0 0.0
  %1575 = vmatpush1.msra.mxu0 %v510
  %1576 = vmatprep.subr.mxu0 0.0
  %1577 = vmatpush1.msra.mxu0 %v511
  %1578 = vmatprep.subr.mxu0 0.0
  %1579 = vmatpush1.msra.mxu0 %v512
  %1580 = vmatprep.subr.mxu0 0.0
  %1581 = vmatpush1.msra.mxu0 %v513
  %1582 = vmatprep.subr.mxu0 0.0
  %1583 = vmatpush1.msra.mxu0 %v514
  %1584 = vmatprep.subr.mxu0 0.0
  %1585 = vmatpush1.msra.mxu0 %v515
  %1586 = vmatprep.subr.mxu0 0.0
  %1587 = vmatpush1.msra.mxu0 %v516
  %1588 = vmatprep.subr.mxu0 0.0
  %1589 = vmatpush1.msra.mxu0 %v517
  %1590 = vmatprep.subr.mxu0 0.0
  %1591 = vmatpush1.msra.mxu0 %v518
  %1592 = vmatprep.subr.mxu0 0.0
  %1593 = vmatpush1.msra.mxu0 %v519
  %1594 = vmatprep.subr.mxu0 0.0
  %1595 = vmatpush1.msra.mxu0 %v520
  %1596 = vmatprep.subr.mxu0 0.0
  %1597 = vmatpush1.msra.mxu0 %v521
  %1598 = vmatprep.subr.mxu0 0.0
  %1599 = vmatpush1.msra.mxu0 %v522
  %1600 = vmatprep.subr.mxu0 0.0
  %1601 = vmatpush1.msra.mxu0 %v523
  %1602 = vmatprep.subr.mxu0 0.0
  %1603 = vmatpush1.msra.mxu0 %v524
  %1604 = vmatprep.subr.mxu0 0.0
  %1605 = vmatpush1.msra.mxu0 %v525
  %1606 = vmatprep.subr.mxu0 0.0
  %1607 = vmatpush1.msra.mxu0 %v526
  %1608 = vmatprep.subr.mxu0 0.0
  %1609 = vmatpush1.msra.mxu0 %v527
  %1610 = vmatprep.subr.mxu0 0.0
  %1611 = vmatpush1.msra.mxu0 %v528
  %1612 = vmatprep.subr.mxu0 0.0
  %1613 = vmatpush1.msra.mxu0 %v529
  %1614 = vmatprep.subr.mxu0 0.0
  %1615 = vmatpush1.msra.mxu0 %v530
  %1616 = vmatprep.subr.mxu0 0.0
  %1617 = vmatpush1.msra.mxu0 %v531
  %1618 = vmatprep.mubr.f32.mxu0 %v35
  %1619 = vmatmul.mubr.f32.gmra.mrb[0].mxu0 %v34
  %v1620 = vpop.f32.mrb[0].mxu0
  %v1621 = vadd.f32 %v1476, %v1620
  %v1622 = vpop.f32.mrb[0].mxu0
  %1623 = vmatprep.mubr.f32.mxu0 %v51
  %1624 = vmatmul.mubr.f32.gmra.mrb[0].mxu0 %v50
  %v1625 = vpop.f32.mrb[0].mxu0
  %v1626 = vadd.f32 %v1481, %v1625
  %v1627 = vpop.f32.mrb[0].mxu0
  %1628 = vmatprep.mubr.f32.mxu0 %v67
  %1629 = vmatmul.mubr.f32.gmra.mrb[0].mxu0 %v66
  %v1630 = vpop.f32.mrb[0].mxu0
  %v1631 = vadd.f32 %v1486, %v1630
  %v1632 = vpop.f32.mrb[0].mxu0
  %1633 = vmatprep.mubr.f32.mxu0 %v83
  %1634 = vmatmul.mubr.f32.gmra.mrb[0].mxu0 %v82
  %v1635 = vpop.f32.mrb[0].mxu0
  %v1636 = vadd.f32 %v1491, %v1635
  %v1637 = vpop.f32.mrb[0].mxu0
  %1638 = vmatprep.mubr.f32.mxu0 %v99
  %1639 = vmatmul.mubr.f32.gmra.mrb[0].mxu0 %v98
  %v1640 = vpop.f32.mrb[0].mxu0
  %v1641 = vadd.f32 %v1496, %v1640
  %v1642 = vpop.f32.mrb[0].mxu0
  %1643 = vmatprep.mubr.f32.mxu0 %v115
  %1644 = vmatmul.mubr.f32.gmra.mrb[0].mxu0 %v114
  %v1645 = vpop.f32.mrb[0].mxu0
  %v1646 = vadd.f32 %v1501, %v1645
  %v1647 = vpop.f32.mrb[0].mxu0
  %1648 = vmatprep.mubr.f32.mxu0 %v131
  %1649 = vmatmul.mubr.f32.gmra.mrb[0].mxu0 %v130
  %v1650 = vpop.f32.mrb[0].mxu0
  %v1651 = vadd.f32 %v1506, %v1650
  %v1652 = vpop.f32.mrb[0].mxu0
  %1653 = vmatprep.mubr.f32.mxu0 %v147
  %1654 = vmatmul.mubr.f32.gmra.mrb[0].mxu0 %v146
  %v1655 = vpop.f32.mrb[0].mxu0
  %v1656 = vadd.f32 %v1511, %v1655
  %v1657 = vpop.f32.mrb[0].mxu0
  %1658 = vmatprep.mubr.f32.mxu0 %v163
  %1659 = vmatmul.mubr.f32.gmra.mrb[0].mxu0 %v162
  %v1660 = vpop.f32.mrb[0].mxu0
  %v1661 = vadd.f32 %v1516, %v1660
  %v1662 = vpop.f32.mrb[0].mxu0
  %1663 = vmatprep.mubr.f32.mxu0 %v179
  %1664 = vmatmul.mubr.f32.gmra.mrb[0].mxu0 %v178
  %v1665 = vpop.f32.mrb[0].mxu0
  %v1666 = vadd.f32 %v1521, %v1665
  %v1667 = vpop.f32.mrb[0].mxu0
  %1668 = vmatprep.mubr.f32.mxu0 %v195
  %1669 = vmatmul.mubr.f32.gmra.mrb[0].mxu0 %v194
  %v1670 = vpop.f32.mrb[0].mxu0
  %v1671 = vadd.f32 %v1526, %v1670
  %v1672 = vpop.f32.mrb[0].mxu0
  %1673 = vmatprep.mubr.f32.mxu0 %v211
  %1674 = vmatmul.mubr.f32.gmra.mrb[0].mxu0 %v210
  %v1675 = vpop.f32.mrb[0].mxu0
  %v1676 = vadd.f32 %v1531, %v1675
  %v1677 = vpop.f32.mrb[0].mxu0
  %1678 = vmatprep.mubr.f32.mxu0 %v227
  %1679 = vmatmul.mubr.f32.gmra.mrb[0].mxu0 %v226
  %v1680 = vpop.f32.mrb[0].mxu0
  %v1681 = vadd.f32 %v1536, %v1680
  %v1682 = vpop.f32.mrb[0].mxu0
  %1683 = vmatprep.mubr.f32.mxu0 %v243
  %1684 = vmatmul.mubr.f32.gmra.mrb[0].mxu0 %v242
  %v1685 = vpop.f32.mrb[0].mxu0
  %v1686 = vadd.f32 %v1541, %v1685
  %v1687 = vpop.f32.mrb[0].mxu0
  %1688 = vmatprep.mubr.f32.mxu0 %v259
  %1689 = vmatmul.mubr.f32.gmra.mrb[0].mxu0 %v258
  %v1690 = vpop.f32.mrb[0].mxu0
  %v1691 = vadd.f32 %v1546, %v1690
  %v1692 = vpop.f32.mrb[0].mxu0
  %1693 = vmatprep.mubr.f32.mxu0 %v275
  %1694 = vmatmul.mubr.f32.gmra.mrb[0].mxu0 %v274
  %v1695 = vpop.f32.mrb[0].mxu0
  %v1696 = vadd.f32 %v1551, %v1695
  %v1697 = vpop.f32.mrb[0].mxu0
  %1698 = vdwg.mxu0
  %v1699 = vadd.f32 %v1621, %v1626
  %v1700 = vadd.f32 %v1699, %v1631
  %v1701 = vadd.f32 %v1700, %v1636
  %v1702 = vadd.f32 %v1701, %v1641
  %v1703 = vadd.f32 %v1702, %v1646
  %v1704 = vadd.f32 %v1703, %v1651
  %v1705 = vadd.f32 %v1704, %v1656
  %v1706 = vadd.f32 %v1705, %v1661
  %v1707 = vadd.f32 %v1706, %v1666
  %v1708 = vadd.f32 %v1707, %v1671
  %v1709 = vadd.f32 %v1708, %v1676
  %v1710 = vadd.f32 %v1709, %v1681
  %v1711 = vadd.f32 %v1710, %v1686
  %v1712 = vadd.f32 %v1711, %v1691
  %v1713 = vadd.f32 %v1712, %v1696
  %v1714 = vrot.slane %v1713, 4
  %v1715 = vadd.f32 %v1713, %v1714
  %v1716 = vrot.slane %v1715, 2
  %v1717 = vadd.f32 %v1715, %v1716
  %v1718 = vrot.slane %v1717, 1
  %v1719 = vadd.f32 %v1717, %v1718
  %v1720 = vadd.f32 %v1719, 0.0
  %v1721 = vmul.f32 %v1621, %v1621
  %v1722 = vmul.f32 %v1626, %v1626
  %v1723 = vmul.f32 %v1631, %v1631
  %v1724 = vmul.f32 %v1636, %v1636
  %v1725 = vmul.f32 %v1641, %v1641
  %v1726 = vmul.f32 %v1646, %v1646
  %v1727 = vmul.f32 %v1651, %v1651
  %v1728 = vmul.f32 %v1656, %v1656
  %v1729 = vmul.f32 %v1661, %v1661
  %v1730 = vmul.f32 %v1666, %v1666
  %v1731 = vmul.f32 %v1671, %v1671
  %v1732 = vmul.f32 %v1676, %v1676
  %v1733 = vmul.f32 %v1681, %v1681
  %v1734 = vmul.f32 %v1686, %v1686
  %v1735 = vmul.f32 %v1691, %v1691
  %v1736 = vmul.f32 %v1696, %v1696
  %v1737 = vadd.f32 %v1721, %v1722
  %v1738 = vadd.f32 %v1737, %v1723
  %v1739 = vadd.f32 %v1738, %v1724
  %v1740 = vadd.f32 %v1739, %v1725
  %v1741 = vadd.f32 %v1740, %v1726
  %v1742 = vadd.f32 %v1741, %v1727
  %v1743 = vadd.f32 %v1742, %v1728
  %v1744 = vadd.f32 %v1743, %v1729
  %v1745 = vadd.f32 %v1744, %v1730
  %v1746 = vadd.f32 %v1745, %v1731
  %v1747 = vadd.f32 %v1746, %v1732
  %v1748 = vadd.f32 %v1747, %v1733
  %v1749 = vadd.f32 %v1748, %v1734
  %v1750 = vadd.f32 %v1749, %v1735
  %v1751 = vadd.f32 %v1750, %v1736
  %v1752 = vrot.slane %v1751, 4
  %v1753 = vadd.f32 %v1751, %v1752
  %v1754 = vrot.slane %v1753, 2
  %v1755 = vadd.f32 %v1753, %v1754
  %v1756 = vrot.slane %v1755, 1
  %v1757 = vadd.f32 %v1755, %v1756
  %v1758 = vadd.f32 %v1757, 0.0
  %v1759 = vrcp.pop 128.0
  %v1760 = vmul.f32 %v1720, %v1759
  %v1761 = vmul.f32 %v1758, %v1759
  %v1762 = vmul.f32 %v1760, %v1760
  %v1763 = vsub.f32 %v1761, %v1762
  %v1764 = vadd.f32 %v1763, 1e-05
  %v1765 = vrsqrt.pop %v1764
  %v1766 = vld [vmem:[%s3] sm:$0x1]
  %v1767 = vmul.f32 %v1765, %v1766
  %v1768 = vld [vmem:[%s4] sm:$0x1]
  %v1769 = vmul.f32 %v1760, %v1767
  %v1770 = vsub.f32 %v1768, %v1769
  %v1771 = vlaneseq
  %v1772 = vshrl.u32 %v1771, 7
  %v1773 = vsub.s32 0, %v1772
  %v1774 = vrot.slane %v1767, %v1773
  %v1775 = vmul.f32 %v1621, %v1774
  %v1776 = vmul.f32 %v1626, %v1774
  %v1777 = vmul.f32 %v1631, %v1774
  %v1778 = vmul.f32 %v1636, %v1774
  %v1779 = vmul.f32 %v1641, %v1774
  %v1780 = vmul.f32 %v1646, %v1774
  %v1781 = vmul.f32 %v1651, %v1774
  %v1782 = vmul.f32 %v1656, %v1774
  %v1783 = vmul.f32 %v1661, %v1774
  %v1784 = vmul.f32 %v1666, %v1774
  %v1785 = vmul.f32 %v1671, %v1774
  %v1786 = vmul.f32 %v1676, %v1774
  %v1787 = vmul.f32 %v1681, %v1774
  %v1788 = vmul.f32 %v1686, %v1774
  %v1789 = vmul.f32 %v1691, %v1774
  %v1790 = vmul.f32 %v1696, %v1774
  %v1792 = vlaneseq
  %v1793 = vshrl.u32 %v1792, 7
  %v1794 = vsub.s32 0, %v1793
  %v1795 = vrot.slane %v1770, %v1794
  %v1797 = vadd.f32 %v1775, %v1795
  %v1798 = vadd.f32 %v1776, %v1795
  %v1799 = vadd.f32 %v1777, %v1795
  %v1800 = vadd.f32 %v1778, %v1795
  %v1801 = vadd.f32 %v1779, %v1795
  %v1802 = vadd.f32 %v1780, %v1795
  %v1803 = vadd.f32 %v1781, %v1795
  %v1804 = vadd.f32 %v1782, %v1795
  %v1805 = vadd.f32 %v1783, %v1795
  %v1806 = vadd.f32 %v1784, %v1795
  %v1807 = vadd.f32 %v1785, %v1795
  %v1808 = vadd.f32 %v1786, %v1795
  %v1809 = vadd.f32 %v1787, %v1795
  %v1810 = vadd.f32 %v1788, %v1795
  %v1811 = vadd.f32 %v1789, %v1795
  %v1812 = vadd.f32 %v1790, %v1795
  %v1813 = vmax.f32 %v1797, 0.0
  %v1814 = vmax.f32 %v1798, 0.0
  %v1815 = vmax.f32 %v1799, 0.0
  %v1816 = vmax.f32 %v1800, 0.0
  %v1817 = vmax.f32 %v1801, 0.0
  %v1818 = vmax.f32 %v1802, 0.0
  %v1819 = vmax.f32 %v1803, 0.0
  %v1820 = vmax.f32 %v1804, 0.0
  %v1821 = vmax.f32 %v1805, 0.0
  %v1822 = vmax.f32 %v1806, 0.0
  %v1823 = vmax.f32 %v1807, 0.0
  %v1824 = vmax.f32 %v1808, 0.0
  %v1825 = vmax.f32 %v1809, 0.0
  %v1826 = vmax.f32 %v1810, 0.0
  %v1827 = vmax.f32 %v1811, 0.0
  %v1828 = vmax.f32 %v1812, 0.0
  %1829 = vst [vmem:[%s5] sm:$0xff] %v1813
  %1830 = vst [vmem:[%s5 + $0x8] sm:$0xff] %v1814
  %1831 = vst [vmem:[%s5 + $0x10] sm:$0xff] %v1815
  %1832 = vst [vmem:[%s5 + $0x18] sm:$0xff] %v1816
  %1833 = vst [vmem:[%s5 + $0x20] sm:$0xff] %v1817
  %1834 = vst [vmem:[%s5 + $0x28] sm:$0xff] %v1818
  %1835 = vst [vmem:[%s5 + $0x30] sm:$0xff] %v1819
  %1836 = vst [vmem:[%s5 + $0x38] sm:$0xff] %v1820
  %1837 = vst [vmem:[%s5 + $0x40] sm:$0xff] %v1821
  %1838 = vst [vmem:[%s5 + $0x48] sm:$0xff] %v1822
  %1839 = vst [vmem:[%s5 + $0x50] sm:$0xff] %v1823
  %1840 = vst [vmem:[%s5 + $0x58] sm:$0xff] %v1824
  %1841 = vst [vmem:[%s5 + $0x60] sm:$0xff] %v1825
  %1842 = vst [vmem:[%s5 + $0x68] sm:$0xff] %v1826
  %1843 = vst [vmem:[%s5 + $0x70] sm:$0xff] %v1827
  %1844 = vst [vmem:[%s5 + $0x78] sm:$0xff] %v1828
  // Predicated region
  $region22: #{vqvae_forward.11} parent=0 // pred_check
    _
  $region23: #{vqvae_forward.11} parent=0 // pred_check_branch
    %1846 = sbr.rel (0) target = $region25
  $region24: #{vqvae_forward.11} parent=0 // pred_region
    _
  $region25: #{vqvae_forward.11} parent=0 // pred_fallthru
    _
  // Predicated region
  $region26: #{vqvae_forward.11} parent=0 // pred_check
    _
  $region27: #{vqvae_forward.11} parent=0 // pred_check_branch
    %1848 = sbr.rel (0) target = $region29
  $region28: #{vqvae_forward.11} parent=0 // pred_region
    _
  $region29: #{vqvae_forward.11} parent=0 // pred_fallthru
    _

// kernel: vqvae_forward.12
$region0: #{vqvae_forward.12}
  #allocation0 [shape = 'u32[]', space=smem, size = 0x4, offset = 0x4, fixed_abs, tag = 'smem constant byte address 0x4 - core index']
  #allocation1 [shape = 'u32[144,128]{1,0:T(1,128)}', space=vmem, size = 0x12000, scoped, tag = 'internal scratch']
  %s0 = inlined_call_operand.vmem [shape: f32[32,2048], index: 0, kind: input, shape index: {}]
  %s1 = inlined_call_operand.vmem [shape: f32[2048,128], index: 1, kind: input, shape index: {}]
  %s2 = inlined_call_operand.vmem [shape: f32[1,128], index: 2, kind: input, shape index: {}]
  %s3 = inlined_call_operand.vmem [shape: f32[1,128], index: 3, kind: input, shape index: {}]
  %s4 = inlined_call_operand.vmem [shape: f32[1,128], index: 4, kind: input, shape index: {}]
  %s5 = inlined_call_operand.vmem [shape: f32[32,128], index: 5, kind: output, shape index: {}]
  %s6 = sld [smem:[#allocation0]]
  $region30: #{vqvae_forward.12} parent=0
    _
  %s8 = ssub.s32 1, %s6
  %s9 = scalar_select 0, %s8, %s6
  // Predicated region
  $region2: #{vqvae_forward.12} parent=0 // pred_check
    _
  $region3: #{vqvae_forward.12} parent=0 // pred_check_branch
    %11 = sbr.rel (0) target = $region5
  $region4: #{vqvae_forward.12} parent=0 // pred_region
    _
  $region5: #{vqvae_forward.12} parent=0 // pred_fallthru
    _
  // Predicated region
  $region6: #{vqvae_forward.12} parent=0 // pred_check
    _
  $region7: #{vqvae_forward.12} parent=0 // pred_check_branch
    %13 = sbr.rel (0) target = $region9
  $region8: #{vqvae_forward.12} parent=0 // pred_region
    _
  $region9: #{vqvae_forward.12} parent=0 // pred_fallthru
    _
  // Predicated region
  $region10: #{vqvae_forward.12} parent=0 // pred_check
    _
  $region11: #{vqvae_forward.12} parent=0 // pred_check_branch
    %15 = sbr.rel (0) target = $region13
  $region12: #{vqvae_forward.12} parent=0 // pred_region
    _
  $region13: #{vqvae_forward.12} parent=0 // pred_fallthru
    _
  // Predicated region
  $region14: #{vqvae_forward.12} parent=0 // pred_check
    _
  $region15: #{vqvae_forward.12} parent=0 // pred_check_branch
    %17 = sbr.rel (0) target = $region17
  $region16: #{vqvae_forward.12} parent=0 // pred_region
    _
  $region17: #{vqvae_forward.12} parent=0 // pred_fallthru
    _
  // Predicated region
  $region18: #{vqvae_forward.12} parent=0 // pred_check
    _
  $region19: #{vqvae_forward.12} parent=0 // pred_check_branch
    %19 = sbr.rel (0) target = $region21
  $region20: #{vqvae_forward.12} parent=0 // pred_region
    _
  $region21: #{vqvae_forward.12} parent=0 // pred_fallthru
    _
  %v20 = vld [vmem:[%s0] sm:$0xff]
  %v21 = vld [vmem:[%s0 + $0x8] sm:$0xff]
  %v22 = vld [vmem:[%s0 + $0x10] sm:$0xff]
  %v23 = vld [vmem:[%s0 + $0x18] sm:$0xff]
  %v24 = vld [vmem:[%s0 + $0x20] sm:$0xff]
  %v25 = vld [vmem:[%s0 + $0x28] sm:$0xff]
  %v26 = vld [vmem:[%s0 + $0x30] sm:$0xff]
  %v27 = vld [vmem:[%s0 + $0x38] sm:$0xff]
  %v28 = vld [vmem:[%s0 + $0x40] sm:$0xff]
  %v29 = vld [vmem:[%s0 + $0x48] sm:$0xff]
  %v30 = vld [vmem:[%s0 + $0x50] sm:$0xff]
  %v31 = vld [vmem:[%s0 + $0x58] sm:$0xff]
  %v32 = vld [vmem:[%s0 + $0x60] sm:$0xff]
  %v33 = vld [vmem:[%s0 + $0x68] sm:$0xff]
  %v34 = vld [vmem:[%s0 + $0x70] sm:$0xff]
  %v35 = vld [vmem:[%s0 + $0x78] sm:$0xff]
  %v36 = vld [vmem:[%s0 + $0x80] sm:$0xff]
  %v37 = vld [vmem:[%s0 + $0x88] sm:$0xff]
  %v38 = vld [vmem:[%s0 + $0x90] sm:$0xff]
  %v39 = vld [vmem:[%s0 + $0x98] sm:$0xff]
  %v40 = vld [vmem:[%s0 + $0xa0] sm:$0xff]
  %v41 = vld [vmem:[%s0 + $0xa8] sm:$0xff]
  %v42 = vld [vmem:[%s0 + $0xb0] sm:$0xff]
  %v43 = vld [vmem:[%s0 + $0xb8] sm:$0xff]
  %v44 = vld [vmem:[%s0 + $0xc0] sm:$0xff]
  %v45 = vld [vmem:[%s0 + $0xc8] sm:$0xff]
  %v46 = vld [vmem:[%s0 + $0xd0] sm:$0xff]
  %v47 = vld [vmem:[%s0 + $0xd8] sm:$0xff]
  %v48 = vld [vmem:[%s0 + $0xe0] sm:$0xff]
  %v49 = vld [vmem:[%s0 + $0xe8] sm:$0xff]
  %v50 = vld [vmem:[%s0 + $0xf0] sm:$0xff]
  %v51 = vld [vmem:[%s0 + $0xf8] sm:$0xff]
  %v52 = vld [vmem:[%s0 + $0x100] sm:$0xff]
  %v53 = vld [vmem:[%s0 + $0x108] sm:$0xff]
  %v54 = vld [vmem:[%s0 + $0x110] sm:$0xff]
  %v55 = vld [vmem:[%s0 + $0x118] sm:$0xff]
  %v56 = vld [vmem:[%s0 + $0x120] sm:$0xff]
  %v57 = vld [vmem:[%s0 + $0x128] sm:$0xff]
  %v58 = vld [vmem:[%s0 + $0x130] sm:$0xff]
  %v59 = vld [vmem:[%s0 + $0x138] sm:$0xff]
  %v60 = vld [vmem:[%s0 + $0x140] sm:$0xff]
  %v61 = vld [vmem:[%s0 + $0x148] sm:$0xff]
  %v62 = vld [vmem:[%s0 + $0x150] sm:$0xff]
  %v63 = vld [vmem:[%s0 + $0x158] sm:$0xff]
  %v64 = vld [vmem:[%s0 + $0x160] sm:$0xff]
  %v65 = vld [vmem:[%s0 + $0x168] sm:$0xff]
  %v66 = vld [vmem:[%s0 + $0x170] sm:$0xff]
  %v67 = vld [vmem:[%s0 + $0x178] sm:$0xff]
  %v68 = vld [vmem:[%s0 + $0x180] sm:$0xff]
  %v69 = vld [vmem:[%s0 + $0x188] sm:$0xff]
  %v70 = vld [vmem:[%s0 + $0x190] sm:$0xff]
  %v71 = vld [vmem:[%s0 + $0x198] sm:$0xff]
  %v72 = vld [vmem:[%s0 + $0x1a0] sm:$0xff]
  %v73 = vld [vmem:[%s0 + $0x1a8] sm:$0xff]
  %v74 = vld [vmem:[%s0 + $0x1b0] sm:$0xff]
  %v75 = vld [vmem:[%s0 + $0x1b8] sm:$0xff]
  %v76 = vld [vmem:[%s0 + $0x1c0] sm:$0xff]
  %v77 = vld [vmem:[%s0 + $0x1c8] sm:$0xff]
  %v78 = vld [vmem:[%s0 + $0x1d0] sm:$0xff]
  %v79 = vld [vmem:[%s0 + $0x1d8] sm:$0xff]
  %v80 = vld [vmem:[%s0 + $0x1e0] sm:$0xff]
  %v81 = vld [vmem:[%s0 + $0x1e8] sm:$0xff]
  %v82 = vld [vmem:[%s0 + $0x1f0] sm:$0xff]
  %v83 = vld [vmem:[%s0 + $0x1f8] sm:$0xff]
  %v84 = vld [vmem:[%s1] sm:$0xff]
  %v85 = vld [vmem:[%s1 + $0x8] sm:$0xff]
  %v86 = vld [vmem:[%s1 + $0x10] sm:$0xff]
  %v87 = vld [vmem:[%s1 + $0x18] sm:$0xff]
  %v88 = vld [vmem:[%s1 + $0x20] sm:$0xff]
  %v89 = vld [vmem:[%s1 + $0x28] sm:$0xff]
  %v90 = vld [vmem:[%s1 + $0x30] sm:$0xff]
  %v91 = vld [vmem:[%s1 + $0x38] sm:$0xff]
  %v92 = vld [vmem:[%s1 + $0x40] sm:$0xff]
  %v93 = vld [vmem:[%s1 + $0x48] sm:$0xff]
  %v94 = vld [vmem:[%s1 + $0x50] sm:$0xff]
  %v95 = vld [vmem:[%s1 + $0x58] sm:$0xff]
  %v96 = vld [vmem:[%s1 + $0x60] sm:$0xff]
  %v97 = vld [vmem:[%s1 + $0x68] sm:$0xff]
  %v98 = vld [vmem:[%s1 + $0x70] sm:$0xff]
  %v99 = vld [vmem:[%s1 + $0x78] sm:$0xff]
  %v100 = vld [vmem:[%s1 + $0x80] sm:$0xff]
  %v101 = vld [vmem:[%s1 + $0x88] sm:$0xff]
  %v102 = vld [vmem:[%s1 + $0x90] sm:$0xff]
  %v103 = vld [vmem:[%s1 + $0x98] sm:$0xff]
  %v104 = vld [vmem:[%s1 + $0xa0] sm:$0xff]
  %v105 = vld [vmem:[%s1 + $0xa8] sm:$0xff]
  %v106 = vld [vmem:[%s1 + $0xb0] sm:$0xff]
  %v107 = vld [vmem:[%s1 + $0xb8] sm:$0xff]
  %v108 = vld [vmem:[%s1 + $0xc0] sm:$0xff]
  %v109 = vld [vmem:[%s1 + $0xc8] sm:$0xff]
  %v110 = vld [vmem:[%s1 + $0xd0] sm:$0xff]
  %v111 = vld [vmem:[%s1 + $0xd8] sm:$0xff]
  %v112 = vld [vmem:[%s1 + $0xe0] sm:$0xff]
  %v113 = vld [vmem:[%s1 + $0xe8] sm:$0xff]
  %v114 = vld [vmem:[%s1 + $0xf0] sm:$0xff]
  %v115 = vld [vmem:[%s1 + $0xf8] sm:$0xff]
  %v116 = vld [vmem:[%s1 + $0x100] sm:$0xff]
  %v117 = vld [vmem:[%s1 + $0x108] sm:$0xff]
  %v118 = vld [vmem:[%s1 + $0x110] sm:$0xff]
  %v119 = vld [vmem:[%s1 + $0x118] sm:$0xff]
  %v120 = vld [vmem:[%s1 + $0x120] sm:$0xff]
  %v121 = vld [vmem:[%s1 + $0x128] sm:$0xff]
  %v122 = vld [vmem:[%s1 + $0x130] sm:$0xff]
  %v123 = vld [vmem:[%s1 + $0x138] sm:$0xff]
  %v124 = vld [vmem:[%s1 + $0x140] sm:$0xff]
  %v125 = vld [vmem:[%s1 + $0x148] sm:$0xff]
  %v126 = vld [vmem:[%s1 + $0x150] sm:$0xff]
  %v127 = vld [vmem:[%s1 + $0x158] sm:$0xff]
  %v128 = vld [vmem:[%s1 + $0x160] sm:$0xff]
  %v129 = vld [vmem:[%s1 + $0x168] sm:$0xff]
  %v130 = vld [vmem:[%s1 + $0x170] sm:$0xff]
  %v131 = vld [vmem:[%s1 + $0x178] sm:$0xff]
  %v132 = vld [vmem:[%s1 + $0x180] sm:$0xff]
  %v133 = vld [vmem:[%s1 + $0x188] sm:$0xff]
  %v134 = vld [vmem:[%s1 + $0x190] sm:$0xff]
  %v135 = vld [vmem:[%s1 + $0x198] sm:$0xff]
  %v136 = vld [vmem:[%s1 + $0x1a0] sm:$0xff]
  %v137 = vld [vmem:[%s1 + $0x1a8] sm:$0xff]
  %v138 = vld [vmem:[%s1 + $0x1b0] sm:$0xff]
  %v139 = vld [vmem:[%s1 + $0x1b8] sm:$0xff]
  %v140 = vld [vmem:[%s1 + $0x1c0] sm:$0xff]
  %v141 = vld [vmem:[%s1 + $0x1c8] sm:$0xff]
  %v142 = vld [vmem:[%s1 + $0x1d0] sm:$0xff]
  %v143 = vld [vmem:[%s1 + $0x1d8] sm:$0xff]
  %v144 = vld [vmem:[%s1 + $0x1e0] sm:$0xff]
  %v145 = vld [vmem:[%s1 + $0x1e8] sm:$0xff]
  %v146 = vld [vmem:[%s1 + $0x1f0] sm:$0xff]
  %v147 = vld [vmem:[%s1 + $0x1f8] sm:$0xff]
  %v148 = vld [vmem:[%s1 + $0x200] sm:$0xff]
  %v149 = vld [vmem:[%s1 + $0x208] sm:$0xff]
  %v150 = vld [vmem:[%s1 + $0x210] sm:$0xff]
  %v151 = vld [vmem:[%s1 + $0x218] sm:$0xff]
  %v152 = vld [vmem:[%s1 + $0x220] sm:$0xff]
  %v153 = vld [vmem:[%s1 + $0x228] sm:$0xff]
  %v154 = vld [vmem:[%s1 + $0x230] sm:$0xff]
  %v155 = vld [vmem:[%s1 + $0x238] sm:$0xff]
  %v156 = vld [vmem:[%s1 + $0x240] sm:$0xff]
  %v157 = vld [vmem:[%s1 + $0x248] sm:$0xff]
  %v158 = vld [vmem:[%s1 + $0x250] sm:$0xff]
  %v159 = vld [vmem:[%s1 + $0x258] sm:$0xff]
  %v160 = vld [vmem:[%s1 + $0x260] sm:$0xff]
  %v161 = vld [vmem:[%s1 + $0x268] sm:$0xff]
  %v162 = vld [vmem:[%s1 + $0x270] sm:$0xff]
  %v163 = vld [vmem:[%s1 + $0x278] sm:$0xff]
  %v164 = vld [vmem:[%s1 + $0x280] sm:$0xff]
  %v165 = vld [vmem:[%s1 + $0x288] sm:$0xff]
  %v166 = vld [vmem:[%s1 + $0x290] sm:$0xff]
  %v167 = vld [vmem:[%s1 + $0x298] sm:$0xff]
  %v168 = vld [vmem:[%s1 + $0x2a0] sm:$0xff]
  %v169 = vld [vmem:[%s1 + $0x2a8] sm:$0xff]
  %v170 = vld [vmem:[%s1 + $0x2b0] sm:$0xff]
  %v171 = vld [vmem:[%s1 + $0x2b8] sm:$0xff]
  %v172 = vld [vmem:[%s1 + $0x2c0] sm:$0xff]
  %v173 = vld [vmem:[%s1 + $0x2c8] sm:$0xff]
  %v174 = vld [vmem:[%s1 + $0x2d0] sm:$0xff]
  %v175 = vld [vmem:[%s1 + $0x2d8] sm:$0xff]
  %v176 = vld [vmem:[%s1 + $0x2e0] sm:$0xff]
  %v177 = vld [vmem:[%s1 + $0x2e8] sm:$0xff]
  %v178 = vld [vmem:[%s1 + $0x2f0] sm:$0xff]
  %v179 = vld [vmem:[%s1 + $0x2f8] sm:$0xff]
  %v180 = vld [vmem:[%s1 + $0x300] sm:$0xff]
  %v181 = vld [vmem:[%s1 + $0x308] sm:$0xff]
  %v182 = vld [vmem:[%s1 + $0x310] sm:$0xff]
  %v183 = vld [vmem:[%s1 + $0x318] sm:$0xff]
  %v184 = vld [vmem:[%s1 + $0x320] sm:$0xff]
  %v185 = vld [vmem:[%s1 + $0x328] sm:$0xff]
  %v186 = vld [vmem:[%s1 + $0x330] sm:$0xff]
  %v187 = vld [vmem:[%s1 + $0x338] sm:$0xff]
  %v188 = vld [vmem:[%s1 + $0x340] sm:$0xff]
  %v189 = vld [vmem:[%s1 + $0x348] sm:$0xff]
  %v190 = vld [vmem:[%s1 + $0x350] sm:$0xff]
  %v191 = vld [vmem:[%s1 + $0x358] sm:$0xff]
  %v192 = vld [vmem:[%s1 + $0x360] sm:$0xff]
  %v193 = vld [vmem:[%s1 + $0x368] sm:$0xff]
  %v194 = vld [vmem:[%s1 + $0x370] sm:$0xff]
  %v195 = vld [vmem:[%s1 + $0x378] sm:$0xff]
  %v196 = vld [vmem:[%s1 + $0x380] sm:$0xff]
  %v197 = vld [vmem:[%s1 + $0x388] sm:$0xff]
  %v198 = vld [vmem:[%s1 + $0x390] sm:$0xff]
  %v199 = vld [vmem:[%s1 + $0x398] sm:$0xff]
  %v200 = vld [vmem:[%s1 + $0x3a0] sm:$0xff]
  %v201 = vld [vmem:[%s1 + $0x3a8] sm:$0xff]
  %v202 = vld [vmem:[%s1 + $0x3b0] sm:$0xff]
  %v203 = vld [vmem:[%s1 + $0x3b8] sm:$0xff]
  %v204 = vld [vmem:[%s1 + $0x3c0] sm:$0xff]
  %v205 = vld [vmem:[%s1 + $0x3c8] sm:$0xff]
  %v206 = vld [vmem:[%s1 + $0x3d0] sm:$0xff]
  %v207 = vld [vmem:[%s1 + $0x3d8] sm:$0xff]
  %v208 = vld [vmem:[%s1 + $0x3e0] sm:$0xff]
  %v209 = vld [vmem:[%s1 + $0x3e8] sm:$0xff]
  %v210 = vld [vmem:[%s1 + $0x3f0] sm:$0xff]
  %v211 = vld [vmem:[%s1 + $0x3f8] sm:$0xff]
  %v212 = vld [vmem:[%s1 + $0x400] sm:$0xff]
  %v213 = vld [vmem:[%s1 + $0x408] sm:$0xff]
  %v214 = vld [vmem:[%s1 + $0x410] sm:$0xff]
  %v215 = vld [vmem:[%s1 + $0x418] sm:$0xff]
  %v216 = vld [vmem:[%s1 + $0x420] sm:$0xff]
  %v217 = vld [vmem:[%s1 + $0x428] sm:$0xff]
  %v218 = vld [vmem:[%s1 + $0x430] sm:$0xff]
  %v219 = vld [vmem:[%s1 + $0x438] sm:$0xff]
  %v220 = vld [vmem:[%s1 + $0x440] sm:$0xff]
  %v221 = vld [vmem:[%s1 + $0x448] sm:$0xff]
  %v222 = vld [vmem:[%s1 + $0x450] sm:$0xff]
  %v223 = vld [vmem:[%s1 + $0x458] sm:$0xff]
  %v224 = vld [vmem:[%s1 + $0x460] sm:$0xff]
  %v225 = vld [vmem:[%s1 + $0x468] sm:$0xff]
  %v226 = vld [vmem:[%s1 + $0x470] sm:$0xff]
  %v227 = vld [vmem:[%s1 + $0x478] sm:$0xff]
  %v228 = vld [vmem:[%s1 + $0x480] sm:$0xff]
  %v229 = vld [vmem:[%s1 + $0x488] sm:$0xff]
  %v230 = vld [vmem:[%s1 + $0x490] sm:$0xff]
  %v231 = vld [vmem:[%s1 + $0x498] sm:$0xff]
  %v232 = vld [vmem:[%s1 + $0x4a0] sm:$0xff]
  %v233 = vld [vmem:[%s1 + $0x4a8] sm:$0xff]
  %v234 = vld [vmem:[%s1 + $0x4b0] sm:$0xff]
  %v235 = vld [vmem:[%s1 + $0x4b8] sm:$0xff]
  %v236 = vld [vmem:[%s1 + $0x4c0] sm:$0xff]
  %v237 = vld [vmem:[%s1 + $0x4c8] sm:$0xff]
  %v238 = vld [vmem:[%s1 + $0x4d0] sm:$0xff]
  %v239 = vld [vmem:[%s1 + $0x4d8] sm:$0xff]
  %v240 = vld [vmem:[%s1 + $0x4e0] sm:$0xff]
  %v241 = vld [vmem:[%s1 + $0x4e8] sm:$0xff]
  %v242 = vld [vmem:[%s1 + $0x4f0] sm:$0xff]
  %v243 = vld [vmem:[%s1 + $0x4f8] sm:$0xff]
  %v244 = vld [vmem:[%s1 + $0x500] sm:$0xff]
  %v245 = vld [vmem:[%s1 + $0x508] sm:$0xff]
  %v246 = vld [vmem:[%s1 + $0x510] sm:$0xff]
  %v247 = vld [vmem:[%s1 + $0x518] sm:$0xff]
  %v248 = vld [vmem:[%s1 + $0x520] sm:$0xff]
  %v249 = vld [vmem:[%s1 + $0x528] sm:$0xff]
  %v250 = vld [vmem:[%s1 + $0x530] sm:$0xff]
  %v251 = vld [vmem:[%s1 + $0x538] sm:$0xff]
  %v252 = vld [vmem:[%s1 + $0x540] sm:$0xff]
  %v253 = vld [vmem:[%s1 + $0x548] sm:$0xff]
  %v254 = vld [vmem:[%s1 + $0x550] sm:$0xff]
  %v255 = vld [vmem:[%s1 + $0x558] sm:$0xff]
  %v256 = vld [vmem:[%s1 + $0x560] sm:$0xff]
  %v257 = vld [vmem:[%s1 + $0x568] sm:$0xff]
  %v258 = vld [vmem:[%s1 + $0x570] sm:$0xff]
  %v259 = vld [vmem:[%s1 + $0x578] sm:$0xff]
  %v260 = vld [vmem:[%s1 + $0x580] sm:$0xff]
  %v261 = vld [vmem:[%s1 + $0x588] sm:$0xff]
  %v262 = vld [vmem:[%s1 + $0x590] sm:$0xff]
  %v263 = vld [vmem:[%s1 + $0x598] sm:$0xff]
  %v264 = vld [vmem:[%s1 + $0x5a0] sm:$0xff]
  %v265 = vld [vmem:[%s1 + $0x5a8] sm:$0xff]
  %v266 = vld [vmem:[%s1 + $0x5b0] sm:$0xff]
  %v267 = vld [vmem:[%s1 + $0x5b8] sm:$0xff]
  %v268 = vld [vmem:[%s1 + $0x5c0] sm:$0xff]
  %v269 = vld [vmem:[%s1 + $0x5c8] sm:$0xff]
  %v270 = vld [vmem:[%s1 + $0x5d0] sm:$0xff]
  %v271 = vld [vmem:[%s1 + $0x5d8] sm:$0xff]
  %v272 = vld [vmem:[%s1 + $0x5e0] sm:$0xff]
  %v273 = vld [vmem:[%s1 + $0x5e8] sm:$0xff]
  %v274 = vld [vmem:[%s1 + $0x5f0] sm:$0xff]
  %v275 = vld [vmem:[%s1 + $0x5f8] sm:$0xff]
  %v276 = vld [vmem:[%s1 + $0x600] sm:$0xff]
  %v277 = vld [vmem:[%s1 + $0x608] sm:$0xff]
  %v278 = vld [vmem:[%s1 + $0x610] sm:$0xff]
  %v279 = vld [vmem:[%s1 + $0x618] sm:$0xff]
  %v280 = vld [vmem:[%s1 + $0x620] sm:$0xff]
  %v281 = vld [vmem:[%s1 + $0x628] sm:$0xff]
  %v282 = vld [vmem:[%s1 + $0x630] sm:$0xff]
  %v283 = vld [vmem:[%s1 + $0x638] sm:$0xff]
  %v284 = vld [vmem:[%s1 + $0x640] sm:$0xff]
  %v285 = vld [vmem:[%s1 + $0x648] sm:$0xff]
  %v286 = vld [vmem:[%s1 + $0x650] sm:$0xff]
  %v287 = vld [vmem:[%s1 + $0x658] sm:$0xff]
  %v288 = vld [vmem:[%s1 + $0x660] sm:$0xff]
  %v289 = vld [vmem:[%s1 + $0x668] sm:$0xff]
  %v290 = vld [vmem:[%s1 + $0x670] sm:$0xff]
  %v291 = vld [vmem:[%s1 + $0x678] sm:$0xff]
  %v292 = vld [vmem:[%s1 + $0x680] sm:$0xff]
  %v293 = vld [vmem:[%s1 + $0x688] sm:$0xff]
  %v294 = vld [vmem:[%s1 + $0x690] sm:$0xff]
  %v295 = vld [vmem:[%s1 + $0x698] sm:$0xff]
  %v296 = vld [vmem:[%s1 + $0x6a0] sm:$0xff]
  %v297 = vld [vmem:[%s1 + $0x6a8] sm:$0xff]
  %v298 = vld [vmem:[%s1 + $0x6b0] sm:$0xff]
  %v299 = vld [vmem:[%s1 + $0x6b8] sm:$0xff]
  %v300 = vld [vmem:[%s1 + $0x6c0] sm:$0xff]
  %v301 = vld [vmem:[%s1 + $0x6c8] sm:$0xff]
  %v302 = vld [vmem:[%s1 + $0x6d0] sm:$0xff]
  %v303 = vld [vmem:[%s1 + $0x6d8] sm:$0xff]
  %v304 = vld [vmem:[%s1 + $0x6e0] sm:$0xff]
  %v305 = vld [vmem:[%s1 + $0x6e8] sm:$0xff]
  %v306 = vld [vmem:[%s1 + $0x6f0] sm:$0xff]
  %v307 = vld [vmem:[%s1 + $0x6f8] sm:$0xff]
  %v308 = vld [vmem:[%s1 + $0x700] sm:$0xff]
  %v309 = vld [vmem:[%s1 + $0x708] sm:$0xff]
  %v310 = vld [vmem:[%s1 + $0x710] sm:$0xff]
  %v311 = vld [vmem:[%s1 + $0x718] sm:$0xff]
  %v312 = vld [vmem:[%s1 + $0x720] sm:$0xff]
  %v313 = vld [vmem:[%s1 + $0x728] sm:$0xff]
  %v314 = vld [vmem:[%s1 + $0x730] sm:$0xff]
  %v315 = vld [vmem:[%s1 + $0x738] sm:$0xff]
  %v316 = vld [vmem:[%s1 + $0x740] sm:$0xff]
  %v317 = vld [vmem:[%s1 + $0x748] sm:$0xff]
  %v318 = vld [vmem:[%s1 + $0x750] sm:$0xff]
  %v319 = vld [vmem:[%s1 + $0x758] sm:$0xff]
  %v320 = vld [vmem:[%s1 + $0x760] sm:$0xff]
  %v321 = vld [vmem:[%s1 + $0x768] sm:$0xff]
  %v322 = vld [vmem:[%s1 + $0x770] sm:$0xff]
  %v323 = vld [vmem:[%s1 + $0x778] sm:$0xff]
  %v324 = vld [vmem:[%s1 + $0x780] sm:$0xff]
  %v325 = vld [vmem:[%s1 + $0x788] sm:$0xff]
  %v326 = vld [vmem:[%s1 + $0x790] sm:$0xff]
  %v327 = vld [vmem:[%s1 + $0x798] sm:$0xff]
  %v328 = vld [vmem:[%s1 + $0x7a0] sm:$0xff]
  %v329 = vld [vmem:[%s1 + $0x7a8] sm:$0xff]
  %v330 = vld [vmem:[%s1 + $0x7b0] sm:$0xff]
  %v331 = vld [vmem:[%s1 + $0x7b8] sm:$0xff]
  %v332 = vld [vmem:[%s1 + $0x7c0] sm:$0xff]
  %v333 = vld [vmem:[%s1 + $0x7c8] sm:$0xff]
  %v334 = vld [vmem:[%s1 + $0x7d0] sm:$0xff]
  %v335 = vld [vmem:[%s1 + $0x7d8] sm:$0xff]
  %v336 = vld [vmem:[%s1 + $0x7e0] sm:$0xff]
  %v337 = vld [vmem:[%s1 + $0x7e8] sm:$0xff]
  %v338 = vld [vmem:[%s1 + $0x7f0] sm:$0xff]
  %v339 = vld [vmem:[%s1 + $0x7f8] sm:$0xff]
  %v340 = vld [vmem:[%s2] sm:$0x1]
  %v342 = vlaneseq
  %v343 = vshrl.u32 %v342, 7
  %v344 = vsub.s32 0, %v343
  %v345 = vrot.slane %v340, %v344
  %347 = vmatprep.subr.mxu0 0.0
  %348 = vmatpush1.msra.mxu0 %v84
  %349 = vmatprep.subr.mxu0 0.0
  %350 = vmatpush1.msra.mxu0 %v85
  %351 = vmatprep.subr.mxu0 0.0
  %352 = vmatpush1.msra.mxu0 %v86
  %353 = vmatprep.subr.mxu0 0.0
  %354 = vmatpush1.msra.mxu0 %v87
  %355 = vmatprep.subr.mxu0 0.0
  %356 = vmatpush1.msra.mxu0 %v88
  %357 = vmatprep.subr.mxu0 0.0
  %358 = vmatpush1.msra.mxu0 %v89
  %359 = vmatprep.subr.mxu0 0.0
  %360 = vmatpush1.msra.mxu0 %v90
  %361 = vmatprep.subr.mxu0 0.0
  %362 = vmatpush1.msra.mxu0 %v91
  %363 = vmatprep.subr.mxu0 0.0
  %364 = vmatpush1.msra.mxu0 %v92
  %365 = vmatprep.subr.mxu0 0.0
  %366 = vmatpush1.msra.mxu0 %v93
  %367 = vmatprep.subr.mxu0 0.0
  %368 = vmatpush1.msra.mxu0 %v94
  %369 = vmatprep.subr.mxu0 0.0
  %370 = vmatpush1.msra.mxu0 %v95
  %371 = vmatprep.subr.mxu0 0.0
  %372 = vmatpush1.msra.mxu0 %v96
  %373 = vmatprep.subr.mxu0 0.0
  %374 = vmatpush1.msra.mxu0 %v97
  %375 = vmatprep.subr.mxu0 0.0
  %376 = vmatpush1.msra.mxu0 %v98
  %377 = vmatprep.subr.mxu0 0.0
  %378 = vmatpush1.msra.mxu0 %v99
  %379 = vmatprep.subr.mxu0 0.0
  %380 = vmatpush1.msra.mxu0 %v100
  %381 = vmatprep.subr.mxu0 0.0
  %382 = vmatpush1.msra.mxu0 %v101
  %383 = vmatprep.subr.mxu0 0.0
  %384 = vmatpush1.msra.mxu0 %v102
  %385 = vmatprep.subr.mxu0 0.0
  %386 = vmatpush1.msra.mxu0 %v103
  %387 = vmatprep.subr.mxu0 0.0
  %388 = vmatpush1.msra.mxu0 %v104
  %389 = vmatprep.subr.mxu0 0.0
  %390 = vmatpush1.msra.mxu0 %v105
  %391 = vmatprep.subr.mxu0 0.0
  %392 = vmatpush1.msra.mxu0 %v106
  %393 = vmatprep.subr.mxu0 0.0
  %394 = vmatpush1.msra.mxu0 %v107
  %395 = vmatprep.subr.mxu0 0.0
  %396 = vmatpush1.msra.mxu0 %v108
  %397 = vmatprep.subr.mxu0 0.0
  %398 = vmatpush1.msra.mxu0 %v109
  %399 = vmatprep.subr.mxu0 0.0
  %400 = vmatpush1.msra.mxu0 %v110
  %401 = vmatprep.subr.mxu0 0.0
  %402 = vmatpush1.msra.mxu0 %v111
  %403 = vmatprep.subr.mxu0 0.0
  %404 = vmatpush1.msra.mxu0 %v112
  %405 = vmatprep.subr.mxu0 0.0
  %406 = vmatpush1.msra.mxu0 %v113
  %407 = vmatprep.subr.mxu0 0.0
  %408 = vmatpush1.msra.mxu0 %v114
  %409 = vmatprep.subr.mxu0 0.0
  %410 = vmatpush1.msra.mxu0 %v115
  %411 = vmatprep.mubr.f32.mxu0 %v21
  %412 = vmatmul.mubr.f32.gmra.mrb[0].mxu0 %v20
  %v413 = vpop.f32.mrb[0].mxu0
  %v414 = vadd.f32 %v345, %v413
  %v415 = vpop.f32.mrb[0].mxu0
  %416 = vmatprep.mubr.f32.mxu0 %v37
  %417 = vmatmul.mubr.f32.gmra.mrb[0].mxu0 %v36
  %v418 = vpop.f32.mrb[0].mxu0
  %v419 = vadd.f32 %v345, %v418
  %v420 = vpop.f32.mrb[0].mxu0
  %421 = vmatprep.mubr.f32.mxu0 %v53
  %422 = vmatmul.mubr.f32.gmra.mrb[0].mxu0 %v52
  %v423 = vpop.f32.mrb[0].mxu0
  %v424 = vadd.f32 %v345, %v423
  %v425 = vpop.f32.mrb[0].mxu0
  %426 = vmatprep.mubr.f32.mxu0 %v69
  %427 = vmatmul.mubr.f32.gmra.mrb[0].mxu0 %v68
  %v428 = vpop.f32.mrb[0].mxu0
  %v429 = vadd.f32 %v345, %v428
  %v430 = vpop.f32.mrb[0].mxu0
  %431 = vdwg.mxu0
  %432 = vmatprep.subr.mxu0 0.0
  %433 = vmatpush1.msra.mxu0 %v116
  %434 = vmatprep.subr.mxu0 0.0
  %435 = vmatpush1.msra.mxu0 %v117
  %436 = vmatprep.subr.mxu0 0.0
  %437 = vmatpush1.msra.mxu0 %v118
  %438 = vmatprep.subr.mxu0 0.0
  %439 = vmatpush1.msra.mxu0 %v119
  %440 = vmatprep.subr.mxu0 0.0
  %441 = vmatpush1.msra.mxu0 %v120
  %442 = vmatprep.subr.mxu0 0.0
  %443 = vmatpush1.msra.mxu0 %v121
  %444 = vmatprep.subr.mxu0 0.0
  %445 = vmatpush1.msra.mxu0 %v122
  %446 = vmatprep.subr.mxu0 0.0
  %447 = vmatpush1.msra.mxu0 %v123
  %448 = vmatprep.subr.mxu0 0.0
  %449 = vmatpush1.msra.mxu0 %v124
  %450 = vmatprep.subr.mxu0 0.0
  %451 = vmatpush1.msra.mxu0 %v125
  %452 = vmatprep.subr.mxu0 0.0
  %453 = vmatpush1.msra.mxu0 %v126
  %454 = vmatprep.subr.mxu0 0.0
  %455 = vmatpush1.msra.mxu0 %v127
  %456 = vmatprep.subr.mxu0 0.0
  %457 = vmatpush1.msra.mxu0 %v128
  %458 = vmatprep.subr.mxu0 0.0
  %459 = vmatpush1.msra.mxu0 %v129
  %460 = vmatprep.subr.mxu0 0.0
  %461 = vmatpush1.msra.mxu0 %v130
  %462 = vmatprep.subr.mxu0 0.0
  %463 = vmatpush1.msra.mxu0 %v131
  %464 = vmatprep.subr.mxu0 0.0
  %465 = vmatpush1.msra.mxu0 %v132
  %466 = vmatprep.subr.mxu0 0.0
  %467 = vmatpush1.msra.mxu0 %v133
  %468 = vmatprep.subr.mxu0 0.0
  %469 = vmatpush1.msra.mxu0 %v134
  %470 = vmatprep.subr.mxu0 0.0
  %471 = vmatpush1.msra.mxu0 %v135
  %472 = vmatprep.subr.mxu0 0.0
  %473 = vmatpush1.msra.mxu0 %v136
  %474 = vmatprep.subr.mxu0 0.0
  %475 = vmatpush1.msra.mxu0 %v137
  %476 = vmatprep.subr.mxu0 0.0
  %477 = vmatpush1.msra.mxu0 %v138
  %478 = vmatprep.subr.mxu0 0.0
  %479 = vmatpush1.msra.mxu0 %v139
  %480 = vmatprep.subr.mxu0 0.0
  %481 = vmatpush1.msra.mxu0 %v140
  %482 = vmatprep.subr.mxu0 0.0
  %483 = vmatpush1.msra.mxu0 %v141
  %484 = vmatprep.subr.mxu0 0.0
  %485 = vmatpush1.msra.mxu0 %v142
  %486 = vmatprep.subr.mxu0 0.0
  %487 = vmatpush1.msra.mxu0 %v143
  %488 = vmatprep.subr.mxu0 0.0
  %489 = vmatpush1.msra.mxu0 %v144
  %490 = vmatprep.subr.mxu0 0.0
  %491 = vmatpush1.msra.mxu0 %v145
  %492 = vmatprep.subr.mxu0 0.0
  %493 = vmatpush1.msra.mxu0 %v146
  %494 = vmatprep.subr.mxu0 0.0
  %495 = vmatpush1.msra.mxu0 %v147
  %496 = vmatprep.mubr.f32.mxu0 %v23
  %497 = vmatmul.mubr.f32.gmra.mrb[0].mxu0 %v22
  %v498 = vpop.f32.mrb[0].mxu0
  %v499 = vadd.f32 %v414, %v498
  %v500 = vpop.f32.mrb[0].mxu0
  %501 = vmatprep.mubr.f32.mxu0 %v39
  %502 = vmatmul.mubr.f32.gmra.mrb[0].mxu0 %v38
  %v503 = vpop.f32.mrb[0].mxu0
  %v504 = vadd.f32 %v419, %v503
  %v505 = vpop.f32.mrb[0].mxu0
  %506 = vmatprep.mubr.f32.mxu0 %v55
  %507 = vmatmul.mubr.f32.gmra.mrb[0].mxu0 %v54
  %v508 = vpop.f32.mrb[0].mxu0
  %v509 = vadd.f32 %v424, %v508
  %v510 = vpop.f32.mrb[0].mxu0
  %511 = vmatprep.mubr.f32.mxu0 %v71
  %512 = vmatmul.mubr.f32.gmra.mrb[0].mxu0 %v70
  %v513 = vpop.f32.mrb[0].mxu0
  %v514 = vadd.f32 %v429, %v513
  %v515 = vpop.f32.mrb[0].mxu0
  %516 = vdwg.mxu0
  %517 = vmatprep.subr.mxu0 0.0
  %518 = vmatpush1.msra.mxu0 %v148
  %519 = vmatprep.subr.mxu0 0.0
  %520 = vmatpush1.msra.mxu0 %v149
  %521 = vmatprep.subr.mxu0 0.0
  %522 = vmatpush1.msra.mxu0 %v150
  %523 = vmatprep.subr.mxu0 0.0
  %524 = vmatpush1.msra.mxu0 %v151
  %525 = vmatprep.subr.mxu0 0.0
  %526 = vmatpush1.msra.mxu0 %v152
  %527 = vmatprep.subr.mxu0 0.0
  %528 = vmatpush1.msra.mxu0 %v153
  %529 = vmatprep.subr.mxu0 0.0
  %530 = vmatpush1.msra.mxu0 %v154
  %531 = vmatprep.subr.mxu0 0.0
  %532 = vmatpush1.msra.mxu0 %v155
  %533 = vmatprep.subr.mxu0 0.0
  %534 = vmatpush1.msra.mxu0 %v156
  %535 = vmatprep.subr.mxu0 0.0
  %536 = vmatpush1.msra.mxu0 %v157
  %537 = vmatprep.subr.mxu0 0.0
  %538 = vmatpush1.msra.mxu0 %v158
  %539 = vmatprep.subr.mxu0 0.0
  %540 = vmatpush1.msra.mxu0 %v159
  %541 = vmatprep.subr.mxu0 0.0
  %542 = vmatpush1.msra.mxu0 %v160
  %543 = vmatprep.subr.mxu0 0.0
  %544 = vmatpush1.msra.mxu0 %v161
  %545 = vmatprep.subr.mxu0 0.0
  %546 = vmatpush1.msra.mxu0 %v162
  %547 = vmatprep.subr.mxu0 0.0
  %548 = vmatpush1.msra.mxu0 %v163
  %549 = vmatprep.subr.mxu0 0.0
  %550 = vmatpush1.msra.mxu0 %v164
  %551 = vmatprep.subr.mxu0 0.0
  %552 = vmatpush1.msra.mxu0 %v165
  %553 = vmatprep.subr.mxu0 0.0
  %554 = vmatpush1.msra.mxu0 %v166
  %555 = vmatprep.subr.mxu0 0.0
  %556 = vmatpush1.msra.mxu0 %v167
  %557 = vmatprep.subr.mxu0 0.0
  %558 = vmatpush1.msra.mxu0 %v168
  %559 = vmatprep.subr.mxu0 0.0
  %560 = vmatpush1.msra.mxu0 %v169
  %561 = vmatprep.subr.mxu0 0.0
  %562 = vmatpush1.msra.mxu0 %v170
  %563 = vmatprep.subr.mxu0 0.0
  %564 = vmatpush1.msra.mxu0 %v171
  %565 = vmatprep.subr.mxu0 0.0
  %566 = vmatpush1.msra.mxu0 %v172
  %567 = vmatprep.subr.mxu0 0.0
  %568 = vmatpush1.msra.mxu0 %v173
  %569 = vmatprep.subr.mxu0 0.0
  %570 = vmatpush1.msra.mxu0 %v174
  %571 = vmatprep.subr.mxu0 0.0
  %572 = vmatpush1.msra.mxu0 %v175
  %573 = vmatprep.subr.mxu0 0.0
  %574 = vmatpush1.msra.mxu0 %v176
  %575 = vmatprep.subr.mxu0 0.0
  %576 = vmatpush1.msra.mxu0 %v177
  %577 = vmatprep.subr.mxu0 0.0
  %578 = vmatpush1.msra.mxu0 %v178
  %579 = vmatprep.subr.mxu0 0.0
  %580 = vmatpush1.msra.mxu0 %v179
  %581 = vmatprep.mubr.f32.mxu0 %v25
  %582 = vmatmul.mubr.f32.gmra.mrb[0].mxu0 %v24
  %v583 = vpop.f32.mrb[0].mxu0
  %v584 = vadd.f32 %v499, %v583
  %v585 = vpop.f32.mrb[0].mxu0
  %586 = vmatprep.mubr.f32.mxu0 %v41
  %587 = vmatmul.mubr.f32.gmra.mrb[0].mxu0 %v40
  %v588 = vpop.f32.mrb[0].mxu0
  %v589 = vadd.f32 %v504, %v588
  %v590 = vpop.f32.mrb[0].mxu0
  %591 = vmatprep.mubr.f32.mxu0 %v57
  %592 = vmatmul.mubr.f32.gmra.mrb[0].mxu0 %v56
  %v593 = vpop.f32.mrb[0].mxu0
  %v594 = vadd.f32 %v509, %v593
  %v595 = vpop.f32.mrb[0].mxu0
  %596 = vmatprep.mubr.f32.mxu0 %v73
  %597 = vmatmul.mubr.f32.gmra.mrb[0].mxu0 %v72
  %v598 = vpop.f32.mrb[0].mxu0
  %v599 = vadd.f32 %v514, %v598
  %v600 = vpop.f32.mrb[0].mxu0
  %601 = vdwg.mxu0
  %602 = vmatprep.subr.mxu0 0.0
  %603 = vmatpush1.msra.mxu0 %v180
  %604 = vmatprep.subr.mxu0 0.0
  %605 = vmatpush1.msra.mxu0 %v181
  %606 = vmatprep.subr.mxu0 0.0
  %607 = vmatpush1.msra.mxu0 %v182
  %608 = vmatprep.subr.mxu0 0.0
  %609 = vmatpush1.msra.mxu0 %v183
  %610 = vmatprep.subr.mxu0 0.0
  %611 = vmatpush1.msra.mxu0 %v184
  %612 = vmatprep.subr.mxu0 0.0
  %613 = vmatpush1.msra.mxu0 %v185
  %614 = vmatprep.subr.mxu0 0.0
  %615 = vmatpush1.msra.mxu0 %v186
  %616 = vmatprep.subr.mxu0 0.0
  %617 = vmatpush1.msra.mxu0 %v187
  %618 = vmatprep.subr.mxu0 0.0
  %619 = vmatpush1.msra.mxu0 %v188
  %620 = vmatprep.subr.mxu0 0.0
  %621 = vmatpush1.msra.mxu0 %v189
  %622 = vmatprep.subr.mxu0 0.0
  %623 = vmatpush1.msra.mxu0 %v190
  %624 = vmatprep.subr.mxu0 0.0
  %625 = vmatpush1.msra.mxu0 %v191
  %626 = vmatprep.subr.mxu0 0.0
  %627 = vmatpush1.msra.mxu0 %v192
  %628 = vmatprep.subr.mxu0 0.0
  %629 = vmatpush1.msra.mxu0 %v193
  %630 = vmatprep.subr.mxu0 0.0
  %631 = vmatpush1.msra.mxu0 %v194
  %632 = vmatprep.subr.mxu0 0.0
  %633 = vmatpush1.msra.mxu0 %v195
  %634 = vmatprep.subr.mxu0 0.0
  %635 = vmatpush1.msra.mxu0 %v196
  %636 = vmatprep.subr.mxu0 0.0
  %637 = vmatpush1.msra.mxu0 %v197
  %638 = vmatprep.subr.mxu0 0.0
  %639 = vmatpush1.msra.mxu0 %v198
  %640 = vmatprep.subr.mxu0 0.0
  %641 = vmatpush1.msra.mxu0 %v199
  %642 = vmatprep.subr.mxu0 0.0
  %643 = vmatpush1.msra.mxu0 %v200
  %644 = vmatprep.subr.mxu0 0.0
  %645 = vmatpush1.msra.mxu0 %v201
  %646 = vmatprep.subr.mxu0 0.0
  %647 = vmatpush1.msra.mxu0 %v202
  %648 = vmatprep.subr.mxu0 0.0
  %649 = vmatpush1.msra.mxu0 %v203
  %650 = vmatprep.subr.mxu0 0.0
  %651 = vmatpush1.msra.mxu0 %v204
  %652 = vmatprep.subr.mxu0 0.0
  %653 = vmatpush1.msra.mxu0 %v205
  %654 = vmatprep.subr.mxu0 0.0
  %655 = vmatpush1.msra.mxu0 %v206
  %656 = vmatprep.subr.mxu0 0.0
  %657 = vmatpush1.msra.mxu0 %v207
  %658 = vmatprep.subr.mxu0 0.0
  %659 = vmatpush1.msra.mxu0 %v208
  %660 = vmatprep.subr.mxu0 0.0
  %661 = vmatpush1.msra.mxu0 %v209
  %662 = vmatprep.subr.mxu0 0.0
  %663 = vmatpush1.msra.mxu0 %v210
  %664 = vmatprep.subr.mxu0 0.0
  %665 = vmatpush1.msra.mxu0 %v211
  %666 = vmatprep.mubr.f32.mxu0 %v27
  %667 = vmatmul.mubr.f32.gmra.mrb[0].mxu0 %v26
  %v668 = vpop.f32.mrb[0].mxu0
  %v669 = vadd.f32 %v584, %v668
  %v670 = vpop.f32.mrb[0].mxu0
  %671 = vmatprep.mubr.f32.mxu0 %v43
  %672 = vmatmul.mubr.f32.gmra.mrb[0].mxu0 %v42
  %v673 = vpop.f32.mrb[0].mxu0
  %v674 = vadd.f32 %v589, %v673
  %v675 = vpop.f32.mrb[0].mxu0
  %676 = vmatprep.mubr.f32.mxu0 %v59
  %677 = vmatmul.mubr.f32.gmra.mrb[0].mxu0 %v58
  %v678 = vpop.f32.mrb[0].mxu0
  %v679 = vadd.f32 %v594, %v678
  %v680 = vpop.f32.mrb[0].mxu0
  %681 = vmatprep.mubr.f32.mxu0 %v75
  %682 = vmatmul.mubr.f32.gmra.mrb[0].mxu0 %v74
  %v683 = vpop.f32.mrb[0].mxu0
  %v684 = vadd.f32 %v599, %v683
  %v685 = vpop.f32.mrb[0].mxu0
  %686 = vdwg.mxu0
  %687 = vmatprep.subr.mxu0 0.0
  %688 = vmatpush1.msra.mxu0 %v212
  %689 = vmatprep.subr.mxu0 0.0
  %690 = vmatpush1.msra.mxu0 %v213
  %691 = vmatprep.subr.mxu0 0.0
  %692 = vmatpush1.msra.mxu0 %v214
  %693 = vmatprep.subr.mxu0 0.0
  %694 = vmatpush1.msra.mxu0 %v215
  %695 = vmatprep.subr.mxu0 0.0
  %696 = vmatpush1.msra.mxu0 %v216
  %697 = vmatprep.subr.mxu0 0.0
  %698 = vmatpush1.msra.mxu0 %v217
  %699 = vmatprep.subr.mxu0 0.0
  %700 = vmatpush1.msra.mxu0 %v218
  %701 = vmatprep.subr.mxu0 0.0
  %702 = vmatpush1.msra.mxu0 %v219
  %703 = vmatprep.subr.mxu0 0.0
  %704 = vmatpush1.msra.mxu0 %v220
  %705 = vmatprep.subr.mxu0 0.0
  %706 = vmatpush1.msra.mxu0 %v221
  %707 = vmatprep.subr.mxu0 0.0
  %708 = vmatpush1.msra.mxu0 %v222
  %709 = vmatprep.subr.mxu0 0.0
  %710 = vmatpush1.msra.mxu0 %v223
  %711 = vmatprep.subr.mxu0 0.0
  %712 = vmatpush1.msra.mxu0 %v224
  %713 = vmatprep.subr.mxu0 0.0
  %714 = vmatpush1.msra.mxu0 %v225
  %715 = vmatprep.subr.mxu0 0.0
  %716 = vmatpush1.msra.mxu0 %v226
  %717 = vmatprep.subr.mxu0 0.0
  %718 = vmatpush1.msra.mxu0 %v227
  %719 = vmatprep.subr.mxu0 0.0
  %720 = vmatpush1.msra.mxu0 %v228
  %721 = vmatprep.subr.mxu0 0.0
  %722 = vmatpush1.msra.mxu0 %v229
  %723 = vmatprep.subr.mxu0 0.0
  %724 = vmatpush1.msra.mxu0 %v230
  %725 = vmatprep.subr.mxu0 0.0
  %726 = vmatpush1.msra.mxu0 %v231
  %727 = vmatprep.subr.mxu0 0.0
  %728 = vmatpush1.msra.mxu0 %v232
  %729 = vmatprep.subr.mxu0 0.0
  %730 = vmatpush1.msra.mxu0 %v233
  %731 = vmatprep.subr.mxu0 0.0
  %732 = vmatpush1.msra.mxu0 %v234
  %733 = vmatprep.subr.mxu0 0.0
  %734 = vmatpush1.msra.mxu0 %v235
  %735 = vmatprep.subr.mxu0 0.0
  %736 = vmatpush1.msra.mxu0 %v236
  %737 = vmatprep.subr.mxu0 0.0
  %738 = vmatpush1.msra.mxu0 %v237
  %739 = vmatprep.subr.mxu0 0.0
  %740 = vmatpush1.msra.mxu0 %v238
  %741 = vmatprep.subr.mxu0 0.0
  %742 = vmatpush1.msra.mxu0 %v239
  %743 = vmatprep.subr.mxu0 0.0
  %744 = vmatpush1.msra.mxu0 %v240
  %745 = vmatprep.subr.mxu0 0.0
  %746 = vmatpush1.msra.mxu0 %v241
  %747 = vmatprep.subr.mxu0 0.0
  %748 = vmatpush1.msra.mxu0 %v242
  %749 = vmatprep.subr.mxu0 0.0
  %750 = vmatpush1.msra.mxu0 %v243
  %751 = vmatprep.mubr.f32.mxu0 %v29
  %752 = vmatmul.mubr.f32.gmra.mrb[0].mxu0 %v28
  %v753 = vpop.f32.mrb[0].mxu0
  %v754 = vadd.f32 %v669, %v753
  %v755 = vpop.f32.mrb[0].mxu0
  %756 = vmatprep.mubr.f32.mxu0 %v45
  %757 = vmatmul.mubr.f32.gmra.mrb[0].mxu0 %v44
  %v758 = vpop.f32.mrb[0].mxu0
  %v759 = vadd.f32 %v674, %v758
  %v760 = vpop.f32.mrb[0].mxu0
  %761 = vmatprep.mubr.f32.mxu0 %v61
  %762 = vmatmul.mubr.f32.gmra.mrb[0].mxu0 %v60
  %v763 = vpop.f32.mrb[0].mxu0
  %v764 = vadd.f32 %v679, %v763
  %v765 = vpop.f32.mrb[0].mxu0
  %766 = vmatprep.mubr.f32.mxu0 %v77
  %767 = vmatmul.mubr.f32.gmra.mrb[0].mxu0 %v76
  %v768 = vpop.f32.mrb[0].mxu0
  %v769 = vadd.f32 %v684, %v768
  %v770 = vpop.f32.mrb[0].mxu0
  %771 = vdwg.mxu0
  %772 = vmatprep.subr.mxu0 0.0
  %773 = vmatpush1.msra.mxu0 %v244
  %774 = vmatprep.subr.mxu0 0.0
  %775 = vmatpush1.msra.mxu0 %v245
  %776 = vmatprep.subr.mxu0 0.0
  %777 = vmatpush1.msra.mxu0 %v246
  %778 = vmatprep.subr.mxu0 0.0
  %779 = vmatpush1.msra.mxu0 %v247
  %780 = vmatprep.subr.mxu0 0.0
  %781 = vmatpush1.msra.mxu0 %v248
  %782 = vmatprep.subr.mxu0 0.0
  %783 = vmatpush1.msra.mxu0 %v249
  %784 = vmatprep.subr.mxu0 0.0
  %785 = vmatpush1.msra.mxu0 %v250
  %786 = vmatprep.subr.mxu0 0.0
  %787 = vmatpush1.msra.mxu0 %v251
  %788 = vmatprep.subr.mxu0 0.0
  %789 = vmatpush1.msra.mxu0 %v252
  %790 = vmatprep.subr.mxu0 0.0
  %791 = vmatpush1.msra.mxu0 %v253
  %792 = vmatprep.subr.mxu0 0.0
  %793 = vmatpush1.msra.mxu0 %v254
  %794 = vmatprep.subr.mxu0 0.0
  %795 = vmatpush1.msra.mxu0 %v255
  %796 = vmatprep.subr.mxu0 0.0
  %797 = vmatpush1.msra.mxu0 %v256
  %798 = vmatprep.subr.mxu0 0.0
  %799 = vmatpush1.msra.mxu0 %v257
  %800 = vmatprep.subr.mxu0 0.0
  %801 = vmatpush1.msra.mxu0 %v258
  %802 = vmatprep.subr.mxu0 0.0
  %803 = vmatpush1.msra.mxu0 %v259
  %804 = vmatprep.subr.mxu0 0.0
  %805 = vmatpush1.msra.mxu0 %v260
  %806 = vmatprep.subr.mxu0 0.0
  %807 = vmatpush1.msra.mxu0 %v261
  %808 = vmatprep.subr.mxu0 0.0
  %809 = vmatpush1.msra.mxu0 %v262
  %810 = vmatprep.subr.mxu0 0.0
  %811 = vmatpush1.msra.mxu0 %v263
  %812 = vmatprep.subr.mxu0 0.0
  %813 = vmatpush1.msra.mxu0 %v264
  %814 = vmatprep.subr.mxu0 0.0
  %815 = vmatpush1.msra.mxu0 %v265
  %816 = vmatprep.subr.mxu0 0.0
  %817 = vmatpush1.msra.mxu0 %v266
  %818 = vmatprep.subr.mxu0 0.0
  %819 = vmatpush1.msra.mxu0 %v267
  %820 = vmatprep.subr.mxu0 0.0
  %821 = vmatpush1.msra.mxu0 %v268
  %822 = vmatprep.subr.mxu0 0.0
  %823 = vmatpush1.msra.mxu0 %v269
  %824 = vmatprep.subr.mxu0 0.0
  %825 = vmatpush1.msra.mxu0 %v270
  %826 = vmatprep.subr.mxu0 0.0
  %827 = vmatpush1.msra.mxu0 %v271
  %828 = vmatprep.subr.mxu0 0.0
  %829 = vmatpush1.msra.mxu0 %v272
  %830 = vmatprep.subr.mxu0 0.0
  %831 = vmatpush1.msra.mxu0 %v273
  %832 = vmatprep.subr.mxu0 0.0
  %833 = vmatpush1.msra.mxu0 %v274
  %834 = vmatprep.subr.mxu0 0.0
  %835 = vmatpush1.msra.mxu0 %v275
  %836 = vmatprep.mubr.f32.mxu0 %v31
  %837 = vmatmul.mubr.f32.gmra.mrb[0].mxu0 %v30
  %v838 = vpop.f32.mrb[0].mxu0
  %v839 = vadd.f32 %v754, %v838
  %v840 = vpop.f32.mrb[0].mxu0
  %841 = vmatprep.mubr.f32.mxu0 %v47
  %842 = vmatmul.mubr.f32.gmra.mrb[0].mxu0 %v46
  %v843 = vpop.f32.mrb[0].mxu0
  %v844 = vadd.f32 %v759, %v843
  %v845 = vpop.f32.mrb[0].mxu0
  %846 = vmatprep.mubr.f32.mxu0 %v63
  %847 = vmatmul.mubr.f32.gmra.mrb[0].mxu0 %v62
  %v848 = vpop.f32.mrb[0].mxu0
  %v849 = vadd.f32 %v764, %v848
  %v850 = vpop.f32.mrb[0].mxu0
  %851 = vmatprep.mubr.f32.mxu0 %v79
  %852 = vmatmul.mubr.f32.gmra.mrb[0].mxu0 %v78
  %v853 = vpop.f32.mrb[0].mxu0
  %v854 = vadd.f32 %v769, %v853
  %v855 = vpop.f32.mrb[0].mxu0
  %856 = vdwg.mxu0
  %857 = vmatprep.subr.mxu0 0.0
  %858 = vmatpush1.msra.mxu0 %v276
  %859 = vmatprep.subr.mxu0 0.0
  %860 = vmatpush1.msra.mxu0 %v277
  %861 = vmatprep.subr.mxu0 0.0
  %862 = vmatpush1.msra.mxu0 %v278
  %863 = vmatprep.subr.mxu0 0.0
  %864 = vmatpush1.msra.mxu0 %v279
  %865 = vmatprep.subr.mxu0 0.0
  %866 = vmatpush1.msra.mxu0 %v280
  %867 = vmatprep.subr.mxu0 0.0
  %868 = vmatpush1.msra.mxu0 %v281
  %869 = vmatprep.subr.mxu0 0.0
  %870 = vmatpush1.msra.mxu0 %v282
  %871 = vmatprep.subr.mxu0 0.0
  %872 = vmatpush1.msra.mxu0 %v283
  %873 = vmatprep.subr.mxu0 0.0
  %874 = vmatpush1.msra.mxu0 %v284
  %875 = vmatprep.subr.mxu0 0.0
  %876 = vmatpush1.msra.mxu0 %v285
  %877 = vmatprep.subr.mxu0 0.0
  %878 = vmatpush1.msra.mxu0 %v286
  %879 = vmatprep.subr.mxu0 0.0
  %880 = vmatpush1.msra.mxu0 %v287
  %881 = vmatprep.subr.mxu0 0.0
  %882 = vmatpush1.msra.mxu0 %v288
  %883 = vmatprep.subr.mxu0 0.0
  %884 = vmatpush1.msra.mxu0 %v289
  %885 = vmatprep.subr.mxu0 0.0
  %886 = vmatpush1.msra.mxu0 %v290
  %887 = vmatprep.subr.mxu0 0.0
  %888 = vmatpush1.msra.mxu0 %v291
  %889 = vmatprep.subr.mxu0 0.0
  %890 = vmatpush1.msra.mxu0 %v292
  %891 = vmatprep.subr.mxu0 0.0
  %892 = vmatpush1.msra.mxu0 %v293
  %893 = vmatprep.subr.mxu0 0.0
  %894 = vmatpush1.msra.mxu0 %v294
  %895 = vmatprep.subr.mxu0 0.0
  %896 = vmatpush1.msra.mxu0 %v295
  %897 = vmatprep.subr.mxu0 0.0
  %898 = vmatpush1.msra.mxu0 %v296
  %899 = vmatprep.subr.mxu0 0.0
  %900 = vmatpush1.msra.mxu0 %v297
  %901 = vmatprep.subr.mxu0 0.0
  %902 = vmatpush1.msra.mxu0 %v298
  %903 = vmatprep.subr.mxu0 0.0
  %904 = vmatpush1.msra.mxu0 %v299
  %905 = vmatprep.subr.mxu0 0.0
  %906 = vmatpush1.msra.mxu0 %v300
  %907 = vmatprep.subr.mxu0 0.0
  %908 = vmatpush1.msra.mxu0 %v301
  %909 = vmatprep.subr.mxu0 0.0
  %910 = vmatpush1.msra.mxu0 %v302
  %911 = vmatprep.subr.mxu0 0.0
  %912 = vmatpush1.msra.mxu0 %v303
  %913 = vmatprep.subr.mxu0 0.0
  %914 = vmatpush1.msra.mxu0 %v304
  %915 = vmatprep.subr.mxu0 0.0
  %916 = vmatpush1.msra.mxu0 %v305
  %917 = vmatprep.subr.mxu0 0.0
  %918 = vmatpush1.msra.mxu0 %v306
  %919 = vmatprep.subr.mxu0 0.0
  %920 = vmatpush1.msra.mxu0 %v307
  %921 = vmatprep.mubr.f32.mxu0 %v33
  %922 = vmatmul.mubr.f32.gmra.mrb[0].mxu0 %v32
  %v923 = vpop.f32.mrb[0].mxu0
  %v924 = vadd.f32 %v839, %v923
  %v925 = vpop.f32.mrb[0].mxu0
  %926 = vmatprep.mubr.f32.mxu0 %v49
  %927 = vmatmul.mubr.f32.gmra.mrb[0].mxu0 %v48
  %v928 = vpop.f32.mrb[0].mxu0
  %v929 = vadd.f32 %v844, %v928
  %v930 = vpop.f32.mrb[0].mxu0
  %931 = vmatprep.mubr.f32.mxu0 %v65
  %932 = vmatmul.mubr.f32.gmra.mrb[0].mxu0 %v64
  %v933 = vpop.f32.mrb[0].mxu0
  %v934 = vadd.f32 %v849, %v933
  %v935 = vpop.f32.mrb[0].mxu0
  %936 = vmatprep.mubr.f32.mxu0 %v81
  %937 = vmatmul.mubr.f32.gmra.mrb[0].mxu0 %v80
  %v938 = vpop.f32.mrb[0].mxu0
  %v939 = vadd.f32 %v854, %v938
  %v940 = vpop.f32.mrb[0].mxu0
  %941 = vdwg.mxu0
  %942 = vmatprep.subr.mxu0 0.0
  %943 = vmatpush1.msra.mxu0 %v308
  %944 = vmatprep.subr.mxu0 0.0
  %945 = vmatpush1.msra.mxu0 %v309
  %946 = vmatprep.subr.mxu0 0.0
  %947 = vmatpush1.msra.mxu0 %v310
  %948 = vmatprep.subr.mxu0 0.0
  %949 = vmatpush1.msra.mxu0 %v311
  %950 = vmatprep.subr.mxu0 0.0
  %951 = vmatpush1.msra.mxu0 %v312
  %952 = vmatprep.subr.mxu0 0.0
  %953 = vmatpush1.msra.mxu0 %v313
  %954 = vmatprep.subr.mxu0 0.0
  %955 = vmatpush1.msra.mxu0 %v314
  %956 = vmatprep.subr.mxu0 0.0
  %957 = vmatpush1.msra.mxu0 %v315
  %958 = vmatprep.subr.mxu0 0.0
  %959 = vmatpush1.msra.mxu0 %v316
  %960 = vmatprep.subr.mxu0 0.0
  %961 = vmatpush1.msra.mxu0 %v317
  %962 = vmatprep.subr.mxu0 0.0
  %963 = vmatpush1.msra.mxu0 %v318
  %964 = vmatprep.subr.mxu0 0.0
  %965 = vmatpush1.msra.mxu0 %v319
  %966 = vmatprep.subr.mxu0 0.0
  %967 = vmatpush1.msra.mxu0 %v320
  %968 = vmatprep.subr.mxu0 0.0
  %969 = vmatpush1.msra.mxu0 %v321
  %970 = vmatprep.subr.mxu0 0.0
  %971 = vmatpush1.msra.mxu0 %v322
  %972 = vmatprep.subr.mxu0 0.0
  %973 = vmatpush1.msra.mxu0 %v323
  %974 = vmatprep.subr.mxu0 0.0
  %975 = vmatpush1.msra.mxu0 %v324
  %976 = vmatprep.subr.mxu0 0.0
  %977 = vmatpush1.msra.mxu0 %v325
  %978 = vmatprep.subr.mxu0 0.0
  %979 = vmatpush1.msra.mxu0 %v326
  %980 = vmatprep.subr.mxu0 0.0
  %981 = vmatpush1.msra.mxu0 %v327
  %982 = vmatprep.subr.mxu0 0.0
  %983 = vmatpush1.msra.mxu0 %v328
  %984 = vmatprep.subr.mxu0 0.0
  %985 = vmatpush1.msra.mxu0 %v329
  %986 = vmatprep.subr.mxu0 0.0
  %987 = vmatpush1.msra.mxu0 %v330
  %988 = vmatprep.subr.mxu0 0.0
  %989 = vmatpush1.msra.mxu0 %v331
  %990 = vmatprep.subr.mxu0 0.0
  %991 = vmatpush1.msra.mxu0 %v332
  %992 = vmatprep.subr.mxu0 0.0
  %993 = vmatpush1.msra.mxu0 %v333
  %994 = vmatprep.subr.mxu0 0.0
  %995 = vmatpush1.msra.mxu0 %v334
  %996 = vmatprep.subr.mxu0 0.0
  %997 = vmatpush1.msra.mxu0 %v335
  %998 = vmatprep.subr.mxu0 0.0
  %999 = vmatpush1.msra.mxu0 %v336
  %1000 = vmatprep.subr.mxu0 0.0
  %1001 = vmatpush1.msra.mxu0 %v337
  %1002 = vmatprep.subr.mxu0 0.0
  %1003 = vmatpush1.msra.mxu0 %v338
  %1004 = vmatprep.subr.mxu0 0.0
  %1005 = vmatpush1.msra.mxu0 %v339
  %1006 = vmatprep.mubr.f32.mxu0 %v35
  %1007 = vmatmul.mubr.f32.gmra.mrb[0].mxu0 %v34
  %v1008 = vpop.f32.mrb[0].mxu0
  %v1009 = vadd.f32 %v924, %v1008
  %v1010 = vpop.f32.mrb[0].mxu0
  %1011 = vmatprep.mubr.f32.mxu0 %v51
  %1012 = vmatmul.mubr.f32.gmra.mrb[0].mxu0 %v50
  %v1013 = vpop.f32.mrb[0].mxu0
  %v1014 = vadd.f32 %v929, %v1013
  %v1015 = vpop.f32.mrb[0].mxu0
  %1016 = vmatprep.mubr.f32.mxu0 %v67
  %1017 = vmatmul.mubr.f32.gmra.mrb[0].mxu0 %v66
  %v1018 = vpop.f32.mrb[0].mxu0
  %v1019 = vadd.f32 %v934, %v1018
  %v1020 = vpop.f32.mrb[0].mxu0
  %1021 = vmatprep.mubr.f32.mxu0 %v83
  %1022 = vmatmul.mubr.f32.gmra.mrb[0].mxu0 %v82
  %v1023 = vpop.f32.mrb[0].mxu0
  %v1024 = vadd.f32 %v939, %v1023
  %v1025 = vpop.f32.mrb[0].mxu0
  %1026 = vdwg.mxu0
  %v1027 = vadd.f32 %v1009, %v1014
  %v1028 = vadd.f32 %v1027, %v1019
  %v1029 = vadd.f32 %v1028, %v1024
  %v1030 = vrot.slane %v1029, 4
  %v1031 = vadd.f32 %v1029, %v1030
  %v1032 = vrot.slane %v1031, 2
  %v1033 = vadd.f32 %v1031, %v1032
  %v1034 = vrot.slane %v1033, 1
  %v1035 = vadd.f32 %v1033, %v1034
  %v1036 = vadd.f32 %v1035, 0.0
  %v1037 = vmul.f32 %v1009, %v1009
  %v1038 = vmul.f32 %v1014, %v1014
  %v1039 = vmul.f32 %v1019, %v1019
  %v1040 = vmul.f32 %v1024, %v1024
  %v1041 = vadd.f32 %v1037, %v1038
  %v1042 = vadd.f32 %v1041, %v1039
  %v1043 = vadd.f32 %v1042, %v1040
  %v1044 = vrot.slane %v1043, 4
  %v1045 = vadd.f32 %v1043, %v1044
  %v1046 = vrot.slane %v1045, 2
  %v1047 = vadd.f32 %v1045, %v1046
  %v1048 = vrot.slane %v1047, 1
  %v1049 = vadd.f32 %v1047, %v1048
  %v1050 = vadd.f32 %v1049, 0.0
  %v1051 = vrcp.pop 32.0
  %v1052 = vmul.f32 %v1036, %v1051
  %v1053 = vmul.f32 %v1050, %v1051
  %v1054 = vmul.f32 %v1052, %v1052
  %v1055 = vsub.f32 %v1053, %v1054
  %v1056 = vadd.f32 %v1055, 1e-05
  %v1057 = vrsqrt.pop %v1056
  %v1058 = vld [vmem:[%s3] sm:$0x1]
  %v1059 = vmul.f32 %v1057, %v1058
  %v1060 = vld [vmem:[%s4] sm:$0x1]
  %v1061 = vmul.f32 %v1052, %v1059
  %v1062 = vsub.f32 %v1060, %v1061
  %v1063 = vlaneseq
  %v1064 = vshrl.u32 %v1063, 7
  %v1065 = vsub.s32 0, %v1064
  %v1066 = vrot.slane %v1059, %v1065
  %v1067 = vmul.f32 %v1009, %v1066
  %v1068 = vmul.f32 %v1014, %v1066
  %v1069 = vmul.f32 %v1019, %v1066
  %v1070 = vmul.f32 %v1024, %v1066
  %v1072 = vlaneseq
  %v1073 = vshrl.u32 %v1072, 7
  %v1074 = vsub.s32 0, %v1073
  %v1075 = vrot.slane %v1062, %v1074
  %v1077 = vadd.f32 %v1067, %v1075
  %v1078 = vadd.f32 %v1068, %v1075
  %v1079 = vadd.f32 %v1069, %v1075
  %v1080 = vadd.f32 %v1070, %v1075
  %v1081 = vmax.f32 %v1077, 0.0
  %v1082 = vmax.f32 %v1078, 0.0
  %v1083 = vmax.f32 %v1079, 0.0
  %v1084 = vmax.f32 %v1080, 0.0
  %1085 = vst [vmem:[%s5] sm:$0xff] %v1081
  %1086 = vst [vmem:[%s5 + $0x8] sm:$0xff] %v1082
  %1087 = vst [vmem:[%s5 + $0x10] sm:$0xff] %v1083
  %1088 = vst [vmem:[%s5 + $0x18] sm:$0xff] %v1084
  // Predicated region
  $region22: #{vqvae_forward.12} parent=0 // pred_check
    _
  $region23: #{vqvae_forward.12} parent=0 // pred_check_branch
    %1090 = sbr.rel (0) target = $region25
  $region24: #{vqvae_forward.12} parent=0 // pred_region
    _
  $region25: #{vqvae_forward.12} parent=0 // pred_fallthru
    _
  // Predicated region
  $region26: #{vqvae_forward.12} parent=0 // pred_check
    _
  $region27: #{vqvae_forward.12} parent=0 // pred_check_branch
    %1092 = sbr.rel (0) target = $region29
  $region28: #{vqvae_forward.12} parent=0 // pred_region
    _
  $region29: #{vqvae_forward.12} parent=0 // pred_fallthru
    _

// kernel: vqvae_forward.13
$region0: #{vqvae_forward.13}
  #allocation0 [shape = 'u32[]', space=smem, size = 0x4, offset = 0x4, fixed_abs, tag = 'smem constant byte address 0x4 - core index']
  #allocation1 [shape = 'u32[144,128]{1,0:T(1,128)}', space=vmem, size = 0x12000, scoped, tag = 'internal scratch']
  %s0 = inlined_call_operand.vmem [shape: f32[32,1152], index: 0, kind: input, shape index: {}]
  %s1 = inlined_call_operand.vmem [shape: f32[1152,128], index: 1, kind: input, shape index: {}]
  %s2 = inlined_call_operand.vmem [shape: f32[1,128], index: 2, kind: input, shape index: {}]
  %s3 = inlined_call_operand.vmem [shape: f32[1,128], index: 3, kind: input, shape index: {}]
  %s4 = inlined_call_operand.vmem [shape: f32[1,128], index: 4, kind: input, shape index: {}]
  %s5 = inlined_call_operand.vmem [shape: f32[32,128], index: 5, kind: output, shape index: {}]
  %s6 = sld [smem:[#allocation0]]
  $region30: #{vqvae_forward.13} parent=0
    _
  %s8 = ssub.s32 1, %s6
  %s9 = scalar_select 0, %s8, %s6
  // Predicated region
  $region2: #{vqvae_forward.13} parent=0 // pred_check
    _
  $region3: #{vqvae_forward.13} parent=0 // pred_check_branch
    %11 = sbr.rel (0) target = $region5
  $region4: #{vqvae_forward.13} parent=0 // pred_region
    _
  $region5: #{vqvae_forward.13} parent=0 // pred_fallthru
    _
  // Predicated region
  $region6: #{vqvae_forward.13} parent=0 // pred_check
    _
  $region7: #{vqvae_forward.13} parent=0 // pred_check_branch
    %13 = sbr.rel (0) target = $region9
  $region8: #{vqvae_forward.13} parent=0 // pred_region
    _
  $region9: #{vqvae_forward.13} parent=0 // pred_fallthru
    _
  // Predicated region
  $region10: #{vqvae_forward.13} parent=0 // pred_check
    _
  $region11: #{vqvae_forward.13} parent=0 // pred_check_branch
    %15 = sbr.rel (0) target = $region13
  $region12: #{vqvae_forward.13} parent=0 // pred_region
    _
  $region13: #{vqvae_forward.13} parent=0 // pred_fallthru
    _
  // Predicated region
  $region14: #{vqvae_forward.13} parent=0 // pred_check
    _
  $region15: #{vqvae_forward.13} parent=0 // pred_check_branch
    %17 = sbr.rel (0) target = $region17
  $region16: #{vqvae_forward.13} parent=0 // pred_region
    _
  $region17: #{vqvae_forward.13} parent=0 // pred_fallthru
    _
  // Predicated region
  $region18: #{vqvae_forward.13} parent=0 // pred_check
    _
  $region19: #{vqvae_forward.13} parent=0 // pred_check_branch
    %19 = sbr.rel (0) target = $region21
  $region20: #{vqvae_forward.13} parent=0 // pred_region
    _
  $region21: #{vqvae_forward.13} parent=0 // pred_fallthru
    _
  %v20 = vld [vmem:[%s0] sm:$0xff]
  %v21 = vld [vmem:[%s0 + $0x8] sm:$0xff]
  %v22 = vld [vmem:[%s0 + $0x10] sm:$0xff]
  %v23 = vld [vmem:[%s0 + $0x18] sm:$0xff]
  %v24 = vld [vmem:[%s0 + $0x20] sm:$0xff]
  %v25 = vld [vmem:[%s0 + $0x28] sm:$0xff]
  %v26 = vld [vmem:[%s0 + $0x30] sm:$0xff]
  %v27 = vld [vmem:[%s0 + $0x38] sm:$0xff]
  %v28 = vld [vmem:[%s0 + $0x40] sm:$0xff]
  %v29 = vld [vmem:[%s0 + $0x48] sm:$0xff]
  %v30 = vld [vmem:[%s0 + $0x50] sm:$0xff]
  %v31 = vld [vmem:[%s0 + $0x58] sm:$0xff]
  %v32 = vld [vmem:[%s0 + $0x60] sm:$0xff]
  %v33 = vld [vmem:[%s0 + $0x68] sm:$0xff]
  %v34 = vld [vmem:[%s0 + $0x70] sm:$0xff]
  %v35 = vld [vmem:[%s0 + $0x78] sm:$0xff]
  %v36 = vld [vmem:[%s0 + $0x80] sm:$0xff]
  %v37 = vld [vmem:[%s0 + $0x88] sm:$0xff]
  %v38 = vld [vmem:[%s0 + $0x90] sm:$0xff]
  %v39 = vld [vmem:[%s0 + $0x98] sm:$0xff]
  %v40 = vld [vmem:[%s0 + $0xa0] sm:$0xff]
  %v41 = vld [vmem:[%s0 + $0xa8] sm:$0xff]
  %v42 = vld [vmem:[%s0 + $0xb0] sm:$0xff]
  %v43 = vld [vmem:[%s0 + $0xb8] sm:$0xff]
  %v44 = vld [vmem:[%s0 + $0xc0] sm:$0xff]
  %v45 = vld [vmem:[%s0 + $0xc8] sm:$0xff]
  %v46 = vld [vmem:[%s0 + $0xd0] sm:$0xff]
  %v47 = vld [vmem:[%s0 + $0xd8] sm:$0xff]
  %v48 = vld [vmem:[%s0 + $0xe0] sm:$0xff]
  %v49 = vld [vmem:[%s0 + $0xe8] sm:$0xff]
  %v50 = vld [vmem:[%s0 + $0xf0] sm:$0xff]
  %v51 = vld [vmem:[%s0 + $0xf8] sm:$0xff]
  %v52 = vld [vmem:[%s0 + $0x100] sm:$0xff]
  %v53 = vld [vmem:[%s0 + $0x108] sm:$0xff]
  %v54 = vld [vmem:[%s0 + $0x110] sm:$0xff]
  %v55 = vld [vmem:[%s0 + $0x118] sm:$0xff]
  %v56 = vld [vmem:[%s1] sm:$0xff]
  %v57 = vld [vmem:[%s1 + $0x8] sm:$0xff]
  %v58 = vld [vmem:[%s1 + $0x10] sm:$0xff]
  %v59 = vld [vmem:[%s1 + $0x18] sm:$0xff]
  %v60 = vld [vmem:[%s1 + $0x20] sm:$0xff]
  %v61 = vld [vmem:[%s1 + $0x28] sm:$0xff]
  %v62 = vld [vmem:[%s1 + $0x30] sm:$0xff]
  %v63 = vld [vmem:[%s1 + $0x38] sm:$0xff]
  %v64 = vld [vmem:[%s1 + $0x40] sm:$0xff]
  %v65 = vld [vmem:[%s1 + $0x48] sm:$0xff]
  %v66 = vld [vmem:[%s1 + $0x50] sm:$0xff]
  %v67 = vld [vmem:[%s1 + $0x58] sm:$0xff]
  %v68 = vld [vmem:[%s1 + $0x60] sm:$0xff]
  %v69 = vld [vmem:[%s1 + $0x68] sm:$0xff]
  %v70 = vld [vmem:[%s1 + $0x70] sm:$0xff]
  %v71 = vld [vmem:[%s1 + $0x78] sm:$0xff]
  %v72 = vld [vmem:[%s1 + $0x80] sm:$0xff]
  %v73 = vld [vmem:[%s1 + $0x88] sm:$0xff]
  %v74 = vld [vmem:[%s1 + $0x90] sm:$0xff]
  %v75 = vld [vmem:[%s1 + $0x98] sm:$0xff]
  %v76 = vld [vmem:[%s1 + $0xa0] sm:$0xff]
  %v77 = vld [vmem:[%s1 + $0xa8] sm:$0xff]
  %v78 = vld [vmem:[%s1 + $0xb0] sm:$0xff]
  %v79 = vld [vmem:[%s1 + $0xb8] sm:$0xff]
  %v80 = vld [vmem:[%s1 + $0xc0] sm:$0xff]
  %v81 = vld [vmem:[%s1 + $0xc8] sm:$0xff]
  %v82 = vld [vmem:[%s1 + $0xd0] sm:$0xff]
  %v83 = vld [vmem:[%s1 + $0xd8] sm:$0xff]
  %v84 = vld [vmem:[%s1 + $0xe0] sm:$0xff]
  %v85 = vld [vmem:[%s1 + $0xe8] sm:$0xff]
  %v86 = vld [vmem:[%s1 + $0xf0] sm:$0xff]
  %v87 = vld [vmem:[%s1 + $0xf8] sm:$0xff]
  %v88 = vld [vmem:[%s1 + $0x100] sm:$0xff]
  %v89 = vld [vmem:[%s1 + $0x108] sm:$0xff]
  %v90 = vld [vmem:[%s1 + $0x110] sm:$0xff]
  %v91 = vld [vmem:[%s1 + $0x118] sm:$0xff]
  %v92 = vld [vmem:[%s1 + $0x120] sm:$0xff]
  %v93 = vld [vmem:[%s1 + $0x128] sm:$0xff]
  %v94 = vld [vmem:[%s1 + $0x130] sm:$0xff]
  %v95 = vld [vmem:[%s1 + $0x138] sm:$0xff]
  %v96 = vld [vmem:[%s1 + $0x140] sm:$0xff]
  %v97 = vld [vmem:[%s1 + $0x148] sm:$0xff]
  %v98 = vld [vmem:[%s1 + $0x150] sm:$0xff]
  %v99 = vld [vmem:[%s1 + $0x158] sm:$0xff]
  %v100 = vld [vmem:[%s1 + $0x160] sm:$0xff]
  %v101 = vld [vmem:[%s1 + $0x168] sm:$0xff]
  %v102 = vld [vmem:[%s1 + $0x170] sm:$0xff]
  %v103 = vld [vmem:[%s1 + $0x178] sm:$0xff]
  %v104 = vld [vmem:[%s1 + $0x180] sm:$0xff]
  %v105 = vld [vmem:[%s1 + $0x188] sm:$0xff]
  %v106 = vld [vmem:[%s1 + $0x190] sm:$0xff]
  %v107 = vld [vmem:[%s1 + $0x198] sm:$0xff]
  %v108 = vld [vmem:[%s1 + $0x1a0] sm:$0xff]
  %v109 = vld [vmem:[%s1 + $0x1a8] sm:$0xff]
  %v110 = vld [vmem:[%s1 + $0x1b0] sm:$0xff]
  %v111 = vld [vmem:[%s1 + $0x1b8] sm:$0xff]
  %v112 = vld [vmem:[%s1 + $0x1c0] sm:$0xff]
  %v113 = vld [vmem:[%s1 + $0x1c8] sm:$0xff]
  %v114 = vld [vmem:[%s1 + $0x1d0] sm:$0xff]
  %v115 = vld [vmem:[%s1 + $0x1d8] sm:$0xff]
  %v116 = vld [vmem:[%s1 + $0x1e0] sm:$0xff]
  %v117 = vld [vmem:[%s1 + $0x1e8] sm:$0xff]
  %v118 = vld [vmem:[%s1 + $0x1f0] sm:$0xff]
  %v119 = vld [vmem:[%s1 + $0x1f8] sm:$0xff]
  %v120 = vld [vmem:[%s1 + $0x200] sm:$0xff]
  %v121 = vld [vmem:[%s1 + $0x208] sm:$0xff]
  %v122 = vld [vmem:[%s1 + $0x210] sm:$0xff]
  %v123 = vld [vmem:[%s1 + $0x218] sm:$0xff]
  %v124 = vld [vmem:[%s1 + $0x220] sm:$0xff]
  %v125 = vld [vmem:[%s1 + $0x228] sm:$0xff]
  %v126 = vld [vmem:[%s1 + $0x230] sm:$0xff]
  %v127 = vld [vmem:[%s1 + $0x238] sm:$0xff]
  %v128 = vld [vmem:[%s1 + $0x240] sm:$0xff]
  %v129 = vld [vmem:[%s1 + $0x248] sm:$0xff]
  %v130 = vld [vmem:[%s1 + $0x250] sm:$0xff]
  %v131 = vld [vmem:[%s1 + $0x258] sm:$0xff]
  %v132 = vld [vmem:[%s1 + $0x260] sm:$0xff]
  %v133 = vld [vmem:[%s1 + $0x268] sm:$0xff]
  %v134 = vld [vmem:[%s1 + $0x270] sm:$0xff]
  %v135 = vld [vmem:[%s1 + $0x278] sm:$0xff]
  %v136 = vld [vmem:[%s1 + $0x280] sm:$0xff]
  %v137 = vld [vmem:[%s1 + $0x288] sm:$0xff]
  %v138 = vld [vmem:[%s1 + $0x290] sm:$0xff]
  %v139 = vld [vmem:[%s1 + $0x298] sm:$0xff]
  %v140 = vld [vmem:[%s1 + $0x2a0] sm:$0xff]
  %v141 = vld [vmem:[%s1 + $0x2a8] sm:$0xff]
  %v142 = vld [vmem:[%s1 + $0x2b0] sm:$0xff]
  %v143 = vld [vmem:[%s1 + $0x2b8] sm:$0xff]
  %v144 = vld [vmem:[%s1 + $0x2c0] sm:$0xff]
  %v145 = vld [vmem:[%s1 + $0x2c8] sm:$0xff]
  %v146 = vld [vmem:[%s1 + $0x2d0] sm:$0xff]
  %v147 = vld [vmem:[%s1 + $0x2d8] sm:$0xff]
  %v148 = vld [vmem:[%s1 + $0x2e0] sm:$0xff]
  %v149 = vld [vmem:[%s1 + $0x2e8] sm:$0xff]
  %v150 = vld [vmem:[%s1 + $0x2f0] sm:$0xff]
  %v151 = vld [vmem:[%s1 + $0x2f8] sm:$0xff]
  %v152 = vld [vmem:[%s1 + $0x300] sm:$0xff]
  %v153 = vld [vmem:[%s1 + $0x308] sm:$0xff]
  %v154 = vld [vmem:[%s1 + $0x310] sm:$0xff]
  %v155 = vld [vmem:[%s1 + $0x318] sm:$0xff]
  %v156 = vld [vmem:[%s1 + $0x320] sm:$0xff]
  %v157 = vld [vmem:[%s1 + $0x328] sm:$0xff]
  %v158 = vld [vmem:[%s1 + $0x330] sm:$0xff]
  %v159 = vld [vmem:[%s1 + $0x338] sm:$0xff]
  %v160 = vld [vmem:[%s1 + $0x340] sm:$0xff]
  %v161 = vld [vmem:[%s1 + $0x348] sm:$0xff]
  %v162 = vld [vmem:[%s1 + $0x350] sm:$0xff]
  %v163 = vld [vmem:[%s1 + $0x358] sm:$0xff]
  %v164 = vld [vmem:[%s1 + $0x360] sm:$0xff]
  %v165 = vld [vmem:[%s1 + $0x368] sm:$0xff]
  %v166 = vld [vmem:[%s1 + $0x370] sm:$0xff]
  %v167 = vld [vmem:[%s1 + $0x378] sm:$0xff]
  %v168 = vld [vmem:[%s1 + $0x380] sm:$0xff]
  %v169 = vld [vmem:[%s1 + $0x388] sm:$0xff]
  %v170 = vld [vmem:[%s1 + $0x390] sm:$0xff]
  %v171 = vld [vmem:[%s1 + $0x398] sm:$0xff]
  %v172 = vld [vmem:[%s1 + $0x3a0] sm:$0xff]
  %v173 = vld [vmem:[%s1 + $0x3a8] sm:$0xff]
  %v174 = vld [vmem:[%s1 + $0x3b0] sm:$0xff]
  %v175 = vld [vmem:[%s1 + $0x3b8] sm:$0xff]
  %v176 = vld [vmem:[%s1 + $0x3c0] sm:$0xff]
  %v177 = vld [vmem:[%s1 + $0x3c8] sm:$0xff]
  %v178 = vld [vmem:[%s1 + $0x3d0] sm:$0xff]
  %v179 = vld [vmem:[%s1 + $0x3d8] sm:$0xff]
  %v180 = vld [vmem:[%s1 + $0x3e0] sm:$0xff]
  %v181 = vld [vmem:[%s1 + $0x3e8] sm:$0xff]
  %v182 = vld [vmem:[%s1 + $0x3f0] sm:$0xff]
  %v183 = vld [vmem:[%s1 + $0x3f8] sm:$0xff]
  %v184 = vld [vmem:[%s1 + $0x400] sm:$0xff]
  %v185 = vld [vmem:[%s1 + $0x408] sm:$0xff]
  %v186 = vld [vmem:[%s1 + $0x410] sm:$0xff]
  %v187 = vld [vmem:[%s1 + $0x418] sm:$0xff]
  %v188 = vld [vmem:[%s1 + $0x420] sm:$0xff]
  %v189 = vld [vmem:[%s1 + $0x428] sm:$0xff]
  %v190 = vld [vmem:[%s1 + $0x430] sm:$0xff]
  %v191 = vld [vmem:[%s1 + $0x438] sm:$0xff]
  %v192 = vld [vmem:[%s1 + $0x440] sm:$0xff]
  %v193 = vld [vmem:[%s1 + $0x448] sm:$0xff]
  %v194 = vld [vmem:[%s1 + $0x450] sm:$0xff]
  %v195 = vld [vmem:[%s1 + $0x458] sm:$0xff]
  %v196 = vld [vmem:[%s1 + $0x460] sm:$0xff]
  %v197 = vld [vmem:[%s1 + $0x468] sm:$0xff]
  %v198 = vld [vmem:[%s1 + $0x470] sm:$0xff]
  %v199 = vld [vmem:[%s1 + $0x478] sm:$0xff]
  %v200 = vld [vmem:[%s2] sm:$0x1]
  %v202 = vlaneseq
  %v203 = vshrl.u32 %v202, 7
  %v204 = vsub.s32 0, %v203
  %v205 = vrot.slane %v200, %v204
  %207 = vmatprep.subr.mxu0 0.0
  %208 = vmatpush1.msra.mxu0 %v56
  %209 = vmatprep.subr.mxu0 0.0
  %210 = vmatpush1.msra.mxu0 %v57
  %211 = vmatprep.subr.mxu0 0.0
  %212 = vmatpush1.msra.mxu0 %v58
  %213 = vmatprep.subr.mxu0 0.0
  %214 = vmatpush1.msra.mxu0 %v59
  %215 = vmatprep.subr.mxu0 0.0
  %216 = vmatpush1.msra.mxu0 %v60
  %217 = vmatprep.subr.mxu0 0.0
  %218 = vmatpush1.msra.mxu0 %v61
  %219 = vmatprep.subr.mxu0 0.0
  %220 = vmatpush1.msra.mxu0 %v62
  %221 = vmatprep.subr.mxu0 0.0
  %222 = vmatpush1.msra.mxu0 %v63
  %223 = vmatprep.subr.mxu0 0.0
  %224 = vmatpush1.msra.mxu0 %v64
  %225 = vmatprep.subr.mxu0 0.0
  %226 = vmatpush1.msra.mxu0 %v65
  %227 = vmatprep.subr.mxu0 0.0
  %228 = vmatpush1.msra.mxu0 %v66
  %229 = vmatprep.subr.mxu0 0.0
  %230 = vmatpush1.msra.mxu0 %v67
  %231 = vmatprep.subr.mxu0 0.0
  %232 = vmatpush1.msra.mxu0 %v68
  %233 = vmatprep.subr.mxu0 0.0
  %234 = vmatpush1.msra.mxu0 %v69
  %235 = vmatprep.subr.mxu0 0.0
  %236 = vmatpush1.msra.mxu0 %v70
  %237 = vmatprep.subr.mxu0 0.0
  %238 = vmatpush1.msra.mxu0 %v71
  %239 = vmatprep.subr.mxu0 0.0
  %240 = vmatpush1.msra.mxu0 %v72
  %241 = vmatprep.subr.mxu0 0.0
  %242 = vmatpush1.msra.mxu0 %v73
  %243 = vmatprep.subr.mxu0 0.0
  %244 = vmatpush1.msra.mxu0 %v74
  %245 = vmatprep.subr.mxu0 0.0
  %246 = vmatpush1.msra.mxu0 %v75
  %247 = vmatprep.subr.mxu0 0.0
  %248 = vmatpush1.msra.mxu0 %v76
  %249 = vmatprep.subr.mxu0 0.0
  %250 = vmatpush1.msra.mxu0 %v77
  %251 = vmatprep.subr.mxu0 0.0
  %252 = vmatpush1.msra.mxu0 %v78
  %253 = vmatprep.subr.mxu0 0.0
  %254 = vmatpush1.msra.mxu0 %v79
  %255 = vmatprep.subr.mxu0 0.0
  %256 = vmatpush1.msra.mxu0 %v80
  %257 = vmatprep.subr.mxu0 0.0
  %258 = vmatpush1.msra.mxu0 %v81
  %259 = vmatprep.subr.mxu0 0.0
  %260 = vmatpush1.msra.mxu0 %v82
  %261 = vmatprep.subr.mxu0 0.0
  %262 = vmatpush1.msra.mxu0 %v83
  %263 = vmatprep.subr.mxu0 0.0
  %264 = vmatpush1.msra.mxu0 %v84
  %265 = vmatprep.subr.mxu0 0.0
  %266 = vmatpush1.msra.mxu0 %v85
  %267 = vmatprep.subr.mxu0 0.0
  %268 = vmatpush1.msra.mxu0 %v86
  %269 = vmatprep.subr.mxu0 0.0
  %270 = vmatpush1.msra.mxu0 %v87
  %271 = vmatprep.mubr.f32.mxu0 %v21
  %272 = vmatmul.mubr.f32.gmra.mrb[0].mxu0 %v20
  %v273 = vpop.f32.mrb[0].mxu0
  %v274 = vadd.f32 %v205, %v273
  %v275 = vpop.f32.mrb[0].mxu0
  %276 = vmatprep.mubr.f32.mxu0 %v30
  %277 = vmatmul.mubr.f32.gmra.mrb[0].mxu0 %v29
  %v278 = vpop.f32.mrb[0].mxu0
  %v279 = vadd.f32 %v205, %v278
  %v280 = vpop.f32.mrb[0].mxu0
  %281 = vmatprep.mubr.f32.mxu0 %v39
  %282 = vmatmul.mubr.f32.gmra.mrb[0].mxu0 %v38
  %v283 = vpop.f32.mrb[0].mxu0
  %v284 = vadd.f32 %v205, %v283
  %v285 = vpop.f32.mrb[0].mxu0
  %286 = vmatprep.mubr.f32.mxu0 %v48
  %287 = vmatmul.mubr.f32.gmra.mrb[0].mxu0 %v47
  %v288 = vpop.f32.mrb[0].mxu0
  %v289 = vadd.f32 %v205, %v288
  %v290 = vpop.f32.mrb[0].mxu0
  %291 = vdwg.mxu0
  %292 = vmatprep.subr.mxu0 0.0
  %293 = vmatpush1.msra.mxu0 %v88
  %294 = vmatprep.subr.mxu0 0.0
  %295 = vmatpush1.msra.mxu0 %v89
  %296 = vmatprep.subr.mxu0 0.0
  %297 = vmatpush1.msra.mxu0 %v90
  %298 = vmatprep.subr.mxu0 0.0
  %299 = vmatpush1.msra.mxu0 %v91
  %300 = vmatprep.subr.mxu0 0.0
  %301 = vmatpush1.msra.mxu0 %v92
  %302 = vmatprep.subr.mxu0 0.0
  %303 = vmatpush1.msra.mxu0 %v93
  %304 = vmatprep.subr.mxu0 0.0
  %305 = vmatpush1.msra.mxu0 %v94
  %306 = vmatprep.subr.mxu0 0.0
  %307 = vmatpush1.msra.mxu0 %v95
  %308 = vmatprep.subr.mxu0 0.0
  %309 = vmatpush1.msra.mxu0 %v96
  %310 = vmatprep.subr.mxu0 0.0
  %311 = vmatpush1.msra.mxu0 %v97
  %312 = vmatprep.subr.mxu0 0.0
  %313 = vmatpush1.msra.mxu0 %v98
  %314 = vmatprep.subr.mxu0 0.0
  %315 = vmatpush1.msra.mxu0 %v99
  %316 = vmatprep.subr.mxu0 0.0
  %317 = vmatpush1.msra.mxu0 %v100
  %318 = vmatprep.subr.mxu0 0.0
  %319 = vmatpush1.msra.mxu0 %v101
  %320 = vmatprep.subr.mxu0 0.0
  %321 = vmatpush1.msra.mxu0 %v102
  %322 = vmatprep.subr.mxu0 0.0
  %323 = vmatpush1.msra.mxu0 %v103
  %324 = vmatprep.subr.mxu0 0.0
  %325 = vmatpush1.msra.mxu0 %v104
  %326 = vmatprep.subr.mxu0 0.0
  %327 = vmatpush1.msra.mxu0 %v105
  %328 = vmatprep.subr.mxu0 0.0
  %329 = vmatpush1.msra.mxu0 %v106
  %330 = vmatprep.subr.mxu0 0.0
  %331 = vmatpush1.msra.mxu0 %v107
  %332 = vmatprep.subr.mxu0 0.0
  %333 = vmatpush1.msra.mxu0 %v108
  %334 = vmatprep.subr.mxu0 0.0
  %335 = vmatpush1.msra.mxu0 %v109
  %336 = vmatprep.subr.mxu0 0.0
  %337 = vmatpush1.msra.mxu0 %v110
  %338 = vmatprep.subr.mxu0 0.0
  %339 = vmatpush1.msra.mxu0 %v111
  %340 = vmatprep.subr.mxu0 0.0
  %341 = vmatpush1.msra.mxu0 %v112
  %342 = vmatprep.subr.mxu0 0.0
  %343 = vmatpush1.msra.mxu0 %v113
  %344 = vmatprep.subr.mxu0 0.0
  %345 = vmatpush1.msra.mxu0 %v114
  %346 = vmatprep.subr.mxu0 0.0
  %347 = vmatpush1.msra.mxu0 %v115
  %348 = vmatprep.subr.mxu0 0.0
  %349 = vmatpush1.msra.mxu0 %v116
  %350 = vmatprep.subr.mxu0 0.0
  %351 = vmatpush1.msra.mxu0 %v117
  %352 = vmatprep.subr.mxu0 0.0
  %353 = vmatpush1.msra.mxu0 %v118
  %354 = vmatprep.subr.mxu0 0.0
  %355 = vmatpush1.msra.mxu0 %v119
  %356 = vmatprep.mubr.f32.mxu0 %v23
  %357 = vmatmul.mubr.f32.gmra.mrb[0].mxu0 %v22
  %v358 = vpop.f32.mrb[0].mxu0
  %v359 = vadd.f32 %v274, %v358
  %v360 = vpop.f32.mrb[0].mxu0
  %361 = vmatprep.mubr.f32.mxu0 %v32
  %362 = vmatmul.mubr.f32.gmra.mrb[0].mxu0 %v31
  %v363 = vpop.f32.mrb[0].mxu0
  %v364 = vadd.f32 %v279, %v363
  %v365 = vpop.f32.mrb[0].mxu0
  %366 = vmatprep.mubr.f32.mxu0 %v41
  %367 = vmatmul.mubr.f32.gmra.mrb[0].mxu0 %v40
  %v368 = vpop.f32.mrb[0].mxu0
  %v369 = vadd.f32 %v284, %v368
  %v370 = vpop.f32.mrb[0].mxu0
  %371 = vmatprep.mubr.f32.mxu0 %v50
  %372 = vmatmul.mubr.f32.gmra.mrb[0].mxu0 %v49
  %v373 = vpop.f32.mrb[0].mxu0
  %v374 = vadd.f32 %v289, %v373
  %v375 = vpop.f32.mrb[0].mxu0
  %376 = vdwg.mxu0
  %377 = vmatprep.subr.mxu0 0.0
  %378 = vmatpush1.msra.mxu0 %v120
  %379 = vmatprep.subr.mxu0 0.0
  %380 = vmatpush1.msra.mxu0 %v121
  %381 = vmatprep.subr.mxu0 0.0
  %382 = vmatpush1.msra.mxu0 %v122
  %383 = vmatprep.subr.mxu0 0.0
  %384 = vmatpush1.msra.mxu0 %v123
  %385 = vmatprep.subr.mxu0 0.0
  %386 = vmatpush1.msra.mxu0 %v124
  %387 = vmatprep.subr.mxu0 0.0
  %388 = vmatpush1.msra.mxu0 %v125
  %389 = vmatprep.subr.mxu0 0.0
  %390 = vmatpush1.msra.mxu0 %v126
  %391 = vmatprep.subr.mxu0 0.0
  %392 = vmatpush1.msra.mxu0 %v127
  %393 = vmatprep.subr.mxu0 0.0
  %394 = vmatpush1.msra.mxu0 %v128
  %395 = vmatprep.subr.mxu0 0.0
  %396 = vmatpush1.msra.mxu0 %v129
  %397 = vmatprep.subr.mxu0 0.0
  %398 = vmatpush1.msra.mxu0 %v130
  %399 = vmatprep.subr.mxu0 0.0
  %400 = vmatpush1.msra.mxu0 %v131
  %401 = vmatprep.subr.mxu0 0.0
  %402 = vmatpush1.msra.mxu0 %v132
  %403 = vmatprep.subr.mxu0 0.0
  %404 = vmatpush1.msra.mxu0 %v133
  %405 = vmatprep.subr.mxu0 0.0
  %406 = vmatpush1.msra.mxu0 %v134
  %407 = vmatprep.subr.mxu0 0.0
  %408 = vmatpush1.msra.mxu0 %v135
  %409 = vmatprep.subr.mxu0 0.0
  %410 = vmatpush1.msra.mxu0 %v136
  %411 = vmatprep.subr.mxu0 0.0
  %412 = vmatpush1.msra.mxu0 %v137
  %413 = vmatprep.subr.mxu0 0.0
  %414 = vmatpush1.msra.mxu0 %v138
  %415 = vmatprep.subr.mxu0 0.0
  %416 = vmatpush1.msra.mxu0 %v139
  %417 = vmatprep.subr.mxu0 0.0
  %418 = vmatpush1.msra.mxu0 %v140
  %419 = vmatprep.subr.mxu0 0.0
  %420 = vmatpush1.msra.mxu0 %v141
  %421 = vmatprep.subr.mxu0 0.0
  %422 = vmatpush1.msra.mxu0 %v142
  %423 = vmatprep.subr.mxu0 0.0
  %424 = vmatpush1.msra.mxu0 %v143
  %425 = vmatprep.subr.mxu0 0.0
  %426 = vmatpush1.msra.mxu0 %v144
  %427 = vmatprep.subr.mxu0 0.0
  %428 = vmatpush1.msra.mxu0 %v145
  %429 = vmatprep.subr.mxu0 0.0
  %430 = vmatpush1.msra.mxu0 %v146
  %431 = vmatprep.subr.mxu0 0.0
  %432 = vmatpush1.msra.mxu0 %v147
  %433 = vmatprep.subr.mxu0 0.0
  %434 = vmatpush1.msra.mxu0 %v148
  %435 = vmatprep.subr.mxu0 0.0
  %436 = vmatpush1.msra.mxu0 %v149
  %437 = vmatprep.subr.mxu0 0.0
  %438 = vmatpush1.msra.mxu0 %v150
  %439 = vmatprep.subr.mxu0 0.0
  %440 = vmatpush1.msra.mxu0 %v151
  %441 = vmatprep.mubr.f32.mxu0 %v25
  %442 = vmatmul.mubr.f32.gmra.mrb[0].mxu0 %v24
  %v443 = vpop.f32.mrb[0].mxu0
  %v444 = vadd.f32 %v359, %v443
  %v445 = vpop.f32.mrb[0].mxu0
  %446 = vmatprep.mubr.f32.mxu0 %v34
  %447 = vmatmul.mubr.f32.gmra.mrb[0].mxu0 %v33
  %v448 = vpop.f32.mrb[0].mxu0
  %v449 = vadd.f32 %v364, %v448
  %v450 = vpop.f32.mrb[0].mxu0
  %451 = vmatprep.mubr.f32.mxu0 %v43
  %452 = vmatmul.mubr.f32.gmra.mrb[0].mxu0 %v42
  %v453 = vpop.f32.mrb[0].mxu0
  %v454 = vadd.f32 %v369, %v453
  %v455 = vpop.f32.mrb[0].mxu0
  %456 = vmatprep.mubr.f32.mxu0 %v52
  %457 = vmatmul.mubr.f32.gmra.mrb[0].mxu0 %v51
  %v458 = vpop.f32.mrb[0].mxu0
  %v459 = vadd.f32 %v374, %v458
  %v460 = vpop.f32.mrb[0].mxu0
  %461 = vdwg.mxu0
  %462 = vmatprep.subr.mxu0 0.0
  %463 = vmatpush1.msra.mxu0 %v152
  %464 = vmatprep.subr.mxu0 0.0
  %465 = vmatpush1.msra.mxu0 %v153
  %466 = vmatprep.subr.mxu0 0.0
  %467 = vmatpush1.msra.mxu0 %v154
  %468 = vmatprep.subr.mxu0 0.0
  %469 = vmatpush1.msra.mxu0 %v155
  %470 = vmatprep.subr.mxu0 0.0
  %471 = vmatpush1.msra.mxu0 %v156
  %472 = vmatprep.subr.mxu0 0.0
  %473 = vmatpush1.msra.mxu0 %v157
  %474 = vmatprep.subr.mxu0 0.0
  %475 = vmatpush1.msra.mxu0 %v158
  %476 = vmatprep.subr.mxu0 0.0
  %477 = vmatpush1.msra.mxu0 %v159
  %478 = vmatprep.subr.mxu0 0.0
  %479 = vmatpush1.msra.mxu0 %v160
  %480 = vmatprep.subr.mxu0 0.0
  %481 = vmatpush1.msra.mxu0 %v161
  %482 = vmatprep.subr.mxu0 0.0
  %483 = vmatpush1.msra.mxu0 %v162
  %484 = vmatprep.subr.mxu0 0.0
  %485 = vmatpush1.msra.mxu0 %v163
  %486 = vmatprep.subr.mxu0 0.0
  %487 = vmatpush1.msra.mxu0 %v164
  %488 = vmatprep.subr.mxu0 0.0
  %489 = vmatpush1.msra.mxu0 %v165
  %490 = vmatprep.subr.mxu0 0.0
  %491 = vmatpush1.msra.mxu0 %v166
  %492 = vmatprep.subr.mxu0 0.0
  %493 = vmatpush1.msra.mxu0 %v167
  %494 = vmatprep.subr.mxu0 0.0
  %495 = vmatpush1.msra.mxu0 %v168
  %496 = vmatprep.subr.mxu0 0.0
  %497 = vmatpush1.msra.mxu0 %v169
  %498 = vmatprep.subr.mxu0 0.0
  %499 = vmatpush1.msra.mxu0 %v170
  %500 = vmatprep.subr.mxu0 0.0
  %501 = vmatpush1.msra.mxu0 %v171
  %502 = vmatprep.subr.mxu0 0.0
  %503 = vmatpush1.msra.mxu0 %v172
  %504 = vmatprep.subr.mxu0 0.0
  %505 = vmatpush1.msra.mxu0 %v173
  %506 = vmatprep.subr.mxu0 0.0
  %507 = vmatpush1.msra.mxu0 %v174
  %508 = vmatprep.subr.mxu0 0.0
  %509 = vmatpush1.msra.mxu0 %v175
  %510 = vmatprep.subr.mxu0 0.0
  %511 = vmatpush1.msra.mxu0 %v176
  %512 = vmatprep.subr.mxu0 0.0
  %513 = vmatpush1.msra.mxu0 %v177
  %514 = vmatprep.subr.mxu0 0.0
  %515 = vmatpush1.msra.mxu0 %v178
  %516 = vmatprep.subr.mxu0 0.0
  %517 = vmatpush1.msra.mxu0 %v179
  %518 = vmatprep.subr.mxu0 0.0
  %519 = vmatpush1.msra.mxu0 %v180
  %520 = vmatprep.subr.mxu0 0.0
  %521 = vmatpush1.msra.mxu0 %v181
  %522 = vmatprep.subr.mxu0 0.0
  %523 = vmatpush1.msra.mxu0 %v182
  %524 = vmatprep.subr.mxu0 0.0
  %525 = vmatpush1.msra.mxu0 %v183
  %526 = vmatprep.mubr.f32.mxu0 %v27
  %527 = vmatmul.mubr.f32.gmra.mrb[0].mxu0 %v26
  %v528 = vpop.f32.mrb[0].mxu0
  %v529 = vadd.f32 %v444, %v528
  %v530 = vpop.f32.mrb[0].mxu0
  %531 = vmatprep.mubr.f32.mxu0 %v36
  %532 = vmatmul.mubr.f32.gmra.mrb[0].mxu0 %v35
  %v533 = vpop.f32.mrb[0].mxu0
  %v534 = vadd.f32 %v449, %v533
  %v535 = vpop.f32.mrb[0].mxu0
  %536 = vmatprep.mubr.f32.mxu0 %v45
  %537 = vmatmul.mubr.f32.gmra.mrb[0].mxu0 %v44
  %v538 = vpop.f32.mrb[0].mxu0
  %v539 = vadd.f32 %v454, %v538
  %v540 = vpop.f32.mrb[0].mxu0
  %541 = vmatprep.mubr.f32.mxu0 %v54
  %542 = vmatmul.mubr.f32.gmra.mrb[0].mxu0 %v53
  %v543 = vpop.f32.mrb[0].mxu0
  %v544 = vadd.f32 %v459, %v543
  %v545 = vpop.f32.mrb[0].mxu0
  %546 = vdwg.mxu0
  %547 = vmatprep.subr.mxu0 0.0
  %548 = vmatpush1.msra.mxu0 %v184
  %549 = vmatprep.subr.mxu0 0.0
  %550 = vmatpush1.msra.mxu0 %v185
  %551 = vmatprep.subr.mxu0 0.0
  %552 = vmatpush1.msra.mxu0 %v186
  %553 = vmatprep.subr.mxu0 0.0
  %554 = vmatpush1.msra.mxu0 %v187
  %555 = vmatprep.subr.mxu0 0.0
  %556 = vmatpush1.msra.mxu0 %v188
  %557 = vmatprep.subr.mxu0 0.0
  %558 = vmatpush1.msra.mxu0 %v189
  %559 = vmatprep.subr.mxu0 0.0
  %560 = vmatpush1.msra.mxu0 %v190
  %561 = vmatprep.subr.mxu0 0.0
  %562 = vmatpush1.msra.mxu0 %v191
  %563 = vmatprep.subr.mxu0 0.0
  %564 = vmatpush1.msra.mxu0 %v192
  %565 = vmatprep.subr.mxu0 0.0
  %566 = vmatpush1.msra.mxu0 %v193
  %567 = vmatprep.subr.mxu0 0.0
  %568 = vmatpush1.msra.mxu0 %v194
  %569 = vmatprep.subr.mxu0 0.0
  %570 = vmatpush1.msra.mxu0 %v195
  %571 = vmatprep.subr.mxu0 0.0
  %572 = vmatpush1.msra.mxu0 %v196
  %573 = vmatprep.subr.mxu0 0.0
  %574 = vmatpush1.msra.mxu0 %v197
  %575 = vmatprep.subr.mxu0 0.0
  %576 = vmatpush1.msra.mxu0 %v198
  %577 = vmatprep.subr.mxu0 0.0
  %578 = vmatpush1.msra.mxu0 %v199
  %579 = vmatprep.subr.mxu0 0.0
  %580 = vmatpush1.msra.mxu0 0.0
  %581 = vmatprep.subr.mxu0 0.0
  %582 = vmatpush1.msra.mxu0 0.0
  %583 = vmatprep.subr.mxu0 0.0
  %584 = vmatpush1.msra.mxu0 0.0
  %585 = vmatprep.subr.mxu0 0.0
  %586 = vmatpush1.msra.mxu0 0.0
  %587 = vmatprep.subr.mxu0 0.0
  %588 = vmatpush1.msra.mxu0 0.0
  %589 = vmatprep.subr.mxu0 0.0
  %590 = vmatpush1.msra.mxu0 0.0
  %591 = vmatprep.subr.mxu0 0.0
  %592 = vmatpush1.msra.mxu0 0.0
  %593 = vmatprep.subr.mxu0 0.0
  %594 = vmatpush1.msra.mxu0 0.0
  %595 = vmatprep.subr.mxu0 0.0
  %596 = vmatpush1.msra.mxu0 0.0
  %597 = vmatprep.subr.mxu0 0.0
  %598 = vmatpush1.msra.mxu0 0.0
  %599 = vmatprep.subr.mxu0 0.0
  %600 = vmatpush1.msra.mxu0 0.0
  %601 = vmatprep.subr.mxu0 0.0
  %602 = vmatpush1.msra.mxu0 0.0
  %603 = vmatprep.subr.mxu0 0.0
  %604 = vmatpush1.msra.mxu0 0.0
  %605 = vmatprep.subr.mxu0 0.0
  %606 = vmatpush1.msra.mxu0 0.0
  %607 = vmatprep.subr.mxu0 0.0
  %608 = vmatpush1.msra.mxu0 0.0
  %609 = vmatprep.subr.mxu0 0.0
  %610 = vmatpush1.msra.mxu0 0.0
  %611 = vmatprep.mubr.f32.mxu0 0.0
  %612 = vmatmul.mubr.f32.gmra.mrb[0].mxu0 %v28
  %v613 = vpop.f32.mrb[0].mxu0
  %v614 = vadd.f32 %v529, %v613
  %v615 = vpop.f32.mrb[0].mxu0
  %616 = vmatprep.mubr.f32.mxu0 0.0
  %617 = vmatmul.mubr.f32.gmra.mrb[0].mxu0 %v37
  %v618 = vpop.f32.mrb[0].mxu0
  %v619 = vadd.f32 %v534, %v618
  %v620 = vpop.f32.mrb[0].mxu0
  %621 = vmatprep.mubr.f32.mxu0 0.0
  %622 = vmatmul.mubr.f32.gmra.mrb[0].mxu0 %v46
  %v623 = vpop.f32.mrb[0].mxu0
  %v624 = vadd.f32 %v539, %v623
  %v625 = vpop.f32.mrb[0].mxu0
  %626 = vmatprep.mubr.f32.mxu0 0.0
  %627 = vmatmul.mubr.f32.gmra.mrb[0].mxu0 %v55
  %v628 = vpop.f32.mrb[0].mxu0
  %v629 = vadd.f32 %v544, %v628
  %v630 = vpop.f32.mrb[0].mxu0
  %631 = vdwg.mxu0
  %v632 = vadd.f32 %v614, %v619
  %v633 = vadd.f32 %v632, %v624
  %v634 = vadd.f32 %v633, %v629
  %v635 = vrot.slane %v634, 4
  %v636 = vadd.f32 %v634, %v635
  %v637 = vrot.slane %v636, 2
  %v638 = vadd.f32 %v636, %v637
  %v639 = vrot.slane %v638, 1
  %v640 = vadd.f32 %v638, %v639
  %v641 = vadd.f32 %v640, 0.0
  %v642 = vmul.f32 %v614, %v614
  %v643 = vmul.f32 %v619, %v619
  %v644 = vmul.f32 %v624, %v624
  %v645 = vmul.f32 %v629, %v629
  %v646 = vadd.f32 %v642, %v643
  %v647 = vadd.f32 %v646, %v644
  %v648 = vadd.f32 %v647, %v645
  %v649 = vrot.slane %v648, 4
  %v650 = vadd.f32 %v648, %v649
  %v651 = vrot.slane %v650, 2
  %v652 = vadd.f32 %v650, %v651
  %v653 = vrot.slane %v652, 1
  %v654 = vadd.f32 %v652, %v653
  %v655 = vadd.f32 %v654, 0.0
  %v656 = vrcp.pop 32.0
  %v657 = vmul.f32 %v641, %v656
  %v658 = vmul.f32 %v655, %v656
  %v659 = vmul.f32 %v657, %v657
  %v660 = vsub.f32 %v658, %v659
  %v661 = vadd.f32 %v660, 1e-05
  %v662 = vrsqrt.pop %v661
  %v663 = vld [vmem:[%s3] sm:$0x1]
  %v664 = vmul.f32 %v662, %v663
  %v665 = vld [vmem:[%s4] sm:$0x1]
  %v666 = vmul.f32 %v657, %v664
  %v667 = vsub.f32 %v665, %v666
  %v668 = vlaneseq
  %v669 = vshrl.u32 %v668, 7
  %v670 = vsub.s32 0, %v669
  %v671 = vrot.slane %v664, %v670
  %v672 = vmul.f32 %v614, %v671
  %v673 = vmul.f32 %v619, %v671
  %v674 = vmul.f32 %v624, %v671
  %v675 = vmul.f32 %v629, %v671
  %v677 = vlaneseq
  %v678 = vshrl.u32 %v677, 7
  %v679 = vsub.s32 0, %v678
  %v680 = vrot.slane %v667, %v679
  %v682 = vadd.f32 %v672, %v680
  %v683 = vadd.f32 %v673, %v680
  %v684 = vadd.f32 %v674, %v680
  %v685 = vadd.f32 %v675, %v680
  %v686 = vmax.f32 %v682, 0.0
  %v687 = vmax.f32 %v683, 0.0
  %v688 = vmax.f32 %v684, 0.0
  %v689 = vmax.f32 %v685, 0.0
  %690 = vst [vmem:[%s5] sm:$0xff] %v686
  %691 = vst [vmem:[%s5 + $0x8] sm:$0xff] %v687
  %692 = vst [vmem:[%s5 + $0x10] sm:$0xff] %v688
  %693 = vst [vmem:[%s5 + $0x18] sm:$0xff] %v689
  // Predicated region
  $region22: #{vqvae_forward.13} parent=0 // pred_check
    _
  $region23: #{vqvae_forward.13} parent=0 // pred_check_branch
    %695 = sbr.rel (0) target = $region25
  $region24: #{vqvae_forward.13} parent=0 // pred_region
    _
  $region25: #{vqvae_forward.13} parent=0 // pred_fallthru
    _
  // Predicated region
  $region26: #{vqvae_forward.13} parent=0 // pred_check
    _
  $region27: #{vqvae_forward.13} parent=0 // pred_check_branch
    %697 = sbr.rel (0) target = $region29
  $region28: #{vqvae_forward.13} parent=0 // pred_region
    _
  $region29: #{vqvae_forward.13} parent=0 // pred_fallthru
    _

// kernel: vqvae_forward.14
$region0: #{vqvae_forward.14}
  #allocation0 [shape = 'u32[]', space=smem, size = 0x4, offset = 0x4, fixed_abs, tag = 'smem constant byte address 0x4 - core index']
  #allocation1 [shape = 'u32[144,128]{1,0:T(1,128)}', space=vmem, size = 0x12000, scoped, tag = 'internal scratch']
  %s0 = inlined_call_operand.vmem [shape: f32[32,1152], index: 0, kind: input, shape index: {}]
  %s1 = inlined_call_operand.vmem [shape: f32[1152,128], index: 1, kind: input, shape index: {}]
  %s2 = inlined_call_operand.vmem [shape: f32[1,128], index: 2, kind: input, shape index: {}]
  %s3 = inlined_call_operand.vmem [shape: f32[1,128], index: 3, kind: input, shape index: {}]
  %s4 = inlined_call_operand.vmem [shape: f32[1,128], index: 4, kind: input, shape index: {}]
  %s5 = inlined_call_operand.vmem [shape: f32[32,128], index: 5, kind: input, shape index: {}]
  %s6 = inlined_call_operand.vmem [shape: f32[32,128], index: 6, kind: output, shape index: {}]
  %s7 = sld [smem:[#allocation0]]
  $region34: #{vqvae_forward.14} parent=0
    _
  %s9 = ssub.s32 1, %s7
  %s10 = scalar_select 0, %s9, %s7
  // Predicated region
  $region2: #{vqvae_forward.14} parent=0 // pred_check
    _
  $region3: #{vqvae_forward.14} parent=0 // pred_check_branch
    %12 = sbr.rel (0) target = $region5
  $region4: #{vqvae_forward.14} parent=0 // pred_region
    _
  $region5: #{vqvae_forward.14} parent=0 // pred_fallthru
    _
  // Predicated region
  $region6: #{vqvae_forward.14} parent=0 // pred_check
    _
  $region7: #{vqvae_forward.14} parent=0 // pred_check_branch
    %14 = sbr.rel (0) target = $region9
  $region8: #{vqvae_forward.14} parent=0 // pred_region
    _
  $region9: #{vqvae_forward.14} parent=0 // pred_fallthru
    _
  // Predicated region
  $region10: #{vqvae_forward.14} parent=0 // pred_check
    _
  $region11: #{vqvae_forward.14} parent=0 // pred_check_branch
    %16 = sbr.rel (0) target = $region13
  $region12: #{vqvae_forward.14} parent=0 // pred_region
    _
  $region13: #{vqvae_forward.14} parent=0 // pred_fallthru
    _
  // Predicated region
  $region14: #{vqvae_forward.14} parent=0 // pred_check
    _
  $region15: #{vqvae_forward.14} parent=0 // pred_check_branch
    %18 = sbr.rel (0) target = $region17
  $region16: #{vqvae_forward.14} parent=0 // pred_region
    _
  $region17: #{vqvae_forward.14} parent=0 // pred_fallthru
    _
  // Predicated region
  $region18: #{vqvae_forward.14} parent=0 // pred_check
    _
  $region19: #{vqvae_forward.14} parent=0 // pred_check_branch
    %20 = sbr.rel (0) target = $region21
  $region20: #{vqvae_forward.14} parent=0 // pred_region
    _
  $region21: #{vqvae_forward.14} parent=0 // pred_fallthru
    _
  // Predicated region
  $region22: #{vqvae_forward.14} parent=0 // pred_check
    _
  $region23: #{vqvae_forward.14} parent=0 // pred_check_branch
    %22 = sbr.rel (0) target = $region25
  $region24: #{vqvae_forward.14} parent=0 // pred_region
    _
  $region25: #{vqvae_forward.14} parent=0 // pred_fallthru
    _
  %v23 = vld [vmem:[%s0] sm:$0xff]
  %v24 = vld [vmem:[%s0 + $0x8] sm:$0xff]
  %v25 = vld [vmem:[%s0 + $0x10] sm:$0xff]
  %v26 = vld [vmem:[%s0 + $0x18] sm:$0xff]
  %v27 = vld [vmem:[%s0 + $0x20] sm:$0xff]
  %v28 = vld [vmem:[%s0 + $0x28] sm:$0xff]
  %v29 = vld [vmem:[%s0 + $0x30] sm:$0xff]
  %v30 = vld [vmem:[%s0 + $0x38] sm:$0xff]
  %v31 = vld [vmem:[%s0 + $0x40] sm:$0xff]
  %v32 = vld [vmem:[%s0 + $0x48] sm:$0xff]
  %v33 = vld [vmem:[%s0 + $0x50] sm:$0xff]
  %v34 = vld [vmem:[%s0 + $0x58] sm:$0xff]
  %v35 = vld [vmem:[%s0 + $0x60] sm:$0xff]
  %v36 = vld [vmem:[%s0 + $0x68] sm:$0xff]
  %v37 = vld [vmem:[%s0 + $0x70] sm:$0xff]
  %v38 = vld [vmem:[%s0 + $0x78] sm:$0xff]
  %v39 = vld [vmem:[%s0 + $0x80] sm:$0xff]
  %v40 = vld [vmem:[%s0 + $0x88] sm:$0xff]
  %v41 = vld [vmem:[%s0 + $0x90] sm:$0xff]
  %v42 = vld [vmem:[%s0 + $0x98] sm:$0xff]
  %v43 = vld [vmem:[%s0 + $0xa0] sm:$0xff]
  %v44 = vld [vmem:[%s0 + $0xa8] sm:$0xff]
  %v45 = vld [vmem:[%s0 + $0xb0] sm:$0xff]
  %v46 = vld [vmem:[%s0 + $0xb8] sm:$0xff]
  %v47 = vld [vmem:[%s0 + $0xc0] sm:$0xff]
  %v48 = vld [vmem:[%s0 + $0xc8] sm:$0xff]
  %v49 = vld [vmem:[%s0 + $0xd0] sm:$0xff]
  %v50 = vld [vmem:[%s0 + $0xd8] sm:$0xff]
  %v51 = vld [vmem:[%s0 + $0xe0] sm:$0xff]
  %v52 = vld [vmem:[%s0 + $0xe8] sm:$0xff]
  %v53 = vld [vmem:[%s0 + $0xf0] sm:$0xff]
  %v54 = vld [vmem:[%s0 + $0xf8] sm:$0xff]
  %v55 = vld [vmem:[%s0 + $0x100] sm:$0xff]
  %v56 = vld [vmem:[%s0 + $0x108] sm:$0xff]
  %v57 = vld [vmem:[%s0 + $0x110] sm:$0xff]
  %v58 = vld [vmem:[%s0 + $0x118] sm:$0xff]
  %v59 = vld [vmem:[%s1] sm:$0xff]
  %v60 = vld [vmem:[%s1 + $0x8] sm:$0xff]
  %v61 = vld [vmem:[%s1 + $0x10] sm:$0xff]
  %v62 = vld [vmem:[%s1 + $0x18] sm:$0xff]
  %v63 = vld [vmem:[%s1 + $0x20] sm:$0xff]
  %v64 = vld [vmem:[%s1 + $0x28] sm:$0xff]
  %v65 = vld [vmem:[%s1 + $0x30] sm:$0xff]
  %v66 = vld [vmem:[%s1 + $0x38] sm:$0xff]
  %v67 = vld [vmem:[%s1 + $0x40] sm:$0xff]
  %v68 = vld [vmem:[%s1 + $0x48] sm:$0xff]
  %v69 = vld [vmem:[%s1 + $0x50] sm:$0xff]
  %v70 = vld [vmem:[%s1 + $0x58] sm:$0xff]
  %v71 = vld [vmem:[%s1 + $0x60] sm:$0xff]
  %v72 = vld [vmem:[%s1 + $0x68] sm:$0xff]
  %v73 = vld [vmem:[%s1 + $0x70] sm:$0xff]
  %v74 = vld [vmem:[%s1 + $0x78] sm:$0xff]
  %v75 = vld [vmem:[%s1 + $0x80] sm:$0xff]
  %v76 = vld [vmem:[%s1 + $0x88] sm:$0xff]
  %v77 = vld [vmem:[%s1 + $0x90] sm:$0xff]
  %v78 = vld [vmem:[%s1 + $0x98] sm:$0xff]
  %v79 = vld [vmem:[%s1 + $0xa0] sm:$0xff]
  %v80 = vld [vmem:[%s1 + $0xa8] sm:$0xff]
  %v81 = vld [vmem:[%s1 + $0xb0] sm:$0xff]
  %v82 = vld [vmem:[%s1 + $0xb8] sm:$0xff]
  %v83 = vld [vmem:[%s1 + $0xc0] sm:$0xff]
  %v84 = vld [vmem:[%s1 + $0xc8] sm:$0xff]
  %v85 = vld [vmem:[%s1 + $0xd0] sm:$0xff]
  %v86 = vld [vmem:[%s1 + $0xd8] sm:$0xff]
  %v87 = vld [vmem:[%s1 + $0xe0] sm:$0xff]
  %v88 = vld [vmem:[%s1 + $0xe8] sm:$0xff]
  %v89 = vld [vmem:[%s1 + $0xf0] sm:$0xff]
  %v90 = vld [vmem:[%s1 + $0xf8] sm:$0xff]
  %v91 = vld [vmem:[%s1 + $0x100] sm:$0xff]
  %v92 = vld [vmem:[%s1 + $0x108] sm:$0xff]
  %v93 = vld [vmem:[%s1 + $0x110] sm:$0xff]
  %v94 = vld [vmem:[%s1 + $0x118] sm:$0xff]
  %v95 = vld [vmem:[%s1 + $0x120] sm:$0xff]
  %v96 = vld [vmem:[%s1 + $0x128] sm:$0xff]
  %v97 = vld [vmem:[%s1 + $0x130] sm:$0xff]
  %v98 = vld [vmem:[%s1 + $0x138] sm:$0xff]
  %v99 = vld [vmem:[%s1 + $0x140] sm:$0xff]
  %v100 = vld [vmem:[%s1 + $0x148] sm:$0xff]
  %v101 = vld [vmem:[%s1 + $0x150] sm:$0xff]
  %v102 = vld [vmem:[%s1 + $0x158] sm:$0xff]
  %v103 = vld [vmem:[%s1 + $0x160] sm:$0xff]
  %v104 = vld [vmem:[%s1 + $0x168] sm:$0xff]
  %v105 = vld [vmem:[%s1 + $0x170] sm:$0xff]
  %v106 = vld [vmem:[%s1 + $0x178] sm:$0xff]
  %v107 = vld [vmem:[%s1 + $0x180] sm:$0xff]
  %v108 = vld [vmem:[%s1 + $0x188] sm:$0xff]
  %v109 = vld [vmem:[%s1 + $0x190] sm:$0xff]
  %v110 = vld [vmem:[%s1 + $0x198] sm:$0xff]
  %v111 = vld [vmem:[%s1 + $0x1a0] sm:$0xff]
  %v112 = vld [vmem:[%s1 + $0x1a8] sm:$0xff]
  %v113 = vld [vmem:[%s1 + $0x1b0] sm:$0xff]
  %v114 = vld [vmem:[%s1 + $0x1b8] sm:$0xff]
  %v115 = vld [vmem:[%s1 + $0x1c0] sm:$0xff]
  %v116 = vld [vmem:[%s1 + $0x1c8] sm:$0xff]
  %v117 = vld [vmem:[%s1 + $0x1d0] sm:$0xff]
  %v118 = vld [vmem:[%s1 + $0x1d8] sm:$0xff]
  %v119 = vld [vmem:[%s1 + $0x1e0] sm:$0xff]
  %v120 = vld [vmem:[%s1 + $0x1e8] sm:$0xff]
  %v121 = vld [vmem:[%s1 + $0x1f0] sm:$0xff]
  %v122 = vld [vmem:[%s1 + $0x1f8] sm:$0xff]
  %v123 = vld [vmem:[%s1 + $0x200] sm:$0xff]
  %v124 = vld [vmem:[%s1 + $0x208] sm:$0xff]
  %v125 = vld [vmem:[%s1 + $0x210] sm:$0xff]
  %v126 = vld [vmem:[%s1 + $0x218] sm:$0xff]
  %v127 = vld [vmem:[%s1 + $0x220] sm:$0xff]
  %v128 = vld [vmem:[%s1 + $0x228] sm:$0xff]
  %v129 = vld [vmem:[%s1 + $0x230] sm:$0xff]
  %v130 = vld [vmem:[%s1 + $0x238] sm:$0xff]
  %v131 = vld [vmem:[%s1 + $0x240] sm:$0xff]
  %v132 = vld [vmem:[%s1 + $0x248] sm:$0xff]
  %v133 = vld [vmem:[%s1 + $0x250] sm:$0xff]
  %v134 = vld [vmem:[%s1 + $0x258] sm:$0xff]
  %v135 = vld [vmem:[%s1 + $0x260] sm:$0xff]
  %v136 = vld [vmem:[%s1 + $0x268] sm:$0xff]
  %v137 = vld [vmem:[%s1 + $0x270] sm:$0xff]
  %v138 = vld [vmem:[%s1 + $0x278] sm:$0xff]
  %v139 = vld [vmem:[%s1 + $0x280] sm:$0xff]
  %v140 = vld [vmem:[%s1 + $0x288] sm:$0xff]
  %v141 = vld [vmem:[%s1 + $0x290] sm:$0xff]
  %v142 = vld [vmem:[%s1 + $0x298] sm:$0xff]
  %v143 = vld [vmem:[%s1 + $0x2a0] sm:$0xff]
  %v144 = vld [vmem:[%s1 + $0x2a8] sm:$0xff]
  %v145 = vld [vmem:[%s1 + $0x2b0] sm:$0xff]
  %v146 = vld [vmem:[%s1 + $0x2b8] sm:$0xff]
  %v147 = vld [vmem:[%s1 + $0x2c0] sm:$0xff]
  %v148 = vld [vmem:[%s1 + $0x2c8] sm:$0xff]
  %v149 = vld [vmem:[%s1 + $0x2d0] sm:$0xff]
  %v150 = vld [vmem:[%s1 + $0x2d8] sm:$0xff]
  %v151 = vld [vmem:[%s1 + $0x2e0] sm:$0xff]
  %v152 = vld [vmem:[%s1 + $0x2e8] sm:$0xff]
  %v153 = vld [vmem:[%s1 + $0x2f0] sm:$0xff]
  %v154 = vld [vmem:[%s1 + $0x2f8] sm:$0xff]
  %v155 = vld [vmem:[%s1 + $0x300] sm:$0xff]
  %v156 = vld [vmem:[%s1 + $0x308] sm:$0xff]
  %v157 = vld [vmem:[%s1 + $0x310] sm:$0xff]
  %v158 = vld [vmem:[%s1 + $0x318] sm:$0xff]
  %v159 = vld [vmem:[%s1 + $0x320] sm:$0xff]
  %v160 = vld [vmem:[%s1 + $0x328] sm:$0xff]
  %v161 = vld [vmem:[%s1 + $0x330] sm:$0xff]
  %v162 = vld [vmem:[%s1 + $0x338] sm:$0xff]
  %v163 = vld [vmem:[%s1 + $0x340] sm:$0xff]
  %v164 = vld [vmem:[%s1 + $0x348] sm:$0xff]
  %v165 = vld [vmem:[%s1 + $0x350] sm:$0xff]
  %v166 = vld [vmem:[%s1 + $0x358] sm:$0xff]
  %v167 = vld [vmem:[%s1 + $0x360] sm:$0xff]
  %v168 = vld [vmem:[%s1 + $0x368] sm:$0xff]
  %v169 = vld [vmem:[%s1 + $0x370] sm:$0xff]
  %v170 = vld [vmem:[%s1 + $0x378] sm:$0xff]
  %v171 = vld [vmem:[%s1 + $0x380] sm:$0xff]
  %v172 = vld [vmem:[%s1 + $0x388] sm:$0xff]
  %v173 = vld [vmem:[%s1 + $0x390] sm:$0xff]
  %v174 = vld [vmem:[%s1 + $0x398] sm:$0xff]
  %v175 = vld [vmem:[%s1 + $0x3a0] sm:$0xff]
  %v176 = vld [vmem:[%s1 + $0x3a8] sm:$0xff]
  %v177 = vld [vmem:[%s1 + $0x3b0] sm:$0xff]
  %v178 = vld [vmem:[%s1 + $0x3b8] sm:$0xff]
  %v179 = vld [vmem:[%s1 + $0x3c0] sm:$0xff]
  %v180 = vld [vmem:[%s1 + $0x3c8] sm:$0xff]
  %v181 = vld [vmem:[%s1 + $0x3d0] sm:$0xff]
  %v182 = vld [vmem:[%s1 + $0x3d8] sm:$0xff]
  %v183 = vld [vmem:[%s1 + $0x3e0] sm:$0xff]
  %v184 = vld [vmem:[%s1 + $0x3e8] sm:$0xff]
  %v185 = vld [vmem:[%s1 + $0x3f0] sm:$0xff]
  %v186 = vld [vmem:[%s1 + $0x3f8] sm:$0xff]
  %v187 = vld [vmem:[%s1 + $0x400] sm:$0xff]
  %v188 = vld [vmem:[%s1 + $0x408] sm:$0xff]
  %v189 = vld [vmem:[%s1 + $0x410] sm:$0xff]
  %v190 = vld [vmem:[%s1 + $0x418] sm:$0xff]
  %v191 = vld [vmem:[%s1 + $0x420] sm:$0xff]
  %v192 = vld [vmem:[%s1 + $0x428] sm:$0xff]
  %v193 = vld [vmem:[%s1 + $0x430] sm:$0xff]
  %v194 = vld [vmem:[%s1 + $0x438] sm:$0xff]
  %v195 = vld [vmem:[%s1 + $0x440] sm:$0xff]
  %v196 = vld [vmem:[%s1 + $0x448] sm:$0xff]
  %v197 = vld [vmem:[%s1 + $0x450] sm:$0xff]
  %v198 = vld [vmem:[%s1 + $0x458] sm:$0xff]
  %v199 = vld [vmem:[%s1 + $0x460] sm:$0xff]
  %v200 = vld [vmem:[%s1 + $0x468] sm:$0xff]
  %v201 = vld [vmem:[%s1 + $0x470] sm:$0xff]
  %v202 = vld [vmem:[%s1 + $0x478] sm:$0xff]
  %v203 = vld [vmem:[%s2] sm:$0x1]
  %v205 = vlaneseq
  %v206 = vshrl.u32 %v205, 7
  %v207 = vsub.s32 0, %v206
  %v208 = vrot.slane %v203, %v207
  %210 = vmatprep.subr.mxu0 0.0
  %211 = vmatpush1.msra.mxu0 %v59
  %212 = vmatprep.subr.mxu0 0.0
  %213 = vmatpush1.msra.mxu0 %v60
  %214 = vmatprep.subr.mxu0 0.0
  %215 = vmatpush1.msra.mxu0 %v61
  %216 = vmatprep.subr.mxu0 0.0
  %217 = vmatpush1.msra.mxu0 %v62
  %218 = vmatprep.subr.mxu0 0.0
  %219 = vmatpush1.msra.mxu0 %v63
  %220 = vmatprep.subr.mxu0 0.0
  %221 = vmatpush1.msra.mxu0 %v64
  %222 = vmatprep.subr.mxu0 0.0
  %223 = vmatpush1.msra.mxu0 %v65
  %224 = vmatprep.subr.mxu0 0.0
  %225 = vmatpush1.msra.mxu0 %v66
  %226 = vmatprep.subr.mxu0 0.0
  %227 = vmatpush1.msra.mxu0 %v67
  %228 = vmatprep.subr.mxu0 0.0
  %229 = vmatpush1.msra.mxu0 %v68
  %230 = vmatprep.subr.mxu0 0.0
  %231 = vmatpush1.msra.mxu0 %v69
  %232 = vmatprep.subr.mxu0 0.0
  %233 = vmatpush1.msra.mxu0 %v70
  %234 = vmatprep.subr.mxu0 0.0
  %235 = vmatpush1.msra.mxu0 %v71
  %236 = vmatprep.subr.mxu0 0.0
  %237 = vmatpush1.msra.mxu0 %v72
  %238 = vmatprep.subr.mxu0 0.0
  %239 = vmatpush1.msra.mxu0 %v73
  %240 = vmatprep.subr.mxu0 0.0
  %241 = vmatpush1.msra.mxu0 %v74
  %242 = vmatprep.subr.mxu0 0.0
  %243 = vmatpush1.msra.mxu0 %v75
  %244 = vmatprep.subr.mxu0 0.0
  %245 = vmatpush1.msra.mxu0 %v76
  %246 = vmatprep.subr.mxu0 0.0
  %247 = vmatpush1.msra.mxu0 %v77
  %248 = vmatprep.subr.mxu0 0.0
  %249 = vmatpush1.msra.mxu0 %v78
  %250 = vmatprep.subr.mxu0 0.0
  %251 = vmatpush1.msra.mxu0 %v79
  %252 = vmatprep.subr.mxu0 0.0
  %253 = vmatpush1.msra.mxu0 %v80
  %254 = vmatprep.subr.mxu0 0.0
  %255 = vmatpush1.msra.mxu0 %v81
  %256 = vmatprep.subr.mxu0 0.0
  %257 = vmatpush1.msra.mxu0 %v82
  %258 = vmatprep.subr.mxu0 0.0
  %259 = vmatpush1.msra.mxu0 %v83
  %260 = vmatprep.subr.mxu0 0.0
  %261 = vmatpush1.msra.mxu0 %v84
  %262 = vmatprep.subr.mxu0 0.0
  %263 = vmatpush1.msra.mxu0 %v85
  %264 = vmatprep.subr.mxu0 0.0
  %265 = vmatpush1.msra.mxu0 %v86
  %266 = vmatprep.subr.mxu0 0.0
  %267 = vmatpush1.msra.mxu0 %v87
  %268 = vmatprep.subr.mxu0 0.0
  %269 = vmatpush1.msra.mxu0 %v88
  %270 = vmatprep.subr.mxu0 0.0
  %271 = vmatpush1.msra.mxu0 %v89
  %272 = vmatprep.subr.mxu0 0.0
  %273 = vmatpush1.msra.mxu0 %v90
  %274 = vmatprep.mubr.f32.mxu0 %v24
  %275 = vmatmul.mubr.f32.gmra.mrb[0].mxu0 %v23
  %v276 = vpop.f32.mrb[0].mxu0
  %v277 = vadd.f32 %v208, %v276
  %v278 = vpop.f32.mrb[0].mxu0
  %279 = vmatprep.mubr.f32.mxu0 %v33
  %280 = vmatmul.mubr.f32.gmra.mrb[0].mxu0 %v32
  %v281 = vpop.f32.mrb[0].mxu0
  %v282 = vadd.f32 %v208, %v281
  %v283 = vpop.f32.mrb[0].mxu0
  %284 = vmatprep.mubr.f32.mxu0 %v42
  %285 = vmatmul.mubr.f32.gmra.mrb[0].mxu0 %v41
  %v286 = vpop.f32.mrb[0].mxu0
  %v287 = vadd.f32 %v208, %v286
  %v288 = vpop.f32.mrb[0].mxu0
  %289 = vmatprep.mubr.f32.mxu0 %v51
  %290 = vmatmul.mubr.f32.gmra.mrb[0].mxu0 %v50
  %v291 = vpop.f32.mrb[0].mxu0
  %v292 = vadd.f32 %v208, %v291
  %v293 = vpop.f32.mrb[0].mxu0
  %294 = vdwg.mxu0
  %295 = vmatprep.subr.mxu0 0.0
  %296 = vmatpush1.msra.mxu0 %v91
  %297 = vmatprep.subr.mxu0 0.0
  %298 = vmatpush1.msra.mxu0 %v92
  %299 = vmatprep.subr.mxu0 0.0
  %300 = vmatpush1.msra.mxu0 %v93
  %301 = vmatprep.subr.mxu0 0.0
  %302 = vmatpush1.msra.mxu0 %v94
  %303 = vmatprep.subr.mxu0 0.0
  %304 = vmatpush1.msra.mxu0 %v95
  %305 = vmatprep.subr.mxu0 0.0
  %306 = vmatpush1.msra.mxu0 %v96
  %307 = vmatprep.subr.mxu0 0.0
  %308 = vmatpush1.msra.mxu0 %v97
  %309 = vmatprep.subr.mxu0 0.0
  %310 = vmatpush1.msra.mxu0 %v98
  %311 = vmatprep.subr.mxu0 0.0
  %312 = vmatpush1.msra.mxu0 %v99
  %313 = vmatprep.subr.mxu0 0.0
  %314 = vmatpush1.msra.mxu0 %v100
  %315 = vmatprep.subr.mxu0 0.0
  %316 = vmatpush1.msra.mxu0 %v101
  %317 = vmatprep.subr.mxu0 0.0
  %318 = vmatpush1.msra.mxu0 %v102
  %319 = vmatprep.subr.mxu0 0.0
  %320 = vmatpush1.msra.mxu0 %v103
  %321 = vmatprep.subr.mxu0 0.0
  %322 = vmatpush1.msra.mxu0 %v104
  %323 = vmatprep.subr.mxu0 0.0
  %324 = vmatpush1.msra.mxu0 %v105
  %325 = vmatprep.subr.mxu0 0.0
  %326 = vmatpush1.msra.mxu0 %v106
  %327 = vmatprep.subr.mxu0 0.0
  %328 = vmatpush1.msra.mxu0 %v107
  %329 = vmatprep.subr.mxu0 0.0
  %330 = vmatpush1.msra.mxu0 %v108
  %331 = vmatprep.subr.mxu0 0.0
  %332 = vmatpush1.msra.mxu0 %v109
  %333 = vmatprep.subr.mxu0 0.0
  %334 = vmatpush1.msra.mxu0 %v110
  %335 = vmatprep.subr.mxu0 0.0
  %336 = vmatpush1.msra.mxu0 %v111
  %337 = vmatprep.subr.mxu0 0.0
  %338 = vmatpush1.msra.mxu0 %v112
  %339 = vmatprep.subr.mxu0 0.0
  %340 = vmatpush1.msra.mxu0 %v113
  %341 = vmatprep.subr.mxu0 0.0
  %342 = vmatpush1.msra.mxu0 %v114
  %343 = vmatprep.subr.mxu0 0.0
  %344 = vmatpush1.msra.mxu0 %v115
  %345 = vmatprep.subr.mxu0 0.0
  %346 = vmatpush1.msra.mxu0 %v116
  %347 = vmatprep.subr.mxu0 0.0
  %348 = vmatpush1.msra.mxu0 %v117
  %349 = vmatprep.subr.mxu0 0.0
  %350 = vmatpush1.msra.mxu0 %v118
  %351 = vmatprep.subr.mxu0 0.0
  %352 = vmatpush1.msra.mxu0 %v119
  %353 = vmatprep.subr.mxu0 0.0
  %354 = vmatpush1.msra.mxu0 %v120
  %355 = vmatprep.subr.mxu0 0.0
  %356 = vmatpush1.msra.mxu0 %v121
  %357 = vmatprep.subr.mxu0 0.0
  %358 = vmatpush1.msra.mxu0 %v122
  %359 = vmatprep.mubr.f32.mxu0 %v26
  %360 = vmatmul.mubr.f32.gmra.mrb[0].mxu0 %v25
  %v361 = vpop.f32.mrb[0].mxu0
  %v362 = vadd.f32 %v277, %v361
  %v363 = vpop.f32.mrb[0].mxu0
  %364 = vmatprep.mubr.f32.mxu0 %v35
  %365 = vmatmul.mubr.f32.gmra.mrb[0].mxu0 %v34
  %v366 = vpop.f32.mrb[0].mxu0
  %v367 = vadd.f32 %v282, %v366
  %v368 = vpop.f32.mrb[0].mxu0
  %369 = vmatprep.mubr.f32.mxu0 %v44
  %370 = vmatmul.mubr.f32.gmra.mrb[0].mxu0 %v43
  %v371 = vpop.f32.mrb[0].mxu0
  %v372 = vadd.f32 %v287, %v371
  %v373 = vpop.f32.mrb[0].mxu0
  %374 = vmatprep.mubr.f32.mxu0 %v53
  %375 = vmatmul.mubr.f32.gmra.mrb[0].mxu0 %v52
  %v376 = vpop.f32.mrb[0].mxu0
  %v377 = vadd.f32 %v292, %v376
  %v378 = vpop.f32.mrb[0].mxu0
  %379 = vdwg.mxu0
  %380 = vmatprep.subr.mxu0 0.0
  %381 = vmatpush1.msra.mxu0 %v123
  %382 = vmatprep.subr.mxu0 0.0
  %383 = vmatpush1.msra.mxu0 %v124
  %384 = vmatprep.subr.mxu0 0.0
  %385 = vmatpush1.msra.mxu0 %v125
  %386 = vmatprep.subr.mxu0 0.0
  %387 = vmatpush1.msra.mxu0 %v126
  %388 = vmatprep.subr.mxu0 0.0
  %389 = vmatpush1.msra.mxu0 %v127
  %390 = vmatprep.subr.mxu0 0.0
  %391 = vmatpush1.msra.mxu0 %v128
  %392 = vmatprep.subr.mxu0 0.0
  %393 = vmatpush1.msra.mxu0 %v129
  %394 = vmatprep.subr.mxu0 0.0
  %395 = vmatpush1.msra.mxu0 %v130
  %396 = vmatprep.subr.mxu0 0.0
  %397 = vmatpush1.msra.mxu0 %v131
  %398 = vmatprep.subr.mxu0 0.0
  %399 = vmatpush1.msra.mxu0 %v132
  %400 = vmatprep.subr.mxu0 0.0
  %401 = vmatpush1.msra.mxu0 %v133
  %402 = vmatprep.subr.mxu0 0.0
  %403 = vmatpush1.msra.mxu0 %v134
  %404 = vmatprep.subr.mxu0 0.0
  %405 = vmatpush1.msra.mxu0 %v135
  %406 = vmatprep.subr.mxu0 0.0
  %407 = vmatpush1.msra.mxu0 %v136
  %408 = vmatprep.subr.mxu0 0.0
  %409 = vmatpush1.msra.mxu0 %v137
  %410 = vmatprep.subr.mxu0 0.0
  %411 = vmatpush1.msra.mxu0 %v138
  %412 = vmatprep.subr.mxu0 0.0
  %413 = vmatpush1.msra.mxu0 %v139
  %414 = vmatprep.subr.mxu0 0.0
  %415 = vmatpush1.msra.mxu0 %v140
  %416 = vmatprep.subr.mxu0 0.0
  %417 = vmatpush1.msra.mxu0 %v141
  %418 = vmatprep.subr.mxu0 0.0
  %419 = vmatpush1.msra.mxu0 %v142
  %420 = vmatprep.subr.mxu0 0.0
  %421 = vmatpush1.msra.mxu0 %v143
  %422 = vmatprep.subr.mxu0 0.0
  %423 = vmatpush1.msra.mxu0 %v144
  %424 = vmatprep.subr.mxu0 0.0
  %425 = vmatpush1.msra.mxu0 %v145
  %426 = vmatprep.subr.mxu0 0.0
  %427 = vmatpush1.msra.mxu0 %v146
  %428 = vmatprep.subr.mxu0 0.0
  %429 = vmatpush1.msra.mxu0 %v147
  %430 = vmatprep.subr.mxu0 0.0
  %431 = vmatpush1.msra.mxu0 %v148
  %432 = vmatprep.subr.mxu0 0.0
  %433 = vmatpush1.msra.mxu0 %v149
  %434 = vmatprep.subr.mxu0 0.0
  %435 = vmatpush1.msra.mxu0 %v150
  %436 = vmatprep.subr.mxu0 0.0
  %437 = vmatpush1.msra.mxu0 %v151
  %438 = vmatprep.subr.mxu0 0.0
  %439 = vmatpush1.msra.mxu0 %v152
  %440 = vmatprep.subr.mxu0 0.0
  %441 = vmatpush1.msra.mxu0 %v153
  %442 = vmatprep.subr.mxu0 0.0
  %443 = vmatpush1.msra.mxu0 %v154
  %444 = vmatprep.mubr.f32.mxu0 %v28
  %445 = vmatmul.mubr.f32.gmra.mrb[0].mxu0 %v27
  %v446 = vpop.f32.mrb[0].mxu0
  %v447 = vadd.f32 %v362, %v446
  %v448 = vpop.f32.mrb[0].mxu0
  %449 = vmatprep.mubr.f32.mxu0 %v37
  %450 = vmatmul.mubr.f32.gmra.mrb[0].mxu0 %v36
  %v451 = vpop.f32.mrb[0].mxu0
  %v452 = vadd.f32 %v367, %v451
  %v453 = vpop.f32.mrb[0].mxu0
  %454 = vmatprep.mubr.f32.mxu0 %v46
  %455 = vmatmul.mubr.f32.gmra.mrb[0].mxu0 %v45
  %v456 = vpop.f32.mrb[0].mxu0
  %v457 = vadd.f32 %v372, %v456
  %v458 = vpop.f32.mrb[0].mxu0
  %459 = vmatprep.mubr.f32.mxu0 %v55
  %460 = vmatmul.mubr.f32.gmra.mrb[0].mxu0 %v54
  %v461 = vpop.f32.mrb[0].mxu0
  %v462 = vadd.f32 %v377, %v461
  %v463 = vpop.f32.mrb[0].mxu0
  %464 = vdwg.mxu0
  %465 = vmatprep.subr.mxu0 0.0
  %466 = vmatpush1.msra.mxu0 %v155
  %467 = vmatprep.subr.mxu0 0.0
  %468 = vmatpush1.msra.mxu0 %v156
  %469 = vmatprep.subr.mxu0 0.0
  %470 = vmatpush1.msra.mxu0 %v157
  %471 = vmatprep.subr.mxu0 0.0
  %472 = vmatpush1.msra.mxu0 %v158
  %473 = vmatprep.subr.mxu0 0.0
  %474 = vmatpush1.msra.mxu0 %v159
  %475 = vmatprep.subr.mxu0 0.0
  %476 = vmatpush1.msra.mxu0 %v160
  %477 = vmatprep.subr.mxu0 0.0
  %478 = vmatpush1.msra.mxu0 %v161
  %479 = vmatprep.subr.mxu0 0.0
  %480 = vmatpush1.msra.mxu0 %v162
  %481 = vmatprep.subr.mxu0 0.0
  %482 = vmatpush1.msra.mxu0 %v163
  %483 = vmatprep.subr.mxu0 0.0
  %484 = vmatpush1.msra.mxu0 %v164
  %485 = vmatprep.subr.mxu0 0.0
  %486 = vmatpush1.msra.mxu0 %v165
  %487 = vmatprep.subr.mxu0 0.0
  %488 = vmatpush1.msra.mxu0 %v166
  %489 = vmatprep.subr.mxu0 0.0
  %490 = vmatpush1.msra.mxu0 %v167
  %491 = vmatprep.subr.mxu0 0.0
  %492 = vmatpush1.msra.mxu0 %v168
  %493 = vmatprep.subr.mxu0 0.0
  %494 = vmatpush1.msra.mxu0 %v169
  %495 = vmatprep.subr.mxu0 0.0
  %496 = vmatpush1.msra.mxu0 %v170
  %497 = vmatprep.subr.mxu0 0.0
  %498 = vmatpush1.msra.mxu0 %v171
  %499 = vmatprep.subr.mxu0 0.0
  %500 = vmatpush1.msra.mxu0 %v172
  %501 = vmatprep.subr.mxu0 0.0
  %502 = vmatpush1.msra.mxu0 %v173
  %503 = vmatprep.subr.mxu0 0.0
  %504 = vmatpush1.msra.mxu0 %v174
  %505 = vmatprep.subr.mxu0 0.0
  %506 = vmatpush1.msra.mxu0 %v175
  %507 = vmatprep.subr.mxu0 0.0
  %508 = vmatpush1.msra.mxu0 %v176
  %509 = vmatprep.subr.mxu0 0.0
  %510 = vmatpush1.msra.mxu0 %v177
  %511 = vmatprep.subr.mxu0 0.0
  %512 = vmatpush1.msra.mxu0 %v178
  %513 = vmatprep.subr.mxu0 0.0
  %514 = vmatpush1.msra.mxu0 %v179
  %515 = vmatprep.subr.mxu0 0.0
  %516 = vmatpush1.msra.mxu0 %v180
  %517 = vmatprep.subr.mxu0 0.0
  %518 = vmatpush1.msra.mxu0 %v181
  %519 = vmatprep.subr.mxu0 0.0
  %520 = vmatpush1.msra.mxu0 %v182
  %521 = vmatprep.subr.mxu0 0.0
  %522 = vmatpush1.msra.mxu0 %v183
  %523 = vmatprep.subr.mxu0 0.0
  %524 = vmatpush1.msra.mxu0 %v184
  %525 = vmatprep.subr.mxu0 0.0
  %526 = vmatpush1.msra.mxu0 %v185
  %527 = vmatprep.subr.mxu0 0.0
  %528 = vmatpush1.msra.mxu0 %v186
  %529 = vmatprep.mubr.f32.mxu0 %v30
  %530 = vmatmul.mubr.f32.gmra.mrb[0].mxu0 %v29
  %v531 = vpop.f32.mrb[0].mxu0
  %v532 = vadd.f32 %v447, %v531
  %v533 = vpop.f32.mrb[0].mxu0
  %534 = vmatprep.mubr.f32.mxu0 %v39
  %535 = vmatmul.mubr.f32.gmra.mrb[0].mxu0 %v38
  %v536 = vpop.f32.mrb[0].mxu0
  %v537 = vadd.f32 %v452, %v536
  %v538 = vpop.f32.mrb[0].mxu0
  %539 = vmatprep.mubr.f32.mxu0 %v48
  %540 = vmatmul.mubr.f32.gmra.mrb[0].mxu0 %v47
  %v541 = vpop.f32.mrb[0].mxu0
  %v542 = vadd.f32 %v457, %v541
  %v543 = vpop.f32.mrb[0].mxu0
  %544 = vmatprep.mubr.f32.mxu0 %v57
  %545 = vmatmul.mubr.f32.gmra.mrb[0].mxu0 %v56
  %v546 = vpop.f32.mrb[0].mxu0
  %v547 = vadd.f32 %v462, %v546
  %v548 = vpop.f32.mrb[0].mxu0
  %549 = vdwg.mxu0
  %550 = vmatprep.subr.mxu0 0.0
  %551 = vmatpush1.msra.mxu0 %v187
  %552 = vmatprep.subr.mxu0 0.0
  %553 = vmatpush1.msra.mxu0 %v188
  %554 = vmatprep.subr.mxu0 0.0
  %555 = vmatpush1.msra.mxu0 %v189
  %556 = vmatprep.subr.mxu0 0.0
  %557 = vmatpush1.msra.mxu0 %v190
  %558 = vmatprep.subr.mxu0 0.0
  %559 = vmatpush1.msra.mxu0 %v191
  %560 = vmatprep.subr.mxu0 0.0
  %561 = vmatpush1.msra.mxu0 %v192
  %562 = vmatprep.subr.mxu0 0.0
  %563 = vmatpush1.msra.mxu0 %v193
  %564 = vmatprep.subr.mxu0 0.0
  %565 = vmatpush1.msra.mxu0 %v194
  %566 = vmatprep.subr.mxu0 0.0
  %567 = vmatpush1.msra.mxu0 %v195
  %568 = vmatprep.subr.mxu0 0.0
  %569 = vmatpush1.msra.mxu0 %v196
  %570 = vmatprep.subr.mxu0 0.0
  %571 = vmatpush1.msra.mxu0 %v197
  %572 = vmatprep.subr.mxu0 0.0
  %573 = vmatpush1.msra.mxu0 %v198
  %574 = vmatprep.subr.mxu0 0.0
  %575 = vmatpush1.msra.mxu0 %v199
  %576 = vmatprep.subr.mxu0 0.0
  %577 = vmatpush1.msra.mxu0 %v200
  %578 = vmatprep.subr.mxu0 0.0
  %579 = vmatpush1.msra.mxu0 %v201
  %580 = vmatprep.subr.mxu0 0.0
  %581 = vmatpush1.msra.mxu0 %v202
  %582 = vmatprep.subr.mxu0 0.0
  %583 = vmatpush1.msra.mxu0 0.0
  %584 = vmatprep.subr.mxu0 0.0
  %585 = vmatpush1.msra.mxu0 0.0
  %586 = vmatprep.subr.mxu0 0.0
  %587 = vmatpush1.msra.mxu0 0.0
  %588 = vmatprep.subr.mxu0 0.0
  %589 = vmatpush1.msra.mxu0 0.0
  %590 = vmatprep.subr.mxu0 0.0
  %591 = vmatpush1.msra.mxu0 0.0
  %592 = vmatprep.subr.mxu0 0.0
  %593 = vmatpush1.msra.mxu0 0.0
  %594 = vmatprep.subr.mxu0 0.0
  %595 = vmatpush1.msra.mxu0 0.0
  %596 = vmatprep.subr.mxu0 0.0
  %597 = vmatpush1.msra.mxu0 0.0
  %598 = vmatprep.subr.mxu0 0.0
  %599 = vmatpush1.msra.mxu0 0.0
  %600 = vmatprep.subr.mxu0 0.0
  %601 = vmatpush1.msra.mxu0 0.0
  %602 = vmatprep.subr.mxu0 0.0
  %603 = vmatpush1.msra.mxu0 0.0
  %604 = vmatprep.subr.mxu0 0.0
  %605 = vmatpush1.msra.mxu0 0.0
  %606 = vmatprep.subr.mxu0 0.0
  %607 = vmatpush1.msra.mxu0 0.0
  %608 = vmatprep.subr.mxu0 0.0
  %609 = vmatpush1.msra.mxu0 0.0
  %610 = vmatprep.subr.mxu0 0.0
  %611 = vmatpush1.msra.mxu0 0.0
  %612 = vmatprep.subr.mxu0 0.0
  %613 = vmatpush1.msra.mxu0 0.0
  %614 = vmatprep.mubr.f32.mxu0 0.0
  %615 = vmatmul.mubr.f32.gmra.mrb[0].mxu0 %v31
  %v616 = vpop.f32.mrb[0].mxu0
  %v617 = vadd.f32 %v532, %v616
  %v618 = vpop.f32.mrb[0].mxu0
  %619 = vmatprep.mubr.f32.mxu0 0.0
  %620 = vmatmul.mubr.f32.gmra.mrb[0].mxu0 %v40
  %v621 = vpop.f32.mrb[0].mxu0
  %v622 = vadd.f32 %v537, %v621
  %v623 = vpop.f32.mrb[0].mxu0
  %624 = vmatprep.mubr.f32.mxu0 0.0
  %625 = vmatmul.mubr.f32.gmra.mrb[0].mxu0 %v49
  %v626 = vpop.f32.mrb[0].mxu0
  %v627 = vadd.f32 %v542, %v626
  %v628 = vpop.f32.mrb[0].mxu0
  %629 = vmatprep.mubr.f32.mxu0 0.0
  %630 = vmatmul.mubr.f32.gmra.mrb[0].mxu0 %v58
  %v631 = vpop.f32.mrb[0].mxu0
  %v632 = vadd.f32 %v547, %v631
  %v633 = vpop.f32.mrb[0].mxu0
  %634 = vdwg.mxu0
  %v635 = vadd.f32 %v617, %v622
  %v636 = vadd.f32 %v635, %v627
  %v637 = vadd.f32 %v636, %v632
  %v638 = vrot.slane %v637, 4
  %v639 = vadd.f32 %v637, %v638
  %v640 = vrot.slane %v639, 2
  %v641 = vadd.f32 %v639, %v640
  %v642 = vrot.slane %v641, 1
  %v643 = vadd.f32 %v641, %v642
  %v644 = vadd.f32 %v643, 0.0
  %v645 = vmul.f32 %v617, %v617
  %v646 = vmul.f32 %v622, %v622
  %v647 = vmul.f32 %v627, %v627
  %v648 = vmul.f32 %v632, %v632
  %v649 = vadd.f32 %v645, %v646
  %v650 = vadd.f32 %v649, %v647
  %v651 = vadd.f32 %v650, %v648
  %v652 = vrot.slane %v651, 4
  %v653 = vadd.f32 %v651, %v652
  %v654 = vrot.slane %v653, 2
  %v655 = vadd.f32 %v653, %v654
  %v656 = vrot.slane %v655, 1
  %v657 = vadd.f32 %v655, %v656
  %v658 = vadd.f32 %v657, 0.0
  %v659 = vrcp.pop 32.0
  %v660 = vmul.f32 %v644, %v659
  %v661 = vmul.f32 %v658, %v659
  %v662 = vmul.f32 %v660, %v660
  %v663 = vsub.f32 %v661, %v662
  %v664 = vadd.f32 %v663, 1e-05
  %v665 = vrsqrt.pop %v664
  %v666 = vld [vmem:[%s3] sm:$0x1]
  %v667 = vmul.f32 %v665, %v666
  %v668 = vld [vmem:[%s4] sm:$0x1]
  %v669 = vmul.f32 %v660, %v667
  %v670 = vsub.f32 %v668, %v669
  %v671 = vlaneseq
  %v672 = vshrl.u32 %v671, 7
  %v673 = vsub.s32 0, %v672
  %v674 = vrot.slane %v667, %v673
  %v675 = vmul.f32 %v617, %v674
  %v676 = vmul.f32 %v622, %v674
  %v677 = vmul.f32 %v627, %v674
  %v678 = vmul.f32 %v632, %v674
  %v680 = vlaneseq
  %v681 = vshrl.u32 %v680, 7
  %v682 = vsub.s32 0, %v681
  %v683 = vrot.slane %v670, %v682
  %v685 = vadd.f32 %v675, %v683
  %v686 = vadd.f32 %v676, %v683
  %v687 = vadd.f32 %v677, %v683
  %v688 = vadd.f32 %v678, %v683
  %v689 = vld [vmem:[%s5] sm:$0xff]
  %v690 = vld [vmem:[%s5 + $0x8] sm:$0xff]
  %v691 = vld [vmem:[%s5 + $0x10] sm:$0xff]
  %v692 = vld [vmem:[%s5 + $0x18] sm:$0xff]
  %v693 = vadd.f32 %v685, %v689
  %v694 = vadd.f32 %v686, %v690
  %v695 = vadd.f32 %v687, %v691
  %v696 = vadd.f32 %v688, %v692
  %v697 = vmax.f32 %v693, 0.0
  %v698 = vmax.f32 %v694, 0.0
  %v699 = vmax.f32 %v695, 0.0
  %v700 = vmax.f32 %v696, 0.0
  %701 = vst [vmem:[%s6] sm:$0xff] %v697
  %702 = vst [vmem:[%s6 + $0x8] sm:$0xff] %v698
  %703 = vst [vmem:[%s6 + $0x10] sm:$0xff] %v699
  %704 = vst [vmem:[%s6 + $0x18] sm:$0xff] %v700
  // Predicated region
  $region26: #{vqvae_forward.14} parent=0 // pred_check
    _
  $region27: #{vqvae_forward.14} parent=0 // pred_check_branch
    %706 = sbr.rel (0) target = $region29
  $region28: #{vqvae_forward.14} parent=0 // pred_region
    _
  $region29: #{vqvae_forward.14} parent=0 // pred_fallthru
    _
  // Predicated region
  $region30: #{vqvae_forward.14} parent=0 // pred_check
    _
  $region31: #{vqvae_forward.14} parent=0 // pred_check_branch
    %708 = sbr.rel (0) target = $region33
  $region32: #{vqvae_forward.14} parent=0 // pred_region
    _
  $region33: #{vqvae_forward.14} parent=0 // pred_fallthru
    _

// kernel: vqvae_forward.15
$region0: #{vqvae_forward.15}
  #allocation0 [shape = 'u32[]', space=smem, size = 0x4, offset = 0x4, fixed_abs, tag = 'smem constant byte address 0x4 - core index']
  #allocation1 [shape = 'u32[144,128]{1,0:T(1,128)}', space=vmem, size = 0x12000, scoped, tag = 'internal scratch']
  %s0 = inlined_call_operand.vmem [shape: f32[32,1152], index: 0, kind: input, shape index: {}]
  %s1 = inlined_call_operand.vmem [shape: f32[1152,128], index: 1, kind: input, shape index: {}]
  %s2 = inlined_call_operand.vmem [shape: f32[1,128], index: 2, kind: input, shape index: {}]
  %s3 = inlined_call_operand.vmem [shape: f32[32,128], index: 3, kind: output, shape index: {}]
  %s4 = sld [smem:[#allocation0]]
  $region22: #{vqvae_forward.15} parent=0
    _
  %s6 = ssub.s32 1, %s4
  %s7 = scalar_select 0, %s6, %s4
  // Predicated region
  $region2: #{vqvae_forward.15} parent=0 // pred_check
    _
  $region3: #{vqvae_forward.15} parent=0 // pred_check_branch
    %9 = sbr.rel (0) target = $region5
  $region4: #{vqvae_forward.15} parent=0 // pred_region
    _
  $region5: #{vqvae_forward.15} parent=0 // pred_fallthru
    _
  // Predicated region
  $region6: #{vqvae_forward.15} parent=0 // pred_check
    _
  $region7: #{vqvae_forward.15} parent=0 // pred_check_branch
    %11 = sbr.rel (0) target = $region9
  $region8: #{vqvae_forward.15} parent=0 // pred_region
    _
  $region9: #{vqvae_forward.15} parent=0 // pred_fallthru
    _
  // Predicated region
  $region10: #{vqvae_forward.15} parent=0 // pred_check
    _
  $region11: #{vqvae_forward.15} parent=0 // pred_check_branch
    %13 = sbr.rel (0) target = $region13
  $region12: #{vqvae_forward.15} parent=0 // pred_region
    _
  $region13: #{vqvae_forward.15} parent=0 // pred_fallthru
    _
  %v14 = vld [vmem:[%s0] sm:$0xff]
  %v15 = vld [vmem:[%s0 + $0x8] sm:$0xff]
  %v16 = vld [vmem:[%s0 + $0x10] sm:$0xff]
  %v17 = vld [vmem:[%s0 + $0x18] sm:$0xff]
  %v18 = vld [vmem:[%s0 + $0x20] sm:$0xff]
  %v19 = vld [vmem:[%s0 + $0x28] sm:$0xff]
  %v20 = vld [vmem:[%s0 + $0x30] sm:$0xff]
  %v21 = vld [vmem:[%s0 + $0x38] sm:$0xff]
  %v22 = vld [vmem:[%s0 + $0x40] sm:$0xff]
  %v23 = vld [vmem:[%s0 + $0x48] sm:$0xff]
  %v24 = vld [vmem:[%s0 + $0x50] sm:$0xff]
  %v25 = vld [vmem:[%s0 + $0x58] sm:$0xff]
  %v26 = vld [vmem:[%s0 + $0x60] sm:$0xff]
  %v27 = vld [vmem:[%s0 + $0x68] sm:$0xff]
  %v28 = vld [vmem:[%s0 + $0x70] sm:$0xff]
  %v29 = vld [vmem:[%s0 + $0x78] sm:$0xff]
  %v30 = vld [vmem:[%s0 + $0x80] sm:$0xff]
  %v31 = vld [vmem:[%s0 + $0x88] sm:$0xff]
  %v32 = vld [vmem:[%s0 + $0x90] sm:$0xff]
  %v33 = vld [vmem:[%s0 + $0x98] sm:$0xff]
  %v34 = vld [vmem:[%s0 + $0xa0] sm:$0xff]
  %v35 = vld [vmem:[%s0 + $0xa8] sm:$0xff]
  %v36 = vld [vmem:[%s0 + $0xb0] sm:$0xff]
  %v37 = vld [vmem:[%s0 + $0xb8] sm:$0xff]
  %v38 = vld [vmem:[%s0 + $0xc0] sm:$0xff]
  %v39 = vld [vmem:[%s0 + $0xc8] sm:$0xff]
  %v40 = vld [vmem:[%s0 + $0xd0] sm:$0xff]
  %v41 = vld [vmem:[%s0 + $0xd8] sm:$0xff]
  %v42 = vld [vmem:[%s0 + $0xe0] sm:$0xff]
  %v43 = vld [vmem:[%s0 + $0xe8] sm:$0xff]
  %v44 = vld [vmem:[%s0 + $0xf0] sm:$0xff]
  %v45 = vld [vmem:[%s0 + $0xf8] sm:$0xff]
  %v46 = vld [vmem:[%s0 + $0x100] sm:$0xff]
  %v47 = vld [vmem:[%s0 + $0x108] sm:$0xff]
  %v48 = vld [vmem:[%s0 + $0x110] sm:$0xff]
  %v49 = vld [vmem:[%s0 + $0x118] sm:$0xff]
  %v50 = vld [vmem:[%s1] sm:$0xff]
  %v51 = vld [vmem:[%s1 + $0x8] sm:$0xff]
  %v52 = vld [vmem:[%s1 + $0x10] sm:$0xff]
  %v53 = vld [vmem:[%s1 + $0x18] sm:$0xff]
  %v54 = vld [vmem:[%s1 + $0x20] sm:$0xff]
  %v55 = vld [vmem:[%s1 + $0x28] sm:$0xff]
  %v56 = vld [vmem:[%s1 + $0x30] sm:$0xff]
  %v57 = vld [vmem:[%s1 + $0x38] sm:$0xff]
  %v58 = vld [vmem:[%s1 + $0x40] sm:$0xff]
  %v59 = vld [vmem:[%s1 + $0x48] sm:$0xff]
  %v60 = vld [vmem:[%s1 + $0x50] sm:$0xff]
  %v61 = vld [vmem:[%s1 + $0x58] sm:$0xff]
  %v62 = vld [vmem:[%s1 + $0x60] sm:$0xff]
  %v63 = vld [vmem:[%s1 + $0x68] sm:$0xff]
  %v64 = vld [vmem:[%s1 + $0x70] sm:$0xff]
  %v65 = vld [vmem:[%s1 + $0x78] sm:$0xff]
  %v66 = vld [vmem:[%s1 + $0x80] sm:$0xff]
  %v67 = vld [vmem:[%s1 + $0x88] sm:$0xff]
  %v68 = vld [vmem:[%s1 + $0x90] sm:$0xff]
  %v69 = vld [vmem:[%s1 + $0x98] sm:$0xff]
  %v70 = vld [vmem:[%s1 + $0xa0] sm:$0xff]
  %v71 = vld [vmem:[%s1 + $0xa8] sm:$0xff]
  %v72 = vld [vmem:[%s1 + $0xb0] sm:$0xff]
  %v73 = vld [vmem:[%s1 + $0xb8] sm:$0xff]
  %v74 = vld [vmem:[%s1 + $0xc0] sm:$0xff]
  %v75 = vld [vmem:[%s1 + $0xc8] sm:$0xff]
  %v76 = vld [vmem:[%s1 + $0xd0] sm:$0xff]
  %v77 = vld [vmem:[%s1 + $0xd8] sm:$0xff]
  %v78 = vld [vmem:[%s1 + $0xe0] sm:$0xff]
  %v79 = vld [vmem:[%s1 + $0xe8] sm:$0xff]
  %v80 = vld [vmem:[%s1 + $0xf0] sm:$0xff]
  %v81 = vld [vmem:[%s1 + $0xf8] sm:$0xff]
  %v82 = vld [vmem:[%s1 + $0x100] sm:$0xff]
  %v83 = vld [vmem:[%s1 + $0x108] sm:$0xff]
  %v84 = vld [vmem:[%s1 + $0x110] sm:$0xff]
  %v85 = vld [vmem:[%s1 + $0x118] sm:$0xff]
  %v86 = vld [vmem:[%s1 + $0x120] sm:$0xff]
  %v87 = vld [vmem:[%s1 + $0x128] sm:$0xff]
  %v88 = vld [vmem:[%s1 + $0x130] sm:$0xff]
  %v89 = vld [vmem:[%s1 + $0x138] sm:$0xff]
  %v90 = vld [vmem:[%s1 + $0x140] sm:$0xff]
  %v91 = vld [vmem:[%s1 + $0x148] sm:$0xff]
  %v92 = vld [vmem:[%s1 + $0x150] sm:$0xff]
  %v93 = vld [vmem:[%s1 + $0x158] sm:$0xff]
  %v94 = vld [vmem:[%s1 + $0x160] sm:$0xff]
  %v95 = vld [vmem:[%s1 + $0x168] sm:$0xff]
  %v96 = vld [vmem:[%s1 + $0x170] sm:$0xff]
  %v97 = vld [vmem:[%s1 + $0x178] sm:$0xff]
  %v98 = vld [vmem:[%s1 + $0x180] sm:$0xff]
  %v99 = vld [vmem:[%s1 + $0x188] sm:$0xff]
  %v100 = vld [vmem:[%s1 + $0x190] sm:$0xff]
  %v101 = vld [vmem:[%s1 + $0x198] sm:$0xff]
  %v102 = vld [vmem:[%s1 + $0x1a0] sm:$0xff]
  %v103 = vld [vmem:[%s1 + $0x1a8] sm:$0xff]
  %v104 = vld [vmem:[%s1 + $0x1b0] sm:$0xff]
  %v105 = vld [vmem:[%s1 + $0x1b8] sm:$0xff]
  %v106 = vld [vmem:[%s1 + $0x1c0] sm:$0xff]
  %v107 = vld [vmem:[%s1 + $0x1c8] sm:$0xff]
  %v108 = vld [vmem:[%s1 + $0x1d0] sm:$0xff]
  %v109 = vld [vmem:[%s1 + $0x1d8] sm:$0xff]
  %v110 = vld [vmem:[%s1 + $0x1e0] sm:$0xff]
  %v111 = vld [vmem:[%s1 + $0x1e8] sm:$0xff]
  %v112 = vld [vmem:[%s1 + $0x1f0] sm:$0xff]
  %v113 = vld [vmem:[%s1 + $0x1f8] sm:$0xff]
  %v114 = vld [vmem:[%s1 + $0x200] sm:$0xff]
  %v115 = vld [vmem:[%s1 + $0x208] sm:$0xff]
  %v116 = vld [vmem:[%s1 + $0x210] sm:$0xff]
  %v117 = vld [vmem:[%s1 + $0x218] sm:$0xff]
  %v118 = vld [vmem:[%s1 + $0x220] sm:$0xff]
  %v119 = vld [vmem:[%s1 + $0x228] sm:$0xff]
  %v120 = vld [vmem:[%s1 + $0x230] sm:$0xff]
  %v121 = vld [vmem:[%s1 + $0x238] sm:$0xff]
  %v122 = vld [vmem:[%s1 + $0x240] sm:$0xff]
  %v123 = vld [vmem:[%s1 + $0x248] sm:$0xff]
  %v124 = vld [vmem:[%s1 + $0x250] sm:$0xff]
  %v125 = vld [vmem:[%s1 + $0x258] sm:$0xff]
  %v126 = vld [vmem:[%s1 + $0x260] sm:$0xff]
  %v127 = vld [vmem:[%s1 + $0x268] sm:$0xff]
  %v128 = vld [vmem:[%s1 + $0x270] sm:$0xff]
  %v129 = vld [vmem:[%s1 + $0x278] sm:$0xff]
  %v130 = vld [vmem:[%s1 + $0x280] sm:$0xff]
  %v131 = vld [vmem:[%s1 + $0x288] sm:$0xff]
  %v132 = vld [vmem:[%s1 + $0x290] sm:$0xff]
  %v133 = vld [vmem:[%s1 + $0x298] sm:$0xff]
  %v134 = vld [vmem:[%s1 + $0x2a0] sm:$0xff]
  %v135 = vld [vmem:[%s1 + $0x2a8] sm:$0xff]
  %v136 = vld [vmem:[%s1 + $0x2b0] sm:$0xff]
  %v137 = vld [vmem:[%s1 + $0x2b8] sm:$0xff]
  %v138 = vld [vmem:[%s1 + $0x2c0] sm:$0xff]
  %v139 = vld [vmem:[%s1 + $0x2c8] sm:$0xff]
  %v140 = vld [vmem:[%s1 + $0x2d0] sm:$0xff]
  %v141 = vld [vmem:[%s1 + $0x2d8] sm:$0xff]
  %v142 = vld [vmem:[%s1 + $0x2e0] sm:$0xff]
  %v143 = vld [vmem:[%s1 + $0x2e8] sm:$0xff]
  %v144 = vld [vmem:[%s1 + $0x2f0] sm:$0xff]
  %v145 = vld [vmem:[%s1 + $0x2f8] sm:$0xff]
  %v146 = vld [vmem:[%s1 + $0x300] sm:$0xff]
  %v147 = vld [vmem:[%s1 + $0x308] sm:$0xff]
  %v148 = vld [vmem:[%s1 + $0x310] sm:$0xff]
  %v149 = vld [vmem:[%s1 + $0x318] sm:$0xff]
  %v150 = vld [vmem:[%s1 + $0x320] sm:$0xff]
  %v151 = vld [vmem:[%s1 + $0x328] sm:$0xff]
  %v152 = vld [vmem:[%s1 + $0x330] sm:$0xff]
  %v153 = vld [vmem:[%s1 + $0x338] sm:$0xff]
  %v154 = vld [vmem:[%s1 + $0x340] sm:$0xff]
  %v155 = vld [vmem:[%s1 + $0x348] sm:$0xff]
  %v156 = vld [vmem:[%s1 + $0x350] sm:$0xff]
  %v157 = vld [vmem:[%s1 + $0x358] sm:$0xff]
  %v158 = vld [vmem:[%s1 + $0x360] sm:$0xff]
  %v159 = vld [vmem:[%s1 + $0x368] sm:$0xff]
  %v160 = vld [vmem:[%s1 + $0x370] sm:$0xff]
  %v161 = vld [vmem:[%s1 + $0x378] sm:$0xff]
  %v162 = vld [vmem:[%s1 + $0x380] sm:$0xff]
  %v163 = vld [vmem:[%s1 + $0x388] sm:$0xff]
  %v164 = vld [vmem:[%s1 + $0x390] sm:$0xff]
  %v165 = vld [vmem:[%s1 + $0x398] sm:$0xff]
  %v166 = vld [vmem:[%s1 + $0x3a0] sm:$0xff]
  %v167 = vld [vmem:[%s1 + $0x3a8] sm:$0xff]
  %v168 = vld [vmem:[%s1 + $0x3b0] sm:$0xff]
  %v169 = vld [vmem:[%s1 + $0x3b8] sm:$0xff]
  %v170 = vld [vmem:[%s1 + $0x3c0] sm:$0xff]
  %v171 = vld [vmem:[%s1 + $0x3c8] sm:$0xff]
  %v172 = vld [vmem:[%s1 + $0x3d0] sm:$0xff]
  %v173 = vld [vmem:[%s1 + $0x3d8] sm:$0xff]
  %v174 = vld [vmem:[%s1 + $0x3e0] sm:$0xff]
  %v175 = vld [vmem:[%s1 + $0x3e8] sm:$0xff]
  %v176 = vld [vmem:[%s1 + $0x3f0] sm:$0xff]
  %v177 = vld [vmem:[%s1 + $0x3f8] sm:$0xff]
  %v178 = vld [vmem:[%s1 + $0x400] sm:$0xff]
  %v179 = vld [vmem:[%s1 + $0x408] sm:$0xff]
  %v180 = vld [vmem:[%s1 + $0x410] sm:$0xff]
  %v181 = vld [vmem:[%s1 + $0x418] sm:$0xff]
  %v182 = vld [vmem:[%s1 + $0x420] sm:$0xff]
  %v183 = vld [vmem:[%s1 + $0x428] sm:$0xff]
  %v184 = vld [vmem:[%s1 + $0x430] sm:$0xff]
  %v185 = vld [vmem:[%s1 + $0x438] sm:$0xff]
  %v186 = vld [vmem:[%s1 + $0x440] sm:$0xff]
  %v187 = vld [vmem:[%s1 + $0x448] sm:$0xff]
  %v188 = vld [vmem:[%s1 + $0x450] sm:$0xff]
  %v189 = vld [vmem:[%s1 + $0x458] sm:$0xff]
  %v190 = vld [vmem:[%s1 + $0x460] sm:$0xff]
  %v191 = vld [vmem:[%s1 + $0x468] sm:$0xff]
  %v192 = vld [vmem:[%s1 + $0x470] sm:$0xff]
  %v193 = vld [vmem:[%s1 + $0x478] sm:$0xff]
  %v194 = vld [vmem:[%s2] sm:$0x1]
  %v196 = vlaneseq
  %v197 = vshrl.u32 %v196, 7
  %v198 = vsub.s32 0, %v197
  %v199 = vrot.slane %v194, %v198
  %201 = vmatprep.subr.mxu0 0.0
  %202 = vmatpush1.msra.mxu0 %v50
  %203 = vmatprep.subr.mxu0 0.0
  %204 = vmatpush1.msra.mxu0 %v51
  %205 = vmatprep.subr.mxu0 0.0
  %206 = vmatpush1.msra.mxu0 %v52
  %207 = vmatprep.subr.mxu0 0.0
  %208 = vmatpush1.msra.mxu0 %v53
  %209 = vmatprep.subr.mxu0 0.0
  %210 = vmatpush1.msra.mxu0 %v54
  %211 = vmatprep.subr.mxu0 0.0
  %212 = vmatpush1.msra.mxu0 %v55
  %213 = vmatprep.subr.mxu0 0.0
  %214 = vmatpush1.msra.mxu0 %v56
  %215 = vmatprep.subr.mxu0 0.0
  %216 = vmatpush1.msra.mxu0 %v57
  %217 = vmatprep.subr.mxu0 0.0
  %218 = vmatpush1.msra.mxu0 %v58
  %219 = vmatprep.subr.mxu0 0.0
  %220 = vmatpush1.msra.mxu0 %v59
  %221 = vmatprep.subr.mxu0 0.0
  %222 = vmatpush1.msra.mxu0 %v60
  %223 = vmatprep.subr.mxu0 0.0
  %224 = vmatpush1.msra.mxu0 %v61
  %225 = vmatprep.subr.mxu0 0.0
  %226 = vmatpush1.msra.mxu0 %v62
  %227 = vmatprep.subr.mxu0 0.0
  %228 = vmatpush1.msra.mxu0 %v63
  %229 = vmatprep.subr.mxu0 0.0
  %230 = vmatpush1.msra.mxu0 %v64
  %231 = vmatprep.subr.mxu0 0.0
  %232 = vmatpush1.msra.mxu0 %v65
  %233 = vmatprep.subr.mxu0 0.0
  %234 = vmatpush1.msra.mxu0 %v66
  %235 = vmatprep.subr.mxu0 0.0
  %236 = vmatpush1.msra.mxu0 %v67
  %237 = vmatprep.subr.mxu0 0.0
  %238 = vmatpush1.msra.mxu0 %v68
  %239 = vmatprep.subr.mxu0 0.0
  %240 = vmatpush1.msra.mxu0 %v69
  %241 = vmatprep.subr.mxu0 0.0
  %242 = vmatpush1.msra.mxu0 %v70
  %243 = vmatprep.subr.mxu0 0.0
  %244 = vmatpush1.msra.mxu0 %v71
  %245 = vmatprep.subr.mxu0 0.0
  %246 = vmatpush1.msra.mxu0 %v72
  %247 = vmatprep.subr.mxu0 0.0
  %248 = vmatpush1.msra.mxu0 %v73
  %249 = vmatprep.subr.mxu0 0.0
  %250 = vmatpush1.msra.mxu0 %v74
  %251 = vmatprep.subr.mxu0 0.0
  %252 = vmatpush1.msra.mxu0 %v75
  %253 = vmatprep.subr.mxu0 0.0
  %254 = vmatpush1.msra.mxu0 %v76
  %255 = vmatprep.subr.mxu0 0.0
  %256 = vmatpush1.msra.mxu0 %v77
  %257 = vmatprep.subr.mxu0 0.0
  %258 = vmatpush1.msra.mxu0 %v78
  %259 = vmatprep.subr.mxu0 0.0
  %260 = vmatpush1.msra.mxu0 %v79
  %261 = vmatprep.subr.mxu0 0.0
  %262 = vmatpush1.msra.mxu0 %v80
  %263 = vmatprep.subr.mxu0 0.0
  %264 = vmatpush1.msra.mxu0 %v81
  %265 = vmatprep.mubr.f32.mxu0 %v15
  %266 = vmatmul.mubr.f32.gmra.mrb[0].mxu0 %v14
  %v267 = vpop.f32.mrb[0].mxu0
  %v268 = vadd.f32 %v199, %v267
  %v269 = vpop.f32.mrb[0].mxu0
  %270 = vmatprep.mubr.f32.mxu0 %v24
  %271 = vmatmul.mubr.f32.gmra.mrb[0].mxu0 %v23
  %v272 = vpop.f32.mrb[0].mxu0
  %v273 = vadd.f32 %v199, %v272
  %v274 = vpop.f32.mrb[0].mxu0
  %275 = vmatprep.mubr.f32.mxu0 %v33
  %276 = vmatmul.mubr.f32.gmra.mrb[0].mxu0 %v32
  %v277 = vpop.f32.mrb[0].mxu0
  %v278 = vadd.f32 %v199, %v277
  %v279 = vpop.f32.mrb[0].mxu0
  %280 = vmatprep.mubr.f32.mxu0 %v42
  %281 = vmatmul.mubr.f32.gmra.mrb[0].mxu0 %v41
  %v282 = vpop.f32.mrb[0].mxu0
  %v283 = vadd.f32 %v199, %v282
  %v284 = vpop.f32.mrb[0].mxu0
  %285 = vdwg.mxu0
  %286 = vmatprep.subr.mxu0 0.0
  %287 = vmatpush1.msra.mxu0 %v82
  %288 = vmatprep.subr.mxu0 0.0
  %289 = vmatpush1.msra.mxu0 %v83
  %290 = vmatprep.subr.mxu0 0.0
  %291 = vmatpush1.msra.mxu0 %v84
  %292 = vmatprep.subr.mxu0 0.0
  %293 = vmatpush1.msra.mxu0 %v85
  %294 = vmatprep.subr.mxu0 0.0
  %295 = vmatpush1.msra.mxu0 %v86
  %296 = vmatprep.subr.mxu0 0.0
  %297 = vmatpush1.msra.mxu0 %v87
  %298 = vmatprep.subr.mxu0 0.0
  %299 = vmatpush1.msra.mxu0 %v88
  %300 = vmatprep.subr.mxu0 0.0
  %301 = vmatpush1.msra.mxu0 %v89
  %302 = vmatprep.subr.mxu0 0.0
  %303 = vmatpush1.msra.mxu0 %v90
  %304 = vmatprep.subr.mxu0 0.0
  %305 = vmatpush1.msra.mxu0 %v91
  %306 = vmatprep.subr.mxu0 0.0
  %307 = vmatpush1.msra.mxu0 %v92
  %308 = vmatprep.subr.mxu0 0.0
  %309 = vmatpush1.msra.mxu0 %v93
  %310 = vmatprep.subr.mxu0 0.0
  %311 = vmatpush1.msra.mxu0 %v94
  %312 = vmatprep.subr.mxu0 0.0
  %313 = vmatpush1.msra.mxu0 %v95
  %314 = vmatprep.subr.mxu0 0.0
  %315 = vmatpush1.msra.mxu0 %v96
  %316 = vmatprep.subr.mxu0 0.0
  %317 = vmatpush1.msra.mxu0 %v97
  %318 = vmatprep.subr.mxu0 0.0
  %319 = vmatpush1.msra.mxu0 %v98
  %320 = vmatprep.subr.mxu0 0.0
  %321 = vmatpush1.msra.mxu0 %v99
  %322 = vmatprep.subr.mxu0 0.0
  %323 = vmatpush1.msra.mxu0 %v100
  %324 = vmatprep.subr.mxu0 0.0
  %325 = vmatpush1.msra.mxu0 %v101
  %326 = vmatprep.subr.mxu0 0.0
  %327 = vmatpush1.msra.mxu0 %v102
  %328 = vmatprep.subr.mxu0 0.0
  %329 = vmatpush1.msra.mxu0 %v103
  %330 = vmatprep.subr.mxu0 0.0
  %331 = vmatpush1.msra.mxu0 %v104
  %332 = vmatprep.subr.mxu0 0.0
  %333 = vmatpush1.msra.mxu0 %v105
  %334 = vmatprep.subr.mxu0 0.0
  %335 = vmatpush1.msra.mxu0 %v106
  %336 = vmatprep.subr.mxu0 0.0
  %337 = vmatpush1.msra.mxu0 %v107
  %338 = vmatprep.subr.mxu0 0.0
  %339 = vmatpush1.msra.mxu0 %v108
  %340 = vmatprep.subr.mxu0 0.0
  %341 = vmatpush1.msra.mxu0 %v109
  %342 = vmatprep.subr.mxu0 0.0
  %343 = vmatpush1.msra.mxu0 %v110
  %344 = vmatprep.subr.mxu0 0.0
  %345 = vmatpush1.msra.mxu0 %v111
  %346 = vmatprep.subr.mxu0 0.0
  %347 = vmatpush1.msra.mxu0 %v112
  %348 = vmatprep.subr.mxu0 0.0
  %349 = vmatpush1.msra.mxu0 %v113
  %350 = vmatprep.mubr.f32.mxu0 %v17
  %351 = vmatmul.mubr.f32.gmra.mrb[0].mxu0 %v16
  %v352 = vpop.f32.mrb[0].mxu0
  %v353 = vadd.f32 %v268, %v352
  %v354 = vpop.f32.mrb[0].mxu0
  %355 = vmatprep.mubr.f32.mxu0 %v26
  %356 = vmatmul.mubr.f32.gmra.mrb[0].mxu0 %v25
  %v357 = vpop.f32.mrb[0].mxu0
  %v358 = vadd.f32 %v273, %v357
  %v359 = vpop.f32.mrb[0].mxu0
  %360 = vmatprep.mubr.f32.mxu0 %v35
  %361 = vmatmul.mubr.f32.gmra.mrb[0].mxu0 %v34
  %v362 = vpop.f32.mrb[0].mxu0
  %v363 = vadd.f32 %v278, %v362
  %v364 = vpop.f32.mrb[0].mxu0
  %365 = vmatprep.mubr.f32.mxu0 %v44
  %366 = vmatmul.mubr.f32.gmra.mrb[0].mxu0 %v43
  %v367 = vpop.f32.mrb[0].mxu0
  %v368 = vadd.f32 %v283, %v367
  %v369 = vpop.f32.mrb[0].mxu0
  %370 = vdwg.mxu0
  %371 = vmatprep.subr.mxu0 0.0
  %372 = vmatpush1.msra.mxu0 %v114
  %373 = vmatprep.subr.mxu0 0.0
  %374 = vmatpush1.msra.mxu0 %v115
  %375 = vmatprep.subr.mxu0 0.0
  %376 = vmatpush1.msra.mxu0 %v116
  %377 = vmatprep.subr.mxu0 0.0
  %378 = vmatpush1.msra.mxu0 %v117
  %379 = vmatprep.subr.mxu0 0.0
  %380 = vmatpush1.msra.mxu0 %v118
  %381 = vmatprep.subr.mxu0 0.0
  %382 = vmatpush1.msra.mxu0 %v119
  %383 = vmatprep.subr.mxu0 0.0
  %384 = vmatpush1.msra.mxu0 %v120
  %385 = vmatprep.subr.mxu0 0.0
  %386 = vmatpush1.msra.mxu0 %v121
  %387 = vmatprep.subr.mxu0 0.0
  %388 = vmatpush1.msra.mxu0 %v122
  %389 = vmatprep.subr.mxu0 0.0
  %390 = vmatpush1.msra.mxu0 %v123
  %391 = vmatprep.subr.mxu0 0.0
  %392 = vmatpush1.msra.mxu0 %v124
  %393 = vmatprep.subr.mxu0 0.0
  %394 = vmatpush1.msra.mxu0 %v125
  %395 = vmatprep.subr.mxu0 0.0
  %396 = vmatpush1.msra.mxu0 %v126
  %397 = vmatprep.subr.mxu0 0.0
  %398 = vmatpush1.msra.mxu0 %v127
  %399 = vmatprep.subr.mxu0 0.0
  %400 = vmatpush1.msra.mxu0 %v128
  %401 = vmatprep.subr.mxu0 0.0
  %402 = vmatpush1.msra.mxu0 %v129
  %403 = vmatprep.subr.mxu0 0.0
  %404 = vmatpush1.msra.mxu0 %v130
  %405 = vmatprep.subr.mxu0 0.0
  %406 = vmatpush1.msra.mxu0 %v131
  %407 = vmatprep.subr.mxu0 0.0
  %408 = vmatpush1.msra.mxu0 %v132
  %409 = vmatprep.subr.mxu0 0.0
  %410 = vmatpush1.msra.mxu0 %v133
  %411 = vmatprep.subr.mxu0 0.0
  %412 = vmatpush1.msra.mxu0 %v134
  %413 = vmatprep.subr.mxu0 0.0
  %414 = vmatpush1.msra.mxu0 %v135
  %415 = vmatprep.subr.mxu0 0.0
  %416 = vmatpush1.msra.mxu0 %v136
  %417 = vmatprep.subr.mxu0 0.0
  %418 = vmatpush1.msra.mxu0 %v137
  %419 = vmatprep.subr.mxu0 0.0
  %420 = vmatpush1.msra.mxu0 %v138
  %421 = vmatprep.subr.mxu0 0.0
  %422 = vmatpush1.msra.mxu0 %v139
  %423 = vmatprep.subr.mxu0 0.0
  %424 = vmatpush1.msra.mxu0 %v140
  %425 = vmatprep.subr.mxu0 0.0
  %426 = vmatpush1.msra.mxu0 %v141
  %427 = vmatprep.subr.mxu0 0.0
  %428 = vmatpush1.msra.mxu0 %v142
  %429 = vmatprep.subr.mxu0 0.0
  %430 = vmatpush1.msra.mxu0 %v143
  %431 = vmatprep.subr.mxu0 0.0
  %432 = vmatpush1.msra.mxu0 %v144
  %433 = vmatprep.subr.mxu0 0.0
  %434 = vmatpush1.msra.mxu0 %v145
  %435 = vmatprep.mubr.f32.mxu0 %v19
  %436 = vmatmul.mubr.f32.gmra.mrb[0].mxu0 %v18
  %v437 = vpop.f32.mrb[0].mxu0
  %v438 = vadd.f32 %v353, %v437
  %v439 = vpop.f32.mrb[0].mxu0
  %440 = vmatprep.mubr.f32.mxu0 %v28
  %441 = vmatmul.mubr.f32.gmra.mrb[0].mxu0 %v27
  %v442 = vpop.f32.mrb[0].mxu0
  %v443 = vadd.f32 %v358, %v442
  %v444 = vpop.f32.mrb[0].mxu0
  %445 = vmatprep.mubr.f32.mxu0 %v37
  %446 = vmatmul.mubr.f32.gmra.mrb[0].mxu0 %v36
  %v447 = vpop.f32.mrb[0].mxu0
  %v448 = vadd.f32 %v363, %v447
  %v449 = vpop.f32.mrb[0].mxu0
  %450 = vmatprep.mubr.f32.mxu0 %v46
  %451 = vmatmul.mubr.f32.gmra.mrb[0].mxu0 %v45
  %v452 = vpop.f32.mrb[0].mxu0
  %v453 = vadd.f32 %v368, %v452
  %v454 = vpop.f32.mrb[0].mxu0
  %455 = vdwg.mxu0
  %456 = vmatprep.subr.mxu0 0.0
  %457 = vmatpush1.msra.mxu0 %v146
  %458 = vmatprep.subr.mxu0 0.0
  %459 = vmatpush1.msra.mxu0 %v147
  %460 = vmatprep.subr.mxu0 0.0
  %461 = vmatpush1.msra.mxu0 %v148
  %462 = vmatprep.subr.mxu0 0.0
  %463 = vmatpush1.msra.mxu0 %v149
  %464 = vmatprep.subr.mxu0 0.0
  %465 = vmatpush1.msra.mxu0 %v150
  %466 = vmatprep.subr.mxu0 0.0
  %467 = vmatpush1.msra.mxu0 %v151
  %468 = vmatprep.subr.mxu0 0.0
  %469 = vmatpush1.msra.mxu0 %v152
  %470 = vmatprep.subr.mxu0 0.0
  %471 = vmatpush1.msra.mxu0 %v153
  %472 = vmatprep.subr.mxu0 0.0
  %473 = vmatpush1.msra.mxu0 %v154
  %474 = vmatprep.subr.mxu0 0.0
  %475 = vmatpush1.msra.mxu0 %v155
  %476 = vmatprep.subr.mxu0 0.0
  %477 = vmatpush1.msra.mxu0 %v156
  %478 = vmatprep.subr.mxu0 0.0
  %479 = vmatpush1.msra.mxu0 %v157
  %480 = vmatprep.subr.mxu0 0.0
  %481 = vmatpush1.msra.mxu0 %v158
  %482 = vmatprep.subr.mxu0 0.0
  %483 = vmatpush1.msra.mxu0 %v159
  %484 = vmatprep.subr.mxu0 0.0
  %485 = vmatpush1.msra.mxu0 %v160
  %486 = vmatprep.subr.mxu0 0.0
  %487 = vmatpush1.msra.mxu0 %v161
  %488 = vmatprep.subr.mxu0 0.0
  %489 = vmatpush1.msra.mxu0 %v162
  %490 = vmatprep.subr.mxu0 0.0
  %491 = vmatpush1.msra.mxu0 %v163
  %492 = vmatprep.subr.mxu0 0.0
  %493 = vmatpush1.msra.mxu0 %v164
  %494 = vmatprep.subr.mxu0 0.0
  %495 = vmatpush1.msra.mxu0 %v165
  %496 = vmatprep.subr.mxu0 0.0
  %497 = vmatpush1.msra.mxu0 %v166
  %498 = vmatprep.subr.mxu0 0.0
  %499 = vmatpush1.msra.mxu0 %v167
  %500 = vmatprep.subr.mxu0 0.0
  %501 = vmatpush1.msra.mxu0 %v168
  %502 = vmatprep.subr.mxu0 0.0
  %503 = vmatpush1.msra.mxu0 %v169
  %504 = vmatprep.subr.mxu0 0.0
  %505 = vmatpush1.msra.mxu0 %v170
  %506 = vmatprep.subr.mxu0 0.0
  %507 = vmatpush1.msra.mxu0 %v171
  %508 = vmatprep.subr.mxu0 0.0
  %509 = vmatpush1.msra.mxu0 %v172
  %510 = vmatprep.subr.mxu0 0.0
  %511 = vmatpush1.msra.mxu0 %v173
  %512 = vmatprep.subr.mxu0 0.0
  %513 = vmatpush1.msra.mxu0 %v174
  %514 = vmatprep.subr.mxu0 0.0
  %515 = vmatpush1.msra.mxu0 %v175
  %516 = vmatprep.subr.mxu0 0.0
  %517 = vmatpush1.msra.mxu0 %v176
  %518 = vmatprep.subr.mxu0 0.0
  %519 = vmatpush1.msra.mxu0 %v177
  %520 = vmatprep.mubr.f32.mxu0 %v21
  %521 = vmatmul.mubr.f32.gmra.mrb[0].mxu0 %v20
  %v522 = vpop.f32.mrb[0].mxu0
  %v523 = vadd.f32 %v438, %v522
  %v524 = vpop.f32.mrb[0].mxu0
  %525 = vmatprep.mubr.f32.mxu0 %v30
  %526 = vmatmul.mubr.f32.gmra.mrb[0].mxu0 %v29
  %v527 = vpop.f32.mrb[0].mxu0
  %v528 = vadd.f32 %v443, %v527
  %v529 = vpop.f32.mrb[0].mxu0
  %530 = vmatprep.mubr.f32.mxu0 %v39
  %531 = vmatmul.mubr.f32.gmra.mrb[0].mxu0 %v38
  %v532 = vpop.f32.mrb[0].mxu0
  %v533 = vadd.f32 %v448, %v532
  %v534 = vpop.f32.mrb[0].mxu0
  %535 = vmatprep.mubr.f32.mxu0 %v48
  %536 = vmatmul.mubr.f32.gmra.mrb[0].mxu0 %v47
  %v537 = vpop.f32.mrb[0].mxu0
  %v538 = vadd.f32 %v453, %v537
  %v539 = vpop.f32.mrb[0].mxu0
  %540 = vdwg.mxu0
  %541 = vmatprep.subr.mxu0 0.0
  %542 = vmatpush1.msra.mxu0 %v178
  %543 = vmatprep.subr.mxu0 0.0
  %544 = vmatpush1.msra.mxu0 %v179
  %545 = vmatprep.subr.mxu0 0.0
  %546 = vmatpush1.msra.mxu0 %v180
  %547 = vmatprep.subr.mxu0 0.0
  %548 = vmatpush1.msra.mxu0 %v181
  %549 = vmatprep.subr.mxu0 0.0
  %550 = vmatpush1.msra.mxu0 %v182
  %551 = vmatprep.subr.mxu0 0.0
  %552 = vmatpush1.msra.mxu0 %v183
  %553 = vmatprep.subr.mxu0 0.0
  %554 = vmatpush1.msra.mxu0 %v184
  %555 = vmatprep.subr.mxu0 0.0
  %556 = vmatpush1.msra.mxu0 %v185
  %557 = vmatprep.subr.mxu0 0.0
  %558 = vmatpush1.msra.mxu0 %v186
  %559 = vmatprep.subr.mxu0 0.0
  %560 = vmatpush1.msra.mxu0 %v187
  %561 = vmatprep.subr.mxu0 0.0
  %562 = vmatpush1.msra.mxu0 %v188
  %563 = vmatprep.subr.mxu0 0.0
  %564 = vmatpush1.msra.mxu0 %v189
  %565 = vmatprep.subr.mxu0 0.0
  %566 = vmatpush1.msra.mxu0 %v190
  %567 = vmatprep.subr.mxu0 0.0
  %568 = vmatpush1.msra.mxu0 %v191
  %569 = vmatprep.subr.mxu0 0.0
  %570 = vmatpush1.msra.mxu0 %v192
  %571 = vmatprep.subr.mxu0 0.0
  %572 = vmatpush1.msra.mxu0 %v193
  %573 = vmatprep.subr.mxu0 0.0
  %574 = vmatpush1.msra.mxu0 0.0
  %575 = vmatprep.subr.mxu0 0.0
  %576 = vmatpush1.msra.mxu0 0.0
  %577 = vmatprep.subr.mxu0 0.0
  %578 = vmatpush1.msra.mxu0 0.0
  %579 = vmatprep.subr.mxu0 0.0
  %580 = vmatpush1.msra.mxu0 0.0
  %581 = vmatprep.subr.mxu0 0.0
  %582 = vmatpush1.msra.mxu0 0.0
  %583 = vmatprep.subr.mxu0 0.0
  %584 = vmatpush1.msra.mxu0 0.0
  %585 = vmatprep.subr.mxu0 0.0
  %586 = vmatpush1.msra.mxu0 0.0
  %587 = vmatprep.subr.mxu0 0.0
  %588 = vmatpush1.msra.mxu0 0.0
  %589 = vmatprep.subr.mxu0 0.0
  %590 = vmatpush1.msra.mxu0 0.0
  %591 = vmatprep.subr.mxu0 0.0
  %592 = vmatpush1.msra.mxu0 0.0
  %593 = vmatprep.subr.mxu0 0.0
  %594 = vmatpush1.msra.mxu0 0.0
  %595 = vmatprep.subr.mxu0 0.0
  %596 = vmatpush1.msra.mxu0 0.0
  %597 = vmatprep.subr.mxu0 0.0
  %598 = vmatpush1.msra.mxu0 0.0
  %599 = vmatprep.subr.mxu0 0.0
  %600 = vmatpush1.msra.mxu0 0.0
  %601 = vmatprep.subr.mxu0 0.0
  %602 = vmatpush1.msra.mxu0 0.0
  %603 = vmatprep.subr.mxu0 0.0
  %604 = vmatpush1.msra.mxu0 0.0
  %605 = vmatprep.mubr.f32.mxu0 0.0
  %606 = vmatmul.mubr.f32.gmra.mrb[0].mxu0 %v22
  %v607 = vpop.f32.mrb[0].mxu0
  %v608 = vadd.f32 %v523, %v607
  %v609 = vpop.f32.mrb[0].mxu0
  %610 = vmatprep.mubr.f32.mxu0 0.0
  %611 = vmatmul.mubr.f32.gmra.mrb[0].mxu0 %v31
  %v612 = vpop.f32.mrb[0].mxu0
  %v613 = vadd.f32 %v528, %v612
  %v614 = vpop.f32.mrb[0].mxu0
  %615 = vmatprep.mubr.f32.mxu0 0.0
  %616 = vmatmul.mubr.f32.gmra.mrb[0].mxu0 %v40
  %v617 = vpop.f32.mrb[0].mxu0
  %v618 = vadd.f32 %v533, %v617
  %v619 = vpop.f32.mrb[0].mxu0
  %620 = vmatprep.mubr.f32.mxu0 0.0
  %621 = vmatmul.mubr.f32.gmra.mrb[0].mxu0 %v49
  %v622 = vpop.f32.mrb[0].mxu0
  %v623 = vadd.f32 %v538, %v622
  %v624 = vpop.f32.mrb[0].mxu0
  %625 = vdwg.mxu0
  %626 = vst [vmem:[%s3] sm:$0xff] %v608
  %627 = vst [vmem:[%s3 + $0x8] sm:$0xff] %v613
  %628 = vst [vmem:[%s3 + $0x10] sm:$0xff] %v618
  %629 = vst [vmem:[%s3 + $0x18] sm:$0xff] %v623
  // Predicated region
  $region14: #{vqvae_forward.15} parent=0 // pred_check
    _
  $region15: #{vqvae_forward.15} parent=0 // pred_check_branch
    %631 = sbr.rel (0) target = $region17
  $region16: #{vqvae_forward.15} parent=0 // pred_region
    _
  $region17: #{vqvae_forward.15} parent=0 // pred_fallthru
    _
  // Predicated region
  $region18: #{vqvae_forward.15} parent=0 // pred_check
    _
  $region19: #{vqvae_forward.15} parent=0 // pred_check_branch
    %633 = sbr.rel (0) target = $region21
  $region20: #{vqvae_forward.15} parent=0 // pred_region
    _
  $region21: #{vqvae_forward.15} parent=0 // pred_fallthru
    _

// kernel: vqvae_forward.16
$region0: #{vqvae_forward.16}
  #allocation0 [shape = 'u32[]', space=smem, size = 0x4, offset = 0x4, fixed_abs, tag = 'smem constant byte address 0x4 - core index']
  #allocation1 [shape = 'u32[144,128]{1,0:T(1,128)}', space=vmem, size = 0x12000, scoped, tag = 'internal scratch']
  %s0 = inlined_call_operand.vmem [shape: f32[32,128], index: 0, kind: input, shape index: {}]
  %s1 = inlined_call_operand.vmem [shape: f32[128,128], index: 1, kind: input, shape index: {}]
  %s2 = inlined_call_operand.vmem [shape: f32[1,128], index: 2, kind: input, shape index: {}]
  %s3 = inlined_call_operand.vmem [shape: f32[32,128], index: 3, kind: output, shape index: {0}]
  %s4 = inlined_call_operand.vmem [shape: s32[32,1], index: 4, kind: output, shape index: {1}]
  %5 = xla_tuple %s3, %s4
  %s6 = sld [smem:[#allocation0]]
  $region30: #{vqvae_forward.16} parent=0
    _
  %s8 = ssub.s32 1, %s6
  %s9 = scalar_select 0, %s8, %s6
  // Predicated region
  $region2: #{vqvae_forward.16} parent=0 // pred_check
    _
  $region3: #{vqvae_forward.16} parent=0 // pred_check_branch
    %11 = sbr.rel (0) target = $region5
  $region4: #{vqvae_forward.16} parent=0 // pred_region
    _
  $region5: #{vqvae_forward.16} parent=0 // pred_fallthru
    _
  // Predicated region
  $region6: #{vqvae_forward.16} parent=0 // pred_check
    _
  $region7: #{vqvae_forward.16} parent=0 // pred_check_branch
    %13 = sbr.rel (0) target = $region9
  $region8: #{vqvae_forward.16} parent=0 // pred_region
    _
  $region9: #{vqvae_forward.16} parent=0 // pred_fallthru
    _
  // Predicated region
  $region10: #{vqvae_forward.16} parent=0 // pred_check
    _
  $region11: #{vqvae_forward.16} parent=0 // pred_check_branch
    %15 = sbr.rel (0) target = $region13
  $region12: #{vqvae_forward.16} parent=0 // pred_region
    _
  $region13: #{vqvae_forward.16} parent=0 // pred_fallthru
    _
  %v16 = vld [vmem:[%s0] sm:$0xff]
  %v17 = vld [vmem:[%s0 + $0x8] sm:$0xff]
  %v18 = vld [vmem:[%s0 + $0x10] sm:$0xff]
  %v19 = vld [vmem:[%s0 + $0x18] sm:$0xff]
  %v20 = vld [vmem:[%s1] sm:$0xff]
  %v21 = vld [vmem:[%s1 + $0x8] sm:$0xff]
  %v22 = vld [vmem:[%s1 + $0x10] sm:$0xff]
  %v23 = vld [vmem:[%s1 + $0x18] sm:$0xff]
  %v24 = vld [vmem:[%s1 + $0x20] sm:$0xff]
  %v25 = vld [vmem:[%s1 + $0x28] sm:$0xff]
  %v26 = vld [vmem:[%s1 + $0x30] sm:$0xff]
  %v27 = vld [vmem:[%s1 + $0x38] sm:$0xff]
  %v28 = vld [vmem:[%s1 + $0x40] sm:$0xff]
  %v29 = vld [vmem:[%s1 + $0x48] sm:$0xff]
  %v30 = vld [vmem:[%s1 + $0x50] sm:$0xff]
  %v31 = vld [vmem:[%s1 + $0x58] sm:$0xff]
  %v32 = vld [vmem:[%s1 + $0x60] sm:$0xff]
  %v33 = vld [vmem:[%s1 + $0x68] sm:$0xff]
  %v34 = vld [vmem:[%s1 + $0x70] sm:$0xff]
  %v35 = vld [vmem:[%s1 + $0x78] sm:$0xff]
  %36 = vmatprep.subr.mxu0 0.0
  %37 = vmatpush1.xpose.msra.mxu0 %v20
  %38 = vmatprep.subr.mxu0 0.0
  %39 = vmatpush1.xpose.msra.mxu0 %v21
  %40 = vmatprep.subr.mxu0 0.0
  %41 = vmatpush1.xpose.msra.mxu0 %v22
  %42 = vmatprep.subr.mxu0 0.0
  %43 = vmatpush1.xpose.msra.mxu0 %v23
  %44 = vmatprep.subr.mxu0 0.0
  %45 = vmatpush1.xpose.msra.mxu0 %v24
  %46 = vmatprep.subr.mxu0 0.0
  %47 = vmatpush1.xpose.msra.mxu0 %v25
  %48 = vmatprep.subr.mxu0 0.0
  %49 = vmatpush1.xpose.msra.mxu0 %v26
  %50 = vmatprep.subr.mxu0 0.0
  %51 = vmatpush1.xpose.msra.mxu0 %v27
  %52 = vmatprep.subr.mxu0 0.0
  %53 = vmatpush1.xpose.msra.mxu0 %v28
  %54 = vmatprep.subr.mxu0 0.0
  %55 = vmatpush1.xpose.msra.mxu0 %v29
  %56 = vmatprep.subr.mxu0 0.0
  %57 = vmatpush1.xpose.msra.mxu0 %v30
  %58 = vmatprep.subr.mxu0 0.0
  %59 = vmatpush1.xpose.msra.mxu0 %v31
  %60 = vmatprep.subr.mxu0 0.0
  %61 = vmatpush1.xpose.msra.mxu0 %v32
  %62 = vmatprep.subr.mxu0 0.0
  %63 = vmatpush1.xpose.msra.mxu0 %v33
  %64 = vmatprep.subr.mxu0 0.0
  %65 = vmatpush1.xpose.msra.mxu0 %v34
  %66 = vmatprep.subr.mxu0 0.0
  %67 = vmatpush1.xpose.msra.mxu0 %v35
  %68 = vmatprep.subr.mxu0 0.0
  %69 = vmatpush1.xpose.msra.mxu0 0.0
  %70 = vmatprep.subr.mxu0 0.0
  %71 = vmatpush1.xpose.msra.mxu0 0.0
  %72 = vmatprep.subr.mxu0 0.0
  %73 = vmatpush1.xpose.msra.mxu0 0.0
  %74 = vmatprep.subr.mxu0 0.0
  %75 = vmatpush1.xpose.msra.mxu0 0.0
  %76 = vmatprep.subr.mxu0 0.0
  %77 = vmatpush1.xpose.msra.mxu0 0.0
  %78 = vmatprep.subr.mxu0 0.0
  %79 = vmatpush1.xpose.msra.mxu0 0.0
  %80 = vmatprep.subr.mxu0 0.0
  %81 = vmatpush1.xpose.msra.mxu0 0.0
  %82 = vmatprep.subr.mxu0 0.0
  %83 = vmatpush1.xpose.msra.mxu0 0.0
  %84 = vmatprep.subr.mxu0 0.0
  %85 = vmatpush1.xpose.msra.mxu0 0.0
  %86 = vmatprep.subr.mxu0 0.0
  %87 = vmatpush1.xpose.msra.mxu0 0.0
  %88 = vmatprep.subr.mxu0 0.0
  %89 = vmatpush1.xpose.msra.mxu0 0.0
  %90 = vmatprep.subr.mxu0 0.0
  %91 = vmatpush1.xpose.msra.mxu0 0.0
  %92 = vmatprep.subr.mxu0 0.0
  %93 = vmatpush1.xpose.msra.mxu0 0.0
  %94 = vmatprep.subr.mxu0 0.0
  %95 = vmatpush1.xpose.msra.mxu0 0.0
  %96 = vmatprep.subr.mxu0 0.0
  %97 = vmatpush1.xpose.msra.mxu0 0.0
  %98 = vmatprep.subr.mxu0 0.0
  %99 = vmatpush1.xpose.msra.mxu0 0.0
  %100 = vmatprep.mubr.f32.mxu0 0.0
  %101 = vmatmul.mubr.f32.gmra.mrb[0].mxu0 %v16
  %v102 = vpop.f32.mrb[0].mxu0
  %v103 = vadd.f32 0.0, %v102
  %v104 = vpop.f32.mrb[0].mxu0
  %105 = vmatprep.mubr.f32.mxu0 0.0
  %106 = vmatmul.mubr.f32.gmra.mrb[0].mxu0 %v17
  %v107 = vpop.f32.mrb[0].mxu0
  %v108 = vadd.f32 0.0, %v107
  %v109 = vpop.f32.mrb[0].mxu0
  %110 = vmatprep.mubr.f32.mxu0 0.0
  %111 = vmatmul.mubr.f32.gmra.mrb[0].mxu0 %v18
  %v112 = vpop.f32.mrb[0].mxu0
  %v113 = vadd.f32 0.0, %v112
  %v114 = vpop.f32.mrb[0].mxu0
  %115 = vmatprep.mubr.f32.mxu0 0.0
  %116 = vmatmul.mubr.f32.gmra.mrb[0].mxu0 %v19
  %v117 = vpop.f32.mrb[0].mxu0
  %v118 = vadd.f32 0.0, %v117
  %v119 = vpop.f32.mrb[0].mxu0
  %120 = vdwg.mxu0
  %v121 = vmul.f32 %v16, %v16
  %v122 = vmul.f32 %v17, %v17
  %v123 = vmul.f32 %v18, %v18
  %v124 = vmul.f32 %v19, %v19
  %125 = vadd.xlane.f32.xlu0 %v121
  %v126 = vpop.xlane.xlu0 %125
  %127 = vadd.xlane.f32.xlu0 %v122
  %v128 = vpop.xlane.xlu0 %127
  %129 = vadd.xlane.f32.xlu0 %v123
  %v130 = vpop.xlane.xlu0 %129
  %131 = vadd.xlane.f32.xlu0 %v124
  %v132 = vpop.xlane.xlu0 %131
  %v133 = vld [vmem:[%s2] sm:$0x1]
  %v135 = vlaneseq
  %v136 = vshrl.u32 %v135, 7
  %v137 = vsub.s32 0, %v136
  %v138 = vrot.slane %v133, %v137
  %v140 = vadd.f32 %v126, %v138
  %v141 = vadd.f32 %v128, %v138
  %v142 = vadd.f32 %v130, %v138
  %v143 = vadd.f32 %v132, %v138
  %v144 = vmul.f32 %v103, 2.0
  %v145 = vmul.f32 %v108, 2.0
  %v146 = vmul.f32 %v113, 2.0
  %v147 = vmul.f32 %v118, 2.0
  %v148 = vsub.f32 %v140, %v144
  %v149 = vsub.f32 %v141, %v145
  %v150 = vsub.f32 %v142, %v146
  %v151 = vsub.f32 %v143, %v147
  %v152 = vlaneseq
  %v153 = vand.u32 %v152, 127
  %154 = vmin.xlane.f32.xlu0 %v148
  %v155 = vpop.xlane.xlu0 %154
  %156 = vmin.xlane.f32.xlu0 %v149
  %v157 = vpop.xlane.xlu0 %156
  %158 = vmin.xlane.f32.xlu0 %v150
  %v159 = vpop.xlane.xlu0 %158
  %160 = vmin.xlane.f32.xlu0 %v151
  %v161 = vpop.xlane.xlu0 %160
  %vm162 = vcmp.le.f32.partialorder %v148, %v155
  %vm163 = vcmp.le.f32.partialorder %v149, %v157
  %vm164 = vcmp.le.f32.partialorder %v150, %v159
  %vm165 = vcmp.le.f32.partialorder %v151, %v161
  %v166 = vsel %vm162, %v153, 128
  %v167 = vsel %vm163, %v153, 128
  %v168 = vsel %vm164, %v153, 128
  %v169 = vsel %vm165, %v153, 128
  %v170 = vand.u32 %v166, 65535
  %v171 = vshra.s32 %v166, 16
  %v172 = vcvt.s32.f32 %v170
  %v173 = vcvt.s32.f32 %v171
  %174 = vmin.xlane.f32.xlu0 %v173
  %v175 = vpop.xlane.xlu0 %174
  %vm176 = vcmp.eq.f32.partialorder %v173, %v175
  %v177 = vsel %vm176, %v172, inf
  %178 = vmin.xlane.f32.xlu0 %v177
  %v179 = vpop.xlane.xlu0 %178
  %v180 = vcvt.f32.s32 %v179
  %v181 = vcvt.f32.s32 %v175
  %v182 = vshll.u32 %v181, 16
  %v183 = vadd.s32 %v182, %v180
  %v184 = vand.u32 %v167, 65535
  %v185 = vshra.s32 %v167, 16
  %v186 = vcvt.s32.f32 %v184
  %v187 = vcvt.s32.f32 %v185
  %188 = vmin.xlane.f32.xlu0 %v187
  %v189 = vpop.xlane.xlu0 %188
  %vm190 = vcmp.eq.f32.partialorder %v187, %v189
  %v191 = vsel %vm190, %v186, inf
  %192 = vmin.xlane.f32.xlu0 %v191
  %v193 = vpop.xlane.xlu0 %192
  %v194 = vcvt.f32.s32 %v193
  %v195 = vcvt.f32.s32 %v189
  %v196 = vshll.u32 %v195, 16
  %v197 = vadd.s32 %v196, %v194
  %v198 = vand.u32 %v168, 65535
  %v199 = vshra.s32 %v168, 16
  %v200 = vcvt.s32.f32 %v198
  %v201 = vcvt.s32.f32 %v199
  %202 = vmin.xlane.f32.xlu0 %v201
  %v203 = vpop.xlane.xlu0 %202
  %vm204 = vcmp.eq.f32.partialorder %v201, %v203
  %v205 = vsel %vm204, %v200, inf
  %206 = vmin.xlane.f32.xlu0 %v205
  %v207 = vpop.xlane.xlu0 %206
  %v208 = vcvt.f32.s32 %v207
  %v209 = vcvt.f32.s32 %v203
  %v210 = vshll.u32 %v209, 16
  %v211 = vadd.s32 %v210, %v208
  %v212 = vand.u32 %v169, 65535
  %v213 = vshra.s32 %v169, 16
  %v214 = vcvt.s32.f32 %v212
  %v215 = vcvt.s32.f32 %v213
  %216 = vmin.xlane.f32.xlu0 %v215
  %v217 = vpop.xlane.xlu0 %216
  %vm218 = vcmp.eq.f32.partialorder %v215, %v217
  %v219 = vsel %vm218, %v214, inf
  %220 = vmin.xlane.f32.xlu0 %v219
  %v221 = vpop.xlane.xlu0 %220
  %v222 = vcvt.f32.s32 %v221
  %v223 = vcvt.f32.s32 %v217
  %v224 = vshll.u32 %v223, 16
  %v225 = vadd.s32 %v224, %v222
  %vm226 = vcmp.eq.s32.totalorder %v153, %v183
  %vm227 = vcmp.eq.s32.totalorder %v153, %v197
  %vm228 = vcmp.eq.s32.totalorder %v153, %v211
  %vm229 = vcmp.eq.s32.totalorder %v153, %v225
  %v230 = vsel %vm226, 1, 0
  %v231 = vsel %vm227, 1, 0
  %v232 = vsel %vm228, 1, 0
  %v233 = vsel %vm229, 1, 0
  %v234 = vcvt.s32.f32 %v230
  %v235 = vcvt.s32.f32 %v231
  %v236 = vcvt.s32.f32 %v232
  %v237 = vcvt.s32.f32 %v233
  %238 = vmatprep.subr.mxu0 0.0
  %239 = vmatpush1.msra.mxu0 %v20
  %240 = vmatprep.subr.mxu0 0.0
  %241 = vmatpush1.msra.mxu0 %v21
  %242 = vmatprep.subr.mxu0 0.0
  %243 = vmatpush1.msra.mxu0 %v22
  %244 = vmatprep.subr.mxu0 0.0
  %245 = vmatpush1.msra.mxu0 %v23
  %246 = vmatprep.subr.mxu0 0.0
  %247 = vmatpush1.msra.mxu0 %v24
  %248 = vmatprep.subr.mxu0 0.0
  %249 = vmatpush1.msra.mxu0 %v25
  %250 = vmatprep.subr.mxu0 0.0
  %251 = vmatpush1.msra.mxu0 %v26
  %252 = vmatprep.subr.mxu0 0.0
  %253 = vmatpush1.msra.mxu0 %v27
  %254 = vmatprep.subr.mxu0 0.0
  %255 = vmatpush1.msra.mxu0 %v28
  %256 = vmatprep.subr.mxu0 0.0
  %257 = vmatpush1.msra.mxu0 %v29
  %258 = vmatprep.subr.mxu0 0.0
  %259 = vmatpush1.msra.mxu0 %v30
  %260 = vmatprep.subr.mxu0 0.0
  %261 = vmatpush1.msra.mxu0 %v31
  %262 = vmatprep.subr.mxu0 0.0
  %263 = vmatpush1.msra.mxu0 %v32
  %264 = vmatprep.subr.mxu0 0.0
  %265 = vmatpush1.msra.mxu0 %v33
  %266 = vmatprep.subr.mxu0 0.0
  %267 = vmatpush1.msra.mxu0 %v34
  %268 = vmatprep.subr.mxu0 0.0
  %269 = vmatpush1.msra.mxu0 %v35
  %270 = vmatprep.subr.mxu0 0.0
  %271 = vmatpush1.msra.mxu0 0.0
  %272 = vmatprep.subr.mxu0 0.0
  %273 = vmatpush1.msra.mxu0 0.0
  %274 = vmatprep.subr.mxu0 0.0
  %275 = vmatpush1.msra.mxu0 0.0
  %276 = vmatprep.subr.mxu0 0.0
  %277 = vmatpush1.msra.mxu0 0.0
  %278 = vmatprep.subr.mxu0 0.0
  %279 = vmatpush1.msra.mxu0 0.0
  %280 = vmatprep.subr.mxu0 0.0
  %281 = vmatpush1.msra.mxu0 0.0
  %282 = vmatprep.subr.mxu0 0.0
  %283 = vmatpush1.msra.mxu0 0.0
  %284 = vmatprep.subr.mxu0 0.0
  %285 = vmatpush1.msra.mxu0 0.0
  %286 = vmatprep.subr.mxu0 0.0
  %287 = vmatpush1.msra.mxu0 0.0
  %288 = vmatprep.subr.mxu0 0.0
  %289 = vmatpush1.msra.mxu0 0.0
  %290 = vmatprep.subr.mxu0 0.0
  %291 = vmatpush1.msra.mxu0 0.0
  %292 = vmatprep.subr.mxu0 0.0
  %293 = vmatpush1.msra.mxu0 0.0
  %294 = vmatprep.subr.mxu0 0.0
  %295 = vmatpush1.msra.mxu0 0.0
  %296 = vmatprep.subr.mxu0 0.0
  %297 = vmatpush1.msra.mxu0 0.0
  %298 = vmatprep.subr.mxu0 0.0
  %299 = vmatpush1.msra.mxu0 0.0
  %300 = vmatprep.subr.mxu0 0.0
  %301 = vmatpush1.msra.mxu0 0.0
  %302 = vmatprep.mubr.f32.mxu0 0.0
  %303 = vmatmul.mubr.f32.gmra.mrb[0].mxu0 %v234
  %v304 = vpop.f32.mrb[0].mxu0
  %v305 = vadd.f32 0.0, %v304
  %v306 = vpop.f32.mrb[0].mxu0
  %307 = vmatprep.mubr.f32.mxu0 0.0
  %308 = vmatmul.mubr.f32.gmra.mrb[0].mxu0 %v235
  %v309 = vpop.f32.mrb[0].mxu0
  %v310 = vadd.f32 0.0, %v309
  %v311 = vpop.f32.mrb[0].mxu0
  %312 = vmatprep.mubr.f32.mxu0 0.0
  %313 = vmatmul.mubr.f32.gmra.mrb[0].mxu0 %v236
  %v314 = vpop.f32.mrb[0].mxu0
  %v315 = vadd.f32 0.0, %v314
  %v316 = vpop.f32.mrb[0].mxu0
  %317 = vmatprep.mubr.f32.mxu0 0.0
  %318 = vmatmul.mubr.f32.gmra.mrb[0].mxu0 %v237
  %v319 = vpop.f32.mrb[0].mxu0
  %v320 = vadd.f32 0.0, %v319
  %v321 = vpop.f32.mrb[0].mxu0
  %322 = vdwg.mxu0
  %323 = vst [vmem:[%s3] sm:$0xff] %v305
  %324 = vst [vmem:[%s3 + $0x8] sm:$0xff] %v310
  %325 = vst [vmem:[%s3 + $0x10] sm:$0xff] %v315
  %326 = vst [vmem:[%s3 + $0x18] sm:$0xff] %v320
  %vm327 = vcmask 7168
  %328 = vst.msk [vmem:[%s4] sm:$0xff] %vm327, %v183
  %329 = vst.msk [vmem:[%s4 + $0x8] sm:$0xff] %vm327, %v197
  %330 = vst.msk [vmem:[%s4 + $0x10] sm:$0xff] %vm327, %v211
  %331 = vst.msk [vmem:[%s4 + $0x18] sm:$0xff] %vm327, %v225
  // Predicated region
  $region14: #{vqvae_forward.16} parent=0 // pred_check
    _
  $region15: #{vqvae_forward.16} parent=0 // pred_check_branch
    %333 = sbr.rel (0) target = $region17
  $region16: #{vqvae_forward.16} parent=0 // pred_region
    _
  $region17: #{vqvae_forward.16} parent=0 // pred_fallthru
    _
  // Predicated region
  $region18: #{vqvae_forward.16} parent=0 // pred_check
    _
  $region19: #{vqvae_forward.16} parent=0 // pred_check_branch
    %335 = sbr.rel (0) target = $region21
  $region20: #{vqvae_forward.16} parent=0 // pred_region
    _
  $region21: #{vqvae_forward.16} parent=0 // pred_fallthru
    _
  // Predicated region
  $region22: #{vqvae_forward.16} parent=0 // pred_check
    _
  $region23: #{vqvae_forward.16} parent=0 // pred_check_branch
    %337 = sbr.rel (0) target = $region25
  $region24: #{vqvae_forward.16} parent=0 // pred_region
    _
  $region25: #{vqvae_forward.16} parent=0 // pred_fallthru
    _
  // Predicated region
  $region26: #{vqvae_forward.16} parent=0 // pred_check
    _
  $region27: #{vqvae_forward.16} parent=0 // pred_check_branch
    %339 = sbr.rel (0) target = $region29
  $region28: #{vqvae_forward.16} parent=0 // pred_region
    _
  $region29: #{vqvae_forward.16} parent=0 // pred_fallthru
    _

// kernel: squeeze.1
$region0: #{squeeze.1}
  %s0 = inlined_call_operand.vmem [shape: s32[32], index: 0, kind: input, shape index: {}]
  %s1 = inlined_call_operand.hbm [shape: s32[2,4,4], index: 1, kind: output, shape index: {}]
  $region1: #{squeeze.1} parent=0
    #allocation0 [shape = 'u8[4096]{0}', space=vmem, size = 0x1000, scoped, tag = 'operand span for operand 1']
    #allocation1 [shape = 's32[1]{0}', space=sflag, size = 0x4, scoped, tag = 'scoped memory for squeeze.1']
    #allocation2 [shape = 'u8[8192]{0}', space=vmem, size = 0x2000, scoped, tag = 'scoped mem for output reshape']
    #allocation3 [shape = 'u8[4096]{0}', space=vmem, size = 0x1000, scoped, tag = 'scoped mem for input reshape']
    %2 = vsyncpa [#allocation1], 0
    %s4 = sshllo.u32 0, 1
    %v5 = vld [vmem:[%s0] sm:%s4]
    %6 = vst [vmem:[#allocation3] sm:%s4] %v5
    %v7 = vld [vmem:[#allocation3] sm:$0x1]
    %vm8 = vcmask 31744
    %9 = vst.msk [vmem:[#allocation2] sm:$0x1] %vm8, %v7
    %v10 = vld [vmem:[#allocation3] sm:$0x1]
    %11 = vrot.lane.b32.xlu0 %v10, 124
    %v12 = vpop.permute.xlu0 %11
    %vm13 = vcmask 31744
    %s14 = scalar_lea.vmem [#allocation2], 1
    %15 = vst.msk [vmem:[%s14] sm:$0x1] %vm13, %v12
    %v16 = vld [vmem:[#allocation3] sm:$0x1]
    %17 = vrot.lane.b32.xlu0 %v16, 120
    %v18 = vpop.permute.xlu0 %17
    %vm19 = vcmask 31744
    %s20 = scalar_lea.vmem [#allocation2], 2
    %21 = vst.msk [vmem:[%s20] sm:$0x1] %vm19, %v18
    %v22 = vld [vmem:[#allocation3] sm:$0x1]
    %23 = vrot.lane.b32.xlu0 %v22, 116
    %v24 = vpop.permute.xlu0 %23
    %vm25 = vcmask 31744
    %s26 = scalar_lea.vmem [#allocation2], 3
    %27 = vst.msk [vmem:[%s26] sm:$0x1] %vm25, %v24
    %v28 = vld [vmem:[#allocation3] sm:$0x1]
    %29 = vrot.lane.b32.xlu0 %v28, 112
    %v30 = vpop.permute.xlu0 %29
    %vm31 = vcmask 31744
    %s32 = scalar_lea.vmem [#allocation2], 8
    %33 = vst.msk [vmem:[%s32] sm:$0x1] %vm31, %v30
    %v34 = vld [vmem:[#allocation3] sm:$0x1]
    %35 = vrot.lane.b32.xlu0 %v34, 108
    %v36 = vpop.permute.xlu0 %35
    %vm37 = vcmask 31744
    %s38 = scalar_lea.vmem [#allocation2], 9
    %39 = vst.msk [vmem:[%s38] sm:$0x1] %vm37, %v36
    %v40 = vld [vmem:[#allocation3] sm:$0x1]
    %41 = vrot.lane.b32.xlu0 %v40, 104
    %v42 = vpop.permute.xlu0 %41
    %vm43 = vcmask 31744
    %s44 = scalar_lea.vmem [#allocation2], 10
    %45 = vst.msk [vmem:[%s44] sm:$0x1] %vm43, %v42
    %v46 = vld [vmem:[#allocation3] sm:$0x1]
    %47 = vrot.lane.b32.xlu0 %v46, 100
    %v48 = vpop.permute.xlu0 %47
    %vm49 = vcmask 31744
    %s50 = scalar_lea.vmem [#allocation2], 11
    %51 = vst.msk [vmem:[%s50] sm:$0x1] %vm49, %v48
    %s53 = sshllo.u32 0, 4
    %v55 = vld [vmem:[#allocation2] sm:%s53]
    %s56 = sshllo.u32 0, 4
    %57 = vst [vmem:[#allocation0] sm:%s56] %v55
    %s58 = scalar_lea.vmem [#allocation2], 8
    %v59 = vld [vmem:[%s58] sm:%s53]
    %s60 = sshllo.u32 0, 4
    %s61 = scalar_lea.vmem [#allocation0], 4
    %62 = vst [vmem:[%s61] sm:%s60] %v59
    %s64 = ssub.s32 128, 128
    %65 = vsyncadd [#allocation1], %s64
    %s67 = sshll.u32 [#allocation0], 4
    %s68 = int_to_ptr.vmem [resolvable:$true] %s67
    %70 = dma.vmem_to_hbm [thread:$0]  %s68, 128, %s1, [#allocation1]
    %71 = dma.done [#allocation1], 128
    %72 = vsyncpa [#allocation1], 1

// kernel: vqvae_forward.20
$region0: #{vqvae_forward.20}
  #allocation0 [shape = 'u32[]', space=smem, size = 0x4, offset = 0x4, fixed_abs, tag = 'smem constant byte address 0x4 - core index']
  #allocation1 [shape = 'u32[144,128]{1,0:T(1,128)}', space=vmem, size = 0x12000, scoped, tag = 'internal scratch']
  %s0 = inlined_call_operand.vmem [shape: f32[32,1152], index: 0, kind: input, shape index: {}]
  %s1 = inlined_call_operand.vmem [shape: f32[1152,512], index: 1, kind: input, shape index: {}]
  %s2 = inlined_call_operand.vmem [shape: f32[1,512], index: 2, kind: input, shape index: {}]
  %s3 = inlined_call_operand.vmem [shape: f32[1,128], index: 3, kind: input, shape index: {}]
  %s4 = inlined_call_operand.vmem [shape: f32[1,128], index: 4, kind: input, shape index: {}]
  %s5 = inlined_call_operand.vmem [shape: f32[32,512], index: 5, kind: output, shape index: {}]
  %s6 = sld [smem:[#allocation0]]
  $region30: #{vqvae_forward.20} parent=0
    _
  %s8 = ssub.s32 1, %s6
  %s9 = scalar_select 0, %s8, %s6
  // Predicated region
  $region2: #{vqvae_forward.20} parent=0 // pred_check
    _
  $region3: #{vqvae_forward.20} parent=0 // pred_check_branch
    %11 = sbr.rel (0) target = $region5
  $region4: #{vqvae_forward.20} parent=0 // pred_region
    _
  $region5: #{vqvae_forward.20} parent=0 // pred_fallthru
    _
  // Predicated region
  $region6: #{vqvae_forward.20} parent=0 // pred_check
    _
  $region7: #{vqvae_forward.20} parent=0 // pred_check_branch
    %13 = sbr.rel (0) target = $region9
  $region8: #{vqvae_forward.20} parent=0 // pred_region
    _
  $region9: #{vqvae_forward.20} parent=0 // pred_fallthru
    _
  // Predicated region
  $region10: #{vqvae_forward.20} parent=0 // pred_check
    _
  $region11: #{vqvae_forward.20} parent=0 // pred_check_branch
    %15 = sbr.rel (0) target = $region13
  $region12: #{vqvae_forward.20} parent=0 // pred_region
    _
  $region13: #{vqvae_forward.20} parent=0 // pred_fallthru
    _
  // Predicated region
  $region14: #{vqvae_forward.20} parent=0 // pred_check
    _
  $region15: #{vqvae_forward.20} parent=0 // pred_check_branch
    %17 = sbr.rel (0) target = $region17
  $region16: #{vqvae_forward.20} parent=0 // pred_region
    _
  $region17: #{vqvae_forward.20} parent=0 // pred_fallthru
    _
  // Predicated region
  $region18: #{vqvae_forward.20} parent=0 // pred_check
    _
  $region19: #{vqvae_forward.20} parent=0 // pred_check_branch
    %19 = sbr.rel (0) target = $region21
  $region20: #{vqvae_forward.20} parent=0 // pred_region
    _
  $region21: #{vqvae_forward.20} parent=0 // pred_fallthru
    _
  %v20 = vld [vmem:[%s0] sm:$0xff]
  %v21 = vld [vmem:[%s0 + $0x8] sm:$0xff]
  %v22 = vld [vmem:[%s0 + $0x10] sm:$0xff]
  %v23 = vld [vmem:[%s0 + $0x18] sm:$0xff]
  %v24 = vld [vmem:[%s0 + $0x20] sm:$0xff]
  %v25 = vld [vmem:[%s0 + $0x28] sm:$0xff]
  %v26 = vld [vmem:[%s0 + $0x30] sm:$0xff]
  %v27 = vld [vmem:[%s0 + $0x38] sm:$0xff]
  %v28 = vld [vmem:[%s0 + $0x40] sm:$0xff]
  %v29 = vld [vmem:[%s0 + $0x48] sm:$0xff]
  %v30 = vld [vmem:[%s0 + $0x50] sm:$0xff]
  %v31 = vld [vmem:[%s0 + $0x58] sm:$0xff]
  %v32 = vld [vmem:[%s0 + $0x60] sm:$0xff]
  %v33 = vld [vmem:[%s0 + $0x68] sm:$0xff]
  %v34 = vld [vmem:[%s0 + $0x70] sm:$0xff]
  %v35 = vld [vmem:[%s0 + $0x78] sm:$0xff]
  %v36 = vld [vmem:[%s0 + $0x80] sm:$0xff]
  %v37 = vld [vmem:[%s0 + $0x88] sm:$0xff]
  %v38 = vld [vmem:[%s0 + $0x90] sm:$0xff]
  %v39 = vld [vmem:[%s0 + $0x98] sm:$0xff]
  %v40 = vld [vmem:[%s0 + $0xa0] sm:$0xff]
  %v41 = vld [vmem:[%s0 + $0xa8] sm:$0xff]
  %v42 = vld [vmem:[%s0 + $0xb0] sm:$0xff]
  %v43 = vld [vmem:[%s0 + $0xb8] sm:$0xff]
  %v44 = vld [vmem:[%s0 + $0xc0] sm:$0xff]
  %v45 = vld [vmem:[%s0 + $0xc8] sm:$0xff]
  %v46 = vld [vmem:[%s0 + $0xd0] sm:$0xff]
  %v47 = vld [vmem:[%s0 + $0xd8] sm:$0xff]
  %v48 = vld [vmem:[%s0 + $0xe0] sm:$0xff]
  %v49 = vld [vmem:[%s0 + $0xe8] sm:$0xff]
  %v50 = vld [vmem:[%s0 + $0xf0] sm:$0xff]
  %v51 = vld [vmem:[%s0 + $0xf8] sm:$0xff]
  %v52 = vld [vmem:[%s0 + $0x100] sm:$0xff]
  %v53 = vld [vmem:[%s0 + $0x108] sm:$0xff]
  %v54 = vld [vmem:[%s0 + $0x110] sm:$0xff]
  %v55 = vld [vmem:[%s0 + $0x118] sm:$0xff]
  %v56 = vld [vmem:[%s1] sm:$0xff]
  %v57 = vld [vmem:[%s1 + $0x8] sm:$0xff]
  %v58 = vld [vmem:[%s1 + $0x10] sm:$0xff]
  %v59 = vld [vmem:[%s1 + $0x18] sm:$0xff]
  %v60 = vld [vmem:[%s1 + $0x20] sm:$0xff]
  %v61 = vld [vmem:[%s1 + $0x28] sm:$0xff]
  %v62 = vld [vmem:[%s1 + $0x30] sm:$0xff]
  %v63 = vld [vmem:[%s1 + $0x38] sm:$0xff]
  %v64 = vld [vmem:[%s1 + $0x40] sm:$0xff]
  %v65 = vld [vmem:[%s1 + $0x48] sm:$0xff]
  %v66 = vld [vmem:[%s1 + $0x50] sm:$0xff]
  %v67 = vld [vmem:[%s1 + $0x58] sm:$0xff]
  %v68 = vld [vmem:[%s1 + $0x60] sm:$0xff]
  %v69 = vld [vmem:[%s1 + $0x68] sm:$0xff]
  %v70 = vld [vmem:[%s1 + $0x70] sm:$0xff]
  %v71 = vld [vmem:[%s1 + $0x78] sm:$0xff]
  %v72 = vld [vmem:[%s1 + $0x80] sm:$0xff]
  %v73 = vld [vmem:[%s1 + $0x88] sm:$0xff]
  %v74 = vld [vmem:[%s1 + $0x90] sm:$0xff]
  %v75 = vld [vmem:[%s1 + $0x98] sm:$0xff]
  %v76 = vld [vmem:[%s1 + $0xa0] sm:$0xff]
  %v77 = vld [vmem:[%s1 + $0xa8] sm:$0xff]
  %v78 = vld [vmem:[%s1 + $0xb0] sm:$0xff]
  %v79 = vld [vmem:[%s1 + $0xb8] sm:$0xff]
  %v80 = vld [vmem:[%s1 + $0xc0] sm:$0xff]
  %v81 = vld [vmem:[%s1 + $0xc8] sm:$0xff]
  %v82 = vld [vmem:[%s1 + $0xd0] sm:$0xff]
  %v83 = vld [vmem:[%s1 + $0xd8] sm:$0xff]
  %v84 = vld [vmem:[%s1 + $0xe0] sm:$0xff]
  %v85 = vld [vmem:[%s1 + $0xe8] sm:$0xff]
  %v86 = vld [vmem:[%s1 + $0xf0] sm:$0xff]
  %v87 = vld [vmem:[%s1 + $0xf8] sm:$0xff]
  %v88 = vld [vmem:[%s1 + $0x100] sm:$0xff]
  %v89 = vld [vmem:[%s1 + $0x108] sm:$0xff]
  %v90 = vld [vmem:[%s1 + $0x110] sm:$0xff]
  %v91 = vld [vmem:[%s1 + $0x118] sm:$0xff]
  %v92 = vld [vmem:[%s1 + $0x120] sm:$0xff]
  %v93 = vld [vmem:[%s1 + $0x128] sm:$0xff]
  %v94 = vld [vmem:[%s1 + $0x130] sm:$0xff]
  %v95 = vld [vmem:[%s1 + $0x138] sm:$0xff]
  %v96 = vld [vmem:[%s1 + $0x140] sm:$0xff]
  %v97 = vld [vmem:[%s1 + $0x148] sm:$0xff]
  %v98 = vld [vmem:[%s1 + $0x150] sm:$0xff]
  %v99 = vld [vmem:[%s1 + $0x158] sm:$0xff]
  %v100 = vld [vmem:[%s1 + $0x160] sm:$0xff]
  %v101 = vld [vmem:[%s1 + $0x168] sm:$0xff]
  %v102 = vld [vmem:[%s1 + $0x170] sm:$0xff]
  %v103 = vld [vmem:[%s1 + $0x178] sm:$0xff]
  %v104 = vld [vmem:[%s1 + $0x180] sm:$0xff]
  %v105 = vld [vmem:[%s1 + $0x188] sm:$0xff]
  %v106 = vld [vmem:[%s1 + $0x190] sm:$0xff]
  %v107 = vld [vmem:[%s1 + $0x198] sm:$0xff]
  %v108 = vld [vmem:[%s1 + $0x1a0] sm:$0xff]
  %v109 = vld [vmem:[%s1 + $0x1a8] sm:$0xff]
  %v110 = vld [vmem:[%s1 + $0x1b0] sm:$0xff]
  %v111 = vld [vmem:[%s1 + $0x1b8] sm:$0xff]
  %v112 = vld [vmem:[%s1 + $0x1c0] sm:$0xff]
  %v113 = vld [vmem:[%s1 + $0x1c8] sm:$0xff]
  %v114 = vld [vmem:[%s1 + $0x1d0] sm:$0xff]
  %v115 = vld [vmem:[%s1 + $0x1d8] sm:$0xff]
  %v116 = vld [vmem:[%s1 + $0x1e0] sm:$0xff]
  %v117 = vld [vmem:[%s1 + $0x1e8] sm:$0xff]
  %v118 = vld [vmem:[%s1 + $0x1f0] sm:$0xff]
  %v119 = vld [vmem:[%s1 + $0x1f8] sm:$0xff]
  %v120 = vld [vmem:[%s1 + $0x200] sm:$0xff]
  %v121 = vld [vmem:[%s1 + $0x208] sm:$0xff]
  %v122 = vld [vmem:[%s1 + $0x210] sm:$0xff]
  %v123 = vld [vmem:[%s1 + $0x218] sm:$0xff]
  %v124 = vld [vmem:[%s1 + $0x220] sm:$0xff]
  %v125 = vld [vmem:[%s1 + $0x228] sm:$0xff]
  %v126 = vld [vmem:[%s1 + $0x230] sm:$0xff]
  %v127 = vld [vmem:[%s1 + $0x238] sm:$0xff]
  %v128 = vld [vmem:[%s1 + $0x240] sm:$0xff]
  %v129 = vld [vmem:[%s1 + $0x248] sm:$0xff]
  %v130 = vld [vmem:[%s1 + $0x250] sm:$0xff]
  %v131 = vld [vmem:[%s1 + $0x258] sm:$0xff]
  %v132 = vld [vmem:[%s1 + $0x260] sm:$0xff]
  %v133 = vld [vmem:[%s1 + $0x268] sm:$0xff]
  %v134 = vld [vmem:[%s1 + $0x270] sm:$0xff]
  %v135 = vld [vmem:[%s1 + $0x278] sm:$0xff]
  %v136 = vld [vmem:[%s1 + $0x280] sm:$0xff]
  %v137 = vld [vmem:[%s1 + $0x288] sm:$0xff]
  %v138 = vld [vmem:[%s1 + $0x290] sm:$0xff]
  %v139 = vld [vmem:[%s1 + $0x298] sm:$0xff]
  %v140 = vld [vmem:[%s1 + $0x2a0] sm:$0xff]
  %v141 = vld [vmem:[%s1 + $0x2a8] sm:$0xff]
  %v142 = vld [vmem:[%s1 + $0x2b0] sm:$0xff]
  %v143 = vld [vmem:[%s1 + $0x2b8] sm:$0xff]
  %v144 = vld [vmem:[%s1 + $0x2c0] sm:$0xff]
  %v145 = vld [vmem:[%s1 + $0x2c8] sm:$0xff]
  %v146 = vld [vmem:[%s1 + $0x2d0] sm:$0xff]
  %v147 = vld [vmem:[%s1 + $0x2d8] sm:$0xff]
  %v148 = vld [vmem:[%s1 + $0x2e0] sm:$0xff]
  %v149 = vld [vmem:[%s1 + $0x2e8] sm:$0xff]
  %v150 = vld [vmem:[%s1 + $0x2f0] sm:$0xff]
  %v151 = vld [vmem:[%s1 + $0x2f8] sm:$0xff]
  %v152 = vld [vmem:[%s1 + $0x300] sm:$0xff]
  %v153 = vld [vmem:[%s1 + $0x308] sm:$0xff]
  %v154 = vld [vmem:[%s1 + $0x310] sm:$0xff]
  %v155 = vld [vmem:[%s1 + $0x318] sm:$0xff]
  %v156 = vld [vmem:[%s1 + $0x320] sm:$0xff]
  %v157 = vld [vmem:[%s1 + $0x328] sm:$0xff]
  %v158 = vld [vmem:[%s1 + $0x330] sm:$0xff]
  %v159 = vld [vmem:[%s1 + $0x338] sm:$0xff]
  %v160 = vld [vmem:[%s1 + $0x340] sm:$0xff]
  %v161 = vld [vmem:[%s1 + $0x348] sm:$0xff]
  %v162 = vld [vmem:[%s1 + $0x350] sm:$0xff]
  %v163 = vld [vmem:[%s1 + $0x358] sm:$0xff]
  %v164 = vld [vmem:[%s1 + $0x360] sm:$0xff]
  %v165 = vld [vmem:[%s1 + $0x368] sm:$0xff]
  %v166 = vld [vmem:[%s1 + $0x370] sm:$0xff]
  %v167 = vld [vmem:[%s1 + $0x378] sm:$0xff]
  %v168 = vld [vmem:[%s1 + $0x380] sm:$0xff]
  %v169 = vld [vmem:[%s1 + $0x388] sm:$0xff]
  %v170 = vld [vmem:[%s1 + $0x390] sm:$0xff]
  %v171 = vld [vmem:[%s1 + $0x398] sm:$0xff]
  %v172 = vld [vmem:[%s1 + $0x3a0] sm:$0xff]
  %v173 = vld [vmem:[%s1 + $0x3a8] sm:$0xff]
  %v174 = vld [vmem:[%s1 + $0x3b0] sm:$0xff]
  %v175 = vld [vmem:[%s1 + $0x3b8] sm:$0xff]
  %v176 = vld [vmem:[%s1 + $0x3c0] sm:$0xff]
  %v177 = vld [vmem:[%s1 + $0x3c8] sm:$0xff]
  %v178 = vld [vmem:[%s1 + $0x3d0] sm:$0xff]
  %v179 = vld [vmem:[%s1 + $0x3d8] sm:$0xff]
  %v180 = vld [vmem:[%s1 + $0x3e0] sm:$0xff]
  %v181 = vld [vmem:[%s1 + $0x3e8] sm:$0xff]
  %v182 = vld [vmem:[%s1 + $0x3f0] sm:$0xff]
  %v183 = vld [vmem:[%s1 + $0x3f8] sm:$0xff]
  %v184 = vld [vmem:[%s1 + $0x400] sm:$0xff]
  %v185 = vld [vmem:[%s1 + $0x408] sm:$0xff]
  %v186 = vld [vmem:[%s1 + $0x410] sm:$0xff]
  %v187 = vld [vmem:[%s1 + $0x418] sm:$0xff]
  %v188 = vld [vmem:[%s1 + $0x420] sm:$0xff]
  %v189 = vld [vmem:[%s1 + $0x428] sm:$0xff]
  %v190 = vld [vmem:[%s1 + $0x430] sm:$0xff]
  %v191 = vld [vmem:[%s1 + $0x438] sm:$0xff]
  %v192 = vld [vmem:[%s1 + $0x440] sm:$0xff]
  %v193 = vld [vmem:[%s1 + $0x448] sm:$0xff]
  %v194 = vld [vmem:[%s1 + $0x450] sm:$0xff]
  %v195 = vld [vmem:[%s1 + $0x458] sm:$0xff]
  %v196 = vld [vmem:[%s1 + $0x460] sm:$0xff]
  %v197 = vld [vmem:[%s1 + $0x468] sm:$0xff]
  %v198 = vld [vmem:[%s1 + $0x470] sm:$0xff]
  %v199 = vld [vmem:[%s1 + $0x478] sm:$0xff]
  %v200 = vld [vmem:[%s1 + $0x480] sm:$0xff]
  %v201 = vld [vmem:[%s1 + $0x488] sm:$0xff]
  %v202 = vld [vmem:[%s1 + $0x490] sm:$0xff]
  %v203 = vld [vmem:[%s1 + $0x498] sm:$0xff]
  %v204 = vld [vmem:[%s1 + $0x4a0] sm:$0xff]
  %v205 = vld [vmem:[%s1 + $0x4a8] sm:$0xff]
  %v206 = vld [vmem:[%s1 + $0x4b0] sm:$0xff]
  %v207 = vld [vmem:[%s1 + $0x4b8] sm:$0xff]
  %v208 = vld [vmem:[%s1 + $0x4c0] sm:$0xff]
  %v209 = vld [vmem:[%s1 + $0x4c8] sm:$0xff]
  %v210 = vld [vmem:[%s1 + $0x4d0] sm:$0xff]
  %v211 = vld [vmem:[%s1 + $0x4d8] sm:$0xff]
  %v212 = vld [vmem:[%s1 + $0x4e0] sm:$0xff]
  %v213 = vld [vmem:[%s1 + $0x4e8] sm:$0xff]
  %v214 = vld [vmem:[%s1 + $0x4f0] sm:$0xff]
  %v215 = vld [vmem:[%s1 + $0x4f8] sm:$0xff]
  %v216 = vld [vmem:[%s1 + $0x500] sm:$0xff]
  %v217 = vld [vmem:[%s1 + $0x508] sm:$0xff]
  %v218 = vld [vmem:[%s1 + $0x510] sm:$0xff]
  %v219 = vld [vmem:[%s1 + $0x518] sm:$0xff]
  %v220 = vld [vmem:[%s1 + $0x520] sm:$0xff]
  %v221 = vld [vmem:[%s1 + $0x528] sm:$0xff]
  %v222 = vld [vmem:[%s1 + $0x530] sm:$0xff]
  %v223 = vld [vmem:[%s1 + $0x538] sm:$0xff]
  %v224 = vld [vmem:[%s1 + $0x540] sm:$0xff]
  %v225 = vld [vmem:[%s1 + $0x548] sm:$0xff]
  %v226 = vld [vmem:[%s1 + $0x550] sm:$0xff]
  %v227 = vld [vmem:[%s1 + $0x558] sm:$0xff]
  %v228 = vld [vmem:[%s1 + $0x560] sm:$0xff]
  %v229 = vld [vmem:[%s1 + $0x568] sm:$0xff]
  %v230 = vld [vmem:[%s1 + $0x570] sm:$0xff]
  %v231 = vld [vmem:[%s1 + $0x578] sm:$0xff]
  %v232 = vld [vmem:[%s1 + $0x580] sm:$0xff]
  %v233 = vld [vmem:[%s1 + $0x588] sm:$0xff]
  %v234 = vld [vmem:[%s1 + $0x590] sm:$0xff]
  %v235 = vld [vmem:[%s1 + $0x598] sm:$0xff]
  %v236 = vld [vmem:[%s1 + $0x5a0] sm:$0xff]
  %v237 = vld [vmem:[%s1 + $0x5a8] sm:$0xff]
  %v238 = vld [vmem:[%s1 + $0x5b0] sm:$0xff]
  %v239 = vld [vmem:[%s1 + $0x5b8] sm:$0xff]
  %v240 = vld [vmem:[%s1 + $0x5c0] sm:$0xff]
  %v241 = vld [vmem:[%s1 + $0x5c8] sm:$0xff]
  %v242 = vld [vmem:[%s1 + $0x5d0] sm:$0xff]
  %v243 = vld [vmem:[%s1 + $0x5d8] sm:$0xff]
  %v244 = vld [vmem:[%s1 + $0x5e0] sm:$0xff]
  %v245 = vld [vmem:[%s1 + $0x5e8] sm:$0xff]
  %v246 = vld [vmem:[%s1 + $0x5f0] sm:$0xff]
  %v247 = vld [vmem:[%s1 + $0x5f8] sm:$0xff]
  %v248 = vld [vmem:[%s1 + $0x600] sm:$0xff]
  %v249 = vld [vmem:[%s1 + $0x608] sm:$0xff]
  %v250 = vld [vmem:[%s1 + $0x610] sm:$0xff]
  %v251 = vld [vmem:[%s1 + $0x618] sm:$0xff]
  %v252 = vld [vmem:[%s1 + $0x620] sm:$0xff]
  %v253 = vld [vmem:[%s1 + $0x628] sm:$0xff]
  %v254 = vld [vmem:[%s1 + $0x630] sm:$0xff]
  %v255 = vld [vmem:[%s1 + $0x638] sm:$0xff]
  %v256 = vld [vmem:[%s1 + $0x640] sm:$0xff]
  %v257 = vld [vmem:[%s1 + $0x648] sm:$0xff]
  %v258 = vld [vmem:[%s1 + $0x650] sm:$0xff]
  %v259 = vld [vmem:[%s1 + $0x658] sm:$0xff]
  %v260 = vld [vmem:[%s1 + $0x660] sm:$0xff]
  %v261 = vld [vmem:[%s1 + $0x668] sm:$0xff]
  %v262 = vld [vmem:[%s1 + $0x670] sm:$0xff]
  %v263 = vld [vmem:[%s1 + $0x678] sm:$0xff]
  %v264 = vld [vmem:[%s1 + $0x680] sm:$0xff]
  %v265 = vld [vmem:[%s1 + $0x688] sm:$0xff]
  %v266 = vld [vmem:[%s1 + $0x690] sm:$0xff]
  %v267 = vld [vmem:[%s1 + $0x698] sm:$0xff]
  %v268 = vld [vmem:[%s1 + $0x6a0] sm:$0xff]
  %v269 = vld [vmem:[%s1 + $0x6a8] sm:$0xff]
  %v270 = vld [vmem:[%s1 + $0x6b0] sm:$0xff]
  %v271 = vld [vmem:[%s1 + $0x6b8] sm:$0xff]
  %v272 = vld [vmem:[%s1 + $0x6c0] sm:$0xff]
  %v273 = vld [vmem:[%s1 + $0x6c8] sm:$0xff]
  %v274 = vld [vmem:[%s1 + $0x6d0] sm:$0xff]
  %v275 = vld [vmem:[%s1 + $0x6d8] sm:$0xff]
  %v276 = vld [vmem:[%s1 + $0x6e0] sm:$0xff]
  %v277 = vld [vmem:[%s1 + $0x6e8] sm:$0xff]
  %v278 = vld [vmem:[%s1 + $0x6f0] sm:$0xff]
  %v279 = vld [vmem:[%s1 + $0x6f8] sm:$0xff]
  %v280 = vld [vmem:[%s1 + $0x700] sm:$0xff]
  %v281 = vld [vmem:[%s1 + $0x708] sm:$0xff]
  %v282 = vld [vmem:[%s1 + $0x710] sm:$0xff]
  %v283 = vld [vmem:[%s1 + $0x718] sm:$0xff]
  %v284 = vld [vmem:[%s1 + $0x720] sm:$0xff]
  %v285 = vld [vmem:[%s1 + $0x728] sm:$0xff]
  %v286 = vld [vmem:[%s1 + $0x730] sm:$0xff]
  %v287 = vld [vmem:[%s1 + $0x738] sm:$0xff]
  %v288 = vld [vmem:[%s1 + $0x740] sm:$0xff]
  %v289 = vld [vmem:[%s1 + $0x748] sm:$0xff]
  %v290 = vld [vmem:[%s1 + $0x750] sm:$0xff]
  %v291 = vld [vmem:[%s1 + $0x758] sm:$0xff]
  %v292 = vld [vmem:[%s1 + $0x760] sm:$0xff]
  %v293 = vld [vmem:[%s1 + $0x768] sm:$0xff]
  %v294 = vld [vmem:[%s1 + $0x770] sm:$0xff]
  %v295 = vld [vmem:[%s1 + $0x778] sm:$0xff]
  %v296 = vld [vmem:[%s1 + $0x780] sm:$0xff]
  %v297 = vld [vmem:[%s1 + $0x788] sm:$0xff]
  %v298 = vld [vmem:[%s1 + $0x790] sm:$0xff]
  %v299 = vld [vmem:[%s1 + $0x798] sm:$0xff]
  %v300 = vld [vmem:[%s1 + $0x7a0] sm:$0xff]
  %v301 = vld [vmem:[%s1 + $0x7a8] sm:$0xff]
  %v302 = vld [vmem:[%s1 + $0x7b0] sm:$0xff]
  %v303 = vld [vmem:[%s1 + $0x7b8] sm:$0xff]
  %v304 = vld [vmem:[%s1 + $0x7c0] sm:$0xff]
  %v305 = vld [vmem:[%s1 + $0x7c8] sm:$0xff]
  %v306 = vld [vmem:[%s1 + $0x7d0] sm:$0xff]
  %v307 = vld [vmem:[%s1 + $0x7d8] sm:$0xff]
  %v308 = vld [vmem:[%s1 + $0x7e0] sm:$0xff]
  %v309 = vld [vmem:[%s1 + $0x7e8] sm:$0xff]
  %v310 = vld [vmem:[%s1 + $0x7f0] sm:$0xff]
  %v311 = vld [vmem:[%s1 + $0x7f8] sm:$0xff]
  %v312 = vld [vmem:[%s1 + $0x800] sm:$0xff]
  %v313 = vld [vmem:[%s1 + $0x808] sm:$0xff]
  %v314 = vld [vmem:[%s1 + $0x810] sm:$0xff]
  %v315 = vld [vmem:[%s1 + $0x818] sm:$0xff]
  %v316 = vld [vmem:[%s1 + $0x820] sm:$0xff]
  %v317 = vld [vmem:[%s1 + $0x828] sm:$0xff]
  %v318 = vld [vmem:[%s1 + $0x830] sm:$0xff]
  %v319 = vld [vmem:[%s1 + $0x838] sm:$0xff]
  %v320 = vld [vmem:[%s1 + $0x840] sm:$0xff]
  %v321 = vld [vmem:[%s1 + $0x848] sm:$0xff]
  %v322 = vld [vmem:[%s1 + $0x850] sm:$0xff]
  %v323 = vld [vmem:[%s1 + $0x858] sm:$0xff]
  %v324 = vld [vmem:[%s1 + $0x860] sm:$0xff]
  %v325 = vld [vmem:[%s1 + $0x868] sm:$0xff]
  %v326 = vld [vmem:[%s1 + $0x870] sm:$0xff]
  %v327 = vld [vmem:[%s1 + $0x878] sm:$0xff]
  %v328 = vld [vmem:[%s1 + $0x880] sm:$0xff]
  %v329 = vld [vmem:[%s1 + $0x888] sm:$0xff]
  %v330 = vld [vmem:[%s1 + $0x890] sm:$0xff]
  %v331 = vld [vmem:[%s1 + $0x898] sm:$0xff]
  %v332 = vld [vmem:[%s1 + $0x8a0] sm:$0xff]
  %v333 = vld [vmem:[%s1 + $0x8a8] sm:$0xff]
  %v334 = vld [vmem:[%s1 + $0x8b0] sm:$0xff]
  %v335 = vld [vmem:[%s1 + $0x8b8] sm:$0xff]
  %v336 = vld [vmem:[%s1 + $0x8c0] sm:$0xff]
  %v337 = vld [vmem:[%s1 + $0x8c8] sm:$0xff]
  %v338 = vld [vmem:[%s1 + $0x8d0] sm:$0xff]
  %v339 = vld [vmem:[%s1 + $0x8d8] sm:$0xff]
  %v340 = vld [vmem:[%s1 + $0x8e0] sm:$0xff]
  %v341 = vld [vmem:[%s1 + $0x8e8] sm:$0xff]
  %v342 = vld [vmem:[%s1 + $0x8f0] sm:$0xff]
  %v343 = vld [vmem:[%s1 + $0x8f8] sm:$0xff]
  %v344 = vld [vmem:[%s1 + $0x900] sm:$0xff]
  %v345 = vld [vmem:[%s1 + $0x908] sm:$0xff]
  %v346 = vld [vmem:[%s1 + $0x910] sm:$0xff]
  %v347 = vld [vmem:[%s1 + $0x918] sm:$0xff]
  %v348 = vld [vmem:[%s1 + $0x920] sm:$0xff]
  %v349 = vld [vmem:[%s1 + $0x928] sm:$0xff]
  %v350 = vld [vmem:[%s1 + $0x930] sm:$0xff]
  %v351 = vld [vmem:[%s1 + $0x938] sm:$0xff]
  %v352 = vld [vmem:[%s1 + $0x940] sm:$0xff]
  %v353 = vld [vmem:[%s1 + $0x948] sm:$0xff]
  %v354 = vld [vmem:[%s1 + $0x950] sm:$0xff]
  %v355 = vld [vmem:[%s1 + $0x958] sm:$0xff]
  %v356 = vld [vmem:[%s1 + $0x960] sm:$0xff]
  %v357 = vld [vmem:[%s1 + $0x968] sm:$0xff]
  %v358 = vld [vmem:[%s1 + $0x970] sm:$0xff]
  %v359 = vld [vmem:[%s1 + $0x978] sm:$0xff]
  %v360 = vld [vmem:[%s1 + $0x980] sm:$0xff]
  %v361 = vld [vmem:[%s1 + $0x988] sm:$0xff]
  %v362 = vld [vmem:[%s1 + $0x990] sm:$0xff]
  %v363 = vld [vmem:[%s1 + $0x998] sm:$0xff]
  %v364 = vld [vmem:[%s1 + $0x9a0] sm:$0xff]
  %v365 = vld [vmem:[%s1 + $0x9a8] sm:$0xff]
  %v366 = vld [vmem:[%s1 + $0x9b0] sm:$0xff]
  %v367 = vld [vmem:[%s1 + $0x9b8] sm:$0xff]
  %v368 = vld [vmem:[%s1 + $0x9c0] sm:$0xff]
  %v369 = vld [vmem:[%s1 + $0x9c8] sm:$0xff]
  %v370 = vld [vmem:[%s1 + $0x9d0] sm:$0xff]
  %v371 = vld [vmem:[%s1 + $0x9d8] sm:$0xff]
  %v372 = vld [vmem:[%s1 + $0x9e0] sm:$0xff]
  %v373 = vld [vmem:[%s1 + $0x9e8] sm:$0xff]
  %v374 = vld [vmem:[%s1 + $0x9f0] sm:$0xff]
  %v375 = vld [vmem:[%s1 + $0x9f8] sm:$0xff]
  %v376 = vld [vmem:[%s1 + $0xa00] sm:$0xff]
  %v377 = vld [vmem:[%s1 + $0xa08] sm:$0xff]
  %v378 = vld [vmem:[%s1 + $0xa10] sm:$0xff]
  %v379 = vld [vmem:[%s1 + $0xa18] sm:$0xff]
  %v380 = vld [vmem:[%s1 + $0xa20] sm:$0xff]
  %v381 = vld [vmem:[%s1 + $0xa28] sm:$0xff]
  %v382 = vld [vmem:[%s1 + $0xa30] sm:$0xff]
  %v383 = vld [vmem:[%s1 + $0xa38] sm:$0xff]
  %v384 = vld [vmem:[%s1 + $0xa40] sm:$0xff]
  %v385 = vld [vmem:[%s1 + $0xa48] sm:$0xff]
  %v386 = vld [vmem:[%s1 + $0xa50] sm:$0xff]
  %v387 = vld [vmem:[%s1 + $0xa58] sm:$0xff]
  %v388 = vld [vmem:[%s1 + $0xa60] sm:$0xff]
  %v389 = vld [vmem:[%s1 + $0xa68] sm:$0xff]
  %v390 = vld [vmem:[%s1 + $0xa70] sm:$0xff]
  %v391 = vld [vmem:[%s1 + $0xa78] sm:$0xff]
  %v392 = vld [vmem:[%s1 + $0xa80] sm:$0xff]
  %v393 = vld [vmem:[%s1 + $0xa88] sm:$0xff]
  %v394 = vld [vmem:[%s1 + $0xa90] sm:$0xff]
  %v395 = vld [vmem:[%s1 + $0xa98] sm:$0xff]
  %v396 = vld [vmem:[%s1 + $0xaa0] sm:$0xff]
  %v397 = vld [vmem:[%s1 + $0xaa8] sm:$0xff]
  %v398 = vld [vmem:[%s1 + $0xab0] sm:$0xff]
  %v399 = vld [vmem:[%s1 + $0xab8] sm:$0xff]
  %v400 = vld [vmem:[%s1 + $0xac0] sm:$0xff]
  %v401 = vld [vmem:[%s1 + $0xac8] sm:$0xff]
  %v402 = vld [vmem:[%s1 + $0xad0] sm:$0xff]
  %v403 = vld [vmem:[%s1 + $0xad8] sm:$0xff]
  %v404 = vld [vmem:[%s1 + $0xae0] sm:$0xff]
  %v405 = vld [vmem:[%s1 + $0xae8] sm:$0xff]
  %v406 = vld [vmem:[%s1 + $0xaf0] sm:$0xff]
  %v407 = vld [vmem:[%s1 + $0xaf8] sm:$0xff]
  %v408 = vld [vmem:[%s1 + $0xb00] sm:$0xff]
  %v409 = vld [vmem:[%s1 + $0xb08] sm:$0xff]
  %v410 = vld [vmem:[%s1 + $0xb10] sm:$0xff]
  %v411 = vld [vmem:[%s1 + $0xb18] sm:$0xff]
  %v412 = vld [vmem:[%s1 + $0xb20] sm:$0xff]
  %v413 = vld [vmem:[%s1 + $0xb28] sm:$0xff]
  %v414 = vld [vmem:[%s1 + $0xb30] sm:$0xff]
  %v415 = vld [vmem:[%s1 + $0xb38] sm:$0xff]
  %v416 = vld [vmem:[%s1 + $0xb40] sm:$0xff]
  %v417 = vld [vmem:[%s1 + $0xb48] sm:$0xff]
  %v418 = vld [vmem:[%s1 + $0xb50] sm:$0xff]
  %v419 = vld [vmem:[%s1 + $0xb58] sm:$0xff]
  %v420 = vld [vmem:[%s1 + $0xb60] sm:$0xff]
  %v421 = vld [vmem:[%s1 + $0xb68] sm:$0xff]
  %v422 = vld [vmem:[%s1 + $0xb70] sm:$0xff]
  %v423 = vld [vmem:[%s1 + $0xb78] sm:$0xff]
  %v424 = vld [vmem:[%s1 + $0xb80] sm:$0xff]
  %v425 = vld [vmem:[%s1 + $0xb88] sm:$0xff]
  %v426 = vld [vmem:[%s1 + $0xb90] sm:$0xff]
  %v427 = vld [vmem:[%s1 + $0xb98] sm:$0xff]
  %v428 = vld [vmem:[%s1 + $0xba0] sm:$0xff]
  %v429 = vld [vmem:[%s1 + $0xba8] sm:$0xff]
  %v430 = vld [vmem:[%s1 + $0xbb0] sm:$0xff]
  %v431 = vld [vmem:[%s1 + $0xbb8] sm:$0xff]
  %v432 = vld [vmem:[%s1 + $0xbc0] sm:$0xff]
  %v433 = vld [vmem:[%s1 + $0xbc8] sm:$0xff]
  %v434 = vld [vmem:[%s1 + $0xbd0] sm:$0xff]
  %v435 = vld [vmem:[%s1 + $0xbd8] sm:$0xff]
  %v436 = vld [vmem:[%s1 + $0xbe0] sm:$0xff]
  %v437 = vld [vmem:[%s1 + $0xbe8] sm:$0xff]
  %v438 = vld [vmem:[%s1 + $0xbf0] sm:$0xff]
  %v439 = vld [vmem:[%s1 + $0xbf8] sm:$0xff]
  %v440 = vld [vmem:[%s1 + $0xc00] sm:$0xff]
  %v441 = vld [vmem:[%s1 + $0xc08] sm:$0xff]
  %v442 = vld [vmem:[%s1 + $0xc10] sm:$0xff]
  %v443 = vld [vmem:[%s1 + $0xc18] sm:$0xff]
  %v444 = vld [vmem:[%s1 + $0xc20] sm:$0xff]
  %v445 = vld [vmem:[%s1 + $0xc28] sm:$0xff]
  %v446 = vld [vmem:[%s1 + $0xc30] sm:$0xff]
  %v447 = vld [vmem:[%s1 + $0xc38] sm:$0xff]
  %v448 = vld [vmem:[%s1 + $0xc40] sm:$0xff]
  %v449 = vld [vmem:[%s1 + $0xc48] sm:$0xff]
  %v450 = vld [vmem:[%s1 + $0xc50] sm:$0xff]
  %v451 = vld [vmem:[%s1 + $0xc58] sm:$0xff]
  %v452 = vld [vmem:[%s1 + $0xc60] sm:$0xff]
  %v453 = vld [vmem:[%s1 + $0xc68] sm:$0xff]
  %v454 = vld [vmem:[%s1 + $0xc70] sm:$0xff]
  %v455 = vld [vmem:[%s1 + $0xc78] sm:$0xff]
  %v456 = vld [vmem:[%s1 + $0xc80] sm:$0xff]
  %v457 = vld [vmem:[%s1 + $0xc88] sm:$0xff]
  %v458 = vld [vmem:[%s1 + $0xc90] sm:$0xff]
  %v459 = vld [vmem:[%s1 + $0xc98] sm:$0xff]
  %v460 = vld [vmem:[%s1 + $0xca0] sm:$0xff]
  %v461 = vld [vmem:[%s1 + $0xca8] sm:$0xff]
  %v462 = vld [vmem:[%s1 + $0xcb0] sm:$0xff]
  %v463 = vld [vmem:[%s1 + $0xcb8] sm:$0xff]
  %v464 = vld [vmem:[%s1 + $0xcc0] sm:$0xff]
  %v465 = vld [vmem:[%s1 + $0xcc8] sm:$0xff]
  %v466 = vld [vmem:[%s1 + $0xcd0] sm:$0xff]
  %v467 = vld [vmem:[%s1 + $0xcd8] sm:$0xff]
  %v468 = vld [vmem:[%s1 + $0xce0] sm:$0xff]
  %v469 = vld [vmem:[%s1 + $0xce8] sm:$0xff]
  %v470 = vld [vmem:[%s1 + $0xcf0] sm:$0xff]
  %v471 = vld [vmem:[%s1 + $0xcf8] sm:$0xff]
  %v472 = vld [vmem:[%s1 + $0xd00] sm:$0xff]
  %v473 = vld [vmem:[%s1 + $0xd08] sm:$0xff]
  %v474 = vld [vmem:[%s1 + $0xd10] sm:$0xff]
  %v475 = vld [vmem:[%s1 + $0xd18] sm:$0xff]
  %v476 = vld [vmem:[%s1 + $0xd20] sm:$0xff]
  %v477 = vld [vmem:[%s1 + $0xd28] sm:$0xff]
  %v478 = vld [vmem:[%s1 + $0xd30] sm:$0xff]
  %v479 = vld [vmem:[%s1 + $0xd38] sm:$0xff]
  %v480 = vld [vmem:[%s1 + $0xd40] sm:$0xff]
  %v481 = vld [vmem:[%s1 + $0xd48] sm:$0xff]
  %v482 = vld [vmem:[%s1 + $0xd50] sm:$0xff]
  %v483 = vld [vmem:[%s1 + $0xd58] sm:$0xff]
  %v484 = vld [vmem:[%s1 + $0xd60] sm:$0xff]
  %v485 = vld [vmem:[%s1 + $0xd68] sm:$0xff]
  %v486 = vld [vmem:[%s1 + $0xd70] sm:$0xff]
  %v487 = vld [vmem:[%s1 + $0xd78] sm:$0xff]
  %v488 = vld [vmem:[%s1 + $0xd80] sm:$0xff]
  %v489 = vld [vmem:[%s1 + $0xd88] sm:$0xff]
  %v490 = vld [vmem:[%s1 + $0xd90] sm:$0xff]
  %v491 = vld [vmem:[%s1 + $0xd98] sm:$0xff]
  %v492 = vld [vmem:[%s1 + $0xda0] sm:$0xff]
  %v493 = vld [vmem:[%s1 + $0xda8] sm:$0xff]
  %v494 = vld [vmem:[%s1 + $0xdb0] sm:$0xff]
  %v495 = vld [vmem:[%s1 + $0xdb8] sm:$0xff]
  %v496 = vld [vmem:[%s1 + $0xdc0] sm:$0xff]
  %v497 = vld [vmem:[%s1 + $0xdc8] sm:$0xff]
  %v498 = vld [vmem:[%s1 + $0xdd0] sm:$0xff]
  %v499 = vld [vmem:[%s1 + $0xdd8] sm:$0xff]
  %v500 = vld [vmem:[%s1 + $0xde0] sm:$0xff]
  %v501 = vld [vmem:[%s1 + $0xde8] sm:$0xff]
  %v502 = vld [vmem:[%s1 + $0xdf0] sm:$0xff]
  %v503 = vld [vmem:[%s1 + $0xdf8] sm:$0xff]
  %v504 = vld [vmem:[%s1 + $0xe00] sm:$0xff]
  %v505 = vld [vmem:[%s1 + $0xe08] sm:$0xff]
  %v506 = vld [vmem:[%s1 + $0xe10] sm:$0xff]
  %v507 = vld [vmem:[%s1 + $0xe18] sm:$0xff]
  %v508 = vld [vmem:[%s1 + $0xe20] sm:$0xff]
  %v509 = vld [vmem:[%s1 + $0xe28] sm:$0xff]
  %v510 = vld [vmem:[%s1 + $0xe30] sm:$0xff]
  %v511 = vld [vmem:[%s1 + $0xe38] sm:$0xff]
  %v512 = vld [vmem:[%s1 + $0xe40] sm:$0xff]
  %v513 = vld [vmem:[%s1 + $0xe48] sm:$0xff]
  %v514 = vld [vmem:[%s1 + $0xe50] sm:$0xff]
  %v515 = vld [vmem:[%s1 + $0xe58] sm:$0xff]
  %v516 = vld [vmem:[%s1 + $0xe60] sm:$0xff]
  %v517 = vld [vmem:[%s1 + $0xe68] sm:$0xff]
  %v518 = vld [vmem:[%s1 + $0xe70] sm:$0xff]
  %v519 = vld [vmem:[%s1 + $0xe78] sm:$0xff]
  %v520 = vld [vmem:[%s1 + $0xe80] sm:$0xff]
  %v521 = vld [vmem:[%s1 + $0xe88] sm:$0xff]
  %v522 = vld [vmem:[%s1 + $0xe90] sm:$0xff]
  %v523 = vld [vmem:[%s1 + $0xe98] sm:$0xff]
  %v524 = vld [vmem:[%s1 + $0xea0] sm:$0xff]
  %v525 = vld [vmem:[%s1 + $0xea8] sm:$0xff]
  %v526 = vld [vmem:[%s1 + $0xeb0] sm:$0xff]
  %v527 = vld [vmem:[%s1 + $0xeb8] sm:$0xff]
  %v528 = vld [vmem:[%s1 + $0xec0] sm:$0xff]
  %v529 = vld [vmem:[%s1 + $0xec8] sm:$0xff]
  %v530 = vld [vmem:[%s1 + $0xed0] sm:$0xff]
  %v531 = vld [vmem:[%s1 + $0xed8] sm:$0xff]
  %v532 = vld [vmem:[%s1 + $0xee0] sm:$0xff]
  %v533 = vld [vmem:[%s1 + $0xee8] sm:$0xff]
  %v534 = vld [vmem:[%s1 + $0xef0] sm:$0xff]
  %v535 = vld [vmem:[%s1 + $0xef8] sm:$0xff]
  %v536 = vld [vmem:[%s1 + $0xf00] sm:$0xff]
  %v537 = vld [vmem:[%s1 + $0xf08] sm:$0xff]
  %v538 = vld [vmem:[%s1 + $0xf10] sm:$0xff]
  %v539 = vld [vmem:[%s1 + $0xf18] sm:$0xff]
  %v540 = vld [vmem:[%s1 + $0xf20] sm:$0xff]
  %v541 = vld [vmem:[%s1 + $0xf28] sm:$0xff]
  %v542 = vld [vmem:[%s1 + $0xf30] sm:$0xff]
  %v543 = vld [vmem:[%s1 + $0xf38] sm:$0xff]
  %v544 = vld [vmem:[%s1 + $0xf40] sm:$0xff]
  %v545 = vld [vmem:[%s1 + $0xf48] sm:$0xff]
  %v546 = vld [vmem:[%s1 + $0xf50] sm:$0xff]
  %v547 = vld [vmem:[%s1 + $0xf58] sm:$0xff]
  %v548 = vld [vmem:[%s1 + $0xf60] sm:$0xff]
  %v549 = vld [vmem:[%s1 + $0xf68] sm:$0xff]
  %v550 = vld [vmem:[%s1 + $0xf70] sm:$0xff]
  %v551 = vld [vmem:[%s1 + $0xf78] sm:$0xff]
  %v552 = vld [vmem:[%s1 + $0xf80] sm:$0xff]
  %v553 = vld [vmem:[%s1 + $0xf88] sm:$0xff]
  %v554 = vld [vmem:[%s1 + $0xf90] sm:$0xff]
  %v555 = vld [vmem:[%s1 + $0xf98] sm:$0xff]
  %v556 = vld [vmem:[%s1 + $0xfa0] sm:$0xff]
  %v557 = vld [vmem:[%s1 + $0xfa8] sm:$0xff]
  %v558 = vld [vmem:[%s1 + $0xfb0] sm:$0xff]
  %v559 = vld [vmem:[%s1 + $0xfb8] sm:$0xff]
  %v560 = vld [vmem:[%s1 + $0xfc0] sm:$0xff]
  %v561 = vld [vmem:[%s1 + $0xfc8] sm:$0xff]
  %v562 = vld [vmem:[%s1 + $0xfd0] sm:$0xff]
  %v563 = vld [vmem:[%s1 + $0xfd8] sm:$0xff]
  %v564 = vld [vmem:[%s1 + $0xfe0] sm:$0xff]
  %v565 = vld [vmem:[%s1 + $0xfe8] sm:$0xff]
  %v566 = vld [vmem:[%s1 + $0xff0] sm:$0xff]
  %v567 = vld [vmem:[%s1 + $0xff8] sm:$0xff]
  %v568 = vld [vmem:[%s1 + $0x1000] sm:$0xff]
  %v569 = vld [vmem:[%s1 + $0x1008] sm:$0xff]
  %v570 = vld [vmem:[%s1 + $0x1010] sm:$0xff]
  %v571 = vld [vmem:[%s1 + $0x1018] sm:$0xff]
  %v572 = vld [vmem:[%s1 + $0x1020] sm:$0xff]
  %v573 = vld [vmem:[%s1 + $0x1028] sm:$0xff]
  %v574 = vld [vmem:[%s1 + $0x1030] sm:$0xff]
  %v575 = vld [vmem:[%s1 + $0x1038] sm:$0xff]
  %v576 = vld [vmem:[%s1 + $0x1040] sm:$0xff]
  %v577 = vld [vmem:[%s1 + $0x1048] sm:$0xff]
  %v578 = vld [vmem:[%s1 + $0x1050] sm:$0xff]
  %v579 = vld [vmem:[%s1 + $0x1058] sm:$0xff]
  %v580 = vld [vmem:[%s1 + $0x1060] sm:$0xff]
  %v581 = vld [vmem:[%s1 + $0x1068] sm:$0xff]
  %v582 = vld [vmem:[%s1 + $0x1070] sm:$0xff]
  %v583 = vld [vmem:[%s1 + $0x1078] sm:$0xff]
  %v584 = vld [vmem:[%s1 + $0x1080] sm:$0xff]
  %v585 = vld [vmem:[%s1 + $0x1088] sm:$0xff]
  %v586 = vld [vmem:[%s1 + $0x1090] sm:$0xff]
  %v587 = vld [vmem:[%s1 + $0x1098] sm:$0xff]
  %v588 = vld [vmem:[%s1 + $0x10a0] sm:$0xff]
  %v589 = vld [vmem:[%s1 + $0x10a8] sm:$0xff]
  %v590 = vld [vmem:[%s1 + $0x10b0] sm:$0xff]
  %v591 = vld [vmem:[%s1 + $0x10b8] sm:$0xff]
  %v592 = vld [vmem:[%s1 + $0x10c0] sm:$0xff]
  %v593 = vld [vmem:[%s1 + $0x10c8] sm:$0xff]
  %v594 = vld [vmem:[%s1 + $0x10d0] sm:$0xff]
  %v595 = vld [vmem:[%s1 + $0x10d8] sm:$0xff]
  %v596 = vld [vmem:[%s1 + $0x10e0] sm:$0xff]
  %v597 = vld [vmem:[%s1 + $0x10e8] sm:$0xff]
  %v598 = vld [vmem:[%s1 + $0x10f0] sm:$0xff]
  %v599 = vld [vmem:[%s1 + $0x10f8] sm:$0xff]
  %v600 = vld [vmem:[%s1 + $0x1100] sm:$0xff]
  %v601 = vld [vmem:[%s1 + $0x1108] sm:$0xff]
  %v602 = vld [vmem:[%s1 + $0x1110] sm:$0xff]
  %v603 = vld [vmem:[%s1 + $0x1118] sm:$0xff]
  %v604 = vld [vmem:[%s1 + $0x1120] sm:$0xff]
  %v605 = vld [vmem:[%s1 + $0x1128] sm:$0xff]
  %v606 = vld [vmem:[%s1 + $0x1130] sm:$0xff]
  %v607 = vld [vmem:[%s1 + $0x1138] sm:$0xff]
  %v608 = vld [vmem:[%s1 + $0x1140] sm:$0xff]
  %v609 = vld [vmem:[%s1 + $0x1148] sm:$0xff]
  %v610 = vld [vmem:[%s1 + $0x1150] sm:$0xff]
  %v611 = vld [vmem:[%s1 + $0x1158] sm:$0xff]
  %v612 = vld [vmem:[%s1 + $0x1160] sm:$0xff]
  %v613 = vld [vmem:[%s1 + $0x1168] sm:$0xff]
  %v614 = vld [vmem:[%s1 + $0x1170] sm:$0xff]
  %v615 = vld [vmem:[%s1 + $0x1178] sm:$0xff]
  %v616 = vld [vmem:[%s1 + $0x1180] sm:$0xff]
  %v617 = vld [vmem:[%s1 + $0x1188] sm:$0xff]
  %v618 = vld [vmem:[%s1 + $0x1190] sm:$0xff]
  %v619 = vld [vmem:[%s1 + $0x1198] sm:$0xff]
  %v620 = vld [vmem:[%s1 + $0x11a0] sm:$0xff]
  %v621 = vld [vmem:[%s1 + $0x11a8] sm:$0xff]
  %v622 = vld [vmem:[%s1 + $0x11b0] sm:$0xff]
  %v623 = vld [vmem:[%s1 + $0x11b8] sm:$0xff]
  %v624 = vld [vmem:[%s1 + $0x11c0] sm:$0xff]
  %v625 = vld [vmem:[%s1 + $0x11c8] sm:$0xff]
  %v626 = vld [vmem:[%s1 + $0x11d0] sm:$0xff]
  %v627 = vld [vmem:[%s1 + $0x11d8] sm:$0xff]
  %v628 = vld [vmem:[%s1 + $0x11e0] sm:$0xff]
  %v629 = vld [vmem:[%s1 + $0x11e8] sm:$0xff]
  %v630 = vld [vmem:[%s1 + $0x11f0] sm:$0xff]
  %v631 = vld [vmem:[%s1 + $0x11f8] sm:$0xff]
  %v632 = vld [vmem:[%s2] sm:$0xf]
  %v634 = vlaneseq
  %v635 = vshrl.u32 %v634, 7
  %v636 = vsub.s32 0, %v635
  %v637 = vrot.slane %v632, %v636
  %v638 = vlaneseq
  %v639 = vshrl.u32 %v638, 7
  %v640 = vsub.s32 1, %v639
  %v641 = vrot.slane %v632, %v640
  %v642 = vlaneseq
  %v643 = vshrl.u32 %v642, 7
  %v644 = vsub.s32 2, %v643
  %v645 = vrot.slane %v632, %v644
  %v646 = vlaneseq
  %v647 = vshrl.u32 %v646, 7
  %v648 = vsub.s32 3, %v647
  %v649 = vrot.slane %v632, %v648
  %654 = vmatprep.subr.mxu0 %v57
  %655 = vmatpush1.msra.mxu0 %v56
  %656 = vmatprep.subr.mxu0 %v61
  %657 = vmatpush1.msra.mxu0 %v60
  %658 = vmatprep.subr.mxu0 %v65
  %659 = vmatpush1.msra.mxu0 %v64
  %660 = vmatprep.subr.mxu0 %v69
  %661 = vmatpush1.msra.mxu0 %v68
  %662 = vmatprep.subr.mxu0 %v73
  %663 = vmatpush1.msra.mxu0 %v72
  %664 = vmatprep.subr.mxu0 %v77
  %665 = vmatpush1.msra.mxu0 %v76
  %666 = vmatprep.subr.mxu0 %v81
  %667 = vmatpush1.msra.mxu0 %v80
  %668 = vmatprep.subr.mxu0 %v85
  %669 = vmatpush1.msra.mxu0 %v84
  %670 = vmatprep.subr.mxu0 %v89
  %671 = vmatpush1.msra.mxu0 %v88
  %672 = vmatprep.subr.mxu0 %v93
  %673 = vmatpush1.msra.mxu0 %v92
  %674 = vmatprep.subr.mxu0 %v97
  %675 = vmatpush1.msra.mxu0 %v96
  %676 = vmatprep.subr.mxu0 %v101
  %677 = vmatpush1.msra.mxu0 %v100
  %678 = vmatprep.subr.mxu0 %v105
  %679 = vmatpush1.msra.mxu0 %v104
  %680 = vmatprep.subr.mxu0 %v109
  %681 = vmatpush1.msra.mxu0 %v108
  %682 = vmatprep.subr.mxu0 %v113
  %683 = vmatpush1.msra.mxu0 %v112
  %684 = vmatprep.subr.mxu0 %v117
  %685 = vmatpush1.msra.mxu0 %v116
  %686 = vmatprep.subr.mxu0 %v121
  %687 = vmatpush1.msra.mxu0 %v120
  %688 = vmatprep.subr.mxu0 %v125
  %689 = vmatpush1.msra.mxu0 %v124
  %690 = vmatprep.subr.mxu0 %v129
  %691 = vmatpush1.msra.mxu0 %v128
  %692 = vmatprep.subr.mxu0 %v133
  %693 = vmatpush1.msra.mxu0 %v132
  %694 = vmatprep.subr.mxu0 %v137
  %695 = vmatpush1.msra.mxu0 %v136
  %696 = vmatprep.subr.mxu0 %v141
  %697 = vmatpush1.msra.mxu0 %v140
  %698 = vmatprep.subr.mxu0 %v145
  %699 = vmatpush1.msra.mxu0 %v144
  %700 = vmatprep.subr.mxu0 %v149
  %701 = vmatpush1.msra.mxu0 %v148
  %702 = vmatprep.subr.mxu0 %v153
  %703 = vmatpush1.msra.mxu0 %v152
  %704 = vmatprep.subr.mxu0 %v157
  %705 = vmatpush1.msra.mxu0 %v156
  %706 = vmatprep.subr.mxu0 %v161
  %707 = vmatpush1.msra.mxu0 %v160
  %708 = vmatprep.subr.mxu0 %v165
  %709 = vmatpush1.msra.mxu0 %v164
  %710 = vmatprep.subr.mxu0 %v169
  %711 = vmatpush1.msra.mxu0 %v168
  %712 = vmatprep.subr.mxu0 %v173
  %713 = vmatpush1.msra.mxu0 %v172
  %714 = vmatprep.subr.mxu0 %v177
  %715 = vmatpush1.msra.mxu0 %v176
  %716 = vmatprep.subr.mxu0 %v181
  %717 = vmatpush1.msra.mxu0 %v180
  %718 = vmatprep.mubr.f32.mxu0 %v21
  %719 = vmatmul.mubr.f32.gmra.mrb[0].mxu0 %v20
  %v720 = vpop.f32.mrb[0].mxu0
  %v721 = vadd.f32 %v637, %v720
  %v722 = vpop.f32.mrb[0].mxu0
  %v723 = vadd.f32 %v641, %v722
  %724 = vmatprep.mubr.f32.mxu0 %v30
  %725 = vmatmul.mubr.f32.gmra.mrb[0].mxu0 %v29
  %v726 = vpop.f32.mrb[0].mxu0
  %v727 = vadd.f32 %v637, %v726
  %v728 = vpop.f32.mrb[0].mxu0
  %v729 = vadd.f32 %v641, %v728
  %730 = vmatprep.mubr.f32.mxu0 %v39
  %731 = vmatmul.mubr.f32.gmra.mrb[0].mxu0 %v38
  %v732 = vpop.f32.mrb[0].mxu0
  %v733 = vadd.f32 %v637, %v732
  %v734 = vpop.f32.mrb[0].mxu0
  %v735 = vadd.f32 %v641, %v734
  %736 = vmatprep.mubr.f32.mxu0 %v48
  %737 = vmatmul.mubr.f32.gmra.mrb[0].mxu0 %v47
  %v738 = vpop.f32.mrb[0].mxu0
  %v739 = vadd.f32 %v637, %v738
  %v740 = vpop.f32.mrb[0].mxu0
  %v741 = vadd.f32 %v641, %v740
  %742 = vdwg.mxu0
  %743 = vmatprep.subr.mxu0 %v185
  %744 = vmatpush1.msra.mxu0 %v184
  %745 = vmatprep.subr.mxu0 %v189
  %746 = vmatpush1.msra.mxu0 %v188
  %747 = vmatprep.subr.mxu0 %v193
  %748 = vmatpush1.msra.mxu0 %v192
  %749 = vmatprep.subr.mxu0 %v197
  %750 = vmatpush1.msra.mxu0 %v196
  %751 = vmatprep.subr.mxu0 %v201
  %752 = vmatpush1.msra.mxu0 %v200
  %753 = vmatprep.subr.mxu0 %v205
  %754 = vmatpush1.msra.mxu0 %v204
  %755 = vmatprep.subr.mxu0 %v209
  %756 = vmatpush1.msra.mxu0 %v208
  %757 = vmatprep.subr.mxu0 %v213
  %758 = vmatpush1.msra.mxu0 %v212
  %759 = vmatprep.subr.mxu0 %v217
  %760 = vmatpush1.msra.mxu0 %v216
  %761 = vmatprep.subr.mxu0 %v221
  %762 = vmatpush1.msra.mxu0 %v220
  %763 = vmatprep.subr.mxu0 %v225
  %764 = vmatpush1.msra.mxu0 %v224
  %765 = vmatprep.subr.mxu0 %v229
  %766 = vmatpush1.msra.mxu0 %v228
  %767 = vmatprep.subr.mxu0 %v233
  %768 = vmatpush1.msra.mxu0 %v232
  %769 = vmatprep.subr.mxu0 %v237
  %770 = vmatpush1.msra.mxu0 %v236
  %771 = vmatprep.subr.mxu0 %v241
  %772 = vmatpush1.msra.mxu0 %v240
  %773 = vmatprep.subr.mxu0 %v245
  %774 = vmatpush1.msra.mxu0 %v244
  %775 = vmatprep.subr.mxu0 %v249
  %776 = vmatpush1.msra.mxu0 %v248
  %777 = vmatprep.subr.mxu0 %v253
  %778 = vmatpush1.msra.mxu0 %v252
  %779 = vmatprep.subr.mxu0 %v257
  %780 = vmatpush1.msra.mxu0 %v256
  %781 = vmatprep.subr.mxu0 %v261
  %782 = vmatpush1.msra.mxu0 %v260
  %783 = vmatprep.subr.mxu0 %v265
  %784 = vmatpush1.msra.mxu0 %v264
  %785 = vmatprep.subr.mxu0 %v269
  %786 = vmatpush1.msra.mxu0 %v268
  %787 = vmatprep.subr.mxu0 %v273
  %788 = vmatpush1.msra.mxu0 %v272
  %789 = vmatprep.subr.mxu0 %v277
  %790 = vmatpush1.msra.mxu0 %v276
  %791 = vmatprep.subr.mxu0 %v281
  %792 = vmatpush1.msra.mxu0 %v280
  %793 = vmatprep.subr.mxu0 %v285
  %794 = vmatpush1.msra.mxu0 %v284
  %795 = vmatprep.subr.mxu0 %v289
  %796 = vmatpush1.msra.mxu0 %v288
  %797 = vmatprep.subr.mxu0 %v293
  %798 = vmatpush1.msra.mxu0 %v292
  %799 = vmatprep.subr.mxu0 %v297
  %800 = vmatpush1.msra.mxu0 %v296
  %801 = vmatprep.subr.mxu0 %v301
  %802 = vmatpush1.msra.mxu0 %v300
  %803 = vmatprep.subr.mxu0 %v305
  %804 = vmatpush1.msra.mxu0 %v304
  %805 = vmatprep.subr.mxu0 %v309
  %806 = vmatpush1.msra.mxu0 %v308
  %807 = vmatprep.mubr.f32.mxu0 %v23
  %808 = vmatmul.mubr.f32.gmra.mrb[0].mxu0 %v22
  %v809 = vpop.f32.mrb[0].mxu0
  %v810 = vadd.f32 %v721, %v809
  %v811 = vpop.f32.mrb[0].mxu0
  %v812 = vadd.f32 %v723, %v811
  %813 = vmatprep.mubr.f32.mxu0 %v32
  %814 = vmatmul.mubr.f32.gmra.mrb[0].mxu0 %v31
  %v815 = vpop.f32.mrb[0].mxu0
  %v816 = vadd.f32 %v727, %v815
  %v817 = vpop.f32.mrb[0].mxu0
  %v818 = vadd.f32 %v729, %v817
  %819 = vmatprep.mubr.f32.mxu0 %v41
  %820 = vmatmul.mubr.f32.gmra.mrb[0].mxu0 %v40
  %v821 = vpop.f32.mrb[0].mxu0
  %v822 = vadd.f32 %v733, %v821
  %v823 = vpop.f32.mrb[0].mxu0
  %v824 = vadd.f32 %v735, %v823
  %825 = vmatprep.mubr.f32.mxu0 %v50
  %826 = vmatmul.mubr.f32.gmra.mrb[0].mxu0 %v49
  %v827 = vpop.f32.mrb[0].mxu0
  %v828 = vadd.f32 %v739, %v827
  %v829 = vpop.f32.mrb[0].mxu0
  %v830 = vadd.f32 %v741, %v829
  %831 = vdwg.mxu0
  %832 = vmatprep.subr.mxu0 %v313
  %833 = vmatpush1.msra.mxu0 %v312
  %834 = vmatprep.subr.mxu0 %v317
  %835 = vmatpush1.msra.mxu0 %v316
  %836 = vmatprep.subr.mxu0 %v321
  %837 = vmatpush1.msra.mxu0 %v320
  %838 = vmatprep.subr.mxu0 %v325
  %839 = vmatpush1.msra.mxu0 %v324
  %840 = vmatprep.subr.mxu0 %v329
  %841 = vmatpush1.msra.mxu0 %v328
  %842 = vmatprep.subr.mxu0 %v333
  %843 = vmatpush1.msra.mxu0 %v332
  %844 = vmatprep.subr.mxu0 %v337
  %845 = vmatpush1.msra.mxu0 %v336
  %846 = vmatprep.subr.mxu0 %v341
  %847 = vmatpush1.msra.mxu0 %v340
  %848 = vmatprep.subr.mxu0 %v345
  %849 = vmatpush1.msra.mxu0 %v344
  %850 = vmatprep.subr.mxu0 %v349
  %851 = vmatpush1.msra.mxu0 %v348
  %852 = vmatprep.subr.mxu0 %v353
  %853 = vmatpush1.msra.mxu0 %v352
  %854 = vmatprep.subr.mxu0 %v357
  %855 = vmatpush1.msra.mxu0 %v356
  %856 = vmatprep.subr.mxu0 %v361
  %857 = vmatpush1.msra.mxu0 %v360
  %858 = vmatprep.subr.mxu0 %v365
  %859 = vmatpush1.msra.mxu0 %v364
  %860 = vmatprep.subr.mxu0 %v369
  %861 = vmatpush1.msra.mxu0 %v368
  %862 = vmatprep.subr.mxu0 %v373
  %863 = vmatpush1.msra.mxu0 %v372
  %864 = vmatprep.subr.mxu0 %v377
  %865 = vmatpush1.msra.mxu0 %v376
  %866 = vmatprep.subr.mxu0 %v381
  %867 = vmatpush1.msra.mxu0 %v380
  %868 = vmatprep.subr.mxu0 %v385
  %869 = vmatpush1.msra.mxu0 %v384
  %870 = vmatprep.subr.mxu0 %v389
  %871 = vmatpush1.msra.mxu0 %v388
  %872 = vmatprep.subr.mxu0 %v393
  %873 = vmatpush1.msra.mxu0 %v392
  %874 = vmatprep.subr.mxu0 %v397
  %875 = vmatpush1.msra.mxu0 %v396
  %876 = vmatprep.subr.mxu0 %v401
  %877 = vmatpush1.msra.mxu0 %v400
  %878 = vmatprep.subr.mxu0 %v405
  %879 = vmatpush1.msra.mxu0 %v404
  %880 = vmatprep.subr.mxu0 %v409
  %881 = vmatpush1.msra.mxu0 %v408
  %882 = vmatprep.subr.mxu0 %v413
  %883 = vmatpush1.msra.mxu0 %v412
  %884 = vmatprep.subr.mxu0 %v417
  %885 = vmatpush1.msra.mxu0 %v416
  %886 = vmatprep.subr.mxu0 %v421
  %887 = vmatpush1.msra.mxu0 %v420
  %888 = vmatprep.subr.mxu0 %v425
  %889 = vmatpush1.msra.mxu0 %v424
  %890 = vmatprep.subr.mxu0 %v429
  %891 = vmatpush1.msra.mxu0 %v428
  %892 = vmatprep.subr.mxu0 %v433
  %893 = vmatpush1.msra.mxu0 %v432
  %894 = vmatprep.subr.mxu0 %v437
  %895 = vmatpush1.msra.mxu0 %v436
  %896 = vmatprep.mubr.f32.mxu0 %v25
  %897 = vmatmul.mubr.f32.gmra.mrb[0].mxu0 %v24
  %v898 = vpop.f32.mrb[0].mxu0
  %v899 = vadd.f32 %v810, %v898
  %v900 = vpop.f32.mrb[0].mxu0
  %v901 = vadd.f32 %v812, %v900
  %902 = vmatprep.mubr.f32.mxu0 %v34
  %903 = vmatmul.mubr.f32.gmra.mrb[0].mxu0 %v33
  %v904 = vpop.f32.mrb[0].mxu0
  %v905 = vadd.f32 %v816, %v904
  %v906 = vpop.f32.mrb[0].mxu0
  %v907 = vadd.f32 %v818, %v906
  %908 = vmatprep.mubr.f32.mxu0 %v43
  %909 = vmatmul.mubr.f32.gmra.mrb[0].mxu0 %v42
  %v910 = vpop.f32.mrb[0].mxu0
  %v911 = vadd.f32 %v822, %v910
  %v912 = vpop.f32.mrb[0].mxu0
  %v913 = vadd.f32 %v824, %v912
  %914 = vmatprep.mubr.f32.mxu0 %v52
  %915 = vmatmul.mubr.f32.gmra.mrb[0].mxu0 %v51
  %v916 = vpop.f32.mrb[0].mxu0
  %v917 = vadd.f32 %v828, %v916
  %v918 = vpop.f32.mrb[0].mxu0
  %v919 = vadd.f32 %v830, %v918
  %920 = vdwg.mxu0
  %921 = vmatprep.subr.mxu0 %v441
  %922 = vmatpush1.msra.mxu0 %v440
  %923 = vmatprep.subr.mxu0 %v445
  %924 = vmatpush1.msra.mxu0 %v444
  %925 = vmatprep.subr.mxu0 %v449
  %926 = vmatpush1.msra.mxu0 %v448
  %927 = vmatprep.subr.mxu0 %v453
  %928 = vmatpush1.msra.mxu0 %v452
  %929 = vmatprep.subr.mxu0 %v457
  %930 = vmatpush1.msra.mxu0 %v456
  %931 = vmatprep.subr.mxu0 %v461
  %932 = vmatpush1.msra.mxu0 %v460
  %933 = vmatprep.subr.mxu0 %v465
  %934 = vmatpush1.msra.mxu0 %v464
  %935 = vmatprep.subr.mxu0 %v469
  %936 = vmatpush1.msra.mxu0 %v468
  %937 = vmatprep.subr.mxu0 %v473
  %938 = vmatpush1.msra.mxu0 %v472
  %939 = vmatprep.subr.mxu0 %v477
  %940 = vmatpush1.msra.mxu0 %v476
  %941 = vmatprep.subr.mxu0 %v481
  %942 = vmatpush1.msra.mxu0 %v480
  %943 = vmatprep.subr.mxu0 %v485
  %944 = vmatpush1.msra.mxu0 %v484
  %945 = vmatprep.subr.mxu0 %v489
  %946 = vmatpush1.msra.mxu0 %v488
  %947 = vmatprep.subr.mxu0 %v493
  %948 = vmatpush1.msra.mxu0 %v492
  %949 = vmatprep.subr.mxu0 %v497
  %950 = vmatpush1.msra.mxu0 %v496
  %951 = vmatprep.subr.mxu0 %v501
  %952 = vmatpush1.msra.mxu0 %v500
  %953 = vmatprep.subr.mxu0 %v505
  %954 = vmatpush1.msra.mxu0 %v504
  %955 = vmatprep.subr.mxu0 %v509
  %956 = vmatpush1.msra.mxu0 %v508
  %957 = vmatprep.subr.mxu0 %v513
  %958 = vmatpush1.msra.mxu0 %v512
  %959 = vmatprep.subr.mxu0 %v517
  %960 = vmatpush1.msra.mxu0 %v516
  %961 = vmatprep.subr.mxu0 %v521
  %962 = vmatpush1.msra.mxu0 %v520
  %963 = vmatprep.subr.mxu0 %v525
  %964 = vmatpush1.msra.mxu0 %v524
  %965 = vmatprep.subr.mxu0 %v529
  %966 = vmatpush1.msra.mxu0 %v528
  %967 = vmatprep.subr.mxu0 %v533
  %968 = vmatpush1.msra.mxu0 %v532
  %969 = vmatprep.subr.mxu0 %v537
  %970 = vmatpush1.msra.mxu0 %v536
  %971 = vmatprep.subr.mxu0 %v541
  %972 = vmatpush1.msra.mxu0 %v540
  %973 = vmatprep.subr.mxu0 %v545
  %974 = vmatpush1.msra.mxu0 %v544
  %975 = vmatprep.subr.mxu0 %v549
  %976 = vmatpush1.msra.mxu0 %v548
  %977 = vmatprep.subr.mxu0 %v553
  %978 = vmatpush1.msra.mxu0 %v552
  %979 = vmatprep.subr.mxu0 %v557
  %980 = vmatpush1.msra.mxu0 %v556
  %981 = vmatprep.subr.mxu0 %v561
  %982 = vmatpush1.msra.mxu0 %v560
  %983 = vmatprep.subr.mxu0 %v565
  %984 = vmatpush1.msra.mxu0 %v564
  %985 = vmatprep.mubr.f32.mxu0 %v27
  %986 = vmatmul.mubr.f32.gmra.mrb[0].mxu0 %v26
  %v987 = vpop.f32.mrb[0].mxu0
  %v988 = vadd.f32 %v899, %v987
  %v989 = vpop.f32.mrb[0].mxu0
  %v990 = vadd.f32 %v901, %v989
  %991 = vmatprep.mubr.f32.mxu0 %v36
  %992 = vmatmul.mubr.f32.gmra.mrb[0].mxu0 %v35
  %v993 = vpop.f32.mrb[0].mxu0
  %v994 = vadd.f32 %v905, %v993
  %v995 = vpop.f32.mrb[0].mxu0
  %v996 = vadd.f32 %v907, %v995
  %997 = vmatprep.mubr.f32.mxu0 %v45
  %998 = vmatmul.mubr.f32.gmra.mrb[0].mxu0 %v44
  %v999 = vpop.f32.mrb[0].mxu0
  %v1000 = vadd.f32 %v911, %v999
  %v1001 = vpop.f32.mrb[0].mxu0
  %v1002 = vadd.f32 %v913, %v1001
  %1003 = vmatprep.mubr.f32.mxu0 %v54
  %1004 = vmatmul.mubr.f32.gmra.mrb[0].mxu0 %v53
  %v1005 = vpop.f32.mrb[0].mxu0
  %v1006 = vadd.f32 %v917, %v1005
  %v1007 = vpop.f32.mrb[0].mxu0
  %v1008 = vadd.f32 %v919, %v1007
  %1009 = vdwg.mxu0
  %1010 = vmatprep.subr.mxu0 %v569
  %1011 = vmatpush1.msra.mxu0 %v568
  %1012 = vmatprep.subr.mxu0 %v573
  %1013 = vmatpush1.msra.mxu0 %v572
  %1014 = vmatprep.subr.mxu0 %v577
  %1015 = vmatpush1.msra.mxu0 %v576
  %1016 = vmatprep.subr.mxu0 %v581
  %1017 = vmatpush1.msra.mxu0 %v580
  %1018 = vmatprep.subr.mxu0 %v585
  %1019 = vmatpush1.msra.mxu0 %v584
  %1020 = vmatprep.subr.mxu0 %v589
  %1021 = vmatpush1.msra.mxu0 %v588
  %1022 = vmatprep.subr.mxu0 %v593
  %1023 = vmatpush1.msra.mxu0 %v592
  %1024 = vmatprep.subr.mxu0 %v597
  %1025 = vmatpush1.msra.mxu0 %v596
  %1026 = vmatprep.subr.mxu0 %v601
  %1027 = vmatpush1.msra.mxu0 %v600
  %1028 = vmatprep.subr.mxu0 %v605
  %1029 = vmatpush1.msra.mxu0 %v604
  %1030 = vmatprep.subr.mxu0 %v609
  %1031 = vmatpush1.msra.mxu0 %v608
  %1032 = vmatprep.subr.mxu0 %v613
  %1033 = vmatpush1.msra.mxu0 %v612
  %1034 = vmatprep.subr.mxu0 %v617
  %1035 = vmatpush1.msra.mxu0 %v616
  %1036 = vmatprep.subr.mxu0 %v621
  %1037 = vmatpush1.msra.mxu0 %v620
  %1038 = vmatprep.subr.mxu0 %v625
  %1039 = vmatpush1.msra.mxu0 %v624
  %1040 = vmatprep.subr.mxu0 %v629
  %1041 = vmatpush1.msra.mxu0 %v628
  %1042 = vmatprep.subr.mxu0 0.0
  %1043 = vmatpush1.msra.mxu0 0.0
  %1044 = vmatprep.subr.mxu0 0.0
  %1045 = vmatpush1.msra.mxu0 0.0
  %1046 = vmatprep.subr.mxu0 0.0
  %1047 = vmatpush1.msra.mxu0 0.0
  %1048 = vmatprep.subr.mxu0 0.0
  %1049 = vmatpush1.msra.mxu0 0.0
  %1050 = vmatprep.subr.mxu0 0.0
  %1051 = vmatpush1.msra.mxu0 0.0
  %1052 = vmatprep.subr.mxu0 0.0
  %1053 = vmatpush1.msra.mxu0 0.0
  %1054 = vmatprep.subr.mxu0 0.0
  %1055 = vmatpush1.msra.mxu0 0.0
  %1056 = vmatprep.subr.mxu0 0.0
  %1057 = vmatpush1.msra.mxu0 0.0
  %1058 = vmatprep.subr.mxu0 0.0
  %1059 = vmatpush1.msra.mxu0 0.0
  %1060 = vmatprep.subr.mxu0 0.0
  %1061 = vmatpush1.msra.mxu0 0.0
  %1062 = vmatprep.subr.mxu0 0.0
  %1063 = vmatpush1.msra.mxu0 0.0
  %1064 = vmatprep.subr.mxu0 0.0
  %1065 = vmatpush1.msra.mxu0 0.0
  %1066 = vmatprep.subr.mxu0 0.0
  %1067 = vmatpush1.msra.mxu0 0.0
  %1068 = vmatprep.subr.mxu0 0.0
  %1069 = vmatpush1.msra.mxu0 0.0
  %1070 = vmatprep.subr.mxu0 0.0
  %1071 = vmatpush1.msra.mxu0 0.0
  %1072 = vmatprep.subr.mxu0 0.0
  %1073 = vmatpush1.msra.mxu0 0.0
  %1074 = vmatprep.mubr.f32.mxu0 0.0
  %1075 = vmatmul.mubr.f32.gmra.mrb[0].mxu0 %v28
  %v1076 = vpop.f32.mrb[0].mxu0
  %v1077 = vadd.f32 %v988, %v1076
  %v1078 = vpop.f32.mrb[0].mxu0
  %v1079 = vadd.f32 %v990, %v1078
  %1080 = vmatprep.mubr.f32.mxu0 0.0
  %1081 = vmatmul.mubr.f32.gmra.mrb[0].mxu0 %v37
  %v1082 = vpop.f32.mrb[0].mxu0
  %v1083 = vadd.f32 %v994, %v1082
  %v1084 = vpop.f32.mrb[0].mxu0
  %v1085 = vadd.f32 %v996, %v1084
  %1086 = vmatprep.mubr.f32.mxu0 0.0
  %1087 = vmatmul.mubr.f32.gmra.mrb[0].mxu0 %v46
  %v1088 = vpop.f32.mrb[0].mxu0
  %v1089 = vadd.f32 %v1000, %v1088
  %v1090 = vpop.f32.mrb[0].mxu0
  %v1091 = vadd.f32 %v1002, %v1090
  %1092 = vmatprep.mubr.f32.mxu0 0.0
  %1093 = vmatmul.mubr.f32.gmra.mrb[0].mxu0 %v55
  %v1094 = vpop.f32.mrb[0].mxu0
  %v1095 = vadd.f32 %v1006, %v1094
  %v1096 = vpop.f32.mrb[0].mxu0
  %v1097 = vadd.f32 %v1008, %v1096
  %1098 = vdwg.mxu0
  %1099 = vmatprep.subr.mxu0 %v59
  %1100 = vmatpush1.msra.mxu0 %v58
  %1101 = vmatprep.subr.mxu0 %v63
  %1102 = vmatpush1.msra.mxu0 %v62
  %1103 = vmatprep.subr.mxu0 %v67
  %1104 = vmatpush1.msra.mxu0 %v66
  %1105 = vmatprep.subr.mxu0 %v71
  %1106 = vmatpush1.msra.mxu0 %v70
  %1107 = vmatprep.subr.mxu0 %v75
  %1108 = vmatpush1.msra.mxu0 %v74
  %1109 = vmatprep.subr.mxu0 %v79
  %1110 = vmatpush1.msra.mxu0 %v78
  %1111 = vmatprep.subr.mxu0 %v83
  %1112 = vmatpush1.msra.mxu0 %v82
  %1113 = vmatprep.subr.mxu0 %v87
  %1114 = vmatpush1.msra.mxu0 %v86
  %1115 = vmatprep.subr.mxu0 %v91
  %1116 = vmatpush1.msra.mxu0 %v90
  %1117 = vmatprep.subr.mxu0 %v95
  %1118 = vmatpush1.msra.mxu0 %v94
  %1119 = vmatprep.subr.mxu0 %v99
  %1120 = vmatpush1.msra.mxu0 %v98
  %1121 = vmatprep.subr.mxu0 %v103
  %1122 = vmatpush1.msra.mxu0 %v102
  %1123 = vmatprep.subr.mxu0 %v107
  %1124 = vmatpush1.msra.mxu0 %v106
  %1125 = vmatprep.subr.mxu0 %v111
  %1126 = vmatpush1.msra.mxu0 %v110
  %1127 = vmatprep.subr.mxu0 %v115
  %1128 = vmatpush1.msra.mxu0 %v114
  %1129 = vmatprep.subr.mxu0 %v119
  %1130 = vmatpush1.msra.mxu0 %v118
  %1131 = vmatprep.subr.mxu0 %v123
  %1132 = vmatpush1.msra.mxu0 %v122
  %1133 = vmatprep.subr.mxu0 %v127
  %1134 = vmatpush1.msra.mxu0 %v126
  %1135 = vmatprep.subr.mxu0 %v131
  %1136 = vmatpush1.msra.mxu0 %v130
  %1137 = vmatprep.subr.mxu0 %v135
  %1138 = vmatpush1.msra.mxu0 %v134
  %1139 = vmatprep.subr.mxu0 %v139
  %1140 = vmatpush1.msra.mxu0 %v138
  %1141 = vmatprep.subr.mxu0 %v143
  %1142 = vmatpush1.msra.mxu0 %v142
  %1143 = vmatprep.subr.mxu0 %v147
  %1144 = vmatpush1.msra.mxu0 %v146
  %1145 = vmatprep.subr.mxu0 %v151
  %1146 = vmatpush1.msra.mxu0 %v150
  %1147 = vmatprep.subr.mxu0 %v155
  %1148 = vmatpush1.msra.mxu0 %v154
  %1149 = vmatprep.subr.mxu0 %v159
  %1150 = vmatpush1.msra.mxu0 %v158
  %1151 = vmatprep.subr.mxu0 %v163
  %1152 = vmatpush1.msra.mxu0 %v162
  %1153 = vmatprep.subr.mxu0 %v167
  %1154 = vmatpush1.msra.mxu0 %v166
  %1155 = vmatprep.subr.mxu0 %v171
  %1156 = vmatpush1.msra.mxu0 %v170
  %1157 = vmatprep.subr.mxu0 %v175
  %1158 = vmatpush1.msra.mxu0 %v174
  %1159 = vmatprep.subr.mxu0 %v179
  %1160 = vmatpush1.msra.mxu0 %v178
  %1161 = vmatprep.subr.mxu0 %v183
  %1162 = vmatpush1.msra.mxu0 %v182
  %1163 = vmatprep.mubr.f32.mxu0 %v21
  %1164 = vmatmul.mubr.f32.gmra.mrb[0].mxu0 %v20
  %v1165 = vpop.f32.mrb[0].mxu0
  %v1166 = vadd.f32 %v645, %v1165
  %v1167 = vpop.f32.mrb[0].mxu0
  %v1168 = vadd.f32 %v649, %v1167
  %1169 = vmatprep.mubr.f32.mxu0 %v30
  %1170 = vmatmul.mubr.f32.gmra.mrb[0].mxu0 %v29
  %v1171 = vpop.f32.mrb[0].mxu0
  %v1172 = vadd.f32 %v645, %v1171
  %v1173 = vpop.f32.mrb[0].mxu0
  %v1174 = vadd.f32 %v649, %v1173
  %1175 = vmatprep.mubr.f32.mxu0 %v39
  %1176 = vmatmul.mubr.f32.gmra.mrb[0].mxu0 %v38
  %v1177 = vpop.f32.mrb[0].mxu0
  %v1178 = vadd.f32 %v645, %v1177
  %v1179 = vpop.f32.mrb[0].mxu0
  %v1180 = vadd.f32 %v649, %v1179
  %1181 = vmatprep.mubr.f32.mxu0 %v48
  %1182 = vmatmul.mubr.f32.gmra.mrb[0].mxu0 %v47
  %v1183 = vpop.f32.mrb[0].mxu0
  %v1184 = vadd.f32 %v645, %v1183
  %v1185 = vpop.f32.mrb[0].mxu0
  %v1186 = vadd.f32 %v649, %v1185
  %1187 = vdwg.mxu0
  %1188 = vmatprep.subr.mxu0 %v187
  %1189 = vmatpush1.msra.mxu0 %v186
  %1190 = vmatprep.subr.mxu0 %v191
  %1191 = vmatpush1.msra.mxu0 %v190
  %1192 = vmatprep.subr.mxu0 %v195
  %1193 = vmatpush1.msra.mxu0 %v194
  %1194 = vmatprep.subr.mxu0 %v199
  %1195 = vmatpush1.msra.mxu0 %v198
  %1196 = vmatprep.subr.mxu0 %v203
  %1197 = vmatpush1.msra.mxu0 %v202
  %1198 = vmatprep.subr.mxu0 %v207
  %1199 = vmatpush1.msra.mxu0 %v206
  %1200 = vmatprep.subr.mxu0 %v211
  %1201 = vmatpush1.msra.mxu0 %v210
  %1202 = vmatprep.subr.mxu0 %v215
  %1203 = vmatpush1.msra.mxu0 %v214
  %1204 = vmatprep.subr.mxu0 %v219
  %1205 = vmatpush1.msra.mxu0 %v218
  %1206 = vmatprep.subr.mxu0 %v223
  %1207 = vmatpush1.msra.mxu0 %v222
  %1208 = vmatprep.subr.mxu0 %v227
  %1209 = vmatpush1.msra.mxu0 %v226
  %1210 = vmatprep.subr.mxu0 %v231
  %1211 = vmatpush1.msra.mxu0 %v230
  %1212 = vmatprep.subr.mxu0 %v235
  %1213 = vmatpush1.msra.mxu0 %v234
  %1214 = vmatprep.subr.mxu0 %v239
  %1215 = vmatpush1.msra.mxu0 %v238
  %1216 = vmatprep.subr.mxu0 %v243
  %1217 = vmatpush1.msra.mxu0 %v242
  %1218 = vmatprep.subr.mxu0 %v247
  %1219 = vmatpush1.msra.mxu0 %v246
  %1220 = vmatprep.subr.mxu0 %v251
  %1221 = vmatpush1.msra.mxu0 %v250
  %1222 = vmatprep.subr.mxu0 %v255
  %1223 = vmatpush1.msra.mxu0 %v254
  %1224 = vmatprep.subr.mxu0 %v259
  %1225 = vmatpush1.msra.mxu0 %v258
  %1226 = vmatprep.subr.mxu0 %v263
  %1227 = vmatpush1.msra.mxu0 %v262
  %1228 = vmatprep.subr.mxu0 %v267
  %1229 = vmatpush1.msra.mxu0 %v266
  %1230 = vmatprep.subr.mxu0 %v271
  %1231 = vmatpush1.msra.mxu0 %v270
  %1232 = vmatprep.subr.mxu0 %v275
  %1233 = vmatpush1.msra.mxu0 %v274
  %1234 = vmatprep.subr.mxu0 %v279
  %1235 = vmatpush1.msra.mxu0 %v278
  %1236 = vmatprep.subr.mxu0 %v283
  %1237 = vmatpush1.msra.mxu0 %v282
  %1238 = vmatprep.subr.mxu0 %v287
  %1239 = vmatpush1.msra.mxu0 %v286
  %1240 = vmatprep.subr.mxu0 %v291
  %1241 = vmatpush1.msra.mxu0 %v290
  %1242 = vmatprep.subr.mxu0 %v295
  %1243 = vmatpush1.msra.mxu0 %v294
  %1244 = vmatprep.subr.mxu0 %v299
  %1245 = vmatpush1.msra.mxu0 %v298
  %1246 = vmatprep.subr.mxu0 %v303
  %1247 = vmatpush1.msra.mxu0 %v302
  %1248 = vmatprep.subr.mxu0 %v307
  %1249 = vmatpush1.msra.mxu0 %v306
  %1250 = vmatprep.subr.mxu0 %v311
  %1251 = vmatpush1.msra.mxu0 %v310
  %1252 = vmatprep.mubr.f32.mxu0 %v23
  %1253 = vmatmul.mubr.f32.gmra.mrb[0].mxu0 %v22
  %v1254 = vpop.f32.mrb[0].mxu0
  %v1255 = vadd.f32 %v1166, %v1254
  %v1256 = vpop.f32.mrb[0].mxu0
  %v1257 = vadd.f32 %v1168, %v1256
  %1258 = vmatprep.mubr.f32.mxu0 %v32
  %1259 = vmatmul.mubr.f32.gmra.mrb[0].mxu0 %v31
  %v1260 = vpop.f32.mrb[0].mxu0
  %v1261 = vadd.f32 %v1172, %v1260
  %v1262 = vpop.f32.mrb[0].mxu0
  %v1263 = vadd.f32 %v1174, %v1262
  %1264 = vmatprep.mubr.f32.mxu0 %v41
  %1265 = vmatmul.mubr.f32.gmra.mrb[0].mxu0 %v40
  %v1266 = vpop.f32.mrb[0].mxu0
  %v1267 = vadd.f32 %v1178, %v1266
  %v1268 = vpop.f32.mrb[0].mxu0
  %v1269 = vadd.f32 %v1180, %v1268
  %1270 = vmatprep.mubr.f32.mxu0 %v50
  %1271 = vmatmul.mubr.f32.gmra.mrb[0].mxu0 %v49
  %v1272 = vpop.f32.mrb[0].mxu0
  %v1273 = vadd.f32 %v1184, %v1272
  %v1274 = vpop.f32.mrb[0].mxu0
  %v1275 = vadd.f32 %v1186, %v1274
  %1276 = vdwg.mxu0
  %1277 = vmatprep.subr.mxu0 %v315
  %1278 = vmatpush1.msra.mxu0 %v314
  %1279 = vmatprep.subr.mxu0 %v319
  %1280 = vmatpush1.msra.mxu0 %v318
  %1281 = vmatprep.subr.mxu0 %v323
  %1282 = vmatpush1.msra.mxu0 %v322
  %1283 = vmatprep.subr.mxu0 %v327
  %1284 = vmatpush1.msra.mxu0 %v326
  %1285 = vmatprep.subr.mxu0 %v331
  %1286 = vmatpush1.msra.mxu0 %v330
  %1287 = vmatprep.subr.mxu0 %v335
  %1288 = vmatpush1.msra.mxu0 %v334
  %1289 = vmatprep.subr.mxu0 %v339
  %1290 = vmatpush1.msra.mxu0 %v338
  %1291 = vmatprep.subr.mxu0 %v343
  %1292 = vmatpush1.msra.mxu0 %v342
  %1293 = vmatprep.subr.mxu0 %v347
  %1294 = vmatpush1.msra.mxu0 %v346
  %1295 = vmatprep.subr.mxu0 %v351
  %1296 = vmatpush1.msra.mxu0 %v350
  %1297 = vmatprep.subr.mxu0 %v355
  %1298 = vmatpush1.msra.mxu0 %v354
  %1299 = vmatprep.subr.mxu0 %v359
  %1300 = vmatpush1.msra.mxu0 %v358
  %1301 = vmatprep.subr.mxu0 %v363
  %1302 = vmatpush1.msra.mxu0 %v362
  %1303 = vmatprep.subr.mxu0 %v367
  %1304 = vmatpush1.msra.mxu0 %v366
  %1305 = vmatprep.subr.mxu0 %v371
  %1306 = vmatpush1.msra.mxu0 %v370
  %1307 = vmatprep.subr.mxu0 %v375
  %1308 = vmatpush1.msra.mxu0 %v374
  %1309 = vmatprep.subr.mxu0 %v379
  %1310 = vmatpush1.msra.mxu0 %v378
  %1311 = vmatprep.subr.mxu0 %v383
  %1312 = vmatpush1.msra.mxu0 %v382
  %1313 = vmatprep.subr.mxu0 %v387
  %1314 = vmatpush1.msra.mxu0 %v386
  %1315 = vmatprep.subr.mxu0 %v391
  %1316 = vmatpush1.msra.mxu0 %v390
  %1317 = vmatprep.subr.mxu0 %v395
  %1318 = vmatpush1.msra.mxu0 %v394
  %1319 = vmatprep.subr.mxu0 %v399
  %1320 = vmatpush1.msra.mxu0 %v398
  %1321 = vmatprep.subr.mxu0 %v403
  %1322 = vmatpush1.msra.mxu0 %v402
  %1323 = vmatprep.subr.mxu0 %v407
  %1324 = vmatpush1.msra.mxu0 %v406
  %1325 = vmatprep.subr.mxu0 %v411
  %1326 = vmatpush1.msra.mxu0 %v410
  %1327 = vmatprep.subr.mxu0 %v415
  %1328 = vmatpush1.msra.mxu0 %v414
  %1329 = vmatprep.subr.mxu0 %v419
  %1330 = vmatpush1.msra.mxu0 %v418
  %1331 = vmatprep.subr.mxu0 %v423
  %1332 = vmatpush1.msra.mxu0 %v422
  %1333 = vmatprep.subr.mxu0 %v427
  %1334 = vmatpush1.msra.mxu0 %v426
  %1335 = vmatprep.subr.mxu0 %v431
  %1336 = vmatpush1.msra.mxu0 %v430
  %1337 = vmatprep.subr.mxu0 %v435
  %1338 = vmatpush1.msra.mxu0 %v434
  %1339 = vmatprep.subr.mxu0 %v439
  %1340 = vmatpush1.msra.mxu0 %v438
  %1341 = vmatprep.mubr.f32.mxu0 %v25
  %1342 = vmatmul.mubr.f32.gmra.mrb[0].mxu0 %v24
  %v1343 = vpop.f32.mrb[0].mxu0
  %v1344 = vadd.f32 %v1255, %v1343
  %v1345 = vpop.f32.mrb[0].mxu0
  %v1346 = vadd.f32 %v1257, %v1345
  %1347 = vmatprep.mubr.f32.mxu0 %v34
  %1348 = vmatmul.mubr.f32.gmra.mrb[0].mxu0 %v33
  %v1349 = vpop.f32.mrb[0].mxu0
  %v1350 = vadd.f32 %v1261, %v1349
  %v1351 = vpop.f32.mrb[0].mxu0
  %v1352 = vadd.f32 %v1263, %v1351
  %1353 = vmatprep.mubr.f32.mxu0 %v43
  %1354 = vmatmul.mubr.f32.gmra.mrb[0].mxu0 %v42
  %v1355 = vpop.f32.mrb[0].mxu0
  %v1356 = vadd.f32 %v1267, %v1355
  %v1357 = vpop.f32.mrb[0].mxu0
  %v1358 = vadd.f32 %v1269, %v1357
  %1359 = vmatprep.mubr.f32.mxu0 %v52
  %1360 = vmatmul.mubr.f32.gmra.mrb[0].mxu0 %v51
  %v1361 = vpop.f32.mrb[0].mxu0
  %v1362 = vadd.f32 %v1273, %v1361
  %v1363 = vpop.f32.mrb[0].mxu0
  %v1364 = vadd.f32 %v1275, %v1363
  %1365 = vdwg.mxu0
  %1366 = vmatprep.subr.mxu0 %v443
  %1367 = vmatpush1.msra.mxu0 %v442
  %1368 = vmatprep.subr.mxu0 %v447
  %1369 = vmatpush1.msra.mxu0 %v446
  %1370 = vmatprep.subr.mxu0 %v451
  %1371 = vmatpush1.msra.mxu0 %v450
  %1372 = vmatprep.subr.mxu0 %v455
  %1373 = vmatpush1.msra.mxu0 %v454
  %1374 = vmatprep.subr.mxu0 %v459
  %1375 = vmatpush1.msra.mxu0 %v458
  %1376 = vmatprep.subr.mxu0 %v463
  %1377 = vmatpush1.msra.mxu0 %v462
  %1378 = vmatprep.subr.mxu0 %v467
  %1379 = vmatpush1.msra.mxu0 %v466
  %1380 = vmatprep.subr.mxu0 %v471
  %1381 = vmatpush1.msra.mxu0 %v470
  %1382 = vmatprep.subr.mxu0 %v475
  %1383 = vmatpush1.msra.mxu0 %v474
  %1384 = vmatprep.subr.mxu0 %v479
  %1385 = vmatpush1.msra.mxu0 %v478
  %1386 = vmatprep.subr.mxu0 %v483
  %1387 = vmatpush1.msra.mxu0 %v482
  %1388 = vmatprep.subr.mxu0 %v487
  %1389 = vmatpush1.msra.mxu0 %v486
  %1390 = vmatprep.subr.mxu0 %v491
  %1391 = vmatpush1.msra.mxu0 %v490
  %1392 = vmatprep.subr.mxu0 %v495
  %1393 = vmatpush1.msra.mxu0 %v494
  %1394 = vmatprep.subr.mxu0 %v499
  %1395 = vmatpush1.msra.mxu0 %v498
  %1396 = vmatprep.subr.mxu0 %v503
  %1397 = vmatpush1.msra.mxu0 %v502
  %1398 = vmatprep.subr.mxu0 %v507
  %1399 = vmatpush1.msra.mxu0 %v506
  %1400 = vmatprep.subr.mxu0 %v511
  %1401 = vmatpush1.msra.mxu0 %v510
  %1402 = vmatprep.subr.mxu0 %v515
  %1403 = vmatpush1.msra.mxu0 %v514
  %1404 = vmatprep.subr.mxu0 %v519
  %1405 = vmatpush1.msra.mxu0 %v518
  %1406 = vmatprep.subr.mxu0 %v523
  %1407 = vmatpush1.msra.mxu0 %v522
  %1408 = vmatprep.subr.mxu0 %v527
  %1409 = vmatpush1.msra.mxu0 %v526
  %1410 = vmatprep.subr.mxu0 %v531
  %1411 = vmatpush1.msra.mxu0 %v530
  %1412 = vmatprep.subr.mxu0 %v535
  %1413 = vmatpush1.msra.mxu0 %v534
  %1414 = vmatprep.subr.mxu0 %v539
  %1415 = vmatpush1.msra.mxu0 %v538
  %1416 = vmatprep.subr.mxu0 %v543
  %1417 = vmatpush1.msra.mxu0 %v542
  %1418 = vmatprep.subr.mxu0 %v547
  %1419 = vmatpush1.msra.mxu0 %v546
  %1420 = vmatprep.subr.mxu0 %v551
  %1421 = vmatpush1.msra.mxu0 %v550
  %1422 = vmatprep.subr.mxu0 %v555
  %1423 = vmatpush1.msra.mxu0 %v554
  %1424 = vmatprep.subr.mxu0 %v559
  %1425 = vmatpush1.msra.mxu0 %v558
  %1426 = vmatprep.subr.mxu0 %v563
  %1427 = vmatpush1.msra.mxu0 %v562
  %1428 = vmatprep.subr.mxu0 %v567
  %1429 = vmatpush1.msra.mxu0 %v566
  %1430 = vmatprep.mubr.f32.mxu0 %v27
  %1431 = vmatmul.mubr.f32.gmra.mrb[0].mxu0 %v26
  %v1432 = vpop.f32.mrb[0].mxu0
  %v1433 = vadd.f32 %v1344, %v1432
  %v1434 = vpop.f32.mrb[0].mxu0
  %v1435 = vadd.f32 %v1346, %v1434
  %1436 = vmatprep.mubr.f32.mxu0 %v36
  %1437 = vmatmul.mubr.f32.gmra.mrb[0].mxu0 %v35
  %v1438 = vpop.f32.mrb[0].mxu0
  %v1439 = vadd.f32 %v1350, %v1438
  %v1440 = vpop.f32.mrb[0].mxu0
  %v1441 = vadd.f32 %v1352, %v1440
  %1442 = vmatprep.mubr.f32.mxu0 %v45
  %1443 = vmatmul.mubr.f32.gmra.mrb[0].mxu0 %v44
  %v1444 = vpop.f32.mrb[0].mxu0
  %v1445 = vadd.f32 %v1356, %v1444
  %v1446 = vpop.f32.mrb[0].mxu0
  %v1447 = vadd.f32 %v1358, %v1446
  %1448 = vmatprep.mubr.f32.mxu0 %v54
  %1449 = vmatmul.mubr.f32.gmra.mrb[0].mxu0 %v53
  %v1450 = vpop.f32.mrb[0].mxu0
  %v1451 = vadd.f32 %v1362, %v1450
  %v1452 = vpop.f32.mrb[0].mxu0
  %v1453 = vadd.f32 %v1364, %v1452
  %1454 = vdwg.mxu0
  %1455 = vmatprep.subr.mxu0 %v571
  %1456 = vmatpush1.msra.mxu0 %v570
  %1457 = vmatprep.subr.mxu0 %v575
  %1458 = vmatpush1.msra.mxu0 %v574
  %1459 = vmatprep.subr.mxu0 %v579
  %1460 = vmatpush1.msra.mxu0 %v578
  %1461 = vmatprep.subr.mxu0 %v583
  %1462 = vmatpush1.msra.mxu0 %v582
  %1463 = vmatprep.subr.mxu0 %v587
  %1464 = vmatpush1.msra.mxu0 %v586
  %1465 = vmatprep.subr.mxu0 %v591
  %1466 = vmatpush1.msra.mxu0 %v590
  %1467 = vmatprep.subr.mxu0 %v595
  %1468 = vmatpush1.msra.mxu0 %v594
  %1469 = vmatprep.subr.mxu0 %v599
  %1470 = vmatpush1.msra.mxu0 %v598
  %1471 = vmatprep.subr.mxu0 %v603
  %1472 = vmatpush1.msra.mxu0 %v602
  %1473 = vmatprep.subr.mxu0 %v607
  %1474 = vmatpush1.msra.mxu0 %v606
  %1475 = vmatprep.subr.mxu0 %v611
  %1476 = vmatpush1.msra.mxu0 %v610
  %1477 = vmatprep.subr.mxu0 %v615
  %1478 = vmatpush1.msra.mxu0 %v614
  %1479 = vmatprep.subr.mxu0 %v619
  %1480 = vmatpush1.msra.mxu0 %v618
  %1481 = vmatprep.subr.mxu0 %v623
  %1482 = vmatpush1.msra.mxu0 %v622
  %1483 = vmatprep.subr.mxu0 %v627
  %1484 = vmatpush1.msra.mxu0 %v626
  %1485 = vmatprep.subr.mxu0 %v631
  %1486 = vmatpush1.msra.mxu0 %v630
  %1487 = vmatprep.subr.mxu0 0.0
  %1488 = vmatpush1.msra.mxu0 0.0
  %1489 = vmatprep.subr.mxu0 0.0
  %1490 = vmatpush1.msra.mxu0 0.0
  %1491 = vmatprep.subr.mxu0 0.0
  %1492 = vmatpush1.msra.mxu0 0.0
  %1493 = vmatprep.subr.mxu0 0.0
  %1494 = vmatpush1.msra.mxu0 0.0
  %1495 = vmatprep.subr.mxu0 0.0
  %1496 = vmatpush1.msra.mxu0 0.0
  %1497 = vmatprep.subr.mxu0 0.0
  %1498 = vmatpush1.msra.mxu0 0.0
  %1499 = vmatprep.subr.mxu0 0.0
  %1500 = vmatpush1.msra.mxu0 0.0
  %1501 = vmatprep.subr.mxu0 0.0
  %1502 = vmatpush1.msra.mxu0 0.0
  %1503 = vmatprep.subr.mxu0 0.0
  %1504 = vmatpush1.msra.mxu0 0.0
  %1505 = vmatprep.subr.mxu0 0.0
  %1506 = vmatpush1.msra.mxu0 0.0
  %1507 = vmatprep.subr.mxu0 0.0
  %1508 = vmatpush1.msra.mxu0 0.0
  %1509 = vmatprep.subr.mxu0 0.0
  %1510 = vmatpush1.msra.mxu0 0.0
  %1511 = vmatprep.subr.mxu0 0.0
  %1512 = vmatpush1.msra.mxu0 0.0
  %1513 = vmatprep.subr.mxu0 0.0
  %1514 = vmatpush1.msra.mxu0 0.0
  %1515 = vmatprep.subr.mxu0 0.0
  %1516 = vmatpush1.msra.mxu0 0.0
  %1517 = vmatprep.subr.mxu0 0.0
  %1518 = vmatpush1.msra.mxu0 0.0
  %1519 = vmatprep.mubr.f32.mxu0 0.0
  %1520 = vmatmul.mubr.f32.gmra.mrb[0].mxu0 %v28
  %v1521 = vpop.f32.mrb[0].mxu0
  %v1522 = vadd.f32 %v1433, %v1521
  %v1523 = vpop.f32.mrb[0].mxu0
  %v1524 = vadd.f32 %v1435, %v1523
  %1525 = vmatprep.mubr.f32.mxu0 0.0
  %1526 = vmatmul.mubr.f32.gmra.mrb[0].mxu0 %v37
  %v1527 = vpop.f32.mrb[0].mxu0
  %v1528 = vadd.f32 %v1439, %v1527
  %v1529 = vpop.f32.mrb[0].mxu0
  %v1530 = vadd.f32 %v1441, %v1529
  %1531 = vmatprep.mubr.f32.mxu0 0.0
  %1532 = vmatmul.mubr.f32.gmra.mrb[0].mxu0 %v46
  %v1533 = vpop.f32.mrb[0].mxu0
  %v1534 = vadd.f32 %v1445, %v1533
  %v1535 = vpop.f32.mrb[0].mxu0
  %v1536 = vadd.f32 %v1447, %v1535
  %1537 = vmatprep.mubr.f32.mxu0 0.0
  %1538 = vmatmul.mubr.f32.gmra.mrb[0].mxu0 %v55
  %v1539 = vpop.f32.mrb[0].mxu0
  %v1540 = vadd.f32 %v1451, %v1539
  %v1541 = vpop.f32.mrb[0].mxu0
  %v1542 = vadd.f32 %v1453, %v1541
  %1543 = vdwg.mxu0
  %v1544 = vadd.f32 %v1077, %v1083
  %v1545 = vadd.f32 %v1544, %v1089
  %v1546 = vadd.f32 %v1545, %v1095
  %v1547 = vrot.slane %v1546, 4
  %v1548 = vadd.f32 %v1546, %v1547
  %v1549 = vrot.slane %v1548, 2
  %v1550 = vadd.f32 %v1548, %v1549
  %v1551 = vrot.slane %v1550, 1
  %v1552 = vadd.f32 %v1550, %v1551
  %v1553 = vadd.f32 %v1552, 0.0
  %v1554 = vmul.f32 %v1077, %v1077
  %v1555 = vmul.f32 %v1083, %v1083
  %v1556 = vmul.f32 %v1089, %v1089
  %v1557 = vmul.f32 %v1095, %v1095
  %v1558 = vadd.f32 %v1554, %v1555
  %v1559 = vadd.f32 %v1558, %v1556
  %v1560 = vadd.f32 %v1559, %v1557
  %v1561 = vrot.slane %v1560, 4
  %v1562 = vadd.f32 %v1560, %v1561
  %v1563 = vrot.slane %v1562, 2
  %v1564 = vadd.f32 %v1562, %v1563
  %v1565 = vrot.slane %v1564, 1
  %v1566 = vadd.f32 %v1564, %v1565
  %v1567 = vadd.f32 %v1566, 0.0
  %v1568 = vadd.f32 %v1079, %v1085
  %v1569 = vadd.f32 %v1568, %v1091
  %v1570 = vadd.f32 %v1569, %v1097
  %v1571 = vrot.slane %v1570, 4
  %v1572 = vadd.f32 %v1570, %v1571
  %v1573 = vrot.slane %v1572, 2
  %v1574 = vadd.f32 %v1572, %v1573
  %v1575 = vrot.slane %v1574, 1
  %v1576 = vadd.f32 %v1574, %v1575
  %v1577 = vadd.f32 %v1553, %v1576
  %v1578 = vmul.f32 %v1079, %v1079
  %v1579 = vmul.f32 %v1085, %v1085
  %v1580 = vmul.f32 %v1091, %v1091
  %v1581 = vmul.f32 %v1097, %v1097
  %v1582 = vadd.f32 %v1578, %v1579
  %v1583 = vadd.f32 %v1582, %v1580
  %v1584 = vadd.f32 %v1583, %v1581
  %v1585 = vrot.slane %v1584, 4
  %v1586 = vadd.f32 %v1584, %v1585
  %v1587 = vrot.slane %v1586, 2
  %v1588 = vadd.f32 %v1586, %v1587
  %v1589 = vrot.slane %v1588, 1
  %v1590 = vadd.f32 %v1588, %v1589
  %v1591 = vadd.f32 %v1567, %v1590
  %v1592 = vadd.f32 %v1522, %v1528
  %v1593 = vadd.f32 %v1592, %v1534
  %v1594 = vadd.f32 %v1593, %v1540
  %v1595 = vrot.slane %v1594, 4
  %v1596 = vadd.f32 %v1594, %v1595
  %v1597 = vrot.slane %v1596, 2
  %v1598 = vadd.f32 %v1596, %v1597
  %v1599 = vrot.slane %v1598, 1
  %v1600 = vadd.f32 %v1598, %v1599
  %v1601 = vadd.f32 %v1577, %v1600
  %v1602 = vmul.f32 %v1522, %v1522
  %v1603 = vmul.f32 %v1528, %v1528
  %v1604 = vmul.f32 %v1534, %v1534
  %v1605 = vmul.f32 %v1540, %v1540
  %v1606 = vadd.f32 %v1602, %v1603
  %v1607 = vadd.f32 %v1606, %v1604
  %v1608 = vadd.f32 %v1607, %v1605
  %v1609 = vrot.slane %v1608, 4
  %v1610 = vadd.f32 %v1608, %v1609
  %v1611 = vrot.slane %v1610, 2
  %v1612 = vadd.f32 %v1610, %v1611
  %v1613 = vrot.slane %v1612, 1
  %v1614 = vadd.f32 %v1612, %v1613
  %v1615 = vadd.f32 %v1591, %v1614
  %v1616 = vadd.f32 %v1524, %v1530
  %v1617 = vadd.f32 %v1616, %v1536
  %v1618 = vadd.f32 %v1617, %v1542
  %v1619 = vrot.slane %v1618, 4
  %v1620 = vadd.f32 %v1618, %v1619
  %v1621 = vrot.slane %v1620, 2
  %v1622 = vadd.f32 %v1620, %v1621
  %v1623 = vrot.slane %v1622, 1
  %v1624 = vadd.f32 %v1622, %v1623
  %v1625 = vadd.f32 %v1601, %v1624
  %v1626 = vmul.f32 %v1524, %v1524
  %v1627 = vmul.f32 %v1530, %v1530
  %v1628 = vmul.f32 %v1536, %v1536
  %v1629 = vmul.f32 %v1542, %v1542
  %v1630 = vadd.f32 %v1626, %v1627
  %v1631 = vadd.f32 %v1630, %v1628
  %v1632 = vadd.f32 %v1631, %v1629
  %v1633 = vrot.slane %v1632, 4
  %v1634 = vadd.f32 %v1632, %v1633
  %v1635 = vrot.slane %v1634, 2
  %v1636 = vadd.f32 %v1634, %v1635
  %v1637 = vrot.slane %v1636, 1
  %v1638 = vadd.f32 %v1636, %v1637
  %v1639 = vadd.f32 %v1615, %v1638
  %v1640 = vrcp.pop 128.0
  %v1641 = vmul.f32 %v1625, %v1640
  %v1642 = vmul.f32 %v1639, %v1640
  %v1643 = vmul.f32 %v1641, %v1641
  %v1644 = vsub.f32 %v1642, %v1643
  %v1645 = vadd.f32 %v1644, 1e-05
  %v1646 = vrsqrt.pop %v1645
  %v1647 = vld [vmem:[%s3] sm:$0x1]
  %v1648 = vmul.f32 %v1646, %v1647
  %v1649 = vld [vmem:[%s4] sm:$0x1]
  %v1650 = vmul.f32 %v1641, %v1648
  %v1651 = vsub.f32 %v1649, %v1650
  %v1652 = vlaneseq
  %v1653 = vshrl.u32 %v1652, 7
  %v1654 = vsub.s32 0, %v1653
  %v1655 = vrot.slane %v1648, %v1654
  %v1656 = vmul.f32 %v1077, %v1655
  %v1657 = vmul.f32 %v1083, %v1655
  %v1658 = vmul.f32 %v1089, %v1655
  %v1659 = vmul.f32 %v1095, %v1655
  %v1661 = vlaneseq
  %v1662 = vshrl.u32 %v1661, 7
  %v1663 = vsub.s32 0, %v1662
  %v1664 = vrot.slane %v1651, %v1663
  %v1666 = vadd.f32 %v1656, %v1664
  %v1667 = vadd.f32 %v1657, %v1664
  %v1668 = vadd.f32 %v1658, %v1664
  %v1669 = vadd.f32 %v1659, %v1664
  %v1670 = vmax.f32 %v1666, 0.0
  %v1671 = vmax.f32 %v1667, 0.0
  %v1672 = vmax.f32 %v1668, 0.0
  %v1673 = vmax.f32 %v1669, 0.0
  %1674 = vst [vmem:[%s5] sm:$0xff] %v1670
  %1675 = vst [vmem:[%s5 + $0x20] sm:$0xff] %v1671
  %1676 = vst [vmem:[%s5 + $0x40] sm:$0xff] %v1672
  %1677 = vst [vmem:[%s5 + $0x60] sm:$0xff] %v1673
  %v1678 = vmul.f32 %v1079, %v1655
  %v1679 = vmul.f32 %v1085, %v1655
  %v1680 = vmul.f32 %v1091, %v1655
  %v1681 = vmul.f32 %v1097, %v1655
  %v1682 = vadd.f32 %v1678, %v1664
  %v1683 = vadd.f32 %v1679, %v1664
  %v1684 = vadd.f32 %v1680, %v1664
  %v1685 = vadd.f32 %v1681, %v1664
  %v1686 = vmax.f32 %v1682, 0.0
  %v1687 = vmax.f32 %v1683, 0.0
  %v1688 = vmax.f32 %v1684, 0.0
  %v1689 = vmax.f32 %v1685, 0.0
  %1690 = vst [vmem:[%s5 + $0x8] sm:$0xff] %v1686
  %1691 = vst [vmem:[%s5 + $0x28] sm:$0xff] %v1687
  %1692 = vst [vmem:[%s5 + $0x48] sm:$0xff] %v1688
  %1693 = vst [vmem:[%s5 + $0x68] sm:$0xff] %v1689
  %v1694 = vmul.f32 %v1522, %v1655
  %v1695 = vmul.f32 %v1528, %v1655
  %v1696 = vmul.f32 %v1534, %v1655
  %v1697 = vmul.f32 %v1540, %v1655
  %v1698 = vadd.f32 %v1694, %v1664
  %v1699 = vadd.f32 %v1695, %v1664
  %v1700 = vadd.f32 %v1696, %v1664
  %v1701 = vadd.f32 %v1697, %v1664
  %v1702 = vmax.f32 %v1698, 0.0
  %v1703 = vmax.f32 %v1699, 0.0
  %v1704 = vmax.f32 %v1700, 0.0
  %v1705 = vmax.f32 %v1701, 0.0
  %1706 = vst [vmem:[%s5 + $0x10] sm:$0xff] %v1702
  %1707 = vst [vmem:[%s5 + $0x30] sm:$0xff] %v1703
  %1708 = vst [vmem:[%s5 + $0x50] sm:$0xff] %v1704
  %1709 = vst [vmem:[%s5 + $0x70] sm:$0xff] %v1705
  %v1710 = vmul.f32 %v1524, %v1655
  %v1711 = vmul.f32 %v1530, %v1655
  %v1712 = vmul.f32 %v1536, %v1655
  %v1713 = vmul.f32 %v1542, %v1655
  %v1714 = vadd.f32 %v1710, %v1664
  %v1715 = vadd.f32 %v1711, %v1664
  %v1716 = vadd.f32 %v1712, %v1664
  %v1717 = vadd.f32 %v1713, %v1664
  %v1718 = vmax.f32 %v1714, 0.0
  %v1719 = vmax.f32 %v1715, 0.0
  %v1720 = vmax.f32 %v1716, 0.0
  %v1721 = vmax.f32 %v1717, 0.0
  %1722 = vst [vmem:[%s5 + $0x18] sm:$0xff] %v1718
  %1723 = vst [vmem:[%s5 + $0x38] sm:$0xff] %v1719
  %1724 = vst [vmem:[%s5 + $0x58] sm:$0xff] %v1720
  %1725 = vst [vmem:[%s5 + $0x78] sm:$0xff] %v1721
  // Predicated region
  $region22: #{vqvae_forward.20} parent=0 // pred_check
    _
  $region23: #{vqvae_forward.20} parent=0 // pred_check_branch
    %1727 = sbr.rel (0) target = $region25
  $region24: #{vqvae_forward.20} parent=0 // pred_region
    _
  $region25: #{vqvae_forward.20} parent=0 // pred_fallthru
    _
  // Predicated region
  $region26: #{vqvae_forward.20} parent=0 // pred_check
    _
  $region27: #{vqvae_forward.20} parent=0 // pred_check_branch
    %1729 = sbr.rel (0) target = $region29
  $region28: #{vqvae_forward.20} parent=0 // pred_region
    _
  $region29: #{vqvae_forward.20} parent=0 // pred_fallthru
    _

// kernel: vqvae_forward.21
$region0: #{vqvae_forward.21}
  #allocation0 [shape = 'u32[]', space=smem, size = 0x4, offset = 0x4, fixed_abs, tag = 'smem constant byte address 0x4 - core index']
  #allocation1 [shape = 'u32[144,128]{1,0:T(1,128)}', space=vmem, size = 0x12000, scoped, tag = 'internal scratch']
  %s0 = inlined_call_operand.vmem [shape: f32[128,1152], index: 0, kind: input, shape index: {}]
  %s1 = inlined_call_operand.vmem [shape: f32[1152,512], index: 1, kind: input, shape index: {}]
  %s2 = inlined_call_operand.vmem [shape: f32[1,512], index: 2, kind: input, shape index: {}]
  %s3 = inlined_call_operand.vmem [shape: f32[128,512], index: 3, kind: output, shape index: {}]
  %s4 = sld [smem:[#allocation0]]
  $region22: #{vqvae_forward.21} parent=0
    _
  %s6 = ssub.s32 1, %s4
  %s7 = scalar_select 0, %s6, %s4
  // Predicated region
  $region2: #{vqvae_forward.21} parent=0 // pred_check
    _
  $region3: #{vqvae_forward.21} parent=0 // pred_check_branch
    %9 = sbr.rel (0) target = $region5
  $region4: #{vqvae_forward.21} parent=0 // pred_region
    _
  $region5: #{vqvae_forward.21} parent=0 // pred_fallthru
    _
  // Predicated region
  $region6: #{vqvae_forward.21} parent=0 // pred_check
    _
  $region7: #{vqvae_forward.21} parent=0 // pred_check_branch
    %11 = sbr.rel (0) target = $region9
  $region8: #{vqvae_forward.21} parent=0 // pred_region
    _
  $region9: #{vqvae_forward.21} parent=0 // pred_fallthru
    _
  // Predicated region
  $region10: #{vqvae_forward.21} parent=0 // pred_check
    _
  $region11: #{vqvae_forward.21} parent=0 // pred_check_branch
    %13 = sbr.rel (0) target = $region13
  $region12: #{vqvae_forward.21} parent=0 // pred_region
    _
  $region13: #{vqvae_forward.21} parent=0 // pred_fallthru
    _
  %v14 = vld [vmem:[%s0] sm:$0xff]
  %v15 = vld [vmem:[%s0 + $0x8] sm:$0xff]
  %v16 = vld [vmem:[%s0 + $0x10] sm:$0xff]
  %v17 = vld [vmem:[%s0 + $0x18] sm:$0xff]
  %v18 = vld [vmem:[%s0 + $0x20] sm:$0xff]
  %v19 = vld [vmem:[%s0 + $0x28] sm:$0xff]
  %v20 = vld [vmem:[%s0 + $0x30] sm:$0xff]
  %v21 = vld [vmem:[%s0 + $0x38] sm:$0xff]
  %v22 = vld [vmem:[%s0 + $0x40] sm:$0xff]
  %v23 = vld [vmem:[%s0 + $0x48] sm:$0xff]
  %v24 = vld [vmem:[%s0 + $0x50] sm:$0xff]
  %v25 = vld [vmem:[%s0 + $0x58] sm:$0xff]
  %v26 = vld [vmem:[%s0 + $0x60] sm:$0xff]
  %v27 = vld [vmem:[%s0 + $0x68] sm:$0xff]
  %v28 = vld [vmem:[%s0 + $0x70] sm:$0xff]
  %v29 = vld [vmem:[%s0 + $0x78] sm:$0xff]
  %v30 = vld [vmem:[%s0 + $0x80] sm:$0xff]
  %v31 = vld [vmem:[%s0 + $0x88] sm:$0xff]
  %v32 = vld [vmem:[%s0 + $0x90] sm:$0xff]
  %v33 = vld [vmem:[%s0 + $0x98] sm:$0xff]
  %v34 = vld [vmem:[%s0 + $0xa0] sm:$0xff]
  %v35 = vld [vmem:[%s0 + $0xa8] sm:$0xff]
  %v36 = vld [vmem:[%s0 + $0xb0] sm:$0xff]
  %v37 = vld [vmem:[%s0 + $0xb8] sm:$0xff]
  %v38 = vld [vmem:[%s0 + $0xc0] sm:$0xff]
  %v39 = vld [vmem:[%s0 + $0xc8] sm:$0xff]
  %v40 = vld [vmem:[%s0 + $0xd0] sm:$0xff]
  %v41 = vld [vmem:[%s0 + $0xd8] sm:$0xff]
  %v42 = vld [vmem:[%s0 + $0xe0] sm:$0xff]
  %v43 = vld [vmem:[%s0 + $0xe8] sm:$0xff]
  %v44 = vld [vmem:[%s0 + $0xf0] sm:$0xff]
  %v45 = vld [vmem:[%s0 + $0xf8] sm:$0xff]
  %v46 = vld [vmem:[%s0 + $0x100] sm:$0xff]
  %v47 = vld [vmem:[%s0 + $0x108] sm:$0xff]
  %v48 = vld [vmem:[%s0 + $0x110] sm:$0xff]
  %v49 = vld [vmem:[%s0 + $0x118] sm:$0xff]
  %v50 = vld [vmem:[%s0 + $0x120] sm:$0xff]
  %v51 = vld [vmem:[%s0 + $0x128] sm:$0xff]
  %v52 = vld [vmem:[%s0 + $0x130] sm:$0xff]
  %v53 = vld [vmem:[%s0 + $0x138] sm:$0xff]
  %v54 = vld [vmem:[%s0 + $0x140] sm:$0xff]
  %v55 = vld [vmem:[%s0 + $0x148] sm:$0xff]
  %v56 = vld [vmem:[%s0 + $0x150] sm:$0xff]
  %v57 = vld [vmem:[%s0 + $0x158] sm:$0xff]
  %v58 = vld [vmem:[%s0 + $0x160] sm:$0xff]
  %v59 = vld [vmem:[%s0 + $0x168] sm:$0xff]
  %v60 = vld [vmem:[%s0 + $0x170] sm:$0xff]
  %v61 = vld [vmem:[%s0 + $0x178] sm:$0xff]
  %v62 = vld [vmem:[%s0 + $0x180] sm:$0xff]
  %v63 = vld [vmem:[%s0 + $0x188] sm:$0xff]
  %v64 = vld [vmem:[%s0 + $0x190] sm:$0xff]
  %v65 = vld [vmem:[%s0 + $0x198] sm:$0xff]
  %v66 = vld [vmem:[%s0 + $0x1a0] sm:$0xff]
  %v67 = vld [vmem:[%s0 + $0x1a8] sm:$0xff]
  %v68 = vld [vmem:[%s0 + $0x1b0] sm:$0xff]
  %v69 = vld [vmem:[%s0 + $0x1b8] sm:$0xff]
  %v70 = vld [vmem:[%s0 + $0x1c0] sm:$0xff]
  %v71 = vld [vmem:[%s0 + $0x1c8] sm:$0xff]
  %v72 = vld [vmem:[%s0 + $0x1d0] sm:$0xff]
  %v73 = vld [vmem:[%s0 + $0x1d8] sm:$0xff]
  %v74 = vld [vmem:[%s0 + $0x1e0] sm:$0xff]
  %v75 = vld [vmem:[%s0 + $0x1e8] sm:$0xff]
  %v76 = vld [vmem:[%s0 + $0x1f0] sm:$0xff]
  %v77 = vld [vmem:[%s0 + $0x1f8] sm:$0xff]
  %v78 = vld [vmem:[%s0 + $0x200] sm:$0xff]
  %v79 = vld [vmem:[%s0 + $0x208] sm:$0xff]
  %v80 = vld [vmem:[%s0 + $0x210] sm:$0xff]
  %v81 = vld [vmem:[%s0 + $0x218] sm:$0xff]
  %v82 = vld [vmem:[%s0 + $0x220] sm:$0xff]
  %v83 = vld [vmem:[%s0 + $0x228] sm:$0xff]
  %v84 = vld [vmem:[%s0 + $0x230] sm:$0xff]
  %v85 = vld [vmem:[%s0 + $0x238] sm:$0xff]
  %v86 = vld [vmem:[%s0 + $0x240] sm:$0xff]
  %v87 = vld [vmem:[%s0 + $0x248] sm:$0xff]
  %v88 = vld [vmem:[%s0 + $0x250] sm:$0xff]
  %v89 = vld [vmem:[%s0 + $0x258] sm:$0xff]
  %v90 = vld [vmem:[%s0 + $0x260] sm:$0xff]
  %v91 = vld [vmem:[%s0 + $0x268] sm:$0xff]
  %v92 = vld [vmem:[%s0 + $0x270] sm:$0xff]
  %v93 = vld [vmem:[%s0 + $0x278] sm:$0xff]
  %v94 = vld [vmem:[%s0 + $0x280] sm:$0xff]
  %v95 = vld [vmem:[%s0 + $0x288] sm:$0xff]
  %v96 = vld [vmem:[%s0 + $0x290] sm:$0xff]
  %v97 = vld [vmem:[%s0 + $0x298] sm:$0xff]
  %v98 = vld [vmem:[%s0 + $0x2a0] sm:$0xff]
  %v99 = vld [vmem:[%s0 + $0x2a8] sm:$0xff]
  %v100 = vld [vmem:[%s0 + $0x2b0] sm:$0xff]
  %v101 = vld [vmem:[%s0 + $0x2b8] sm:$0xff]
  %v102 = vld [vmem:[%s0 + $0x2c0] sm:$0xff]
  %v103 = vld [vmem:[%s0 + $0x2c8] sm:$0xff]
  %v104 = vld [vmem:[%s0 + $0x2d0] sm:$0xff]
  %v105 = vld [vmem:[%s0 + $0x2d8] sm:$0xff]
  %v106 = vld [vmem:[%s0 + $0x2e0] sm:$0xff]
  %v107 = vld [vmem:[%s0 + $0x2e8] sm:$0xff]
  %v108 = vld [vmem:[%s0 + $0x2f0] sm:$0xff]
  %v109 = vld [vmem:[%s0 + $0x2f8] sm:$0xff]
  %v110 = vld [vmem:[%s0 + $0x300] sm:$0xff]
  %v111 = vld [vmem:[%s0 + $0x308] sm:$0xff]
  %v112 = vld [vmem:[%s0 + $0x310] sm:$0xff]
  %v113 = vld [vmem:[%s0 + $0x318] sm:$0xff]
  %v114 = vld [vmem:[%s0 + $0x320] sm:$0xff]
  %v115 = vld [vmem:[%s0 + $0x328] sm:$0xff]
  %v116 = vld [vmem:[%s0 + $0x330] sm:$0xff]
  %v117 = vld [vmem:[%s0 + $0x338] sm:$0xff]
  %v118 = vld [vmem:[%s0 + $0x340] sm:$0xff]
  %v119 = vld [vmem:[%s0 + $0x348] sm:$0xff]
  %v120 = vld [vmem:[%s0 + $0x350] sm:$0xff]
  %v121 = vld [vmem:[%s0 + $0x358] sm:$0xff]
  %v122 = vld [vmem:[%s0 + $0x360] sm:$0xff]
  %v123 = vld [vmem:[%s0 + $0x368] sm:$0xff]
  %v124 = vld [vmem:[%s0 + $0x370] sm:$0xff]
  %v125 = vld [vmem:[%s0 + $0x378] sm:$0xff]
  %v126 = vld [vmem:[%s0 + $0x380] sm:$0xff]
  %v127 = vld [vmem:[%s0 + $0x388] sm:$0xff]
  %v128 = vld [vmem:[%s0 + $0x390] sm:$0xff]
  %v129 = vld [vmem:[%s0 + $0x398] sm:$0xff]
  %v130 = vld [vmem:[%s0 + $0x3a0] sm:$0xff]
  %v131 = vld [vmem:[%s0 + $0x3a8] sm:$0xff]
  %v132 = vld [vmem:[%s0 + $0x3b0] sm:$0xff]
  %v133 = vld [vmem:[%s0 + $0x3b8] sm:$0xff]
  %v134 = vld [vmem:[%s0 + $0x3c0] sm:$0xff]
  %v135 = vld [vmem:[%s0 + $0x3c8] sm:$0xff]
  %v136 = vld [vmem:[%s0 + $0x3d0] sm:$0xff]
  %v137 = vld [vmem:[%s0 + $0x3d8] sm:$0xff]
  %v138 = vld [vmem:[%s0 + $0x3e0] sm:$0xff]
  %v139 = vld [vmem:[%s0 + $0x3e8] sm:$0xff]
  %v140 = vld [vmem:[%s0 + $0x3f0] sm:$0xff]
  %v141 = vld [vmem:[%s0 + $0x3f8] sm:$0xff]
  %v142 = vld [vmem:[%s0 + $0x400] sm:$0xff]
  %v143 = vld [vmem:[%s0 + $0x408] sm:$0xff]
  %v144 = vld [vmem:[%s0 + $0x410] sm:$0xff]
  %v145 = vld [vmem:[%s0 + $0x418] sm:$0xff]
  %v146 = vld [vmem:[%s0 + $0x420] sm:$0xff]
  %v147 = vld [vmem:[%s0 + $0x428] sm:$0xff]
  %v148 = vld [vmem:[%s0 + $0x430] sm:$0xff]
  %v149 = vld [vmem:[%s0 + $0x438] sm:$0xff]
  %v150 = vld [vmem:[%s0 + $0x440] sm:$0xff]
  %v151 = vld [vmem:[%s0 + $0x448] sm:$0xff]
  %v152 = vld [vmem:[%s0 + $0x450] sm:$0xff]
  %v153 = vld [vmem:[%s0 + $0x458] sm:$0xff]
  %v154 = vld [vmem:[%s0 + $0x460] sm:$0xff]
  %v155 = vld [vmem:[%s0 + $0x468] sm:$0xff]
  %v156 = vld [vmem:[%s0 + $0x470] sm:$0xff]
  %v157 = vld [vmem:[%s0 + $0x478] sm:$0xff]
  %v158 = vld [vmem:[%s1] sm:$0xff]
  %v159 = vld [vmem:[%s1 + $0x8] sm:$0xff]
  %v160 = vld [vmem:[%s1 + $0x10] sm:$0xff]
  %v161 = vld [vmem:[%s1 + $0x18] sm:$0xff]
  %v162 = vld [vmem:[%s1 + $0x20] sm:$0xff]
  %v163 = vld [vmem:[%s1 + $0x28] sm:$0xff]
  %v164 = vld [vmem:[%s1 + $0x30] sm:$0xff]
  %v165 = vld [vmem:[%s1 + $0x38] sm:$0xff]
  %v166 = vld [vmem:[%s1 + $0x40] sm:$0xff]
  %v167 = vld [vmem:[%s1 + $0x48] sm:$0xff]
  %v168 = vld [vmem:[%s1 + $0x50] sm:$0xff]
  %v169 = vld [vmem:[%s1 + $0x58] sm:$0xff]
  %v170 = vld [vmem:[%s1 + $0x60] sm:$0xff]
  %v171 = vld [vmem:[%s1 + $0x68] sm:$0xff]
  %v172 = vld [vmem:[%s1 + $0x70] sm:$0xff]
  %v173 = vld [vmem:[%s1 + $0x78] sm:$0xff]
  %v174 = vld [vmem:[%s1 + $0x80] sm:$0xff]
  %v175 = vld [vmem:[%s1 + $0x88] sm:$0xff]
  %v176 = vld [vmem:[%s1 + $0x90] sm:$0xff]
  %v177 = vld [vmem:[%s1 + $0x98] sm:$0xff]
  %v178 = vld [vmem:[%s1 + $0xa0] sm:$0xff]
  %v179 = vld [vmem:[%s1 + $0xa8] sm:$0xff]
  %v180 = vld [vmem:[%s1 + $0xb0] sm:$0xff]
  %v181 = vld [vmem:[%s1 + $0xb8] sm:$0xff]
  %v182 = vld [vmem:[%s1 + $0xc0] sm:$0xff]
  %v183 = vld [vmem:[%s1 + $0xc8] sm:$0xff]
  %v184 = vld [vmem:[%s1 + $0xd0] sm:$0xff]
  %v185 = vld [vmem:[%s1 + $0xd8] sm:$0xff]
  %v186 = vld [vmem:[%s1 + $0xe0] sm:$0xff]
  %v187 = vld [vmem:[%s1 + $0xe8] sm:$0xff]
  %v188 = vld [vmem:[%s1 + $0xf0] sm:$0xff]
  %v189 = vld [vmem:[%s1 + $0xf8] sm:$0xff]
  %v190 = vld [vmem:[%s1 + $0x100] sm:$0xff]
  %v191 = vld [vmem:[%s1 + $0x108] sm:$0xff]
  %v192 = vld [vmem:[%s1 + $0x110] sm:$0xff]
  %v193 = vld [vmem:[%s1 + $0x118] sm:$0xff]
  %v194 = vld [vmem:[%s1 + $0x120] sm:$0xff]
  %v195 = vld [vmem:[%s1 + $0x128] sm:$0xff]
  %v196 = vld [vmem:[%s1 + $0x130] sm:$0xff]
  %v197 = vld [vmem:[%s1 + $0x138] sm:$0xff]
  %v198 = vld [vmem:[%s1 + $0x140] sm:$0xff]
  %v199 = vld [vmem:[%s1 + $0x148] sm:$0xff]
  %v200 = vld [vmem:[%s1 + $0x150] sm:$0xff]
  %v201 = vld [vmem:[%s1 + $0x158] sm:$0xff]
  %v202 = vld [vmem:[%s1 + $0x160] sm:$0xff]
  %v203 = vld [vmem:[%s1 + $0x168] sm:$0xff]
  %v204 = vld [vmem:[%s1 + $0x170] sm:$0xff]
  %v205 = vld [vmem:[%s1 + $0x178] sm:$0xff]
  %v206 = vld [vmem:[%s1 + $0x180] sm:$0xff]
  %v207 = vld [vmem:[%s1 + $0x188] sm:$0xff]
  %v208 = vld [vmem:[%s1 + $0x190] sm:$0xff]
  %v209 = vld [vmem:[%s1 + $0x198] sm:$0xff]
  %v210 = vld [vmem:[%s1 + $0x1a0] sm:$0xff]
  %v211 = vld [vmem:[%s1 + $0x1a8] sm:$0xff]
  %v212 = vld [vmem:[%s1 + $0x1b0] sm:$0xff]
  %v213 = vld [vmem:[%s1 + $0x1b8] sm:$0xff]
  %v214 = vld [vmem:[%s1 + $0x1c0] sm:$0xff]
  %v215 = vld [vmem:[%s1 + $0x1c8] sm:$0xff]
  %v216 = vld [vmem:[%s1 + $0x1d0] sm:$0xff]
  %v217 = vld [vmem:[%s1 + $0x1d8] sm:$0xff]
  %v218 = vld [vmem:[%s1 + $0x1e0] sm:$0xff]
  %v219 = vld [vmem:[%s1 + $0x1e8] sm:$0xff]
  %v220 = vld [vmem:[%s1 + $0x1f0] sm:$0xff]
  %v221 = vld [vmem:[%s1 + $0x1f8] sm:$0xff]
  %v222 = vld [vmem:[%s1 + $0x200] sm:$0xff]
  %v223 = vld [vmem:[%s1 + $0x208] sm:$0xff]
  %v224 = vld [vmem:[%s1 + $0x210] sm:$0xff]
  %v225 = vld [vmem:[%s1 + $0x218] sm:$0xff]
  %v226 = vld [vmem:[%s1 + $0x220] sm:$0xff]
  %v227 = vld [vmem:[%s1 + $0x228] sm:$0xff]
  %v228 = vld [vmem:[%s1 + $0x230] sm:$0xff]
  %v229 = vld [vmem:[%s1 + $0x238] sm:$0xff]
  %v230 = vld [vmem:[%s1 + $0x240] sm:$0xff]
  %v231 = vld [vmem:[%s1 + $0x248] sm:$0xff]
  %v232 = vld [vmem:[%s1 + $0x250] sm:$0xff]
  %v233 = vld [vmem:[%s1 + $0x258] sm:$0xff]
  %v234 = vld [vmem:[%s1 + $0x260] sm:$0xff]
  %v235 = vld [vmem:[%s1 + $0x268] sm:$0xff]
  %v236 = vld [vmem:[%s1 + $0x270] sm:$0xff]
  %v237 = vld [vmem:[%s1 + $0x278] sm:$0xff]
  %v238 = vld [vmem:[%s1 + $0x280] sm:$0xff]
  %v239 = vld [vmem:[%s1 + $0x288] sm:$0xff]
  %v240 = vld [vmem:[%s1 + $0x290] sm:$0xff]
  %v241 = vld [vmem:[%s1 + $0x298] sm:$0xff]
  %v242 = vld [vmem:[%s1 + $0x2a0] sm:$0xff]
  %v243 = vld [vmem:[%s1 + $0x2a8] sm:$0xff]
  %v244 = vld [vmem:[%s1 + $0x2b0] sm:$0xff]
  %v245 = vld [vmem:[%s1 + $0x2b8] sm:$0xff]
  %v246 = vld [vmem:[%s1 + $0x2c0] sm:$0xff]
  %v247 = vld [vmem:[%s1 + $0x2c8] sm:$0xff]
  %v248 = vld [vmem:[%s1 + $0x2d0] sm:$0xff]
  %v249 = vld [vmem:[%s1 + $0x2d8] sm:$0xff]
  %v250 = vld [vmem:[%s1 + $0x2e0] sm:$0xff]
  %v251 = vld [vmem:[%s1 + $0x2e8] sm:$0xff]
  %v252 = vld [vmem:[%s1 + $0x2f0] sm:$0xff]
  %v253 = vld [vmem:[%s1 + $0x2f8] sm:$0xff]
  %v254 = vld [vmem:[%s1 + $0x300] sm:$0xff]
  %v255 = vld [vmem:[%s1 + $0x308] sm:$0xff]
  %v256 = vld [vmem:[%s1 + $0x310] sm:$0xff]
  %v257 = vld [vmem:[%s1 + $0x318] sm:$0xff]
  %v258 = vld [vmem:[%s1 + $0x320] sm:$0xff]
  %v259 = vld [vmem:[%s1 + $0x328] sm:$0xff]
  %v260 = vld [vmem:[%s1 + $0x330] sm:$0xff]
  %v261 = vld [vmem:[%s1 + $0x338] sm:$0xff]
  %v262 = vld [vmem:[%s1 + $0x340] sm:$0xff]
  %v263 = vld [vmem:[%s1 + $0x348] sm:$0xff]
  %v264 = vld [vmem:[%s1 + $0x350] sm:$0xff]
  %v265 = vld [vmem:[%s1 + $0x358] sm:$0xff]
  %v266 = vld [vmem:[%s1 + $0x360] sm:$0xff]
  %v267 = vld [vmem:[%s1 + $0x368] sm:$0xff]
  %v268 = vld [vmem:[%s1 + $0x370] sm:$0xff]
  %v269 = vld [vmem:[%s1 + $0x378] sm:$0xff]
  %v270 = vld [vmem:[%s1 + $0x380] sm:$0xff]
  %v271 = vld [vmem:[%s1 + $0x388] sm:$0xff]
  %v272 = vld [vmem:[%s1 + $0x390] sm:$0xff]
  %v273 = vld [vmem:[%s1 + $0x398] sm:$0xff]
  %v274 = vld [vmem:[%s1 + $0x3a0] sm:$0xff]
  %v275 = vld [vmem:[%s1 + $0x3a8] sm:$0xff]
  %v276 = vld [vmem:[%s1 + $0x3b0] sm:$0xff]
  %v277 = vld [vmem:[%s1 + $0x3b8] sm:$0xff]
  %v278 = vld [vmem:[%s1 + $0x3c0] sm:$0xff]
  %v279 = vld [vmem:[%s1 + $0x3c8] sm:$0xff]
  %v280 = vld [vmem:[%s1 + $0x3d0] sm:$0xff]
  %v281 = vld [vmem:[%s1 + $0x3d8] sm:$0xff]
  %v282 = vld [vmem:[%s1 + $0x3e0] sm:$0xff]
  %v283 = vld [vmem:[%s1 + $0x3e8] sm:$0xff]
  %v284 = vld [vmem:[%s1 + $0x3f0] sm:$0xff]
  %v285 = vld [vmem:[%s1 + $0x3f8] sm:$0xff]
  %v286 = vld [vmem:[%s1 + $0x400] sm:$0xff]
  %v287 = vld [vmem:[%s1 + $0x408] sm:$0xff]
  %v288 = vld [vmem:[%s1 + $0x410] sm:$0xff]
  %v289 = vld [vmem:[%s1 + $0x418] sm:$0xff]
  %v290 = vld [vmem:[%s1 + $0x420] sm:$0xff]
  %v291 = vld [vmem:[%s1 + $0x428] sm:$0xff]
  %v292 = vld [vmem:[%s1 + $0x430] sm:$0xff]
  %v293 = vld [vmem:[%s1 + $0x438] sm:$0xff]
  %v294 = vld [vmem:[%s1 + $0x440] sm:$0xff]
  %v295 = vld [vmem:[%s1 + $0x448] sm:$0xff]
  %v296 = vld [vmem:[%s1 + $0x450] sm:$0xff]
  %v297 = vld [vmem:[%s1 + $0x458] sm:$0xff]
  %v298 = vld [vmem:[%s1 + $0x460] sm:$0xff]
  %v299 = vld [vmem:[%s1 + $0x468] sm:$0xff]
  %v300 = vld [vmem:[%s1 + $0x470] sm:$0xff]
  %v301 = vld [vmem:[%s1 + $0x478] sm:$0xff]
  %v302 = vld [vmem:[%s1 + $0x480] sm:$0xff]
  %v303 = vld [vmem:[%s1 + $0x488] sm:$0xff]
  %v304 = vld [vmem:[%s1 + $0x490] sm:$0xff]
  %v305 = vld [vmem:[%s1 + $0x498] sm:$0xff]
  %v306 = vld [vmem:[%s1 + $0x4a0] sm:$0xff]
  %v307 = vld [vmem:[%s1 + $0x4a8] sm:$0xff]
  %v308 = vld [vmem:[%s1 + $0x4b0] sm:$0xff]
  %v309 = vld [vmem:[%s1 + $0x4b8] sm:$0xff]
  %v310 = vld [vmem:[%s1 + $0x4c0] sm:$0xff]
  %v311 = vld [vmem:[%s1 + $0x4c8] sm:$0xff]
  %v312 = vld [vmem:[%s1 + $0x4d0] sm:$0xff]
  %v313 = vld [vmem:[%s1 + $0x4d8] sm:$0xff]
  %v314 = vld [vmem:[%s1 + $0x4e0] sm:$0xff]
  %v315 = vld [vmem:[%s1 + $0x4e8] sm:$0xff]
  %v316 = vld [vmem:[%s1 + $0x4f0] sm:$0xff]
  %v317 = vld [vmem:[%s1 + $0x4f8] sm:$0xff]
  %v318 = vld [vmem:[%s1 + $0x500] sm:$0xff]
  %v319 = vld [vmem:[%s1 + $0x508] sm:$0xff]
  %v320 = vld [vmem:[%s1 + $0x510] sm:$0xff]
  %v321 = vld [vmem:[%s1 + $0x518] sm:$0xff]
  %v322 = vld [vmem:[%s1 + $0x520] sm:$0xff]
  %v323 = vld [vmem:[%s1 + $0x528] sm:$0xff]
  %v324 = vld [vmem:[%s1 + $0x530] sm:$0xff]
  %v325 = vld [vmem:[%s1 + $0x538] sm:$0xff]
  %v326 = vld [vmem:[%s1 + $0x540] sm:$0xff]
  %v327 = vld [vmem:[%s1 + $0x548] sm:$0xff]
  %v328 = vld [vmem:[%s1 + $0x550] sm:$0xff]
  %v329 = vld [vmem:[%s1 + $0x558] sm:$0xff]
  %v330 = vld [vmem:[%s1 + $0x560] sm:$0xff]
  %v331 = vld [vmem:[%s1 + $0x568] sm:$0xff]
  %v332 = vld [vmem:[%s1 + $0x570] sm:$0xff]
  %v333 = vld [vmem:[%s1 + $0x578] sm:$0xff]
  %v334 = vld [vmem:[%s1 + $0x580] sm:$0xff]
  %v335 = vld [vmem:[%s1 + $0x588] sm:$0xff]
  %v336 = vld [vmem:[%s1 + $0x590] sm:$0xff]
  %v337 = vld [vmem:[%s1 + $0x598] sm:$0xff]
  %v338 = vld [vmem:[%s1 + $0x5a0] sm:$0xff]
  %v339 = vld [vmem:[%s1 + $0x5a8] sm:$0xff]
  %v340 = vld [vmem:[%s1 + $0x5b0] sm:$0xff]
  %v341 = vld [vmem:[%s1 + $0x5b8] sm:$0xff]
  %v342 = vld [vmem:[%s1 + $0x5c0] sm:$0xff]
  %v343 = vld [vmem:[%s1 + $0x5c8] sm:$0xff]
  %v344 = vld [vmem:[%s1 + $0x5d0] sm:$0xff]
  %v345 = vld [vmem:[%s1 + $0x5d8] sm:$0xff]
  %v346 = vld [vmem:[%s1 + $0x5e0] sm:$0xff]
  %v347 = vld [vmem:[%s1 + $0x5e8] sm:$0xff]
  %v348 = vld [vmem:[%s1 + $0x5f0] sm:$0xff]
  %v349 = vld [vmem:[%s1 + $0x5f8] sm:$0xff]
  %v350 = vld [vmem:[%s1 + $0x600] sm:$0xff]
  %v351 = vld [vmem:[%s1 + $0x608] sm:$0xff]
  %v352 = vld [vmem:[%s1 + $0x610] sm:$0xff]
  %v353 = vld [vmem:[%s1 + $0x618] sm:$0xff]
  %v354 = vld [vmem:[%s1 + $0x620] sm:$0xff]
  %v355 = vld [vmem:[%s1 + $0x628] sm:$0xff]
  %v356 = vld [vmem:[%s1 + $0x630] sm:$0xff]
  %v357 = vld [vmem:[%s1 + $0x638] sm:$0xff]
  %v358 = vld [vmem:[%s1 + $0x640] sm:$0xff]
  %v359 = vld [vmem:[%s1 + $0x648] sm:$0xff]
  %v360 = vld [vmem:[%s1 + $0x650] sm:$0xff]
  %v361 = vld [vmem:[%s1 + $0x658] sm:$0xff]
  %v362 = vld [vmem:[%s1 + $0x660] sm:$0xff]
  %v363 = vld [vmem:[%s1 + $0x668] sm:$0xff]
  %v364 = vld [vmem:[%s1 + $0x670] sm:$0xff]
  %v365 = vld [vmem:[%s1 + $0x678] sm:$0xff]
  %v366 = vld [vmem:[%s1 + $0x680] sm:$0xff]
  %v367 = vld [vmem:[%s1 + $0x688] sm:$0xff]
  %v368 = vld [vmem:[%s1 + $0x690] sm:$0xff]
  %v369 = vld [vmem:[%s1 + $0x698] sm:$0xff]
  %v370 = vld [vmem:[%s1 + $0x6a0] sm:$0xff]
  %v371 = vld [vmem:[%s1 + $0x6a8] sm:$0xff]
  %v372 = vld [vmem:[%s1 + $0x6b0] sm:$0xff]
  %v373 = vld [vmem:[%s1 + $0x6b8] sm:$0xff]
  %v374 = vld [vmem:[%s1 + $0x6c0] sm:$0xff]
  %v375 = vld [vmem:[%s1 + $0x6c8] sm:$0xff]
  %v376 = vld [vmem:[%s1 + $0x6d0] sm:$0xff]
  %v377 = vld [vmem:[%s1 + $0x6d8] sm:$0xff]
  %v378 = vld [vmem:[%s1 + $0x6e0] sm:$0xff]
  %v379 = vld [vmem:[%s1 + $0x6e8] sm:$0xff]
  %v380 = vld [vmem:[%s1 + $0x6f0] sm:$0xff]
  %v381 = vld [vmem:[%s1 + $0x6f8] sm:$0xff]
  %v382 = vld [vmem:[%s1 + $0x700] sm:$0xff]
  %v383 = vld [vmem:[%s1 + $0x708] sm:$0xff]
  %v384 = vld [vmem:[%s1 + $0x710] sm:$0xff]
  %v385 = vld [vmem:[%s1 + $0x718] sm:$0xff]
  %v386 = vld [vmem:[%s1 + $0x720] sm:$0xff]
  %v387 = vld [vmem:[%s1 + $0x728] sm:$0xff]
  %v388 = vld [vmem:[%s1 + $0x730] sm:$0xff]
  %v389 = vld [vmem:[%s1 + $0x738] sm:$0xff]
  %v390 = vld [vmem:[%s1 + $0x740] sm:$0xff]
  %v391 = vld [vmem:[%s1 + $0x748] sm:$0xff]
  %v392 = vld [vmem:[%s1 + $0x750] sm:$0xff]
  %v393 = vld [vmem:[%s1 + $0x758] sm:$0xff]
  %v394 = vld [vmem:[%s1 + $0x760] sm:$0xff]
  %v395 = vld [vmem:[%s1 + $0x768] sm:$0xff]
  %v396 = vld [vmem:[%s1 + $0x770] sm:$0xff]
  %v397 = vld [vmem:[%s1 + $0x778] sm:$0xff]
  %v398 = vld [vmem:[%s1 + $0x780] sm:$0xff]
  %v399 = vld [vmem:[%s1 + $0x788] sm:$0xff]
  %v400 = vld [vmem:[%s1 + $0x790] sm:$0xff]
  %v401 = vld [vmem:[%s1 + $0x798] sm:$0xff]
  %v402 = vld [vmem:[%s1 + $0x7a0] sm:$0xff]
  %v403 = vld [vmem:[%s1 + $0x7a8] sm:$0xff]
  %v404 = vld [vmem:[%s1 + $0x7b0] sm:$0xff]
  %v405 = vld [vmem:[%s1 + $0x7b8] sm:$0xff]
  %v406 = vld [vmem:[%s1 + $0x7c0] sm:$0xff]
  %v407 = vld [vmem:[%s1 + $0x7c8] sm:$0xff]
  %v408 = vld [vmem:[%s1 + $0x7d0] sm:$0xff]
  %v409 = vld [vmem:[%s1 + $0x7d8] sm:$0xff]
  %v410 = vld [vmem:[%s1 + $0x7e0] sm:$0xff]
  %v411 = vld [vmem:[%s1 + $0x7e8] sm:$0xff]
  %v412 = vld [vmem:[%s1 + $0x7f0] sm:$0xff]
  %v413 = vld [vmem:[%s1 + $0x7f8] sm:$0xff]
  %v414 = vld [vmem:[%s1 + $0x800] sm:$0xff]
  %v415 = vld [vmem:[%s1 + $0x808] sm:$0xff]
  %v416 = vld [vmem:[%s1 + $0x810] sm:$0xff]
  %v417 = vld [vmem:[%s1 + $0x818] sm:$0xff]
  %v418 = vld [vmem:[%s1 + $0x820] sm:$0xff]
  %v419 = vld [vmem:[%s1 + $0x828] sm:$0xff]
  %v420 = vld [vmem:[%s1 + $0x830] sm:$0xff]
  %v421 = vld [vmem:[%s1 + $0x838] sm:$0xff]
  %v422 = vld [vmem:[%s1 + $0x840] sm:$0xff]
  %v423 = vld [vmem:[%s1 + $0x848] sm:$0xff]
  %v424 = vld [vmem:[%s1 + $0x850] sm:$0xff]
  %v425 = vld [vmem:[%s1 + $0x858] sm:$0xff]
  %v426 = vld [vmem:[%s1 + $0x860] sm:$0xff]
  %v427 = vld [vmem:[%s1 + $0x868] sm:$0xff]
  %v428 = vld [vmem:[%s1 + $0x870] sm:$0xff]
  %v429 = vld [vmem:[%s1 + $0x878] sm:$0xff]
  %v430 = vld [vmem:[%s1 + $0x880] sm:$0xff]
  %v431 = vld [vmem:[%s1 + $0x888] sm:$0xff]
  %v432 = vld [vmem:[%s1 + $0x890] sm:$0xff]
  %v433 = vld [vmem:[%s1 + $0x898] sm:$0xff]
  %v434 = vld [vmem:[%s1 + $0x8a0] sm:$0xff]
  %v435 = vld [vmem:[%s1 + $0x8a8] sm:$0xff]
  %v436 = vld [vmem:[%s1 + $0x8b0] sm:$0xff]
  %v437 = vld [vmem:[%s1 + $0x8b8] sm:$0xff]
  %v438 = vld [vmem:[%s1 + $0x8c0] sm:$0xff]
  %v439 = vld [vmem:[%s1 + $0x8c8] sm:$0xff]
  %v440 = vld [vmem:[%s1 + $0x8d0] sm:$0xff]
  %v441 = vld [vmem:[%s1 + $0x8d8] sm:$0xff]
  %v442 = vld [vmem:[%s1 + $0x8e0] sm:$0xff]
  %v443 = vld [vmem:[%s1 + $0x8e8] sm:$0xff]
  %v444 = vld [vmem:[%s1 + $0x8f0] sm:$0xff]
  %v445 = vld [vmem:[%s1 + $0x8f8] sm:$0xff]
  %v446 = vld [vmem:[%s1 + $0x900] sm:$0xff]
  %v447 = vld [vmem:[%s1 + $0x908] sm:$0xff]
  %v448 = vld [vmem:[%s1 + $0x910] sm:$0xff]
  %v449 = vld [vmem:[%s1 + $0x918] sm:$0xff]
  %v450 = vld [vmem:[%s1 + $0x920] sm:$0xff]
  %v451 = vld [vmem:[%s1 + $0x928] sm:$0xff]
  %v452 = vld [vmem:[%s1 + $0x930] sm:$0xff]
  %v453 = vld [vmem:[%s1 + $0x938] sm:$0xff]
  %v454 = vld [vmem:[%s1 + $0x940] sm:$0xff]
  %v455 = vld [vmem:[%s1 + $0x948] sm:$0xff]
  %v456 = vld [vmem:[%s1 + $0x950] sm:$0xff]
  %v457 = vld [vmem:[%s1 + $0x958] sm:$0xff]
  %v458 = vld [vmem:[%s1 + $0x960] sm:$0xff]
  %v459 = vld [vmem:[%s1 + $0x968] sm:$0xff]
  %v460 = vld [vmem:[%s1 + $0x970] sm:$0xff]
  %v461 = vld [vmem:[%s1 + $0x978] sm:$0xff]
  %v462 = vld [vmem:[%s1 + $0x980] sm:$0xff]
  %v463 = vld [vmem:[%s1 + $0x988] sm:$0xff]
  %v464 = vld [vmem:[%s1 + $0x990] sm:$0xff]
  %v465 = vld [vmem:[%s1 + $0x998] sm:$0xff]
  %v466 = vld [vmem:[%s1 + $0x9a0] sm:$0xff]
  %v467 = vld [vmem:[%s1 + $0x9a8] sm:$0xff]
  %v468 = vld [vmem:[%s1 + $0x9b0] sm:$0xff]
  %v469 = vld [vmem:[%s1 + $0x9b8] sm:$0xff]
  %v470 = vld [vmem:[%s1 + $0x9c0] sm:$0xff]
  %v471 = vld [vmem:[%s1 + $0x9c8] sm:$0xff]
  %v472 = vld [vmem:[%s1 + $0x9d0] sm:$0xff]
  %v473 = vld [vmem:[%s1 + $0x9d8] sm:$0xff]
  %v474 = vld [vmem:[%s1 + $0x9e0] sm:$0xff]
  %v475 = vld [vmem:[%s1 + $0x9e8] sm:$0xff]
  %v476 = vld [vmem:[%s1 + $0x9f0] sm:$0xff]
  %v477 = vld [vmem:[%s1 + $0x9f8] sm:$0xff]
  %v478 = vld [vmem:[%s1 + $0xa00] sm:$0xff]
  %v479 = vld [vmem:[%s1 + $0xa08] sm:$0xff]
  %v480 = vld [vmem:[%s1 + $0xa10] sm:$0xff]
  %v481 = vld [vmem:[%s1 + $0xa18] sm:$0xff]
  %v482 = vld [vmem:[%s1 + $0xa20] sm:$0xff]
  %v483 = vld [vmem:[%s1 + $0xa28] sm:$0xff]
  %v484 = vld [vmem:[%s1 + $0xa30] sm:$0xff]
  %v485 = vld [vmem:[%s1 + $0xa38] sm:$0xff]
  %v486 = vld [vmem:[%s1 + $0xa40] sm:$0xff]
  %v487 = vld [vmem:[%s1 + $0xa48] sm:$0xff]
  %v488 = vld [vmem:[%s1 + $0xa50] sm:$0xff]
  %v489 = vld [vmem:[%s1 + $0xa58] sm:$0xff]
  %v490 = vld [vmem:[%s1 + $0xa60] sm:$0xff]
  %v491 = vld [vmem:[%s1 + $0xa68] sm:$0xff]
  %v492 = vld [vmem:[%s1 + $0xa70] sm:$0xff]
  %v493 = vld [vmem:[%s1 + $0xa78] sm:$0xff]
  %v494 = vld [vmem:[%s1 + $0xa80] sm:$0xff]
  %v495 = vld [vmem:[%s1 + $0xa88] sm:$0xff]
  %v496 = vld [vmem:[%s1 + $0xa90] sm:$0xff]
  %v497 = vld [vmem:[%s1 + $0xa98] sm:$0xff]
  %v498 = vld [vmem:[%s1 + $0xaa0] sm:$0xff]
  %v499 = vld [vmem:[%s1 + $0xaa8] sm:$0xff]
  %v500 = vld [vmem:[%s1 + $0xab0] sm:$0xff]
  %v501 = vld [vmem:[%s1 + $0xab8] sm:$0xff]
  %v502 = vld [vmem:[%s1 + $0xac0] sm:$0xff]
  %v503 = vld [vmem:[%s1 + $0xac8] sm:$0xff]
  %v504 = vld [vmem:[%s1 + $0xad0] sm:$0xff]
  %v505 = vld [vmem:[%s1 + $0xad8] sm:$0xff]
  %v506 = vld [vmem:[%s1 + $0xae0] sm:$0xff]
  %v507 = vld [vmem:[%s1 + $0xae8] sm:$0xff]
  %v508 = vld [vmem:[%s1 + $0xaf0] sm:$0xff]
  %v509 = vld [vmem:[%s1 + $0xaf8] sm:$0xff]
  %v510 = vld [vmem:[%s1 + $0xb00] sm:$0xff]
  %v511 = vld [vmem:[%s1 + $0xb08] sm:$0xff]
  %v512 = vld [vmem:[%s1 + $0xb10] sm:$0xff]
  %v513 = vld [vmem:[%s1 + $0xb18] sm:$0xff]
  %v514 = vld [vmem:[%s1 + $0xb20] sm:$0xff]
  %v515 = vld [vmem:[%s1 + $0xb28] sm:$0xff]
  %v516 = vld [vmem:[%s1 + $0xb30] sm:$0xff]
  %v517 = vld [vmem:[%s1 + $0xb38] sm:$0xff]
  %v518 = vld [vmem:[%s1 + $0xb40] sm:$0xff]
  %v519 = vld [vmem:[%s1 + $0xb48] sm:$0xff]
  %v520 = vld [vmem:[%s1 + $0xb50] sm:$0xff]
  %v521 = vld [vmem:[%s1 + $0xb58] sm:$0xff]
  %v522 = vld [vmem:[%s1 + $0xb60] sm:$0xff]
  %v523 = vld [vmem:[%s1 + $0xb68] sm:$0xff]
  %v524 = vld [vmem:[%s1 + $0xb70] sm:$0xff]
  %v525 = vld [vmem:[%s1 + $0xb78] sm:$0xff]
  %v526 = vld [vmem:[%s1 + $0xb80] sm:$0xff]
  %v527 = vld [vmem:[%s1 + $0xb88] sm:$0xff]
  %v528 = vld [vmem:[%s1 + $0xb90] sm:$0xff]
  %v529 = vld [vmem:[%s1 + $0xb98] sm:$0xff]
  %v530 = vld [vmem:[%s1 + $0xba0] sm:$0xff]
  %v531 = vld [vmem:[%s1 + $0xba8] sm:$0xff]
  %v532 = vld [vmem:[%s1 + $0xbb0] sm:$0xff]
  %v533 = vld [vmem:[%s1 + $0xbb8] sm:$0xff]
  %v534 = vld [vmem:[%s1 + $0xbc0] sm:$0xff]
  %v535 = vld [vmem:[%s1 + $0xbc8] sm:$0xff]
  %v536 = vld [vmem:[%s1 + $0xbd0] sm:$0xff]
  %v537 = vld [vmem:[%s1 + $0xbd8] sm:$0xff]
  %v538 = vld [vmem:[%s1 + $0xbe0] sm:$0xff]
  %v539 = vld [vmem:[%s1 + $0xbe8] sm:$0xff]
  %v540 = vld [vmem:[%s1 + $0xbf0] sm:$0xff]
  %v541 = vld [vmem:[%s1 + $0xbf8] sm:$0xff]
  %v542 = vld [vmem:[%s1 + $0xc00] sm:$0xff]
  %v543 = vld [vmem:[%s1 + $0xc08] sm:$0xff]
  %v544 = vld [vmem:[%s1 + $0xc10] sm:$0xff]
  %v545 = vld [vmem:[%s1 + $0xc18] sm:$0xff]
  %v546 = vld [vmem:[%s1 + $0xc20] sm:$0xff]
  %v547 = vld [vmem:[%s1 + $0xc28] sm:$0xff]
  %v548 = vld [vmem:[%s1 + $0xc30] sm:$0xff]
  %v549 = vld [vmem:[%s1 + $0xc38] sm:$0xff]
  %v550 = vld [vmem:[%s1 + $0xc40] sm:$0xff]
  %v551 = vld [vmem:[%s1 + $0xc48] sm:$0xff]
  %v552 = vld [vmem:[%s1 + $0xc50] sm:$0xff]
  %v553 = vld [vmem:[%s1 + $0xc58] sm:$0xff]
  %v554 = vld [vmem:[%s1 + $0xc60] sm:$0xff]
  %v555 = vld [vmem:[%s1 + $0xc68] sm:$0xff]
  %v556 = vld [vmem:[%s1 + $0xc70] sm:$0xff]
  %v557 = vld [vmem:[%s1 + $0xc78] sm:$0xff]
  %v558 = vld [vmem:[%s1 + $0xc80] sm:$0xff]
  %v559 = vld [vmem:[%s1 + $0xc88] sm:$0xff]
  %v560 = vld [vmem:[%s1 + $0xc90] sm:$0xff]
  %v561 = vld [vmem:[%s1 + $0xc98] sm:$0xff]
  %v562 = vld [vmem:[%s1 + $0xca0] sm:$0xff]
  %v563 = vld [vmem:[%s1 + $0xca8] sm:$0xff]
  %v564 = vld [vmem:[%s1 + $0xcb0] sm:$0xff]
  %v565 = vld [vmem:[%s1 + $0xcb8] sm:$0xff]
  %v566 = vld [vmem:[%s1 + $0xcc0] sm:$0xff]
  %v567 = vld [vmem:[%s1 + $0xcc8] sm:$0xff]
  %v568 = vld [vmem:[%s1 + $0xcd0] sm:$0xff]
  %v569 = vld [vmem:[%s1 + $0xcd8] sm:$0xff]
  %v570 = vld [vmem:[%s1 + $0xce0] sm:$0xff]
  %v571 = vld [vmem:[%s1 + $0xce8] sm:$0xff]
  %v572 = vld [vmem:[%s1 + $0xcf0] sm:$0xff]
  %v573 = vld [vmem:[%s1 + $0xcf8] sm:$0xff]
  %v574 = vld [vmem:[%s1 + $0xd00] sm:$0xff]
  %v575 = vld [vmem:[%s1 + $0xd08] sm:$0xff]
  %v576 = vld [vmem:[%s1 + $0xd10] sm:$0xff]
  %v577 = vld [vmem:[%s1 + $0xd18] sm:$0xff]
  %v578 = vld [vmem:[%s1 + $0xd20] sm:$0xff]
  %v579 = vld [vmem:[%s1 + $0xd28] sm:$0xff]
  %v580 = vld [vmem:[%s1 + $0xd30] sm:$0xff]
  %v581 = vld [vmem:[%s1 + $0xd38] sm:$0xff]
  %v582 = vld [vmem:[%s1 + $0xd40] sm:$0xff]
  %v583 = vld [vmem:[%s1 + $0xd48] sm:$0xff]
  %v584 = vld [vmem:[%s1 + $0xd50] sm:$0xff]
  %v585 = vld [vmem:[%s1 + $0xd58] sm:$0xff]
  %v586 = vld [vmem:[%s1 + $0xd60] sm:$0xff]
  %v587 = vld [vmem:[%s1 + $0xd68] sm:$0xff]
  %v588 = vld [vmem:[%s1 + $0xd70] sm:$0xff]
  %v589 = vld [vmem:[%s1 + $0xd78] sm:$0xff]
  %v590 = vld [vmem:[%s1 + $0xd80] sm:$0xff]
  %v591 = vld [vmem:[%s1 + $0xd88] sm:$0xff]
  %v592 = vld [vmem:[%s1 + $0xd90] sm:$0xff]
  %v593 = vld [vmem:[%s1 + $0xd98] sm:$0xff]
  %v594 = vld [vmem:[%s1 + $0xda0] sm:$0xff]
  %v595 = vld [vmem:[%s1 + $0xda8] sm:$0xff]
  %v596 = vld [vmem:[%s1 + $0xdb0] sm:$0xff]
  %v597 = vld [vmem:[%s1 + $0xdb8] sm:$0xff]
  %v598 = vld [vmem:[%s1 + $0xdc0] sm:$0xff]
  %v599 = vld [vmem:[%s1 + $0xdc8] sm:$0xff]
  %v600 = vld [vmem:[%s1 + $0xdd0] sm:$0xff]
  %v601 = vld [vmem:[%s1 + $0xdd8] sm:$0xff]
  %v602 = vld [vmem:[%s1 + $0xde0] sm:$0xff]
  %v603 = vld [vmem:[%s1 + $0xde8] sm:$0xff]
  %v604 = vld [vmem:[%s1 + $0xdf0] sm:$0xff]
  %v605 = vld [vmem:[%s1 + $0xdf8] sm:$0xff]
  %v606 = vld [vmem:[%s1 + $0xe00] sm:$0xff]
  %v607 = vld [vmem:[%s1 + $0xe08] sm:$0xff]
  %v608 = vld [vmem:[%s1 + $0xe10] sm:$0xff]
  %v609 = vld [vmem:[%s1 + $0xe18] sm:$0xff]
  %v610 = vld [vmem:[%s1 + $0xe20] sm:$0xff]
  %v611 = vld [vmem:[%s1 + $0xe28] sm:$0xff]
  %v612 = vld [vmem:[%s1 + $0xe30] sm:$0xff]
  %v613 = vld [vmem:[%s1 + $0xe38] sm:$0xff]
  %v614 = vld [vmem:[%s1 + $0xe40] sm:$0xff]
  %v615 = vld [vmem:[%s1 + $0xe48] sm:$0xff]
  %v616 = vld [vmem:[%s1 + $0xe50] sm:$0xff]
  %v617 = vld [vmem:[%s1 + $0xe58] sm:$0xff]
  %v618 = vld [vmem:[%s1 + $0xe60] sm:$0xff]
  %v619 = vld [vmem:[%s1 + $0xe68] sm:$0xff]
  %v620 = vld [vmem:[%s1 + $0xe70] sm:$0xff]
  %v621 = vld [vmem:[%s1 + $0xe78] sm:$0xff]
  %v622 = vld [vmem:[%s1 + $0xe80] sm:$0xff]
  %v623 = vld [vmem:[%s1 + $0xe88] sm:$0xff]
  %v624 = vld [vmem:[%s1 + $0xe90] sm:$0xff]
  %v625 = vld [vmem:[%s1 + $0xe98] sm:$0xff]
  %v626 = vld [vmem:[%s1 + $0xea0] sm:$0xff]
  %v627 = vld [vmem:[%s1 + $0xea8] sm:$0xff]
  %v628 = vld [vmem:[%s1 + $0xeb0] sm:$0xff]
  %v629 = vld [vmem:[%s1 + $0xeb8] sm:$0xff]
  %v630 = vld [vmem:[%s1 + $0xec0] sm:$0xff]
  %v631 = vld [vmem:[%s1 + $0xec8] sm:$0xff]
  %v632 = vld [vmem:[%s1 + $0xed0] sm:$0xff]
  %v633 = vld [vmem:[%s1 + $0xed8] sm:$0xff]
  %v634 = vld [vmem:[%s1 + $0xee0] sm:$0xff]
  %v635 = vld [vmem:[%s1 + $0xee8] sm:$0xff]
  %v636 = vld [vmem:[%s1 + $0xef0] sm:$0xff]
  %v637 = vld [vmem:[%s1 + $0xef8] sm:$0xff]
  %v638 = vld [vmem:[%s1 + $0xf00] sm:$0xff]
  %v639 = vld [vmem:[%s1 + $0xf08] sm:$0xff]
  %v640 = vld [vmem:[%s1 + $0xf10] sm:$0xff]
  %v641 = vld [vmem:[%s1 + $0xf18] sm:$0xff]
  %v642 = vld [vmem:[%s1 + $0xf20] sm:$0xff]
  %v643 = vld [vmem:[%s1 + $0xf28] sm:$0xff]
  %v644 = vld [vmem:[%s1 + $0xf30] sm:$0xff]
  %v645 = vld [vmem:[%s1 + $0xf38] sm:$0xff]
  %v646 = vld [vmem:[%s1 + $0xf40] sm:$0xff]
  %v647 = vld [vmem:[%s1 + $0xf48] sm:$0xff]
  %v648 = vld [vmem:[%s1 + $0xf50] sm:$0xff]
  %v649 = vld [vmem:[%s1 + $0xf58] sm:$0xff]
  %v650 = vld [vmem:[%s1 + $0xf60] sm:$0xff]
  %v651 = vld [vmem:[%s1 + $0xf68] sm:$0xff]
  %v652 = vld [vmem:[%s1 + $0xf70] sm:$0xff]
  %v653 = vld [vmem:[%s1 + $0xf78] sm:$0xff]
  %v654 = vld [vmem:[%s1 + $0xf80] sm:$0xff]
  %v655 = vld [vmem:[%s1 + $0xf88] sm:$0xff]
  %v656 = vld [vmem:[%s1 + $0xf90] sm:$0xff]
  %v657 = vld [vmem:[%s1 + $0xf98] sm:$0xff]
  %v658 = vld [vmem:[%s1 + $0xfa0] sm:$0xff]
  %v659 = vld [vmem:[%s1 + $0xfa8] sm:$0xff]
  %v660 = vld [vmem:[%s1 + $0xfb0] sm:$0xff]
  %v661 = vld [vmem:[%s1 + $0xfb8] sm:$0xff]
  %v662 = vld [vmem:[%s1 + $0xfc0] sm:$0xff]
  %v663 = vld [vmem:[%s1 + $0xfc8] sm:$0xff]
  %v664 = vld [vmem:[%s1 + $0xfd0] sm:$0xff]
  %v665 = vld [vmem:[%s1 + $0xfd8] sm:$0xff]
  %v666 = vld [vmem:[%s1 + $0xfe0] sm:$0xff]
  %v667 = vld [vmem:[%s1 + $0xfe8] sm:$0xff]
  %v668 = vld [vmem:[%s1 + $0xff0] sm:$0xff]
  %v669 = vld [vmem:[%s1 + $0xff8] sm:$0xff]
  %v670 = vld [vmem:[%s1 + $0x1000] sm:$0xff]
  %v671 = vld [vmem:[%s1 + $0x1008] sm:$0xff]
  %v672 = vld [vmem:[%s1 + $0x1010] sm:$0xff]
  %v673 = vld [vmem:[%s1 + $0x1018] sm:$0xff]
  %v674 = vld [vmem:[%s1 + $0x1020] sm:$0xff]
  %v675 = vld [vmem:[%s1 + $0x1028] sm:$0xff]
  %v676 = vld [vmem:[%s1 + $0x1030] sm:$0xff]
  %v677 = vld [vmem:[%s1 + $0x1038] sm:$0xff]
  %v678 = vld [vmem:[%s1 + $0x1040] sm:$0xff]
  %v679 = vld [vmem:[%s1 + $0x1048] sm:$0xff]
  %v680 = vld [vmem:[%s1 + $0x1050] sm:$0xff]
  %v681 = vld [vmem:[%s1 + $0x1058] sm:$0xff]
  %v682 = vld [vmem:[%s1 + $0x1060] sm:$0xff]
  %v683 = vld [vmem:[%s1 + $0x1068] sm:$0xff]
  %v684 = vld [vmem:[%s1 + $0x1070] sm:$0xff]
  %v685 = vld [vmem:[%s1 + $0x1078] sm:$0xff]
  %v686 = vld [vmem:[%s1 + $0x1080] sm:$0xff]
  %v687 = vld [vmem:[%s1 + $0x1088] sm:$0xff]
  %v688 = vld [vmem:[%s1 + $0x1090] sm:$0xff]
  %v689 = vld [vmem:[%s1 + $0x1098] sm:$0xff]
  %v690 = vld [vmem:[%s1 + $0x10a0] sm:$0xff]
  %v691 = vld [vmem:[%s1 + $0x10a8] sm:$0xff]
  %v692 = vld [vmem:[%s1 + $0x10b0] sm:$0xff]
  %v693 = vld [vmem:[%s1 + $0x10b8] sm:$0xff]
  %v694 = vld [vmem:[%s1 + $0x10c0] sm:$0xff]
  %v695 = vld [vmem:[%s1 + $0x10c8] sm:$0xff]
  %v696 = vld [vmem:[%s1 + $0x10d0] sm:$0xff]
  %v697 = vld [vmem:[%s1 + $0x10d8] sm:$0xff]
  %v698 = vld [vmem:[%s1 + $0x10e0] sm:$0xff]
  %v699 = vld [vmem:[%s1 + $0x10e8] sm:$0xff]
  %v700 = vld [vmem:[%s1 + $0x10f0] sm:$0xff]
  %v701 = vld [vmem:[%s1 + $0x10f8] sm:$0xff]
  %v702 = vld [vmem:[%s1 + $0x1100] sm:$0xff]
  %v703 = vld [vmem:[%s1 + $0x1108] sm:$0xff]
  %v704 = vld [vmem:[%s1 + $0x1110] sm:$0xff]
  %v705 = vld [vmem:[%s1 + $0x1118] sm:$0xff]
  %v706 = vld [vmem:[%s1 + $0x1120] sm:$0xff]
  %v707 = vld [vmem:[%s1 + $0x1128] sm:$0xff]
  %v708 = vld [vmem:[%s1 + $0x1130] sm:$0xff]
  %v709 = vld [vmem:[%s1 + $0x1138] sm:$0xff]
  %v710 = vld [vmem:[%s1 + $0x1140] sm:$0xff]
  %v711 = vld [vmem:[%s1 + $0x1148] sm:$0xff]
  %v712 = vld [vmem:[%s1 + $0x1150] sm:$0xff]
  %v713 = vld [vmem:[%s1 + $0x1158] sm:$0xff]
  %v714 = vld [vmem:[%s1 + $0x1160] sm:$0xff]
  %v715 = vld [vmem:[%s1 + $0x1168] sm:$0xff]
  %v716 = vld [vmem:[%s1 + $0x1170] sm:$0xff]
  %v717 = vld [vmem:[%s1 + $0x1178] sm:$0xff]
  %v718 = vld [vmem:[%s1 + $0x1180] sm:$0xff]
  %v719 = vld [vmem:[%s1 + $0x1188] sm:$0xff]
  %v720 = vld [vmem:[%s1 + $0x1190] sm:$0xff]
  %v721 = vld [vmem:[%s1 + $0x1198] sm:$0xff]
  %v722 = vld [vmem:[%s1 + $0x11a0] sm:$0xff]
  %v723 = vld [vmem:[%s1 + $0x11a8] sm:$0xff]
  %v724 = vld [vmem:[%s1 + $0x11b0] sm:$0xff]
  %v725 = vld [vmem:[%s1 + $0x11b8] sm:$0xff]
  %v726 = vld [vmem:[%s1 + $0x11c0] sm:$0xff]
  %v727 = vld [vmem:[%s1 + $0x11c8] sm:$0xff]
  %v728 = vld [vmem:[%s1 + $0x11d0] sm:$0xff]
  %v729 = vld [vmem:[%s1 + $0x11d8] sm:$0xff]
  %v730 = vld [vmem:[%s1 + $0x11e0] sm:$0xff]
  %v731 = vld [vmem:[%s1 + $0x11e8] sm:$0xff]
  %v732 = vld [vmem:[%s1 + $0x11f0] sm:$0xff]
  %v733 = vld [vmem:[%s1 + $0x11f8] sm:$0xff]
  %v734 = vld [vmem:[%s2] sm:$0xf]
  %v736 = vlaneseq
  %v737 = vshrl.u32 %v736, 7
  %v738 = vsub.s32 0, %v737
  %v739 = vrot.slane %v734, %v738
  %v740 = vlaneseq
  %v741 = vshrl.u32 %v740, 7
  %v742 = vsub.s32 1, %v741
  %v743 = vrot.slane %v734, %v742
  %v744 = vlaneseq
  %v745 = vshrl.u32 %v744, 7
  %v746 = vsub.s32 2, %v745
  %v747 = vrot.slane %v734, %v746
  %v748 = vlaneseq
  %v749 = vshrl.u32 %v748, 7
  %v750 = vsub.s32 3, %v749
  %v751 = vrot.slane %v734, %v750
  %756 = vmatprep.subr.mxu0 %v159
  %757 = vmatpush1.msra.mxu0 %v158
  %758 = vmatprep.subr.mxu0 %v163
  %759 = vmatpush1.msra.mxu0 %v162
  %760 = vmatprep.subr.mxu0 %v167
  %761 = vmatpush1.msra.mxu0 %v166
  %762 = vmatprep.subr.mxu0 %v171
  %763 = vmatpush1.msra.mxu0 %v170
  %764 = vmatprep.subr.mxu0 %v175
  %765 = vmatpush1.msra.mxu0 %v174
  %766 = vmatprep.subr.mxu0 %v179
  %767 = vmatpush1.msra.mxu0 %v178
  %768 = vmatprep.subr.mxu0 %v183
  %769 = vmatpush1.msra.mxu0 %v182
  %770 = vmatprep.subr.mxu0 %v187
  %771 = vmatpush1.msra.mxu0 %v186
  %772 = vmatprep.subr.mxu0 %v191
  %773 = vmatpush1.msra.mxu0 %v190
  %774 = vmatprep.subr.mxu0 %v195
  %775 = vmatpush1.msra.mxu0 %v194
  %776 = vmatprep.subr.mxu0 %v199
  %777 = vmatpush1.msra.mxu0 %v198
  %778 = vmatprep.subr.mxu0 %v203
  %779 = vmatpush1.msra.mxu0 %v202
  %780 = vmatprep.subr.mxu0 %v207
  %781 = vmatpush1.msra.mxu0 %v206
  %782 = vmatprep.subr.mxu0 %v211
  %783 = vmatpush1.msra.mxu0 %v210
  %784 = vmatprep.subr.mxu0 %v215
  %785 = vmatpush1.msra.mxu0 %v214
  %786 = vmatprep.subr.mxu0 %v219
  %787 = vmatpush1.msra.mxu0 %v218
  %788 = vmatprep.subr.mxu0 %v223
  %789 = vmatpush1.msra.mxu0 %v222
  %790 = vmatprep.subr.mxu0 %v227
  %791 = vmatpush1.msra.mxu0 %v226
  %792 = vmatprep.subr.mxu0 %v231
  %793 = vmatpush1.msra.mxu0 %v230
  %794 = vmatprep.subr.mxu0 %v235
  %795 = vmatpush1.msra.mxu0 %v234
  %796 = vmatprep.subr.mxu0 %v239
  %797 = vmatpush1.msra.mxu0 %v238
  %798 = vmatprep.subr.mxu0 %v243
  %799 = vmatpush1.msra.mxu0 %v242
  %800 = vmatprep.subr.mxu0 %v247
  %801 = vmatpush1.msra.mxu0 %v246
  %802 = vmatprep.subr.mxu0 %v251
  %803 = vmatpush1.msra.mxu0 %v250
  %804 = vmatprep.subr.mxu0 %v255
  %805 = vmatpush1.msra.mxu0 %v254
  %806 = vmatprep.subr.mxu0 %v259
  %807 = vmatpush1.msra.mxu0 %v258
  %808 = vmatprep.subr.mxu0 %v263
  %809 = vmatpush1.msra.mxu0 %v262
  %810 = vmatprep.subr.mxu0 %v267
  %811 = vmatpush1.msra.mxu0 %v266
  %812 = vmatprep.subr.mxu0 %v271
  %813 = vmatpush1.msra.mxu0 %v270
  %814 = vmatprep.subr.mxu0 %v275
  %815 = vmatpush1.msra.mxu0 %v274
  %816 = vmatprep.subr.mxu0 %v279
  %817 = vmatpush1.msra.mxu0 %v278
  %818 = vmatprep.subr.mxu0 %v283
  %819 = vmatpush1.msra.mxu0 %v282
  %820 = vmatprep.mubr.f32.mxu0 %v15
  %821 = vmatmul.mubr.f32.gmra.mrb[0].mxu0 %v14
  %v822 = vpop.f32.mrb[0].mxu0
  %v823 = vadd.f32 %v739, %v822
  %v824 = vpop.f32.mrb[0].mxu0
  %v825 = vadd.f32 %v743, %v824
  %826 = vmatprep.mubr.f32.mxu0 %v24
  %827 = vmatmul.mubr.f32.gmra.mrb[0].mxu0 %v23
  %v828 = vpop.f32.mrb[0].mxu0
  %v829 = vadd.f32 %v739, %v828
  %v830 = vpop.f32.mrb[0].mxu0
  %v831 = vadd.f32 %v743, %v830
  %832 = vmatprep.mubr.f32.mxu0 %v33
  %833 = vmatmul.mubr.f32.gmra.mrb[0].mxu0 %v32
  %v834 = vpop.f32.mrb[0].mxu0
  %v835 = vadd.f32 %v739, %v834
  %v836 = vpop.f32.mrb[0].mxu0
  %v837 = vadd.f32 %v743, %v836
  %838 = vmatprep.mubr.f32.mxu0 %v42
  %839 = vmatmul.mubr.f32.gmra.mrb[0].mxu0 %v41
  %v840 = vpop.f32.mrb[0].mxu0
  %v841 = vadd.f32 %v739, %v840
  %v842 = vpop.f32.mrb[0].mxu0
  %v843 = vadd.f32 %v743, %v842
  %844 = vmatprep.mubr.f32.mxu0 %v51
  %845 = vmatmul.mubr.f32.gmra.mrb[0].mxu0 %v50
  %v846 = vpop.f32.mrb[0].mxu0
  %v847 = vadd.f32 %v739, %v846
  %v848 = vpop.f32.mrb[0].mxu0
  %v849 = vadd.f32 %v743, %v848
  %850 = vmatprep.mubr.f32.mxu0 %v60
  %851 = vmatmul.mubr.f32.gmra.mrb[0].mxu0 %v59
  %v852 = vpop.f32.mrb[0].mxu0
  %v853 = vadd.f32 %v739, %v852
  %v854 = vpop.f32.mrb[0].mxu0
  %v855 = vadd.f32 %v743, %v854
  %856 = vmatprep.mubr.f32.mxu0 %v69
  %857 = vmatmul.mubr.f32.gmra.mrb[0].mxu0 %v68
  %v858 = vpop.f32.mrb[0].mxu0
  %v859 = vadd.f32 %v739, %v858
  %v860 = vpop.f32.mrb[0].mxu0
  %v861 = vadd.f32 %v743, %v860
  %862 = vmatprep.mubr.f32.mxu0 %v78
  %863 = vmatmul.mubr.f32.gmra.mrb[0].mxu0 %v77
  %v864 = vpop.f32.mrb[0].mxu0
  %v865 = vadd.f32 %v739, %v864
  %v866 = vpop.f32.mrb[0].mxu0
  %v867 = vadd.f32 %v743, %v866
  %868 = vmatprep.mubr.f32.mxu0 %v87
  %869 = vmatmul.mubr.f32.gmra.mrb[0].mxu0 %v86
  %v870 = vpop.f32.mrb[0].mxu0
  %v871 = vadd.f32 %v739, %v870
  %v872 = vpop.f32.mrb[0].mxu0
  %v873 = vadd.f32 %v743, %v872
  %874 = vmatprep.mubr.f32.mxu0 %v96
  %875 = vmatmul.mubr.f32.gmra.mrb[0].mxu0 %v95
  %v876 = vpop.f32.mrb[0].mxu0
  %v877 = vadd.f32 %v739, %v876
  %v878 = vpop.f32.mrb[0].mxu0
  %v879 = vadd.f32 %v743, %v878
  %880 = vmatprep.mubr.f32.mxu0 %v105
  %881 = vmatmul.mubr.f32.gmra.mrb[0].mxu0 %v104
  %v882 = vpop.f32.mrb[0].mxu0
  %v883 = vadd.f32 %v739, %v882
  %v884 = vpop.f32.mrb[0].mxu0
  %v885 = vadd.f32 %v743, %v884
  %886 = vmatprep.mubr.f32.mxu0 %v114
  %887 = vmatmul.mubr.f32.gmra.mrb[0].mxu0 %v113
  %v888 = vpop.f32.mrb[0].mxu0
  %v889 = vadd.f32 %v739, %v888
  %v890 = vpop.f32.mrb[0].mxu0
  %v891 = vadd.f32 %v743, %v890
  %892 = vmatprep.mubr.f32.mxu0 %v123
  %893 = vmatmul.mubr.f32.gmra.mrb[0].mxu0 %v122
  %v894 = vpop.f32.mrb[0].mxu0
  %v895 = vadd.f32 %v739, %v894
  %v896 = vpop.f32.mrb[0].mxu0
  %v897 = vadd.f32 %v743, %v896
  %898 = vmatprep.mubr.f32.mxu0 %v132
  %899 = vmatmul.mubr.f32.gmra.mrb[0].mxu0 %v131
  %v900 = vpop.f32.mrb[0].mxu0
  %v901 = vadd.f32 %v739, %v900
  %v902 = vpop.f32.mrb[0].mxu0
  %v903 = vadd.f32 %v743, %v902
  %904 = vmatprep.mubr.f32.mxu0 %v141
  %905 = vmatmul.mubr.f32.gmra.mrb[0].mxu0 %v140
  %v906 = vpop.f32.mrb[0].mxu0
  %v907 = vadd.f32 %v739, %v906
  %v908 = vpop.f32.mrb[0].mxu0
  %v909 = vadd.f32 %v743, %v908
  %910 = vmatprep.mubr.f32.mxu0 %v150
  %911 = vmatmul.mubr.f32.gmra.mrb[0].mxu0 %v149
  %v912 = vpop.f32.mrb[0].mxu0
  %v913 = vadd.f32 %v739, %v912
  %v914 = vpop.f32.mrb[0].mxu0
  %v915 = vadd.f32 %v743, %v914
  %916 = vdwg.mxu0
  %917 = vmatprep.subr.mxu0 %v287
  %918 = vmatpush1.msra.mxu0 %v286
  %919 = vmatprep.subr.mxu0 %v291
  %920 = vmatpush1.msra.mxu0 %v290
  %921 = vmatprep.subr.mxu0 %v295
  %922 = vmatpush1.msra.mxu0 %v294
  %923 = vmatprep.subr.mxu0 %v299
  %924 = vmatpush1.msra.mxu0 %v298
  %925 = vmatprep.subr.mxu0 %v303
  %926 = vmatpush1.msra.mxu0 %v302
  %927 = vmatprep.subr.mxu0 %v307
  %928 = vmatpush1.msra.mxu0 %v306
  %929 = vmatprep.subr.mxu0 %v311
  %930 = vmatpush1.msra.mxu0 %v310
  %931 = vmatprep.subr.mxu0 %v315
  %932 = vmatpush1.msra.mxu0 %v314
  %933 = vmatprep.subr.mxu0 %v319
  %934 = vmatpush1.msra.mxu0 %v318
  %935 = vmatprep.subr.mxu0 %v323
  %936 = vmatpush1.msra.mxu0 %v322
  %937 = vmatprep.subr.mxu0 %v327
  %938 = vmatpush1.msra.mxu0 %v326
  %939 = vmatprep.subr.mxu0 %v331
  %940 = vmatpush1.msra.mxu0 %v330
  %941 = vmatprep.subr.mxu0 %v335
  %942 = vmatpush1.msra.mxu0 %v334
  %943 = vmatprep.subr.mxu0 %v339
  %944 = vmatpush1.msra.mxu0 %v338
  %945 = vmatprep.subr.mxu0 %v343
  %946 = vmatpush1.msra.mxu0 %v342
  %947 = vmatprep.subr.mxu0 %v347
  %948 = vmatpush1.msra.mxu0 %v346
  %949 = vmatprep.subr.mxu0 %v351
  %950 = vmatpush1.msra.mxu0 %v350
  %951 = vmatprep.subr.mxu0 %v355
  %952 = vmatpush1.msra.mxu0 %v354
  %953 = vmatprep.subr.mxu0 %v359
  %954 = vmatpush1.msra.mxu0 %v358
  %955 = vmatprep.subr.mxu0 %v363
  %956 = vmatpush1.msra.mxu0 %v362
  %957 = vmatprep.subr.mxu0 %v367
  %958 = vmatpush1.msra.mxu0 %v366
  %959 = vmatprep.subr.mxu0 %v371
  %960 = vmatpush1.msra.mxu0 %v370
  %961 = vmatprep.subr.mxu0 %v375
  %962 = vmatpush1.msra.mxu0 %v374
  %963 = vmatprep.subr.mxu0 %v379
  %964 = vmatpush1.msra.mxu0 %v378
  %965 = vmatprep.subr.mxu0 %v383
  %966 = vmatpush1.msra.mxu0 %v382
  %967 = vmatprep.subr.mxu0 %v387
  %968 = vmatpush1.msra.mxu0 %v386
  %969 = vmatprep.subr.mxu0 %v391
  %970 = vmatpush1.msra.mxu0 %v390
  %971 = vmatprep.subr.mxu0 %v395
  %972 = vmatpush1.msra.mxu0 %v394
  %973 = vmatprep.subr.mxu0 %v399
  %974 = vmatpush1.msra.mxu0 %v398
  %975 = vmatprep.subr.mxu0 %v403
  %976 = vmatpush1.msra.mxu0 %v402
  %977 = vmatprep.subr.mxu0 %v407
  %978 = vmatpush1.msra.mxu0 %v406
  %979 = vmatprep.subr.mxu0 %v411
  %980 = vmatpush1.msra.mxu0 %v410
  %981 = vmatprep.mubr.f32.mxu0 %v17
  %982 = vmatmul.mubr.f32.gmra.mrb[0].mxu0 %v16
  %v983 = vpop.f32.mrb[0].mxu0
  %v984 = vadd.f32 %v823, %v983
  %v985 = vpop.f32.mrb[0].mxu0
  %v986 = vadd.f32 %v825, %v985
  %987 = vmatprep.mubr.f32.mxu0 %v26
  %988 = vmatmul.mubr.f32.gmra.mrb[0].mxu0 %v25
  %v989 = vpop.f32.mrb[0].mxu0
  %v990 = vadd.f32 %v829, %v989
  %v991 = vpop.f32.mrb[0].mxu0
  %v992 = vadd.f32 %v831, %v991
  %993 = vmatprep.mubr.f32.mxu0 %v35
  %994 = vmatmul.mubr.f32.gmra.mrb[0].mxu0 %v34
  %v995 = vpop.f32.mrb[0].mxu0
  %v996 = vadd.f32 %v835, %v995
  %v997 = vpop.f32.mrb[0].mxu0
  %v998 = vadd.f32 %v837, %v997
  %999 = vmatprep.mubr.f32.mxu0 %v44
  %1000 = vmatmul.mubr.f32.gmra.mrb[0].mxu0 %v43
  %v1001 = vpop.f32.mrb[0].mxu0
  %v1002 = vadd.f32 %v841, %v1001
  %v1003 = vpop.f32.mrb[0].mxu0
  %v1004 = vadd.f32 %v843, %v1003
  %1005 = vmatprep.mubr.f32.mxu0 %v53
  %1006 = vmatmul.mubr.f32.gmra.mrb[0].mxu0 %v52
  %v1007 = vpop.f32.mrb[0].mxu0
  %v1008 = vadd.f32 %v847, %v1007
  %v1009 = vpop.f32.mrb[0].mxu0
  %v1010 = vadd.f32 %v849, %v1009
  %1011 = vmatprep.mubr.f32.mxu0 %v62
  %1012 = vmatmul.mubr.f32.gmra.mrb[0].mxu0 %v61
  %v1013 = vpop.f32.mrb[0].mxu0
  %v1014 = vadd.f32 %v853, %v1013
  %v1015 = vpop.f32.mrb[0].mxu0
  %v1016 = vadd.f32 %v855, %v1015
  %1017 = vmatprep.mubr.f32.mxu0 %v71
  %1018 = vmatmul.mubr.f32.gmra.mrb[0].mxu0 %v70
  %v1019 = vpop.f32.mrb[0].mxu0
  %v1020 = vadd.f32 %v859, %v1019
  %v1021 = vpop.f32.mrb[0].mxu0
  %v1022 = vadd.f32 %v861, %v1021
  %1023 = vmatprep.mubr.f32.mxu0 %v80
  %1024 = vmatmul.mubr.f32.gmra.mrb[0].mxu0 %v79
  %v1025 = vpop.f32.mrb[0].mxu0
  %v1026 = vadd.f32 %v865, %v1025
  %v1027 = vpop.f32.mrb[0].mxu0
  %v1028 = vadd.f32 %v867, %v1027
  %1029 = vmatprep.mubr.f32.mxu0 %v89
  %1030 = vmatmul.mubr.f32.gmra.mrb[0].mxu0 %v88
  %v1031 = vpop.f32.mrb[0].mxu0
  %v1032 = vadd.f32 %v871, %v1031
  %v1033 = vpop.f32.mrb[0].mxu0
  %v1034 = vadd.f32 %v873, %v1033
  %1035 = vmatprep.mubr.f32.mxu0 %v98
  %1036 = vmatmul.mubr.f32.gmra.mrb[0].mxu0 %v97
  %v1037 = vpop.f32.mrb[0].mxu0
  %v1038 = vadd.f32 %v877, %v1037
  %v1039 = vpop.f32.mrb[0].mxu0
  %v1040 = vadd.f32 %v879, %v1039
  %1041 = vmatprep.mubr.f32.mxu0 %v107
  %1042 = vmatmul.mubr.f32.gmra.mrb[0].mxu0 %v106
  %v1043 = vpop.f32.mrb[0].mxu0
  %v1044 = vadd.f32 %v883, %v1043
  %v1045 = vpop.f32.mrb[0].mxu0
  %v1046 = vadd.f32 %v885, %v1045
  %1047 = vmatprep.mubr.f32.mxu0 %v116
  %1048 = vmatmul.mubr.f32.gmra.mrb[0].mxu0 %v115
  %v1049 = vpop.f32.mrb[0].mxu0
  %v1050 = vadd.f32 %v889, %v1049
  %v1051 = vpop.f32.mrb[0].mxu0
  %v1052 = vadd.f32 %v891, %v1051
  %1053 = vmatprep.mubr.f32.mxu0 %v125
  %1054 = vmatmul.mubr.f32.gmra.mrb[0].mxu0 %v124
  %v1055 = vpop.f32.mrb[0].mxu0
  %v1056 = vadd.f32 %v895, %v1055
  %v1057 = vpop.f32.mrb[0].mxu0
  %v1058 = vadd.f32 %v897, %v1057
  %1059 = vmatprep.mubr.f32.mxu0 %v134
  %1060 = vmatmul.mubr.f32.gmra.mrb[0].mxu0 %v133
  %v1061 = vpop.f32.mrb[0].mxu0
  %v1062 = vadd.f32 %v901, %v1061
  %v1063 = vpop.f32.mrb[0].mxu0
  %v1064 = vadd.f32 %v903, %v1063
  %1065 = vmatprep.mubr.f32.mxu0 %v143
  %1066 = vmatmul.mubr.f32.gmra.mrb[0].mxu0 %v142
  %v1067 = vpop.f32.mrb[0].mxu0
  %v1068 = vadd.f32 %v907, %v1067
  %v1069 = vpop.f32.mrb[0].mxu0
  %v1070 = vadd.f32 %v909, %v1069
  %1071 = vmatprep.mubr.f32.mxu0 %v152
  %1072 = vmatmul.mubr.f32.gmra.mrb[0].mxu0 %v151
  %v1073 = vpop.f32.mrb[0].mxu0
  %v1074 = vadd.f32 %v913, %v1073
  %v1075 = vpop.f32.mrb[0].mxu0
  %v1076 = vadd.f32 %v915, %v1075
  %1077 = vdwg.mxu0
  %1078 = vmatprep.subr.mxu0 %v415
  %1079 = vmatpush1.msra.mxu0 %v414
  %1080 = vmatprep.subr.mxu0 %v419
  %1081 = vmatpush1.msra.mxu0 %v418
  %1082 = vmatprep.subr.mxu0 %v423
  %1083 = vmatpush1.msra.mxu0 %v422
  %1084 = vmatprep.subr.mxu0 %v427
  %1085 = vmatpush1.msra.mxu0 %v426
  %1086 = vmatprep.subr.mxu0 %v431
  %1087 = vmatpush1.msra.mxu0 %v430
  %1088 = vmatprep.subr.mxu0 %v435
  %1089 = vmatpush1.msra.mxu0 %v434
  %1090 = vmatprep.subr.mxu0 %v439
  %1091 = vmatpush1.msra.mxu0 %v438
  %1092 = vmatprep.subr.mxu0 %v443
  %1093 = vmatpush1.msra.mxu0 %v442
  %1094 = vmatprep.subr.mxu0 %v447
  %1095 = vmatpush1.msra.mxu0 %v446
  %1096 = vmatprep.subr.mxu0 %v451
  %1097 = vmatpush1.msra.mxu0 %v450
  %1098 = vmatprep.subr.mxu0 %v455
  %1099 = vmatpush1.msra.mxu0 %v454
  %1100 = vmatprep.subr.mxu0 %v459
  %1101 = vmatpush1.msra.mxu0 %v458
  %1102 = vmatprep.subr.mxu0 %v463
  %1103 = vmatpush1.msra.mxu0 %v462
  %1104 = vmatprep.subr.mxu0 %v467
  %1105 = vmatpush1.msra.mxu0 %v466
  %1106 = vmatprep.subr.mxu0 %v471
  %1107 = vmatpush1.msra.mxu0 %v470
  %1108 = vmatprep.subr.mxu0 %v475
  %1109 = vmatpush1.msra.mxu0 %v474
  %1110 = vmatprep.subr.mxu0 %v479
  %1111 = vmatpush1.msra.mxu0 %v478
  %1112 = vmatprep.subr.mxu0 %v483
  %1113 = vmatpush1.msra.mxu0 %v482
  %1114 = vmatprep.subr.mxu0 %v487
  %1115 = vmatpush1.msra.mxu0 %v486
  %1116 = vmatprep.subr.mxu0 %v491
  %1117 = vmatpush1.msra.mxu0 %v490
  %1118 = vmatprep.subr.mxu0 %v495
  %1119 = vmatpush1.msra.mxu0 %v494
  %1120 = vmatprep.subr.mxu0 %v499
  %1121 = vmatpush1.msra.mxu0 %v498
  %1122 = vmatprep.subr.mxu0 %v503
  %1123 = vmatpush1.msra.mxu0 %v502
  %1124 = vmatprep.subr.mxu0 %v507
  %1125 = vmatpush1.msra.mxu0 %v506
  %1126 = vmatprep.subr.mxu0 %v511
  %1127 = vmatpush1.msra.mxu0 %v510
  %1128 = vmatprep.subr.mxu0 %v515
  %1129 = vmatpush1.msra.mxu0 %v514
  %1130 = vmatprep.subr.mxu0 %v519
  %1131 = vmatpush1.msra.mxu0 %v518
  %1132 = vmatprep.subr.mxu0 %v523
  %1133 = vmatpush1.msra.mxu0 %v522
  %1134 = vmatprep.subr.mxu0 %v527
  %1135 = vmatpush1.msra.mxu0 %v526
  %1136 = vmatprep.subr.mxu0 %v531
  %1137 = vmatpush1.msra.mxu0 %v530
  %1138 = vmatprep.subr.mxu0 %v535
  %1139 = vmatpush1.msra.mxu0 %v534
  %1140 = vmatprep.subr.mxu0 %v539
  %1141 = vmatpush1.msra.mxu0 %v538
  %1142 = vmatprep.mubr.f32.mxu0 %v19
  %1143 = vmatmul.mubr.f32.gmra.mrb[0].mxu0 %v18
  %v1144 = vpop.f32.mrb[0].mxu0
  %v1145 = vadd.f32 %v984, %v1144
  %v1146 = vpop.f32.mrb[0].mxu0
  %v1147 = vadd.f32 %v986, %v1146
  %1148 = vmatprep.mubr.f32.mxu0 %v28
  %1149 = vmatmul.mubr.f32.gmra.mrb[0].mxu0 %v27
  %v1150 = vpop.f32.mrb[0].mxu0
  %v1151 = vadd.f32 %v990, %v1150
  %v1152 = vpop.f32.mrb[0].mxu0
  %v1153 = vadd.f32 %v992, %v1152
  %1154 = vmatprep.mubr.f32.mxu0 %v37
  %1155 = vmatmul.mubr.f32.gmra.mrb[0].mxu0 %v36
  %v1156 = vpop.f32.mrb[0].mxu0
  %v1157 = vadd.f32 %v996, %v1156
  %v1158 = vpop.f32.mrb[0].mxu0
  %v1159 = vadd.f32 %v998, %v1158
  %1160 = vmatprep.mubr.f32.mxu0 %v46
  %1161 = vmatmul.mubr.f32.gmra.mrb[0].mxu0 %v45
  %v1162 = vpop.f32.mrb[0].mxu0
  %v1163 = vadd.f32 %v1002, %v1162
  %v1164 = vpop.f32.mrb[0].mxu0
  %v1165 = vadd.f32 %v1004, %v1164
  %1166 = vmatprep.mubr.f32.mxu0 %v55
  %1167 = vmatmul.mubr.f32.gmra.mrb[0].mxu0 %v54
  %v1168 = vpop.f32.mrb[0].mxu0
  %v1169 = vadd.f32 %v1008, %v1168
  %v1170 = vpop.f32.mrb[0].mxu0
  %v1171 = vadd.f32 %v1010, %v1170
  %1172 = vmatprep.mubr.f32.mxu0 %v64
  %1173 = vmatmul.mubr.f32.gmra.mrb[0].mxu0 %v63
  %v1174 = vpop.f32.mrb[0].mxu0
  %v1175 = vadd.f32 %v1014, %v1174
  %v1176 = vpop.f32.mrb[0].mxu0
  %v1177 = vadd.f32 %v1016, %v1176
  %1178 = vmatprep.mubr.f32.mxu0 %v73
  %1179 = vmatmul.mubr.f32.gmra.mrb[0].mxu0 %v72
  %v1180 = vpop.f32.mrb[0].mxu0
  %v1181 = vadd.f32 %v1020, %v1180
  %v1182 = vpop.f32.mrb[0].mxu0
  %v1183 = vadd.f32 %v1022, %v1182
  %1184 = vmatprep.mubr.f32.mxu0 %v82
  %1185 = vmatmul.mubr.f32.gmra.mrb[0].mxu0 %v81
  %v1186 = vpop.f32.mrb[0].mxu0
  %v1187 = vadd.f32 %v1026, %v1186
  %v1188 = vpop.f32.mrb[0].mxu0
  %v1189 = vadd.f32 %v1028, %v1188
  %1190 = vmatprep.mubr.f32.mxu0 %v91
  %1191 = vmatmul.mubr.f32.gmra.mrb[0].mxu0 %v90
  %v1192 = vpop.f32.mrb[0].mxu0
  %v1193 = vadd.f32 %v1032, %v1192
  %v1194 = vpop.f32.mrb[0].mxu0
  %v1195 = vadd.f32 %v1034, %v1194
  %1196 = vmatprep.mubr.f32.mxu0 %v100
  %1197 = vmatmul.mubr.f32.gmra.mrb[0].mxu0 %v99
  %v1198 = vpop.f32.mrb[0].mxu0
  %v1199 = vadd.f32 %v1038, %v1198
  %v1200 = vpop.f32.mrb[0].mxu0
  %v1201 = vadd.f32 %v1040, %v1200
  %1202 = vmatprep.mubr.f32.mxu0 %v109
  %1203 = vmatmul.mubr.f32.gmra.mrb[0].mxu0 %v108
  %v1204 = vpop.f32.mrb[0].mxu0
  %v1205 = vadd.f32 %v1044, %v1204
  %v1206 = vpop.f32.mrb[0].mxu0
  %v1207 = vadd.f32 %v1046, %v1206
  %1208 = vmatprep.mubr.f32.mxu0 %v118
  %1209 = vmatmul.mubr.f32.gmra.mrb[0].mxu0 %v117
  %v1210 = vpop.f32.mrb[0].mxu0
  %v1211 = vadd.f32 %v1050, %v1210
  %v1212 = vpop.f32.mrb[0].mxu0
  %v1213 = vadd.f32 %v1052, %v1212
  %1214 = vmatprep.mubr.f32.mxu0 %v127
  %1215 = vmatmul.mubr.f32.gmra.mrb[0].mxu0 %v126
  %v1216 = vpop.f32.mrb[0].mxu0
  %v1217 = vadd.f32 %v1056, %v1216
  %v1218 = vpop.f32.mrb[0].mxu0
  %v1219 = vadd.f32 %v1058, %v1218
  %1220 = vmatprep.mubr.f32.mxu0 %v136
  %1221 = vmatmul.mubr.f32.gmra.mrb[0].mxu0 %v135
  %v1222 = vpop.f32.mrb[0].mxu0
  %v1223 = vadd.f32 %v1062, %v1222
  %v1224 = vpop.f32.mrb[0].mxu0
  %v1225 = vadd.f32 %v1064, %v1224
  %1226 = vmatprep.mubr.f32.mxu0 %v145
  %1227 = vmatmul.mubr.f32.gmra.mrb[0].mxu0 %v144
  %v1228 = vpop.f32.mrb[0].mxu0
  %v1229 = vadd.f32 %v1068, %v1228
  %v1230 = vpop.f32.mrb[0].mxu0
  %v1231 = vadd.f32 %v1070, %v1230
  %1232 = vmatprep.mubr.f32.mxu0 %v154
  %1233 = vmatmul.mubr.f32.gmra.mrb[0].mxu0 %v153
  %v1234 = vpop.f32.mrb[0].mxu0
  %v1235 = vadd.f32 %v1074, %v1234
  %v1236 = vpop.f32.mrb[0].mxu0
  %v1237 = vadd.f32 %v1076, %v1236
  %1238 = vdwg.mxu0
  %1239 = vmatprep.subr.mxu0 %v543
  %1240 = vmatpush1.msra.mxu0 %v542
  %1241 = vmatprep.subr.mxu0 %v547
  %1242 = vmatpush1.msra.mxu0 %v546
  %1243 = vmatprep.subr.mxu0 %v551
  %1244 = vmatpush1.msra.mxu0 %v550
  %1245 = vmatprep.subr.mxu0 %v555
  %1246 = vmatpush1.msra.mxu0 %v554
  %1247 = vmatprep.subr.mxu0 %v559
  %1248 = vmatpush1.msra.mxu0 %v558
  %1249 = vmatprep.subr.mxu0 %v563
  %1250 = vmatpush1.msra.mxu0 %v562
  %1251 = vmatprep.subr.mxu0 %v567
  %1252 = vmatpush1.msra.mxu0 %v566
  %1253 = vmatprep.subr.mxu0 %v571
  %1254 = vmatpush1.msra.mxu0 %v570
  %1255 = vmatprep.subr.mxu0 %v575
  %1256 = vmatpush1.msra.mxu0 %v574
  %1257 = vmatprep.subr.mxu0 %v579
  %1258 = vmatpush1.msra.mxu0 %v578
  %1259 = vmatprep.subr.mxu0 %v583
  %1260 = vmatpush1.msra.mxu0 %v582
  %1261 = vmatprep.subr.mxu0 %v587
  %1262 = vmatpush1.msra.mxu0 %v586
  %1263 = vmatprep.subr.mxu0 %v591
  %1264 = vmatpush1.msra.mxu0 %v590
  %1265 = vmatprep.subr.mxu0 %v595
  %1266 = vmatpush1.msra.mxu0 %v594
  %1267 = vmatprep.subr.mxu0 %v599
  %1268 = vmatpush1.msra.mxu0 %v598
  %1269 = vmatprep.subr.mxu0 %v603
  %1270 = vmatpush1.msra.mxu0 %v602
  %1271 = vmatprep.subr.mxu0 %v607
  %1272 = vmatpush1.msra.mxu0 %v606
  %1273 = vmatprep.subr.mxu0 %v611
  %1274 = vmatpush1.msra.mxu0 %v610
  %1275 = vmatprep.subr.mxu0 %v615
  %1276 = vmatpush1.msra.mxu0 %v614
  %1277 = vmatprep.subr.mxu0 %v619
  %1278 = vmatpush1.msra.mxu0 %v618
  %1279 = vmatprep.subr.mxu0 %v623
  %1280 = vmatpush1.msra.mxu0 %v622
  %1281 = vmatprep.subr.mxu0 %v627
  %1282 = vmatpush1.msra.mxu0 %v626
  %1283 = vmatprep.subr.mxu0 %v631
  %1284 = vmatpush1.msra.mxu0 %v630
  %1285 = vmatprep.subr.mxu0 %v635
  %1286 = vmatpush1.msra.mxu0 %v634
  %1287 = vmatprep.subr.mxu0 %v639
  %1288 = vmatpush1.msra.mxu0 %v638
  %1289 = vmatprep.subr.mxu0 %v643
  %1290 = vmatpush1.msra.mxu0 %v642
  %1291 = vmatprep.subr.mxu0 %v647
  %1292 = vmatpush1.msra.mxu0 %v646
  %1293 = vmatprep.subr.mxu0 %v651
  %1294 = vmatpush1.msra.mxu0 %v650
  %1295 = vmatprep.subr.mxu0 %v655
  %1296 = vmatpush1.msra.mxu0 %v654
  %1297 = vmatprep.subr.mxu0 %v659
  %1298 = vmatpush1.msra.mxu0 %v658
  %1299 = vmatprep.subr.mxu0 %v663
  %1300 = vmatpush1.msra.mxu0 %v662
  %1301 = vmatprep.subr.mxu0 %v667
  %1302 = vmatpush1.msra.mxu0 %v666
  %1303 = vmatprep.mubr.f32.mxu0 %v21
  %1304 = vmatmul.mubr.f32.gmra.mrb[0].mxu0 %v20
  %v1305 = vpop.f32.mrb[0].mxu0
  %v1306 = vadd.f32 %v1145, %v1305
  %v1307 = vpop.f32.mrb[0].mxu0
  %v1308 = vadd.f32 %v1147, %v1307
  %1309 = vmatprep.mubr.f32.mxu0 %v30
  %1310 = vmatmul.mubr.f32.gmra.mrb[0].mxu0 %v29
  %v1311 = vpop.f32.mrb[0].mxu0
  %v1312 = vadd.f32 %v1151, %v1311
  %v1313 = vpop.f32.mrb[0].mxu0
  %v1314 = vadd.f32 %v1153, %v1313
  %1315 = vmatprep.mubr.f32.mxu0 %v39
  %1316 = vmatmul.mubr.f32.gmra.mrb[0].mxu0 %v38
  %v1317 = vpop.f32.mrb[0].mxu0
  %v1318 = vadd.f32 %v1157, %v1317
  %v1319 = vpop.f32.mrb[0].mxu0
  %v1320 = vadd.f32 %v1159, %v1319
  %1321 = vmatprep.mubr.f32.mxu0 %v48
  %1322 = vmatmul.mubr.f32.gmra.mrb[0].mxu0 %v47
  %v1323 = vpop.f32.mrb[0].mxu0
  %v1324 = vadd.f32 %v1163, %v1323
  %v1325 = vpop.f32.mrb[0].mxu0
  %v1326 = vadd.f32 %v1165, %v1325
  %1327 = vmatprep.mubr.f32.mxu0 %v57
  %1328 = vmatmul.mubr.f32.gmra.mrb[0].mxu0 %v56
  %v1329 = vpop.f32.mrb[0].mxu0
  %v1330 = vadd.f32 %v1169, %v1329
  %v1331 = vpop.f32.mrb[0].mxu0
  %v1332 = vadd.f32 %v1171, %v1331
  %1333 = vmatprep.mubr.f32.mxu0 %v66
  %1334 = vmatmul.mubr.f32.gmra.mrb[0].mxu0 %v65
  %v1335 = vpop.f32.mrb[0].mxu0
  %v1336 = vadd.f32 %v1175, %v1335
  %v1337 = vpop.f32.mrb[0].mxu0
  %v1338 = vadd.f32 %v1177, %v1337
  %1339 = vmatprep.mubr.f32.mxu0 %v75
  %1340 = vmatmul.mubr.f32.gmra.mrb[0].mxu0 %v74
  %v1341 = vpop.f32.mrb[0].mxu0
  %v1342 = vadd.f32 %v1181, %v1341
  %v1343 = vpop.f32.mrb[0].mxu0
  %v1344 = vadd.f32 %v1183, %v1343
  %1345 = vmatprep.mubr.f32.mxu0 %v84
  %1346 = vmatmul.mubr.f32.gmra.mrb[0].mxu0 %v83
  %v1347 = vpop.f32.mrb[0].mxu0
  %v1348 = vadd.f32 %v1187, %v1347
  %v1349 = vpop.f32.mrb[0].mxu0
  %v1350 = vadd.f32 %v1189, %v1349
  %1351 = vmatprep.mubr.f32.mxu0 %v93
  %1352 = vmatmul.mubr.f32.gmra.mrb[0].mxu0 %v92
  %v1353 = vpop.f32.mrb[0].mxu0
  %v1354 = vadd.f32 %v1193, %v1353
  %v1355 = vpop.f32.mrb[0].mxu0
  %v1356 = vadd.f32 %v1195, %v1355
  %1357 = vmatprep.mubr.f32.mxu0 %v102
  %1358 = vmatmul.mubr.f32.gmra.mrb[0].mxu0 %v101
  %v1359 = vpop.f32.mrb[0].mxu0
  %v1360 = vadd.f32 %v1199, %v1359
  %v1361 = vpop.f32.mrb[0].mxu0
  %v1362 = vadd.f32 %v1201, %v1361
  %1363 = vmatprep.mubr.f32.mxu0 %v111
  %1364 = vmatmul.mubr.f32.gmra.mrb[0].mxu0 %v110
  %v1365 = vpop.f32.mrb[0].mxu0
  %v1366 = vadd.f32 %v1205, %v1365
  %v1367 = vpop.f32.mrb[0].mxu0
  %v1368 = vadd.f32 %v1207, %v1367
  %1369 = vmatprep.mubr.f32.mxu0 %v120
  %1370 = vmatmul.mubr.f32.gmra.mrb[0].mxu0 %v119
  %v1371 = vpop.f32.mrb[0].mxu0
  %v1372 = vadd.f32 %v1211, %v1371
  %v1373 = vpop.f32.mrb[0].mxu0
  %v1374 = vadd.f32 %v1213, %v1373
  %1375 = vmatprep.mubr.f32.mxu0 %v129
  %1376 = vmatmul.mubr.f32.gmra.mrb[0].mxu0 %v128
  %v1377 = vpop.f32.mrb[0].mxu0
  %v1378 = vadd.f32 %v1217, %v1377
  %v1379 = vpop.f32.mrb[0].mxu0
  %v1380 = vadd.f32 %v1219, %v1379
  %1381 = vmatprep.mubr.f32.mxu0 %v138
  %1382 = vmatmul.mubr.f32.gmra.mrb[0].mxu0 %v137
  %v1383 = vpop.f32.mrb[0].mxu0
  %v1384 = vadd.f32 %v1223, %v1383
  %v1385 = vpop.f32.mrb[0].mxu0
  %v1386 = vadd.f32 %v1225, %v1385
  %1387 = vmatprep.mubr.f32.mxu0 %v147
  %1388 = vmatmul.mubr.f32.gmra.mrb[0].mxu0 %v146
  %v1389 = vpop.f32.mrb[0].mxu0
  %v1390 = vadd.f32 %v1229, %v1389
  %v1391 = vpop.f32.mrb[0].mxu0
  %v1392 = vadd.f32 %v1231, %v1391
  %1393 = vmatprep.mubr.f32.mxu0 %v156
  %1394 = vmatmul.mubr.f32.gmra.mrb[0].mxu0 %v155
  %v1395 = vpop.f32.mrb[0].mxu0
  %v1396 = vadd.f32 %v1235, %v1395
  %v1397 = vpop.f32.mrb[0].mxu0
  %v1398 = vadd.f32 %v1237, %v1397
  %1399 = vdwg.mxu0
  %1400 = vmatprep.subr.mxu0 %v671
  %1401 = vmatpush1.msra.mxu0 %v670
  %1402 = vmatprep.subr.mxu0 %v675
  %1403 = vmatpush1.msra.mxu0 %v674
  %1404 = vmatprep.subr.mxu0 %v679
  %1405 = vmatpush1.msra.mxu0 %v678
  %1406 = vmatprep.subr.mxu0 %v683
  %1407 = vmatpush1.msra.mxu0 %v682
  %1408 = vmatprep.subr.mxu0 %v687
  %1409 = vmatpush1.msra.mxu0 %v686
  %1410 = vmatprep.subr.mxu0 %v691
  %1411 = vmatpush1.msra.mxu0 %v690
  %1412 = vmatprep.subr.mxu0 %v695
  %1413 = vmatpush1.msra.mxu0 %v694
  %1414 = vmatprep.subr.mxu0 %v699
  %1415 = vmatpush1.msra.mxu0 %v698
  %1416 = vmatprep.subr.mxu0 %v703
  %1417 = vmatpush1.msra.mxu0 %v702
  %1418 = vmatprep.subr.mxu0 %v707
  %1419 = vmatpush1.msra.mxu0 %v706
  %1420 = vmatprep.subr.mxu0 %v711
  %1421 = vmatpush1.msra.mxu0 %v710
  %1422 = vmatprep.subr.mxu0 %v715
  %1423 = vmatpush1.msra.mxu0 %v714
  %1424 = vmatprep.subr.mxu0 %v719
  %1425 = vmatpush1.msra.mxu0 %v718
  %1426 = vmatprep.subr.mxu0 %v723
  %1427 = vmatpush1.msra.mxu0 %v722
  %1428 = vmatprep.subr.mxu0 %v727
  %1429 = vmatpush1.msra.mxu0 %v726
  %1430 = vmatprep.subr.mxu0 %v731
  %1431 = vmatpush1.msra.mxu0 %v730
  %1432 = vmatprep.subr.mxu0 0.0
  %1433 = vmatpush1.msra.mxu0 0.0
  %1434 = vmatprep.subr.mxu0 0.0
  %1435 = vmatpush1.msra.mxu0 0.0
  %1436 = vmatprep.subr.mxu0 0.0
  %1437 = vmatpush1.msra.mxu0 0.0
  %1438 = vmatprep.subr.mxu0 0.0
  %1439 = vmatpush1.msra.mxu0 0.0
  %1440 = vmatprep.subr.mxu0 0.0
  %1441 = vmatpush1.msra.mxu0 0.0
  %1442 = vmatprep.subr.mxu0 0.0
  %1443 = vmatpush1.msra.mxu0 0.0
  %1444 = vmatprep.subr.mxu0 0.0
  %1445 = vmatpush1.msra.mxu0 0.0
  %1446 = vmatprep.subr.mxu0 0.0
  %1447 = vmatpush1.msra.mxu0 0.0
  %1448 = vmatprep.subr.mxu0 0.0
  %1449 = vmatpush1.msra.mxu0 0.0
  %1450 = vmatprep.subr.mxu0 0.0
  %1451 = vmatpush1.msra.mxu0 0.0
  %1452 = vmatprep.subr.mxu0 0.0
  %1453 = vmatpush1.msra.mxu0 0.0
  %1454 = vmatprep.subr.mxu0 0.0
  %1455 = vmatpush1.msra.mxu0 0.0
  %1456 = vmatprep.subr.mxu0 0.0
  %1457 = vmatpush1.msra.mxu0 0.0
  %1458 = vmatprep.subr.mxu0 0.0
  %1459 = vmatpush1.msra.mxu0 0.0
  %1460 = vmatprep.subr.mxu0 0.0
  %1461 = vmatpush1.msra.mxu0 0.0
  %1462 = vmatprep.subr.mxu0 0.0
  %1463 = vmatpush1.msra.mxu0 0.0
  %1464 = vmatprep.mubr.f32.mxu0 0.0
  %1465 = vmatmul.mubr.f32.gmra.mrb[0].mxu0 %v22
  %v1466 = vpop.f32.mrb[0].mxu0
  %v1467 = vadd.f32 %v1306, %v1466
  %v1468 = vpop.f32.mrb[0].mxu0
  %v1469 = vadd.f32 %v1308, %v1468
  %1470 = vmatprep.mubr.f32.mxu0 0.0
  %1471 = vmatmul.mubr.f32.gmra.mrb[0].mxu0 %v31
  %v1472 = vpop.f32.mrb[0].mxu0
  %v1473 = vadd.f32 %v1312, %v1472
  %v1474 = vpop.f32.mrb[0].mxu0
  %v1475 = vadd.f32 %v1314, %v1474
  %1476 = vmatprep.mubr.f32.mxu0 0.0
  %1477 = vmatmul.mubr.f32.gmra.mrb[0].mxu0 %v40
  %v1478 = vpop.f32.mrb[0].mxu0
  %v1479 = vadd.f32 %v1318, %v1478
  %v1480 = vpop.f32.mrb[0].mxu0
  %v1481 = vadd.f32 %v1320, %v1480
  %1482 = vmatprep.mubr.f32.mxu0 0.0
  %1483 = vmatmul.mubr.f32.gmra.mrb[0].mxu0 %v49
  %v1484 = vpop.f32.mrb[0].mxu0
  %v1485 = vadd.f32 %v1324, %v1484
  %v1486 = vpop.f32.mrb[0].mxu0
  %v1487 = vadd.f32 %v1326, %v1486
  %1488 = vmatprep.mubr.f32.mxu0 0.0
  %1489 = vmatmul.mubr.f32.gmra.mrb[0].mxu0 %v58
  %v1490 = vpop.f32.mrb[0].mxu0
  %v1491 = vadd.f32 %v1330, %v1490
  %v1492 = vpop.f32.mrb[0].mxu0
  %v1493 = vadd.f32 %v1332, %v1492
  %1494 = vmatprep.mubr.f32.mxu0 0.0
  %1495 = vmatmul.mubr.f32.gmra.mrb[0].mxu0 %v67
  %v1496 = vpop.f32.mrb[0].mxu0
  %v1497 = vadd.f32 %v1336, %v1496
  %v1498 = vpop.f32.mrb[0].mxu0
  %v1499 = vadd.f32 %v1338, %v1498
  %1500 = vmatprep.mubr.f32.mxu0 0.0
  %1501 = vmatmul.mubr.f32.gmra.mrb[0].mxu0 %v76
  %v1502 = vpop.f32.mrb[0].mxu0
  %v1503 = vadd.f32 %v1342, %v1502
  %v1504 = vpop.f32.mrb[0].mxu0
  %v1505 = vadd.f32 %v1344, %v1504
  %1506 = vmatprep.mubr.f32.mxu0 0.0
  %1507 = vmatmul.mubr.f32.gmra.mrb[0].mxu0 %v85
  %v1508 = vpop.f32.mrb[0].mxu0
  %v1509 = vadd.f32 %v1348, %v1508
  %v1510 = vpop.f32.mrb[0].mxu0
  %v1511 = vadd.f32 %v1350, %v1510
  %1512 = vmatprep.mubr.f32.mxu0 0.0
  %1513 = vmatmul.mubr.f32.gmra.mrb[0].mxu0 %v94
  %v1514 = vpop.f32.mrb[0].mxu0
  %v1515 = vadd.f32 %v1354, %v1514
  %v1516 = vpop.f32.mrb[0].mxu0
  %v1517 = vadd.f32 %v1356, %v1516
  %1518 = vmatprep.mubr.f32.mxu0 0.0
  %1519 = vmatmul.mubr.f32.gmra.mrb[0].mxu0 %v103
  %v1520 = vpop.f32.mrb[0].mxu0
  %v1521 = vadd.f32 %v1360, %v1520
  %v1522 = vpop.f32.mrb[0].mxu0
  %v1523 = vadd.f32 %v1362, %v1522
  %1524 = vmatprep.mubr.f32.mxu0 0.0
  %1525 = vmatmul.mubr.f32.gmra.mrb[0].mxu0 %v112
  %v1526 = vpop.f32.mrb[0].mxu0
  %v1527 = vadd.f32 %v1366, %v1526
  %v1528 = vpop.f32.mrb[0].mxu0
  %v1529 = vadd.f32 %v1368, %v1528
  %1530 = vmatprep.mubr.f32.mxu0 0.0
  %1531 = vmatmul.mubr.f32.gmra.mrb[0].mxu0 %v121
  %v1532 = vpop.f32.mrb[0].mxu0
  %v1533 = vadd.f32 %v1372, %v1532
  %v1534 = vpop.f32.mrb[0].mxu0
  %v1535 = vadd.f32 %v1374, %v1534
  %1536 = vmatprep.mubr.f32.mxu0 0.0
  %1537 = vmatmul.mubr.f32.gmra.mrb[0].mxu0 %v130
  %v1538 = vpop.f32.mrb[0].mxu0
  %v1539 = vadd.f32 %v1378, %v1538
  %v1540 = vpop.f32.mrb[0].mxu0
  %v1541 = vadd.f32 %v1380, %v1540
  %1542 = vmatprep.mubr.f32.mxu0 0.0
  %1543 = vmatmul.mubr.f32.gmra.mrb[0].mxu0 %v139
  %v1544 = vpop.f32.mrb[0].mxu0
  %v1545 = vadd.f32 %v1384, %v1544
  %v1546 = vpop.f32.mrb[0].mxu0
  %v1547 = vadd.f32 %v1386, %v1546
  %1548 = vmatprep.mubr.f32.mxu0 0.0
  %1549 = vmatmul.mubr.f32.gmra.mrb[0].mxu0 %v148
  %v1550 = vpop.f32.mrb[0].mxu0
  %v1551 = vadd.f32 %v1390, %v1550
  %v1552 = vpop.f32.mrb[0].mxu0
  %v1553 = vadd.f32 %v1392, %v1552
  %1554 = vmatprep.mubr.f32.mxu0 0.0
  %1555 = vmatmul.mubr.f32.gmra.mrb[0].mxu0 %v157
  %v1556 = vpop.f32.mrb[0].mxu0
  %v1557 = vadd.f32 %v1396, %v1556
  %v1558 = vpop.f32.mrb[0].mxu0
  %v1559 = vadd.f32 %v1398, %v1558
  %1560 = vdwg.mxu0
  %1561 = vmatprep.subr.mxu0 %v161
  %1562 = vmatpush1.msra.mxu0 %v160
  %1563 = vmatprep.subr.mxu0 %v165
  %1564 = vmatpush1.msra.mxu0 %v164
  %1565 = vmatprep.subr.mxu0 %v169
  %1566 = vmatpush1.msra.mxu0 %v168
  %1567 = vmatprep.subr.mxu0 %v173
  %1568 = vmatpush1.msra.mxu0 %v172
  %1569 = vmatprep.subr.mxu0 %v177
  %1570 = vmatpush1.msra.mxu0 %v176
  %1571 = vmatprep.subr.mxu0 %v181
  %1572 = vmatpush1.msra.mxu0 %v180
  %1573 = vmatprep.subr.mxu0 %v185
  %1574 = vmatpush1.msra.mxu0 %v184
  %1575 = vmatprep.subr.mxu0 %v189
  %1576 = vmatpush1.msra.mxu0 %v188
  %1577 = vmatprep.subr.mxu0 %v193
  %1578 = vmatpush1.msra.mxu0 %v192
  %1579 = vmatprep.subr.mxu0 %v197
  %1580 = vmatpush1.msra.mxu0 %v196
  %1581 = vmatprep.subr.mxu0 %v201
  %1582 = vmatpush1.msra.mxu0 %v200
  %1583 = vmatprep.subr.mxu0 %v205
  %1584 = vmatpush1.msra.mxu0 %v204
  %1585 = vmatprep.subr.mxu0 %v209
  %1586 = vmatpush1.msra.mxu0 %v208
  %1587 = vmatprep.subr.mxu0 %v213
  %1588 = vmatpush1.msra.mxu0 %v212
  %1589 = vmatprep.subr.mxu0 %v217
  %1590 = vmatpush1.msra.mxu0 %v216
  %1591 = vmatprep.subr.mxu0 %v221
  %1592 = vmatpush1.msra.mxu0 %v220
  %1593 = vmatprep.subr.mxu0 %v225
  %1594 = vmatpush1.msra.mxu0 %v224
  %1595 = vmatprep.subr.mxu0 %v229
  %1596 = vmatpush1.msra.mxu0 %v228
  %1597 = vmatprep.subr.mxu0 %v233
  %1598 = vmatpush1.msra.mxu0 %v232
  %1599 = vmatprep.subr.mxu0 %v237
  %1600 = vmatpush1.msra.mxu0 %v236
  %1601 = vmatprep.subr.mxu0 %v241
  %1602 = vmatpush1.msra.mxu0 %v240
  %1603 = vmatprep.subr.mxu0 %v245
  %1604 = vmatpush1.msra.mxu0 %v244
  %1605 = vmatprep.subr.mxu0 %v249
  %1606 = vmatpush1.msra.mxu0 %v248
  %1607 = vmatprep.subr.mxu0 %v253
  %1608 = vmatpush1.msra.mxu0 %v252
  %1609 = vmatprep.subr.mxu0 %v257
  %1610 = vmatpush1.msra.mxu0 %v256
  %1611 = vmatprep.subr.mxu0 %v261
  %1612 = vmatpush1.msra.mxu0 %v260
  %1613 = vmatprep.subr.mxu0 %v265
  %1614 = vmatpush1.msra.mxu0 %v264
  %1615 = vmatprep.subr.mxu0 %v269
  %1616 = vmatpush1.msra.mxu0 %v268
  %1617 = vmatprep.subr.mxu0 %v273
  %1618 = vmatpush1.msra.mxu0 %v272
  %1619 = vmatprep.subr.mxu0 %v277
  %1620 = vmatpush1.msra.mxu0 %v276
  %1621 = vmatprep.subr.mxu0 %v281
  %1622 = vmatpush1.msra.mxu0 %v280
  %1623 = vmatprep.subr.mxu0 %v285
  %1624 = vmatpush1.msra.mxu0 %v284
  %1625 = vmatprep.mubr.f32.mxu0 %v15
  %1626 = vmatmul.mubr.f32.gmra.mrb[0].mxu0 %v14
  %v1627 = vpop.f32.mrb[0].mxu0
  %v1628 = vadd.f32 %v747, %v1627
  %v1629 = vpop.f32.mrb[0].mxu0
  %v1630 = vadd.f32 %v751, %v1629
  %1631 = vmatprep.mubr.f32.mxu0 %v24
  %1632 = vmatmul.mubr.f32.gmra.mrb[0].mxu0 %v23
  %v1633 = vpop.f32.mrb[0].mxu0
  %v1634 = vadd.f32 %v747, %v1633
  %v1635 = vpop.f32.mrb[0].mxu0
  %v1636 = vadd.f32 %v751, %v1635
  %1637 = vmatprep.mubr.f32.mxu0 %v33
  %1638 = vmatmul.mubr.f32.gmra.mrb[0].mxu0 %v32
  %v1639 = vpop.f32.mrb[0].mxu0
  %v1640 = vadd.f32 %v747, %v1639
  %v1641 = vpop.f32.mrb[0].mxu0
  %v1642 = vadd.f32 %v751, %v1641
  %1643 = vmatprep.mubr.f32.mxu0 %v42
  %1644 = vmatmul.mubr.f32.gmra.mrb[0].mxu0 %v41
  %v1645 = vpop.f32.mrb[0].mxu0
  %v1646 = vadd.f32 %v747, %v1645
  %v1647 = vpop.f32.mrb[0].mxu0
  %v1648 = vadd.f32 %v751, %v1647
  %1649 = vmatprep.mubr.f32.mxu0 %v51
  %1650 = vmatmul.mubr.f32.gmra.mrb[0].mxu0 %v50
  %v1651 = vpop.f32.mrb[0].mxu0
  %v1652 = vadd.f32 %v747, %v1651
  %v1653 = vpop.f32.mrb[0].mxu0
  %v1654 = vadd.f32 %v751, %v1653
  %1655 = vmatprep.mubr.f32.mxu0 %v60
  %1656 = vmatmul.mubr.f32.gmra.mrb[0].mxu0 %v59
  %v1657 = vpop.f32.mrb[0].mxu0
  %v1658 = vadd.f32 %v747, %v1657
  %v1659 = vpop.f32.mrb[0].mxu0
  %v1660 = vadd.f32 %v751, %v1659
  %1661 = vmatprep.mubr.f32.mxu0 %v69
  %1662 = vmatmul.mubr.f32.gmra.mrb[0].mxu0 %v68
  %v1663 = vpop.f32.mrb[0].mxu0
  %v1664 = vadd.f32 %v747, %v1663
  %v1665 = vpop.f32.mrb[0].mxu0
  %v1666 = vadd.f32 %v751, %v1665
  %1667 = vmatprep.mubr.f32.mxu0 %v78
  %1668 = vmatmul.mubr.f32.gmra.mrb[0].mxu0 %v77
  %v1669 = vpop.f32.mrb[0].mxu0
  %v1670 = vadd.f32 %v747, %v1669
  %v1671 = vpop.f32.mrb[0].mxu0
  %v1672 = vadd.f32 %v751, %v1671
  %1673 = vmatprep.mubr.f32.mxu0 %v87
  %1674 = vmatmul.mubr.f32.gmra.mrb[0].mxu0 %v86
  %v1675 = vpop.f32.mrb[0].mxu0
  %v1676 = vadd.f32 %v747, %v1675
  %v1677 = vpop.f32.mrb[0].mxu0
  %v1678 = vadd.f32 %v751, %v1677
  %1679 = vmatprep.mubr.f32.mxu0 %v96
  %1680 = vmatmul.mubr.f32.gmra.mrb[0].mxu0 %v95
  %v1681 = vpop.f32.mrb[0].mxu0
  %v1682 = vadd.f32 %v747, %v1681
  %v1683 = vpop.f32.mrb[0].mxu0
  %v1684 = vadd.f32 %v751, %v1683
  %1685 = vmatprep.mubr.f32.mxu0 %v105
  %1686 = vmatmul.mubr.f32.gmra.mrb[0].mxu0 %v104
  %v1687 = vpop.f32.mrb[0].mxu0
  %v1688 = vadd.f32 %v747, %v1687
  %v1689 = vpop.f32.mrb[0].mxu0
  %v1690 = vadd.f32 %v751, %v1689
  %1691 = vmatprep.mubr.f32.mxu0 %v114
  %1692 = vmatmul.mubr.f32.gmra.mrb[0].mxu0 %v113
  %v1693 = vpop.f32.mrb[0].mxu0
  %v1694 = vadd.f32 %v747, %v1693
  %v1695 = vpop.f32.mrb[0].mxu0
  %v1696 = vadd.f32 %v751, %v1695
  %1697 = vmatprep.mubr.f32.mxu0 %v123
  %1698 = vmatmul.mubr.f32.gmra.mrb[0].mxu0 %v122
  %v1699 = vpop.f32.mrb[0].mxu0
  %v1700 = vadd.f32 %v747, %v1699
  %v1701 = vpop.f32.mrb[0].mxu0
  %v1702 = vadd.f32 %v751, %v1701
  %1703 = vmatprep.mubr.f32.mxu0 %v132
  %1704 = vmatmul.mubr.f32.gmra.mrb[0].mxu0 %v131
  %v1705 = vpop.f32.mrb[0].mxu0
  %v1706 = vadd.f32 %v747, %v1705
  %v1707 = vpop.f32.mrb[0].mxu0
  %v1708 = vadd.f32 %v751, %v1707
  %1709 = vmatprep.mubr.f32.mxu0 %v141
  %1710 = vmatmul.mubr.f32.gmra.mrb[0].mxu0 %v140
  %v1711 = vpop.f32.mrb[0].mxu0
  %v1712 = vadd.f32 %v747, %v1711
  %v1713 = vpop.f32.mrb[0].mxu0
  %v1714 = vadd.f32 %v751, %v1713
  %1715 = vmatprep.mubr.f32.mxu0 %v150
  %1716 = vmatmul.mubr.f32.gmra.mrb[0].mxu0 %v149
  %v1717 = vpop.f32.mrb[0].mxu0
  %v1718 = vadd.f32 %v747, %v1717
  %v1719 = vpop.f32.mrb[0].mxu0
  %v1720 = vadd.f32 %v751, %v1719
  %1721 = vdwg.mxu0
  %1722 = vmatprep.subr.mxu0 %v289
  %1723 = vmatpush1.msra.mxu0 %v288
  %1724 = vmatprep.subr.mxu0 %v293
  %1725 = vmatpush1.msra.mxu0 %v292
  %1726 = vmatprep.subr.mxu0 %v297
  %1727 = vmatpush1.msra.mxu0 %v296
  %1728 = vmatprep.subr.mxu0 %v301
  %1729 = vmatpush1.msra.mxu0 %v300
  %1730 = vmatprep.subr.mxu0 %v305
  %1731 = vmatpush1.msra.mxu0 %v304
  %1732 = vmatprep.subr.mxu0 %v309
  %1733 = vmatpush1.msra.mxu0 %v308
  %1734 = vmatprep.subr.mxu0 %v313
  %1735 = vmatpush1.msra.mxu0 %v312
  %1736 = vmatprep.subr.mxu0 %v317
  %1737 = vmatpush1.msra.mxu0 %v316
  %1738 = vmatprep.subr.mxu0 %v321
  %1739 = vmatpush1.msra.mxu0 %v320
  %1740 = vmatprep.subr.mxu0 %v325
  %1741 = vmatpush1.msra.mxu0 %v324
  %1742 = vmatprep.subr.mxu0 %v329
  %1743 = vmatpush1.msra.mxu0 %v328
  %1744 = vmatprep.subr.mxu0 %v333
  %1745 = vmatpush1.msra.mxu0 %v332
  %1746 = vmatprep.subr.mxu0 %v337
  %1747 = vmatpush1.msra.mxu0 %v336
  %1748 = vmatprep.subr.mxu0 %v341
  %1749 = vmatpush1.msra.mxu0 %v340
  %1750 = vmatprep.subr.mxu0 %v345
  %1751 = vmatpush1.msra.mxu0 %v344
  %1752 = vmatprep.subr.mxu0 %v349
  %1753 = vmatpush1.msra.mxu0 %v348
  %1754 = vmatprep.subr.mxu0 %v353
  %1755 = vmatpush1.msra.mxu0 %v352
  %1756 = vmatprep.subr.mxu0 %v357
  %1757 = vmatpush1.msra.mxu0 %v356
  %1758 = vmatprep.subr.mxu0 %v361
  %1759 = vmatpush1.msra.mxu0 %v360
  %1760 = vmatprep.subr.mxu0 %v365
  %1761 = vmatpush1.msra.mxu0 %v364
  %1762 = vmatprep.subr.mxu0 %v369
  %1763 = vmatpush1.msra.mxu0 %v368
  %1764 = vmatprep.subr.mxu0 %v373
  %1765 = vmatpush1.msra.mxu0 %v372
  %1766 = vmatprep.subr.mxu0 %v377
  %1767 = vmatpush1.msra.mxu0 %v376
  %1768 = vmatprep.subr.mxu0 %v381
  %1769 = vmatpush1.msra.mxu0 %v380
  %1770 = vmatprep.subr.mxu0 %v385
  %1771 = vmatpush1.msra.mxu0 %v384
  %1772 = vmatprep.subr.mxu0 %v389
  %1773 = vmatpush1.msra.mxu0 %v388
  %1774 = vmatprep.subr.mxu0 %v393
  %1775 = vmatpush1.msra.mxu0 %v392
  %1776 = vmatprep.subr.mxu0 %v397
  %1777 = vmatpush1.msra.mxu0 %v396
  %1778 = vmatprep.subr.mxu0 %v401
  %1779 = vmatpush1.msra.mxu0 %v400
  %1780 = vmatprep.subr.mxu0 %v405
  %1781 = vmatpush1.msra.mxu0 %v404
  %1782 = vmatprep.subr.mxu0 %v409
  %1783 = vmatpush1.msra.mxu0 %v408
  %1784 = vmatprep.subr.mxu0 %v413
  %1785 = vmatpush1.msra.mxu0 %v412
  %1786 = vmatprep.mubr.f32.mxu0 %v17
  %1787 = vmatmul.mubr.f32.gmra.mrb[0].mxu0 %v16
  %v1788 = vpop.f32.mrb[0].mxu0
  %v1789 = vadd.f32 %v1628, %v1788
  %v1790 = vpop.f32.mrb[0].mxu0
  %v1791 = vadd.f32 %v1630, %v1790
  %1792 = vmatprep.mubr.f32.mxu0 %v26
  %1793 = vmatmul.mubr.f32.gmra.mrb[0].mxu0 %v25
  %v1794 = vpop.f32.mrb[0].mxu0
  %v1795 = vadd.f32 %v1634, %v1794
  %v1796 = vpop.f32.mrb[0].mxu0
  %v1797 = vadd.f32 %v1636, %v1796
  %1798 = vmatprep.mubr.f32.mxu0 %v35
  %1799 = vmatmul.mubr.f32.gmra.mrb[0].mxu0 %v34
  %v1800 = vpop.f32.mrb[0].mxu0
  %v1801 = vadd.f32 %v1640, %v1800
  %v1802 = vpop.f32.mrb[0].mxu0
  %v1803 = vadd.f32 %v1642, %v1802
  %1804 = vmatprep.mubr.f32.mxu0 %v44
  %1805 = vmatmul.mubr.f32.gmra.mrb[0].mxu0 %v43
  %v1806 = vpop.f32.mrb[0].mxu0
  %v1807 = vadd.f32 %v1646, %v1806
  %v1808 = vpop.f32.mrb[0].mxu0
  %v1809 = vadd.f32 %v1648, %v1808
  %1810 = vmatprep.mubr.f32.mxu0 %v53
  %1811 = vmatmul.mubr.f32.gmra.mrb[0].mxu0 %v52
  %v1812 = vpop.f32.mrb[0].mxu0
  %v1813 = vadd.f32 %v1652, %v1812
  %v1814 = vpop.f32.mrb[0].mxu0
  %v1815 = vadd.f32 %v1654, %v1814
  %1816 = vmatprep.mubr.f32.mxu0 %v62
  %1817 = vmatmul.mubr.f32.gmra.mrb[0].mxu0 %v61
  %v1818 = vpop.f32.mrb[0].mxu0
  %v1819 = vadd.f32 %v1658, %v1818
  %v1820 = vpop.f32.mrb[0].mxu0
  %v1821 = vadd.f32 %v1660, %v1820
  %1822 = vmatprep.mubr.f32.mxu0 %v71
  %1823 = vmatmul.mubr.f32.gmra.mrb[0].mxu0 %v70
  %v1824 = vpop.f32.mrb[0].mxu0
  %v1825 = vadd.f32 %v1664, %v1824
  %v1826 = vpop.f32.mrb[0].mxu0
  %v1827 = vadd.f32 %v1666, %v1826
  %1828 = vmatprep.mubr.f32.mxu0 %v80
  %1829 = vmatmul.mubr.f32.gmra.mrb[0].mxu0 %v79
  %v1830 = vpop.f32.mrb[0].mxu0
  %v1831 = vadd.f32 %v1670, %v1830
  %v1832 = vpop.f32.mrb[0].mxu0
  %v1833 = vadd.f32 %v1672, %v1832
  %1834 = vmatprep.mubr.f32.mxu0 %v89
  %1835 = vmatmul.mubr.f32.gmra.mrb[0].mxu0 %v88
  %v1836 = vpop.f32.mrb[0].mxu0
  %v1837 = vadd.f32 %v1676, %v1836
  %v1838 = vpop.f32.mrb[0].mxu0
  %v1839 = vadd.f32 %v1678, %v1838
  %1840 = vmatprep.mubr.f32.mxu0 %v98
  %1841 = vmatmul.mubr.f32.gmra.mrb[0].mxu0 %v97
  %v1842 = vpop.f32.mrb[0].mxu0
  %v1843 = vadd.f32 %v1682, %v1842
  %v1844 = vpop.f32.mrb[0].mxu0
  %v1845 = vadd.f32 %v1684, %v1844
  %1846 = vmatprep.mubr.f32.mxu0 %v107
  %1847 = vmatmul.mubr.f32.gmra.mrb[0].mxu0 %v106
  %v1848 = vpop.f32.mrb[0].mxu0
  %v1849 = vadd.f32 %v1688, %v1848
  %v1850 = vpop.f32.mrb[0].mxu0
  %v1851 = vadd.f32 %v1690, %v1850
  %1852 = vmatprep.mubr.f32.mxu0 %v116
  %1853 = vmatmul.mubr.f32.gmra.mrb[0].mxu0 %v115
  %v1854 = vpop.f32.mrb[0].mxu0
  %v1855 = vadd.f32 %v1694, %v1854
  %v1856 = vpop.f32.mrb[0].mxu0
  %v1857 = vadd.f32 %v1696, %v1856
  %1858 = vmatprep.mubr.f32.mxu0 %v125
  %1859 = vmatmul.mubr.f32.gmra.mrb[0].mxu0 %v124
  %v1860 = vpop.f32.mrb[0].mxu0
  %v1861 = vadd.f32 %v1700, %v1860
  %v1862 = vpop.f32.mrb[0].mxu0
  %v1863 = vadd.f32 %v1702, %v1862
  %1864 = vmatprep.mubr.f32.mxu0 %v134
  %1865 = vmatmul.mubr.f32.gmra.mrb[0].mxu0 %v133
  %v1866 = vpop.f32.mrb[0].mxu0
  %v1867 = vadd.f32 %v1706, %v1866
  %v1868 = vpop.f32.mrb[0].mxu0
  %v1869 = vadd.f32 %v1708, %v1868
  %1870 = vmatprep.mubr.f32.mxu0 %v143
  %1871 = vmatmul.mubr.f32.gmra.mrb[0].mxu0 %v142
  %v1872 = vpop.f32.mrb[0].mxu0
  %v1873 = vadd.f32 %v1712, %v1872
  %v1874 = vpop.f32.mrb[0].mxu0
  %v1875 = vadd.f32 %v1714, %v1874
  %1876 = vmatprep.mubr.f32.mxu0 %v152
  %1877 = vmatmul.mubr.f32.gmra.mrb[0].mxu0 %v151
  %v1878 = vpop.f32.mrb[0].mxu0
  %v1879 = vadd.f32 %v1718, %v1878
  %v1880 = vpop.f32.mrb[0].mxu0
  %v1881 = vadd.f32 %v1720, %v1880
  %1882 = vdwg.mxu0
  %1883 = vmatprep.subr.mxu0 %v417
  %1884 = vmatpush1.msra.mxu0 %v416
  %1885 = vmatprep.subr.mxu0 %v421
  %1886 = vmatpush1.msra.mxu0 %v420
  %1887 = vmatprep.subr.mxu0 %v425
  %1888 = vmatpush1.msra.mxu0 %v424
  %1889 = vmatprep.subr.mxu0 %v429
  %1890 = vmatpush1.msra.mxu0 %v428
  %1891 = vmatprep.subr.mxu0 %v433
  %1892 = vmatpush1.msra.mxu0 %v432
  %1893 = vmatprep.subr.mxu0 %v437
  %1894 = vmatpush1.msra.mxu0 %v436
  %1895 = vmatprep.subr.mxu0 %v441
  %1896 = vmatpush1.msra.mxu0 %v440
  %1897 = vmatprep.subr.mxu0 %v445
  %1898 = vmatpush1.msra.mxu0 %v444
  %1899 = vmatprep.subr.mxu0 %v449
  %1900 = vmatpush1.msra.mxu0 %v448
  %1901 = vmatprep.subr.mxu0 %v453
  %1902 = vmatpush1.msra.mxu0 %v452
  %1903 = vmatprep.subr.mxu0 %v457
  %1904 = vmatpush1.msra.mxu0 %v456
  %1905 = vmatprep.subr.mxu0 %v461
  %1906 = vmatpush1.msra.mxu0 %v460
  %1907 = vmatprep.subr.mxu0 %v465
  %1908 = vmatpush1.msra.mxu0 %v464
  %1909 = vmatprep.subr.mxu0 %v469
  %1910 = vmatpush1.msra.mxu0 %v468
  %1911 = vmatprep.subr.mxu0 %v473
  %1912 = vmatpush1.msra.mxu0 %v472
  %1913 = vmatprep.subr.mxu0 %v477
  %1914 = vmatpush1.msra.mxu0 %v476
  %1915 = vmatprep.subr.mxu0 %v481
  %1916 = vmatpush1.msra.mxu0 %v480
  %1917 = vmatprep.subr.mxu0 %v485
  %1918 = vmatpush1.msra.mxu0 %v484
  %1919 = vmatprep.subr.mxu0 %v489
  %1920 = vmatpush1.msra.mxu0 %v488
  %1921 = vmatprep.subr.mxu0 %v493
  %1922 = vmatpush1.msra.mxu0 %v492
  %1923 = vmatprep.subr.mxu0 %v497
  %1924 = vmatpush1.msra.mxu0 %v496
  %1925 = vmatprep.subr.mxu0 %v501
  %1926 = vmatpush1.msra.mxu0 %v500
  %1927 = vmatprep.subr.mxu0 %v505
  %1928 = vmatpush1.msra.mxu0 %v504
  %1929 = vmatprep.subr.mxu0 %v509
  %1930 = vmatpush1.msra.mxu0 %v508
  %1931 = vmatprep.subr.mxu0 %v513
  %1932 = vmatpush1.msra.mxu0 %v512
  %1933 = vmatprep.subr.mxu0 %v517
  %1934 = vmatpush1.msra.mxu0 %v516
  %1935 = vmatprep.subr.mxu0 %v521
  %1936 = vmatpush1.msra.mxu0 %v520
  %1937 = vmatprep.subr.mxu0 %v525
  %1938 = vmatpush1.msra.mxu0 %v524
  %1939 = vmatprep.subr.mxu0 %v529
  %1940 = vmatpush1.msra.mxu0 %v528
  %1941 = vmatprep.subr.mxu0 %v533
  %1942 = vmatpush1.msra.mxu0 %v532
  %1943 = vmatprep.subr.mxu0 %v537
  %1944 = vmatpush1.msra.mxu0 %v536
  %1945 = vmatprep.subr.mxu0 %v541
  %1946 = vmatpush1.msra.mxu0 %v540
  %1947 = vmatprep.mubr.f32.mxu0 %v19
  %1948 = vmatmul.mubr.f32.gmra.mrb[0].mxu0 %v18
  %v1949 = vpop.f32.mrb[0].mxu0
  %v1950 = vadd.f32 %v1789, %v1949
  %v1951 = vpop.f32.mrb[0].mxu0
  %v1952 = vadd.f32 %v1791, %v1951
  %1953 = vmatprep.mubr.f32.mxu0 %v28
  %1954 = vmatmul.mubr.f32.gmra.mrb[0].mxu0 %v27
  %v1955 = vpop.f32.mrb[0].mxu0
  %v1956 = vadd.f32 %v1795, %v1955
  %v1957 = vpop.f32.mrb[0].mxu0
  %v1958 = vadd.f32 %v1797, %v1957
  %1959 = vmatprep.mubr.f32.mxu0 %v37
  %1960 = vmatmul.mubr.f32.gmra.mrb[0].mxu0 %v36
  %v1961 = vpop.f32.mrb[0].mxu0
  %v1962 = vadd.f32 %v1801, %v1961
  %v1963 = vpop.f32.mrb[0].mxu0
  %v1964 = vadd.f32 %v1803, %v1963
  %1965 = vmatprep.mubr.f32.mxu0 %v46
  %1966 = vmatmul.mubr.f32.gmra.mrb[0].mxu0 %v45
  %v1967 = vpop.f32.mrb[0].mxu0
  %v1968 = vadd.f32 %v1807, %v1967
  %v1969 = vpop.f32.mrb[0].mxu0
  %v1970 = vadd.f32 %v1809, %v1969
  %1971 = vmatprep.mubr.f32.mxu0 %v55
  %1972 = vmatmul.mubr.f32.gmra.mrb[0].mxu0 %v54
  %v1973 = vpop.f32.mrb[0].mxu0
  %v1974 = vadd.f32 %v1813, %v1973
  %v1975 = vpop.f32.mrb[0].mxu0
  %v1976 = vadd.f32 %v1815, %v1975
  %1977 = vmatprep.mubr.f32.mxu0 %v64
  %1978 = vmatmul.mubr.f32.gmra.mrb[0].mxu0 %v63
  %v1979 = vpop.f32.mrb[0].mxu0
  %v1980 = vadd.f32 %v1819, %v1979
  %v1981 = vpop.f32.mrb[0].mxu0
  %v1982 = vadd.f32 %v1821, %v1981
  %1983 = vmatprep.mubr.f32.mxu0 %v73
  %1984 = vmatmul.mubr.f32.gmra.mrb[0].mxu0 %v72
  %v1985 = vpop.f32.mrb[0].mxu0
  %v1986 = vadd.f32 %v1825, %v1985
  %v1987 = vpop.f32.mrb[0].mxu0
  %v1988 = vadd.f32 %v1827, %v1987
  %1989 = vmatprep.mubr.f32.mxu0 %v82
  %1990 = vmatmul.mubr.f32.gmra.mrb[0].mxu0 %v81
  %v1991 = vpop.f32.mrb[0].mxu0
  %v1992 = vadd.f32 %v1831, %v1991
  %v1993 = vpop.f32.mrb[0].mxu0
  %v1994 = vadd.f32 %v1833, %v1993
  %1995 = vmatprep.mubr.f32.mxu0 %v91
  %1996 = vmatmul.mubr.f32.gmra.mrb[0].mxu0 %v90
  %v1997 = vpop.f32.mrb[0].mxu0
  %v1998 = vadd.f32 %v1837, %v1997
  %v1999 = vpop.f32.mrb[0].mxu0
  %v2000 = vadd.f32 %v1839, %v1999
  %2001 = vmatprep.mubr.f32.mxu0 %v100
  %2002 = vmatmul.mubr.f32.gmra.mrb[0].mxu0 %v99
  %v2003 = vpop.f32.mrb[0].mxu0
  %v2004 = vadd.f32 %v1843, %v2003
  %v2005 = vpop.f32.mrb[0].mxu0
  %v2006 = vadd.f32 %v1845, %v2005
  %2007 = vmatprep.mubr.f32.mxu0 %v109
  %2008 = vmatmul.mubr.f32.gmra.mrb[0].mxu0 %v108
  %v2009 = vpop.f32.mrb[0].mxu0
  %v2010 = vadd.f32 %v1849, %v2009
  %v2011 = vpop.f32.mrb[0].mxu0
  %v2012 = vadd.f32 %v1851, %v2011
  %2013 = vmatprep.mubr.f32.mxu0 %v118
  %2014 = vmatmul.mubr.f32.gmra.mrb[0].mxu0 %v117
  %v2015 = vpop.f32.mrb[0].mxu0
  %v2016 = vadd.f32 %v1855, %v2015
  %v2017 = vpop.f32.mrb[0].mxu0
  %v2018 = vadd.f32 %v1857, %v2017
  %2019 = vmatprep.mubr.f32.mxu0 %v127
  %2020 = vmatmul.mubr.f32.gmra.mrb[0].mxu0 %v126
  %v2021 = vpop.f32.mrb[0].mxu0
  %v2022 = vadd.f32 %v1861, %v2021
  %v2023 = vpop.f32.mrb[0].mxu0
  %v2024 = vadd.f32 %v1863, %v2023
  %2025 = vmatprep.mubr.f32.mxu0 %v136
  %2026 = vmatmul.mubr.f32.gmra.mrb[0].mxu0 %v135
  %v2027 = vpop.f32.mrb[0].mxu0
  %v2028 = vadd.f32 %v1867, %v2027
  %v2029 = vpop.f32.mrb[0].mxu0
  %v2030 = vadd.f32 %v1869, %v2029
  %2031 = vmatprep.mubr.f32.mxu0 %v145
  %2032 = vmatmul.mubr.f32.gmra.mrb[0].mxu0 %v144
  %v2033 = vpop.f32.mrb[0].mxu0
  %v2034 = vadd.f32 %v1873, %v2033
  %v2035 = vpop.f32.mrb[0].mxu0
  %v2036 = vadd.f32 %v1875, %v2035
  %2037 = vmatprep.mubr.f32.mxu0 %v154
  %2038 = vmatmul.mubr.f32.gmra.mrb[0].mxu0 %v153
  %v2039 = vpop.f32.mrb[0].mxu0
  %v2040 = vadd.f32 %v1879, %v2039
  %v2041 = vpop.f32.mrb[0].mxu0
  %v2042 = vadd.f32 %v1881, %v2041
  %2043 = vdwg.mxu0
  %2044 = vmatprep.subr.mxu0 %v545
  %2045 = vmatpush1.msra.mxu0 %v544
  %2046 = vmatprep.subr.mxu0 %v549
  %2047 = vmatpush1.msra.mxu0 %v548
  %2048 = vmatprep.subr.mxu0 %v553
  %2049 = vmatpush1.msra.mxu0 %v552
  %2050 = vmatprep.subr.mxu0 %v557
  %2051 = vmatpush1.msra.mxu0 %v556
  %2052 = vmatprep.subr.mxu0 %v561
  %2053 = vmatpush1.msra.mxu0 %v560
  %2054 = vmatprep.subr.mxu0 %v565
  %2055 = vmatpush1.msra.mxu0 %v564
  %2056 = vmatprep.subr.mxu0 %v569
  %2057 = vmatpush1.msra.mxu0 %v568
  %2058 = vmatprep.subr.mxu0 %v573
  %2059 = vmatpush1.msra.mxu0 %v572
  %2060 = vmatprep.subr.mxu0 %v577
  %2061 = vmatpush1.msra.mxu0 %v576
  %2062 = vmatprep.subr.mxu0 %v581
  %2063 = vmatpush1.msra.mxu0 %v580
  %2064 = vmatprep.subr.mxu0 %v585
  %2065 = vmatpush1.msra.mxu0 %v584
  %2066 = vmatprep.subr.mxu0 %v589
  %2067 = vmatpush1.msra.mxu0 %v588
  %2068 = vmatprep.subr.mxu0 %v593
  %2069 = vmatpush1.msra.mxu0 %v592
  %2070 = vmatprep.subr.mxu0 %v597
  %2071 = vmatpush1.msra.mxu0 %v596
  %2072 = vmatprep.subr.mxu0 %v601
  %2073 = vmatpush1.msra.mxu0 %v600
  %2074 = vmatprep.subr.mxu0 %v605
  %2075 = vmatpush1.msra.mxu0 %v604
  %2076 = vmatprep.subr.mxu0 %v609
  %2077 = vmatpush1.msra.mxu0 %v608
  %2078 = vmatprep.subr.mxu0 %v613
  %2079 = vmatpush1.msra.mxu0 %v612
  %2080 = vmatprep.subr.mxu0 %v617
  %2081 = vmatpush1.msra.mxu0 %v616
  %2082 = vmatprep.subr.mxu0 %v621
  %2083 = vmatpush1.msra.mxu0 %v620
  %2084 = vmatprep.subr.mxu0 %v625
  %2085 = vmatpush1.msra.mxu0 %v624
  %2086 = vmatprep.subr.mxu0 %v629
  %2087 = vmatpush1.msra.mxu0 %v628
  %2088 = vmatprep.subr.mxu0 %v633
  %2089 = vmatpush1.msra.mxu0 %v632
  %2090 = vmatprep.subr.mxu0 %v637
  %2091 = vmatpush1.msra.mxu0 %v636
  %2092 = vmatprep.subr.mxu0 %v641
  %2093 = vmatpush1.msra.mxu0 %v640
  %2094 = vmatprep.subr.mxu0 %v645
  %2095 = vmatpush1.msra.mxu0 %v644
  %2096 = vmatprep.subr.mxu0 %v649
  %2097 = vmatpush1.msra.mxu0 %v648
  %2098 = vmatprep.subr.mxu0 %v653
  %2099 = vmatpush1.msra.mxu0 %v652
  %2100 = vmatprep.subr.mxu0 %v657
  %2101 = vmatpush1.msra.mxu0 %v656
  %2102 = vmatprep.subr.mxu0 %v661
  %2103 = vmatpush1.msra.mxu0 %v660
  %2104 = vmatprep.subr.mxu0 %v665
  %2105 = vmatpush1.msra.mxu0 %v664
  %2106 = vmatprep.subr.mxu0 %v669
  %2107 = vmatpush1.msra.mxu0 %v668
  %2108 = vmatprep.mubr.f32.mxu0 %v21
  %2109 = vmatmul.mubr.f32.gmra.mrb[0].mxu0 %v20
  %v2110 = vpop.f32.mrb[0].mxu0
  %v2111 = vadd.f32 %v1950, %v2110
  %v2112 = vpop.f32.mrb[0].mxu0
  %v2113 = vadd.f32 %v1952, %v2112
  %2114 = vmatprep.mubr.f32.mxu0 %v30
  %2115 = vmatmul.mubr.f32.gmra.mrb[0].mxu0 %v29
  %v2116 = vpop.f32.mrb[0].mxu0
  %v2117 = vadd.f32 %v1956, %v2116
  %v2118 = vpop.f32.mrb[0].mxu0
  %v2119 = vadd.f32 %v1958, %v2118
  %2120 = vmatprep.mubr.f32.mxu0 %v39
  %2121 = vmatmul.mubr.f32.gmra.mrb[0].mxu0 %v38
  %v2122 = vpop.f32.mrb[0].mxu0
  %v2123 = vadd.f32 %v1962, %v2122
  %v2124 = vpop.f32.mrb[0].mxu0
  %v2125 = vadd.f32 %v1964, %v2124
  %2126 = vmatprep.mubr.f32.mxu0 %v48
  %2127 = vmatmul.mubr.f32.gmra.mrb[0].mxu0 %v47
  %v2128 = vpop.f32.mrb[0].mxu0
  %v2129 = vadd.f32 %v1968, %v2128
  %v2130 = vpop.f32.mrb[0].mxu0
  %v2131 = vadd.f32 %v1970, %v2130
  %2132 = vmatprep.mubr.f32.mxu0 %v57
  %2133 = vmatmul.mubr.f32.gmra.mrb[0].mxu0 %v56
  %v2134 = vpop.f32.mrb[0].mxu0
  %v2135 = vadd.f32 %v1974, %v2134
  %v2136 = vpop.f32.mrb[0].mxu0
  %v2137 = vadd.f32 %v1976, %v2136
  %2138 = vmatprep.mubr.f32.mxu0 %v66
  %2139 = vmatmul.mubr.f32.gmra.mrb[0].mxu0 %v65
  %v2140 = vpop.f32.mrb[0].mxu0
  %v2141 = vadd.f32 %v1980, %v2140
  %v2142 = vpop.f32.mrb[0].mxu0
  %v2143 = vadd.f32 %v1982, %v2142
  %2144 = vmatprep.mubr.f32.mxu0 %v75
  %2145 = vmatmul.mubr.f32.gmra.mrb[0].mxu0 %v74
  %v2146 = vpop.f32.mrb[0].mxu0
  %v2147 = vadd.f32 %v1986, %v2146
  %v2148 = vpop.f32.mrb[0].mxu0
  %v2149 = vadd.f32 %v1988, %v2148
  %2150 = vmatprep.mubr.f32.mxu0 %v84
  %2151 = vmatmul.mubr.f32.gmra.mrb[0].mxu0 %v83
  %v2152 = vpop.f32.mrb[0].mxu0
  %v2153 = vadd.f32 %v1992, %v2152
  %v2154 = vpop.f32.mrb[0].mxu0
  %v2155 = vadd.f32 %v1994, %v2154
  %2156 = vmatprep.mubr.f32.mxu0 %v93
  %2157 = vmatmul.mubr.f32.gmra.mrb[0].mxu0 %v92
  %v2158 = vpop.f32.mrb[0].mxu0
  %v2159 = vadd.f32 %v1998, %v2158
  %v2160 = vpop.f32.mrb[0].mxu0
  %v2161 = vadd.f32 %v2000, %v2160
  %2162 = vmatprep.mubr.f32.mxu0 %v102
  %2163 = vmatmul.mubr.f32.gmra.mrb[0].mxu0 %v101
  %v2164 = vpop.f32.mrb[0].mxu0
  %v2165 = vadd.f32 %v2004, %v2164
  %v2166 = vpop.f32.mrb[0].mxu0
  %v2167 = vadd.f32 %v2006, %v2166
  %2168 = vmatprep.mubr.f32.mxu0 %v111
  %2169 = vmatmul.mubr.f32.gmra.mrb[0].mxu0 %v110
  %v2170 = vpop.f32.mrb[0].mxu0
  %v2171 = vadd.f32 %v2010, %v2170
  %v2172 = vpop.f32.mrb[0].mxu0
  %v2173 = vadd.f32 %v2012, %v2172
  %2174 = vmatprep.mubr.f32.mxu0 %v120
  %2175 = vmatmul.mubr.f32.gmra.mrb[0].mxu0 %v119
  %v2176 = vpop.f32.mrb[0].mxu0
  %v2177 = vadd.f32 %v2016, %v2176
  %v2178 = vpop.f32.mrb[0].mxu0
  %v2179 = vadd.f32 %v2018, %v2178
  %2180 = vmatprep.mubr.f32.mxu0 %v129
  %2181 = vmatmul.mubr.f32.gmra.mrb[0].mxu0 %v128
  %v2182 = vpop.f32.mrb[0].mxu0
  %v2183 = vadd.f32 %v2022, %v2182
  %v2184 = vpop.f32.mrb[0].mxu0
  %v2185 = vadd.f32 %v2024, %v2184
  %2186 = vmatprep.mubr.f32.mxu0 %v138
  %2187 = vmatmul.mubr.f32.gmra.mrb[0].mxu0 %v137
  %v2188 = vpop.f32.mrb[0].mxu0
  %v2189 = vadd.f32 %v2028, %v2188
  %v2190 = vpop.f32.mrb[0].mxu0
  %v2191 = vadd.f32 %v2030, %v2190
  %2192 = vmatprep.mubr.f32.mxu0 %v147
  %2193 = vmatmul.mubr.f32.gmra.mrb[0].mxu0 %v146
  %v2194 = vpop.f32.mrb[0].mxu0
  %v2195 = vadd.f32 %v2034, %v2194
  %v2196 = vpop.f32.mrb[0].mxu0
  %v2197 = vadd.f32 %v2036, %v2196
  %2198 = vmatprep.mubr.f32.mxu0 %v156
  %2199 = vmatmul.mubr.f32.gmra.mrb[0].mxu0 %v155
  %v2200 = vpop.f32.mrb[0].mxu0
  %v2201 = vadd.f32 %v2040, %v2200
  %v2202 = vpop.f32.mrb[0].mxu0
  %v2203 = vadd.f32 %v2042, %v2202
  %2204 = vdwg.mxu0
  %2205 = vmatprep.subr.mxu0 %v673
  %2206 = vmatpush1.msra.mxu0 %v672
  %2207 = vmatprep.subr.mxu0 %v677
  %2208 = vmatpush1.msra.mxu0 %v676
  %2209 = vmatprep.subr.mxu0 %v681
  %2210 = vmatpush1.msra.mxu0 %v680
  %2211 = vmatprep.subr.mxu0 %v685
  %2212 = vmatpush1.msra.mxu0 %v684
  %2213 = vmatprep.subr.mxu0 %v689
  %2214 = vmatpush1.msra.mxu0 %v688
  %2215 = vmatprep.subr.mxu0 %v693
  %2216 = vmatpush1.msra.mxu0 %v692
  %2217 = vmatprep.subr.mxu0 %v697
  %2218 = vmatpush1.msra.mxu0 %v696
  %2219 = vmatprep.subr.mxu0 %v701
  %2220 = vmatpush1.msra.mxu0 %v700
  %2221 = vmatprep.subr.mxu0 %v705
  %2222 = vmatpush1.msra.mxu0 %v704
  %2223 = vmatprep.subr.mxu0 %v709
  %2224 = vmatpush1.msra.mxu0 %v708
  %2225 = vmatprep.subr.mxu0 %v713
  %2226 = vmatpush1.msra.mxu0 %v712
  %2227 = vmatprep.subr.mxu0 %v717
  %2228 = vmatpush1.msra.mxu0 %v716
  %2229 = vmatprep.subr.mxu0 %v721
  %2230 = vmatpush1.msra.mxu0 %v720
  %2231 = vmatprep.subr.mxu0 %v725
  %2232 = vmatpush1.msra.mxu0 %v724
  %2233 = vmatprep.subr.mxu0 %v729
  %2234 = vmatpush1.msra.mxu0 %v728
  %2235 = vmatprep.subr.mxu0 %v733
  %2236 = vmatpush1.msra.mxu0 %v732
  %2237 = vmatprep.subr.mxu0 0.0
  %2238 = vmatpush1.msra.mxu0 0.0
  %2239 = vmatprep.subr.mxu0 0.0
  %2240 = vmatpush1.msra.mxu0 0.0
  %2241 = vmatprep.subr.mxu0 0.0
  %2242 = vmatpush1.msra.mxu0 0.0
  %2243 = vmatprep.subr.mxu0 0.0
  %2244 = vmatpush1.msra.mxu0 0.0
  %2245 = vmatprep.subr.mxu0 0.0
  %2246 = vmatpush1.msra.mxu0 0.0
  %2247 = vmatprep.subr.mxu0 0.0
  %2248 = vmatpush1.msra.mxu0 0.0
  %2249 = vmatprep.subr.mxu0 0.0
  %2250 = vmatpush1.msra.mxu0 0.0
  %2251 = vmatprep.subr.mxu0 0.0
  %2252 = vmatpush1.msra.mxu0 0.0
  %2253 = vmatprep.subr.mxu0 0.0
  %2254 = vmatpush1.msra.mxu0 0.0
  %2255 = vmatprep.subr.mxu0 0.0
  %2256 = vmatpush1.msra.mxu0 0.0
  %2257 = vmatprep.subr.mxu0 0.0
  %2258 = vmatpush1.msra.mxu0 0.0
  %2259 = vmatprep.subr.mxu0 0.0
  %2260 = vmatpush1.msra.mxu0 0.0
  %2261 = vmatprep.subr.mxu0 0.0
  %2262 = vmatpush1.msra.mxu0 0.0
  %2263 = vmatprep.subr.mxu0 0.0
  %2264 = vmatpush1.msra.mxu0 0.0
  %2265 = vmatprep.subr.mxu0 0.0
  %2266 = vmatpush1.msra.mxu0 0.0
  %2267 = vmatprep.subr.mxu0 0.0
  %2268 = vmatpush1.msra.mxu0 0.0
  %2269 = vmatprep.mubr.f32.mxu0 0.0
  %2270 = vmatmul.mubr.f32.gmra.mrb[0].mxu0 %v22
  %v2271 = vpop.f32.mrb[0].mxu0
  %v2272 = vadd.f32 %v2111, %v2271
  %v2273 = vpop.f32.mrb[0].mxu0
  %v2274 = vadd.f32 %v2113, %v2273
  %2275 = vmatprep.mubr.f32.mxu0 0.0
  %2276 = vmatmul.mubr.f32.gmra.mrb[0].mxu0 %v31
  %v2277 = vpop.f32.mrb[0].mxu0
  %v2278 = vadd.f32 %v2117, %v2277
  %v2279 = vpop.f32.mrb[0].mxu0
  %v2280 = vadd.f32 %v2119, %v2279
  %2281 = vmatprep.mubr.f32.mxu0 0.0
  %2282 = vmatmul.mubr.f32.gmra.mrb[0].mxu0 %v40
  %v2283 = vpop.f32.mrb[0].mxu0
  %v2284 = vadd.f32 %v2123, %v2283
  %v2285 = vpop.f32.mrb[0].mxu0
  %v2286 = vadd.f32 %v2125, %v2285
  %2287 = vmatprep.mubr.f32.mxu0 0.0
  %2288 = vmatmul.mubr.f32.gmra.mrb[0].mxu0 %v49
  %v2289 = vpop.f32.mrb[0].mxu0
  %v2290 = vadd.f32 %v2129, %v2289
  %v2291 = vpop.f32.mrb[0].mxu0
  %v2292 = vadd.f32 %v2131, %v2291
  %2293 = vmatprep.mubr.f32.mxu0 0.0
  %2294 = vmatmul.mubr.f32.gmra.mrb[0].mxu0 %v58
  %v2295 = vpop.f32.mrb[0].mxu0
  %v2296 = vadd.f32 %v2135, %v2295
  %v2297 = vpop.f32.mrb[0].mxu0
  %v2298 = vadd.f32 %v2137, %v2297
  %2299 = vmatprep.mubr.f32.mxu0 0.0
  %2300 = vmatmul.mubr.f32.gmra.mrb[0].mxu0 %v67
  %v2301 = vpop.f32.mrb[0].mxu0
  %v2302 = vadd.f32 %v2141, %v2301
  %v2303 = vpop.f32.mrb[0].mxu0
  %v2304 = vadd.f32 %v2143, %v2303
  %2305 = vmatprep.mubr.f32.mxu0 0.0
  %2306 = vmatmul.mubr.f32.gmra.mrb[0].mxu0 %v76
  %v2307 = vpop.f32.mrb[0].mxu0
  %v2308 = vadd.f32 %v2147, %v2307
  %v2309 = vpop.f32.mrb[0].mxu0
  %v2310 = vadd.f32 %v2149, %v2309
  %2311 = vmatprep.mubr.f32.mxu0 0.0
  %2312 = vmatmul.mubr.f32.gmra.mrb[0].mxu0 %v85
  %v2313 = vpop.f32.mrb[0].mxu0
  %v2314 = vadd.f32 %v2153, %v2313
  %v2315 = vpop.f32.mrb[0].mxu0
  %v2316 = vadd.f32 %v2155, %v2315
  %2317 = vmatprep.mubr.f32.mxu0 0.0
  %2318 = vmatmul.mubr.f32.gmra.mrb[0].mxu0 %v94
  %v2319 = vpop.f32.mrb[0].mxu0
  %v2320 = vadd.f32 %v2159, %v2319
  %v2321 = vpop.f32.mrb[0].mxu0
  %v2322 = vadd.f32 %v2161, %v2321
  %2323 = vmatprep.mubr.f32.mxu0 0.0
  %2324 = vmatmul.mubr.f32.gmra.mrb[0].mxu0 %v103
  %v2325 = vpop.f32.mrb[0].mxu0
  %v2326 = vadd.f32 %v2165, %v2325
  %v2327 = vpop.f32.mrb[0].mxu0
  %v2328 = vadd.f32 %v2167, %v2327
  %2329 = vmatprep.mubr.f32.mxu0 0.0
  %2330 = vmatmul.mubr.f32.gmra.mrb[0].mxu0 %v112
  %v2331 = vpop.f32.mrb[0].mxu0
  %v2332 = vadd.f32 %v2171, %v2331
  %v2333 = vpop.f32.mrb[0].mxu0
  %v2334 = vadd.f32 %v2173, %v2333
  %2335 = vmatprep.mubr.f32.mxu0 0.0
  %2336 = vmatmul.mubr.f32.gmra.mrb[0].mxu0 %v121
  %v2337 = vpop.f32.mrb[0].mxu0
  %v2338 = vadd.f32 %v2177, %v2337
  %v2339 = vpop.f32.mrb[0].mxu0
  %v2340 = vadd.f32 %v2179, %v2339
  %2341 = vmatprep.mubr.f32.mxu0 0.0
  %2342 = vmatmul.mubr.f32.gmra.mrb[0].mxu0 %v130
  %v2343 = vpop.f32.mrb[0].mxu0
  %v2344 = vadd.f32 %v2183, %v2343
  %v2345 = vpop.f32.mrb[0].mxu0
  %v2346 = vadd.f32 %v2185, %v2345
  %2347 = vmatprep.mubr.f32.mxu0 0.0
  %2348 = vmatmul.mubr.f32.gmra.mrb[0].mxu0 %v139
  %v2349 = vpop.f32.mrb[0].mxu0
  %v2350 = vadd.f32 %v2189, %v2349
  %v2351 = vpop.f32.mrb[0].mxu0
  %v2352 = vadd.f32 %v2191, %v2351
  %2353 = vmatprep.mubr.f32.mxu0 0.0
  %2354 = vmatmul.mubr.f32.gmra.mrb[0].mxu0 %v148
  %v2355 = vpop.f32.mrb[0].mxu0
  %v2356 = vadd.f32 %v2195, %v2355
  %v2357 = vpop.f32.mrb[0].mxu0
  %v2358 = vadd.f32 %v2197, %v2357
  %2359 = vmatprep.mubr.f32.mxu0 0.0
  %2360 = vmatmul.mubr.f32.gmra.mrb[0].mxu0 %v157
  %v2361 = vpop.f32.mrb[0].mxu0
  %v2362 = vadd.f32 %v2201, %v2361
  %v2363 = vpop.f32.mrb[0].mxu0
  %v2364 = vadd.f32 %v2203, %v2363
  %2365 = vdwg.mxu0
  %v2366 = vtanh.pop %v1467
  %v2367 = vtanh.pop %v1473
  %v2368 = vtanh.pop %v1479
  %v2369 = vtanh.pop %v1485
  %v2370 = vtanh.pop %v1491
  %v2371 = vtanh.pop %v1497
  %v2372 = vtanh.pop %v1503
  %v2373 = vtanh.pop %v1509
  %v2374 = vtanh.pop %v1515
  %v2375 = vtanh.pop %v1521
  %v2376 = vtanh.pop %v1527
  %v2377 = vtanh.pop %v1533
  %v2378 = vtanh.pop %v1539
  %v2379 = vtanh.pop %v1545
  %v2380 = vtanh.pop %v1551
  %v2381 = vtanh.pop %v1557
  %2382 = vst [vmem:[%s3] sm:$0xff] %v2366
  %2383 = vst [vmem:[%s3 + $0x20] sm:$0xff] %v2367
  %2384 = vst [vmem:[%s3 + $0x40] sm:$0xff] %v2368
  %2385 = vst [vmem:[%s3 + $0x60] sm:$0xff] %v2369
  %2386 = vst [vmem:[%s3 + $0x80] sm:$0xff] %v2370
  %2387 = vst [vmem:[%s3 + $0xa0] sm:$0xff] %v2371
  %2388 = vst [vmem:[%s3 + $0xc0] sm:$0xff] %v2372
  %2389 = vst [vmem:[%s3 + $0xe0] sm:$0xff] %v2373
  %2390 = vst [vmem:[%s3 + $0x100] sm:$0xff] %v2374
  %2391 = vst [vmem:[%s3 + $0x120] sm:$0xff] %v2375
  %2392 = vst [vmem:[%s3 + $0x140] sm:$0xff] %v2376
  %2393 = vst [vmem:[%s3 + $0x160] sm:$0xff] %v2377
  %2394 = vst [vmem:[%s3 + $0x180] sm:$0xff] %v2378
  %2395 = vst [vmem:[%s3 + $0x1a0] sm:$0xff] %v2379
  %2396 = vst [vmem:[%s3 + $0x1c0] sm:$0xff] %v2380
  %2397 = vst [vmem:[%s3 + $0x1e0] sm:$0xff] %v2381
  %v2398 = vtanh.pop %v1469
  %v2399 = vtanh.pop %v1475
  %v2400 = vtanh.pop %v1481
  %v2401 = vtanh.pop %v1487
  %v2402 = vtanh.pop %v1493
  %v2403 = vtanh.pop %v1499
  %v2404 = vtanh.pop %v1505
  %v2405 = vtanh.pop %v1511
  %v2406 = vtanh.pop %v1517
  %v2407 = vtanh.pop %v1523
  %v2408 = vtanh.pop %v1529
  %v2409 = vtanh.pop %v1535
  %v2410 = vtanh.pop %v1541
  %v2411 = vtanh.pop %v1547
  %v2412 = vtanh.pop %v1553
  %v2413 = vtanh.pop %v1559
  %2414 = vst [vmem:[%s3 + $0x8] sm:$0xff] %v2398
  %2415 = vst [vmem:[%s3 + $0x28] sm:$0xff] %v2399
  %2416 = vst [vmem:[%s3 + $0x48] sm:$0xff] %v2400
  %2417 = vst [vmem:[%s3 + $0x68] sm:$0xff] %v2401
  %2418 = vst [vmem:[%s3 + $0x88] sm:$0xff] %v2402
  %2419 = vst [vmem:[%s3 + $0xa8] sm:$0xff] %v2403
  %2420 = vst [vmem:[%s3 + $0xc8] sm:$0xff] %v2404
  %2421 = vst [vmem:[%s3 + $0xe8] sm:$0xff] %v2405
  %2422 = vst [vmem:[%s3 + $0x108] sm:$0xff] %v2406
  %2423 = vst [vmem:[%s3 + $0x128] sm:$0xff] %v2407
  %2424 = vst [vmem:[%s3 + $0x148] sm:$0xff] %v2408
  %2425 = vst [vmem:[%s3 + $0x168] sm:$0xff] %v2409
  %2426 = vst [vmem:[%s3 + $0x188] sm:$0xff] %v2410
  %2427 = vst [vmem:[%s3 + $0x1a8] sm:$0xff] %v2411
  %2428 = vst [vmem:[%s3 + $0x1c8] sm:$0xff] %v2412
  %2429 = vst [vmem:[%s3 + $0x1e8] sm:$0xff] %v2413
  %v2430 = vtanh.pop %v2272
  %v2431 = vtanh.pop %v2278
  %v2432 = vtanh.pop %v2284
  %v2433 = vtanh.pop %v2290
  %v2434 = vtanh.pop %v2296
  %v2435 = vtanh.pop %v2302
  %v2436 = vtanh.pop %v2308
  %v2437 = vtanh.pop %v2314
  %v2438 = vtanh.pop %v2320
  %v2439 = vtanh.pop %v2326
  %v2440 = vtanh.pop %v2332
  %v2441 = vtanh.pop %v2338
  %v2442 = vtanh.pop %v2344
  %v2443 = vtanh.pop %v2350
  %v2444 = vtanh.pop %v2356
  %v2445 = vtanh.pop %v2362
  %2446 = vst [vmem:[%s3 + $0x10] sm:$0xff] %v2430
  %2447 = vst [vmem:[%s3 + $0x30] sm:$0xff] %v2431
  %2448 = vst [vmem:[%s3 + $0x50] sm:$0xff] %v2432
  %2449 = vst [vmem:[%s3 + $0x70] sm:$0xff] %v2433
  %2450 = vst [vmem:[%s3 + $0x90] sm:$0xff] %v2434
  %2451 = vst [vmem:[%s3 + $0xb0] sm:$0xff] %v2435
  %2452 = vst [vmem:[%s3 + $0xd0] sm:$0xff] %v2436
  %2453 = vst [vmem:[%s3 + $0xf0] sm:$0xff] %v2437
  %2454 = vst [vmem:[%s3 + $0x110] sm:$0xff] %v2438
  %2455 = vst [vmem:[%s3 + $0x130] sm:$0xff] %v2439
  %2456 = vst [vmem:[%s3 + $0x150] sm:$0xff] %v2440
  %2457 = vst [vmem:[%s3 + $0x170] sm:$0xff] %v2441
  %2458 = vst [vmem:[%s3 + $0x190] sm:$0xff] %v2442
  %2459 = vst [vmem:[%s3 + $0x1b0] sm:$0xff] %v2443
  %2460 = vst [vmem:[%s3 + $0x1d0] sm:$0xff] %v2444
  %2461 = vst [vmem:[%s3 + $0x1f0] sm:$0xff] %v2445
  %v2462 = vtanh.pop %v2274
  %v2463 = vtanh.pop %v2280
  %v2464 = vtanh.pop %v2286
  %v2465 = vtanh.pop %v2292
  %v2466 = vtanh.pop %v2298
  %v2467 = vtanh.pop %v2304
  %v2468 = vtanh.pop %v2310
  %v2469 = vtanh.pop %v2316
  %v2470 = vtanh.pop %v2322
  %v2471 = vtanh.pop %v2328
  %v2472 = vtanh.pop %v2334
  %v2473 = vtanh.pop %v2340
  %v2474 = vtanh.pop %v2346
  %v2475 = vtanh.pop %v2352
  %v2476 = vtanh.pop %v2358
  %v2477 = vtanh.pop %v2364
  %2478 = vst [vmem:[%s3 + $0x18] sm:$0xff] %v2462
  %2479 = vst [vmem:[%s3 + $0x38] sm:$0xff] %v2463
  %2480 = vst [vmem:[%s3 + $0x58] sm:$0xff] %v2464
  %2481 = vst [vmem:[%s3 + $0x78] sm:$0xff] %v2465
  %2482 = vst [vmem:[%s3 + $0x98] sm:$0xff] %v2466
  %2483 = vst [vmem:[%s3 + $0xb8] sm:$0xff] %v2467
  %2484 = vst [vmem:[%s3 + $0xd8] sm:$0xff] %v2468
  %2485 = vst [vmem:[%s3 + $0xf8] sm:$0xff] %v2469
  %2486 = vst [vmem:[%s3 + $0x118] sm:$0xff] %v2470
  %2487 = vst [vmem:[%s3 + $0x138] sm:$0xff] %v2471
  %2488 = vst [vmem:[%s3 + $0x158] sm:$0xff] %v2472
  %2489 = vst [vmem:[%s3 + $0x178] sm:$0xff] %v2473
  %2490 = vst [vmem:[%s3 + $0x198] sm:$0xff] %v2474
  %2491 = vst [vmem:[%s3 + $0x1b8] sm:$0xff] %v2475
  %2492 = vst [vmem:[%s3 + $0x1d8] sm:$0xff] %v2476
  %2493 = vst [vmem:[%s3 + $0x1f8] sm:$0xff] %v2477
  // Predicated region
  $region14: #{vqvae_forward.21} parent=0 // pred_check
    _
  $region15: #{vqvae_forward.21} parent=0 // pred_check_branch
    %2495 = sbr.rel (0) target = $region17
  $region16: #{vqvae_forward.21} parent=0 // pred_region
    _
  $region17: #{vqvae_forward.21} parent=0 // pred_fallthru
    _
  // Predicated region
  $region18: #{vqvae_forward.21} parent=0 // pred_check
    _
  $region19: #{vqvae_forward.21} parent=0 // pred_check_branch
    %2497 = sbr.rel (0) target = $region21
  $region20: #{vqvae_forward.21} parent=0 // pred_region
    _
  $region21: #{vqvae_forward.21} parent=0 // pred_fallthru
    _

</llo_original>
